<compile_context>
chip_gen: v6e
topology: v6e:2x2x1
jax: 0.10.0
libtpu: 0.0.40
codegen_flags: <defaults>
</compile_context>

<pallas_src>
import jax
import jax.numpy as jnp
from jax.experimental import pallas as pl
from jax.experimental.pallas import tpu as pltpu


def _leaky_relu(x, slope=0.2):
    # max(x, slope*x) == LeakyReLU(slope) for 0 < slope < 1 (mul+max, no select).
    return jnp.maximum(x, slope * x)


def ranknet_kernel(x1_ref, x2_ref,
                   w1_ref, b1_ref,
                   w2_ref, b2_ref,
                   w3_ref, b3_ref,
                   out_ref,
                   h1_ref):
    """Computes sigmoid(model(x1) - model(x2)) for one batch tile."""
    tile = x1_ref.shape[0]
    w1 = w1_ref[...]                                                 # (F, 512) bf16
    b1 = b1_ref[...]                                                 # (1, 512) f32

    # Layer 1: Linear(F, 512) + Dropout(identity) + LeakyReLU(0.2).
    # One dot per tower writing into halves of a shared (2T, 512) bf16 scratch
    # (avoids a (2T, F) concat temp); the f32->bf16 input cast runs on the VPU
    # here, hidden under the MXU.
    h1_ref[:tile, :] = _leaky_relu(
        jnp.dot(x1_ref[...].astype(jnp.bfloat16), w1,
                preferred_element_type=jnp.float32) + b1
    ).astype(jnp.bfloat16)
    h1_ref[tile:, :] = _leaky_relu(
        jnp.dot(x2_ref[...].astype(jnp.bfloat16), w1,
                preferred_element_type=jnp.float32) + b1
    ).astype(jnp.bfloat16)

    # Layer 2: Linear(512, 256) + Dropout(identity) + LeakyReLU(0.2).
    # Single fused matmul over both towers.
    h2 = _leaky_relu(
        jnp.dot(h1_ref[...], w2_ref[...],
                preferred_element_type=jnp.float32) + b2_ref[...]
    )                                                                # (2T, 256) f32

    # Layer 3: Linear(256, 1) + Sigmoid.  One VPU multiply + XLU lane reduction
    # over the full h2 (keeps the MXU for the wide layers), then slice the two
    # towers out of the lane-dense (1, 2T) score row.
    s = jnp.sum(h2 * w3_ref[...], axis=-1)[None, :] + b3_ref[...]   # (1, 2T)
    s = jax.nn.sigmoid(s)
    s1 = s[:, :tile]                                                 # (1, T)
    s2 = s[:, tile:]                                                 # (1, T)

    # output_sig(s1 - s2), written lane-dense as one (1, 1, T) row.
    out_ref[...] = jax.nn.sigmoid(s1 - s2).reshape(1, 1, tile)


def _round_up(x, m):
    return ((x + m - 1) // m) * m


def pick_batch_tile(batch, *, max_tile=2048):
    """Adaptive tile: as large as is useful (amortizes per-step overhead), but
    keep >= 2 grid steps when the batch allows (v7x has 2 TensorCores), and a
    multiple of 128 lanes (also a multiple of the bf16 (16,128) tile)."""
    if batch <= 128:
        return 128
    per_core = pl.cdiv(batch, 2)
    return min(max_tile, _round_up(per_core, 128))


def _vmem_limit_bytes(batch_tile, num_feature):
    """Generation-aware scoped-VMEM limit computed from actual block sizes."""
    t, f = batch_tile, num_feature
    x_blocks = 2 * 2 * t * f * 4                            # x1, x2 (f32, double-buffered)
    weights = 2 * (f * 512 * 2 + 512 * 4                    # w1 (bf16) + b1 (f32)
                   + 512 * 256 * 2 + 256 * 4                # w2 (bf16) + b2 (f32)
                   + 256 * 4 + 4)                           # w3, b3 (f32)
    h1_scratch = 2 * t * 512 * 2                            # bf16 scratch
    temps = 2 * t * 512 * 4 + 2 * t * 256 * 4               # layer-1 f32 result + h2 f32
    out_blocks = 2 * t * 4
    need = x_blocks + weights + h1_scratch + temps + out_blocks
    need = int(need * 1.25) + (8 << 20)                     # Mosaic internal-scratch margin
    try:
        cap = pltpu.get_tpu_info().vmem_capacity_bytes      # 64 MiB v7x, 128 MiB v5e/v6e
    except Exception:
        cap = 64 << 20
    return max(32 << 20, min(need, int(cap * 0.85)))


def prepare_params(params):
    """One-time dtype conversion to what the kernel consumes (hoisted out of
    the per-call path): w1/w2 -> bf16 MXU operands, everything else f32."""
    w1, b1, w2, b2, w3, b3 = params
    return (w1.astype(jnp.bfloat16), b1.astype(jnp.float32),
            w2.astype(jnp.bfloat16), b2.astype(jnp.float32),
            w3.astype(jnp.float32), b3.astype(jnp.float32))


def ranknet_forward(x1, x2, params, *, batch_tile=None):
    """params = (w1 (F,512), b1 (1,512), w2 (512,256), b2 (1,256),
                 w3 (1,256), b3 (1,1)).  Returns (B, 1) float32."""
    w1, b1, w2, b2, w3, b3 = params
    B, F = x1.shape
    assert x2.shape == (B, F)

    if batch_tile is None:
        batch_tile = pick_batch_tile(B)
    assert batch_tile % 128 == 0

    # Pad the batch to a multiple of batch_tile; padding is sliced off below.
    num_tiles = pl.cdiv(B, batch_tile)
    b_pad = num_tiles * batch_tile
    if b_pad != B:
        pad = ((0, b_pad - B), (0, 0))
        x1 = jnp.pad(x1, pad)
        x2 = jnp.pad(x2, pad)

    # x1/x2 stay f32 (cast to bf16 inside the kernel).  Weight casts are no-ops
    # if the caller already ran prepare_params().
    x1 = x1.astype(jnp.float32)
    x2 = x2.astype(jnp.float32)
    w1 = w1.astype(jnp.bfloat16)
    w2 = w2.astype(jnp.bfloat16)
    b1 = b1.astype(jnp.float32)
    b2 = b2.astype(jnp.float32)
    w3 = w3.astype(jnp.float32)
    b3 = b3.astype(jnp.float32)

    x_spec = pl.BlockSpec((batch_tile, F), lambda i: (i, 0))
    full = lambda a: pl.BlockSpec(a.shape, lambda i: (0, 0))

    # Advisory cost estimate (per full call) for XLA's scheduler.
    flops = 2 * (2 * b_pad) * (F * 512 + 512 * 256)
    transcendentals = 3 * b_pad                              # sigmoids (s1, s2, output)
    bytes_accessed = (2 * b_pad * F * 4
                      + F * 512 * 2 + 512 * 4 + 512 * 256 * 2 + 256 * 4 + 256 * 4 + 4
                      + b_pad * 4)
    cost = pl.CostEstimate(flops=flops, transcendentals=transcendentals,
                           bytes_accessed=bytes_accessed)

    out = pl.pallas_call(
        ranknet_kernel,
        out_shape=jax.ShapeDtypeStruct((num_tiles, 1, batch_tile), jnp.float32),
        grid_spec=pltpu.PrefetchScalarGridSpec(
            num_scalar_prefetch=0,
            grid=(num_tiles,),
            in_specs=[
                x_spec, x_spec,
                full(w1), full(b1),
                full(w2), full(b2),
                full(w3), full(b3),
            ],
            out_specs=pl.BlockSpec((1, 1, batch_tile), lambda i: (i, 0, 0)),
            scratch_shapes=[pltpu.VMEM((2 * batch_tile, 512), jnp.bfloat16)],
        ),
        compiler_params=pltpu.CompilerParams(
            dimension_semantics=("parallel",),
            vmem_limit_bytes=_vmem_limit_bytes(batch_tile, F),
        ),
        cost_estimate=cost,
    )(x1, x2, w1, b1, w2, b2, w3, b3)

    # (num_tiles, 1, batch_tile) -> (B, 1), dropping the batch padding.
    return out.reshape(b_pad, 1)[:B]


def init_params(key, num_feature):
    """Deterministic synthetic parameter init (uniform, PyTorch-Linear-like bounds)."""
    k1, k2, k3, k4, k5, k6 = jax.random.split(key, 6)

    def u(k, shape, fan_in):
        bound = 1.0 / jnp.sqrt(fan_in)
        return jax.random.uniform(k, shape, jnp.float32, -bound, bound)

    w1 = u(k1, (num_feature, 512), num_feature)
    b1 = u(k2, (1, 512), num_feature)
    w2 = u(k3, (512, 256), 512)
    b2 = u(k4, (1, 256), 512)
    w3 = u(k5, (1, 256), 256)          # Linear(256, 1) weight stored as (1, 256)
    b3 = u(k6, (1, 1), 256)
    return (w1, b1, w2, b2, w3, b3)


def ranknet_reference(x1, x2, params):
    """Pure-JAX reference mirroring the kernel's bf16-operand / f32-accum math."""
    w1, b1, w2, b2, w3, b3 = params
    w1b = w1.astype(jnp.bfloat16)
    w2b = w2.astype(jnp.bfloat16)
    b1 = b1.astype(jnp.float32)
    b2 = b2.astype(jnp.float32)
    w3 = w3.astype(jnp.float32)
    b3 = b3.astype(jnp.float32)

    def mlp(x):
        x = x.astype(jnp.bfloat16)
        h1 = jnp.dot(x, w1b, preferred_element_type=jnp.float32) + b1
        h1 = _leaky_relu(h1).astype(jnp.bfloat16)
        h2 = jnp.dot(h1, w2b, preferred_element_type=jnp.float32) + b2
        h2 = _leaky_relu(h2)
        s = jnp.sum(h2 * w3, axis=-1, keepdims=True) + b3
        return jax.nn.sigmoid(s)

    return jax.nn.sigmoid(mlp(x1) - mlp(x2))


if __name__ == "__main__":
    key = jax.random.PRNGKey(0)
    k_params, k_x1, k_x2 = jax.random.split(key, 3)

    batch = 300          # not a tile multiple -> exercises padding; adaptive tile=256, grid=2
    num_feature = 32

    params = init_params(k_params, num_feature)
    kernel_params = prepare_params(params)     # one-time weight dtype conversion

    x1 = jax.random.normal(k_x1, (batch, num_feature), jnp.float32)
    x2 = jax.random.normal(k_x2, (batch, num_feature), jnp.float32)

    out = ranknet_forward(x1, x2, kernel_params)
    out = jax.block_until_ready(out)

    ref = ranknet_reference(x1, x2, params)
    assert out.shape == (batch, 1)
    assert jnp.allclose(out, ref, atol=5e-5, rtol=1e-4), (
        float(jnp.max(jnp.abs(out - ref))))

    print("KERNEL_OK")
</pallas_src>

<mosaic_0001>
module attributes {stable_mosaic.version = 11 : i64} {
  func.func @ranknet_kernel(%arg0: i32, %arg1: memref<256x32xf32, #tpu.memory_space<vmem>>, %arg2: memref<256x32xf32, #tpu.memory_space<vmem>>, %arg3: memref<32x512xbf16, #tpu.memory_space<vmem>>, %arg4: memref<1x512xf32, #tpu.memory_space<vmem>>, %arg5: memref<512x256xbf16, #tpu.memory_space<vmem>>, %arg6: memref<1x256xf32, #tpu.memory_space<vmem>>, %arg7: memref<1x256xf32, #tpu.memory_space<vmem>>, %arg8: memref<1x1xf32, #tpu.memory_space<vmem>>, %arg9: memref<1x1x256xf32, #tpu.memory_space<vmem>>, %arg10: memref<512x512xbf16, #tpu.memory_space<vmem>>) attributes {dimension_semantics = [#tpu.dimension_semantics<parallel>], iteration_bounds = array<i64: 2>, scalar_prefetch = 0 : i64, scratch_operands = 1 : i64, tpu.core_type = #tpu.core_type<tc>, window_params = [{transform_indices = @transform_0, window_bounds = array<i64: 256, 32>}, {transform_indices = @transform_1, window_bounds = array<i64: 256, 32>}, {pipeline_mode = #tpu.pipeline_mode<synchronous>, transform_indices = @transform_2, window_bounds = array<i64: 32, 512>}, {pipeline_mode = #tpu.pipeline_mode<synchronous>, transform_indices = @transform_3, window_bounds = array<i64: 1, 512>}, {pipeline_mode = #tpu.pipeline_mode<synchronous>, transform_indices = @transform_4, window_bounds = array<i64: 512, 256>}, {pipeline_mode = #tpu.pipeline_mode<synchronous>, transform_indices = @transform_5, window_bounds = array<i64: 1, 256>}, {pipeline_mode = #tpu.pipeline_mode<synchronous>, transform_indices = @transform_6, window_bounds = array<i64: 1, 256>}, {pipeline_mode = #tpu.pipeline_mode<synchronous>, transform_indices = @transform_7, window_bounds = array<i64: 1, 1>}, {transform_indices = @transform_8, window_bounds = array<i64: 1, 1, 256>}]} {
    %c0 = arith.constant 0 : index
    %c0_0 = arith.constant 0 : index
    %0 = vector.load %arg3[%c0, %c0_0] : memref<32x512xbf16, #tpu.memory_space<vmem>>, vector<32x512xbf16>
    %c0_1 = arith.constant 0 : index
    %c0_2 = arith.constant 0 : index
    %1 = vector.load %arg4[%c0_1, %c0_2] : memref<1x512xf32, #tpu.memory_space<vmem>>, vector<1x512xf32>
    %c0_3 = arith.constant 0 : index
    %c0_4 = arith.constant 0 : index
    %2 = vector.load %arg1[%c0_3, %c0_4] : memref<256x32xf32, #tpu.memory_space<vmem>>, vector<256x32xf32>
    %3 = arith.truncf %2 : vector<256x32xf32> to vector<256x32xbf16>
    %cst = arith.constant dense<0.000000e+00> : vector<256x512xf32>
    %4 = tpu.matmul %3, %0, %cst {dimension_numbers = #tpu.dot_dimension_numbers<[1], [0], [0], [1], [0, 0, 1, 1], [], []>} : vector<256x32xbf16>, vector<32x512xbf16>, vector<256x512xf32> -> vector<256x512xf32>
    %5 = vector.broadcast %1 : vector<1x512xf32> to vector<256x512xf32>
    %6 = arith.addf %4, %5 : vector<256x512xf32>
    %cst_5 = arith.constant 2.000000e-01 : f32
    %7 = vector.broadcast %cst_5 : f32 to vector<256x512xf32>
    %8 = arith.mulf %7, %6 : vector<256x512xf32>
    %9 = arith.maximumf %6, %8 : vector<256x512xf32>
    %10 = arith.truncf %9 : vector<256x512xf32> to vector<256x512xbf16>
    %c0_6 = arith.constant 0 : index
    %c0_7 = arith.constant 0 : index
    %11 = vector.load %arg10[%c0_6, %c0_7] : memref<512x512xbf16, #tpu.memory_space<vmem>>, vector<256x512xbf16>
    tpu.vector_store %arg10[%c0_6, %c0_7], %10 {strides = array<i32>} : memref<512x512xbf16, #tpu.memory_space<vmem>>, vector<256x512xbf16>,
    %c0_8 = arith.constant 0 : index
    %c0_9 = arith.constant 0 : index
    %12 = vector.load %arg2[%c0_8, %c0_9] : memref<256x32xf32, #tpu.memory_space<vmem>>, vector<256x32xf32>
    %13 = arith.truncf %12 : vector<256x32xf32> to vector<256x32xbf16>
    %cst_10 = arith.constant dense<0.000000e+00> : vector<256x512xf32>
    %14 = tpu.matmul %13, %0, %cst_10 {dimension_numbers = #tpu.dot_dimension_numbers<[1], [0], [0], [1], [0, 0, 1, 1], [], []>} : vector<256x32xbf16>, vector<32x512xbf16>, vector<256x512xf32> -> vector<256x512xf32>
    %15 = vector.broadcast %1 : vector<1x512xf32> to vector<256x512xf32>
    %16 = arith.addf %14, %15 : vector<256x512xf32>
    %cst_11 = arith.constant 2.000000e-01 : f32
    %17 = vector.broadcast %cst_11 : f32 to vector<256x512xf32>
    %18 = arith.mulf %17, %16 : vector<256x512xf32>
    %19 = arith.maximumf %16, %18 : vector<256x512xf32>
    %20 = arith.truncf %19 : vector<256x512xf32> to vector<256x512xbf16>
    %c256 = arith.constant 256 : index
    %c0_12 = arith.constant 0 : index
    %21 = vector.load %arg10[%c256, %c0_12] : memref<512x512xbf16, #tpu.memory_space<vmem>>, vector<256x512xbf16>
    tpu.vector_store %arg10[%c256, %c0_12], %20 {strides = array<i32>} : memref<512x512xbf16, #tpu.memory_space<vmem>>, vector<256x512xbf16>,
    %c0_13 = arith.constant 0 : index
    %c0_14 = arith.constant 0 : index
    %22 = vector.load %arg10[%c0_13, %c0_14] : memref<512x512xbf16, #tpu.memory_space<vmem>>, vector<512x512xbf16>
    %c0_15 = arith.constant 0 : index
    %c0_16 = arith.constant 0 : index
    %23 = vector.load %arg5[%c0_15, %c0_16] : memref<512x256xbf16, #tpu.memory_space<vmem>>, vector<512x256xbf16>
    %cst_17 = arith.constant dense<0.000000e+00> : vector<512x256xf32>
    %24 = tpu.matmul %22, %23, %cst_17 {dimension_numbers = #tpu.dot_dimension_numbers<[1], [0], [0], [1], [0, 0, 1, 1], [], []>} : vector<512x512xbf16>, vector<512x256xbf16>, vector<512x256xf32> -> vector<512x256xf32>
    %c0_18 = arith.constant 0 : index
    %c0_19 = arith.constant 0 : index
    %25 = vector.load %arg6[%c0_18, %c0_19] : memref<1x256xf32, #tpu.memory_space<vmem>>, vector<1x256xf32>
    %26 = vector.broadcast %25 : vector<1x256xf32> to vector<512x256xf32>
    %27 = arith.addf %24, %26 : vector<512x256xf32>
    %cst_20 = arith.constant 2.000000e-01 : f32
    %28 = vector.broadcast %cst_20 : f32 to vector<512x256xf32>
    %29 = arith.mulf %28, %27 : vector<512x256xf32>
    %30 = arith.maximumf %27, %29 : vector<512x256xf32>
    %c0_21 = arith.constant 0 : index
    %c0_22 = arith.constant 0 : index
    %31 = vector.load %arg7[%c0_21, %c0_22] : memref<1x256xf32, #tpu.memory_space<vmem>>, vector<1x256xf32>
    %32 = vector.broadcast %31 : vector<1x256xf32> to vector<512x256xf32>
    %33 = arith.mulf %30, %32 : vector<512x256xf32>
    %cst_23 = arith.constant dense<0.000000e+00> : vector<512xf32>
    %34 = vector.multi_reduction <add>, %33, %cst_23 [1] : vector<512x256xf32> to vector<512xf32>
    %35 = vector.shape_cast %34 : vector<512xf32> to vector<1x512xf32>
    %c0_24 = arith.constant 0 : index
    %c0_25 = arith.constant 0 : index
    %36 = vector.load %arg8[%c0_24, %c0_25] : memref<1x1xf32, #tpu.memory_space<vmem>>, vector<1x1xf32>
    %37 = vector.broadcast %36 : vector<1x1xf32> to vector<1x512xf32>
    %38 = arith.addf %35, %37 : vector<1x512xf32>
    %39 = arith.negf %38 : vector<1x512xf32>
    %40 = math.exp %39 : vector<1x512xf32>
    %cst_26 = arith.constant 1.000000e+00 : f32
    %41 = vector.broadcast %cst_26 : f32 to vector<1x512xf32>
    %42 = arith.addf %41, %40 : vector<1x512xf32>
    %43 = arith.divf %41, %42 : vector<1x512xf32>
    %44 = vector.extract_strided_slice %43 {offsets = [0, 0], sizes = [1, 256], strides = [1, 1]} : vector<1x512xf32> to vector<1x256xf32>
    %45 = vector.extract_strided_slice %43 {offsets = [0, 256], sizes = [1, 256], strides = [1, 1]} : vector<1x512xf32> to vector<1x256xf32>
    %46 = arith.subf %44, %45 : vector<1x256xf32>
    %47 = arith.negf %46 : vector<1x256xf32>
    %48 = math.exp %47 : vector<1x256xf32>
    %cst_27 = arith.constant 1.000000e+00 : f32
    %49 = vector.broadcast %cst_27 : f32 to vector<1x256xf32>
    %50 = arith.addf %49, %48 : vector<1x256xf32>
    %51 = arith.divf %49, %50 : vector<1x256xf32>
    %52 = vector.shape_cast %51 : vector<1x256xf32> to vector<1x1x256xf32>
    %c0_28 = arith.constant 0 : index
    %c0_29 = arith.constant 0 : index
    %c0_30 = arith.constant 0 : index
    %53 = vector.load %arg9[%c0_28, %c0_29, %c0_30] : memref<1x1x256xf32, #tpu.memory_space<vmem>>, vector<1x1x256xf32>
    tpu.vector_store %arg9[%c0_28, %c0_29, %c0_30], %52 {strides = array<i32>} : memref<1x1x256xf32, #tpu.memory_space<vmem>>, vector<1x1x256xf32>,
    return
  }
  func.func @transform_0(%arg0: i32) -> (i32, i32) {
    %c0_i32 = arith.constant 0 : i32
    %c0_i32_0 = arith.constant 0 : i32
    return %arg0, %c0_i32 : i32, i32
  }
  func.func @transform_1(%arg0: i32) -> (i32, i32) {
    %c0_i32 = arith.constant 0 : i32
    %c0_i32_0 = arith.constant 0 : i32
    return %arg0, %c0_i32 : i32, i32
  }
  func.func @transform_2(%arg0: i32) -> (i32, i32) {
    %c0_i32 = arith.constant 0 : i32
    %c0_i32_0 = arith.constant 0 : i32
    %c0_i32_1 = arith.constant 0 : i32
    return %c0_i32, %c0_i32_0 : i32, i32
  }
  func.func @transform_3(%arg0: i32) -> (i32, i32) {
    %c0_i32 = arith.constant 0 : i32
    %c0_i32_0 = arith.constant 0 : i32
    %c0_i32_1 = arith.constant 0 : i32
    return %c0_i32, %c0_i32_0 : i32, i32
  }
  func.func @transform_4(%arg0: i32) -> (i32, i32) {
    %c0_i32 = arith.constant 0 : i32
    %c0_i32_0 = arith.constant 0 : i32
    %c0_i32_1 = arith.constant 0 : i32
    return %c0_i32, %c0_i32_0 : i32, i32
  }
  func.func @transform_5(%arg0: i32) -> (i32, i32) {
    %c0_i32 = arith.constant 0 : i32
    %c0_i32_0 = arith.constant 0 : i32
    %c0_i32_1 = arith.constant 0 : i32
    return %c0_i32, %c0_i32_0 : i32, i32
  }
  func.func @transform_6(%arg0: i32) -> (i32, i32) {
    %c0_i32 = arith.constant 0 : i32
    %c0_i32_0 = arith.constant 0 : i32
    %c0_i32_1 = arith.constant 0 : i32
    return %c0_i32, %c0_i32_0 : i32, i32
  }
  func.func @transform_7(%arg0: i32) -> (i32, i32) {
    %c0_i32 = arith.constant 0 : i32
    %c0_i32_0 = arith.constant 0 : i32
    %c0_i32_1 = arith.constant 0 : i32
    return %c0_i32, %c0_i32_0 : i32, i32
  }
  func.func @transform_8(%arg0: i32) -> (i32, i32, i32) {
    %c0_i32 = arith.constant 0 : i32
    %c0_i32_0 = arith.constant 0 : i32
    %c0_i32_1 = arith.constant 0 : i32
    return %arg0, %c0_i32, %c0_i32_0 : i32, i32, i32
  }
}

</mosaic_0001>

<llo_original>
// kernel: tpu_custom_call.1
$region0: #{tpu_custom_call.1}
  #allocation0 [shape = 'u32[]', space=smem, size = 0x4, offset = 0x4, fixed_abs, tag = 'smem constant byte address 0x4 - core index']
  #allocation1 [shape = 'u32[144,128]{1,0:T(1,128)}', space=vmem, size = 0x12000, scoped, tag = 'internal scratch']
  #allocation2 [shape = 'bf16[512,512]{1,0:T(8,128)(2,1)}', space=vmem, size = 0x80000, scoped, tag = 'scratch operand']
  #allocation3 [shape = 'f32[1,1]{1,0:T(1,128)S(1)}', space=vmem, size = 0x200, scoped, tag = 'scoped memory for tpu_custom_call.1']
  %s0 = inlined_call_operand.vmem [shape: f32[512,32], index: 0, kind: input, shape index: {}]
  %s1 = inlined_call_operand.vmem [shape: f32[512,32], index: 1, kind: input, shape index: {}]
  %s2 = inlined_call_operand.vmem [shape: bf16[32,512], index: 2, kind: input, shape index: {}]
  %s3 = inlined_call_operand.vmem [shape: f32[1,512], index: 3, kind: input, shape index: {}]
  %s4 = inlined_call_operand.vmem [shape: bf16[512,256], index: 4, kind: input, shape index: {}]
  %s5 = inlined_call_operand.vmem [shape: f32[1,256], index: 5, kind: input, shape index: {}]
  %s6 = inlined_call_operand.vmem [shape: f32[1,256], index: 6, kind: input, shape index: {}]
  %s7 = inlined_call_operand.<no memory space> [shape: f32[1,1], index: 7, kind: input, shape index: {}]
  %s8 = inlined_call_operand.hbm [shape: f32[2,1,256], index: 8, kind: output, shape index: {}]
  %s9 = sld [smem:[#allocation0]]
  $region65: #{tpu_custom_call.1} parent=0
    _
  %s11 = ssub.s32 1, %s9
  %s12 = scalar_select 0, %s11, %s9
  %v13 = vstv %s7
  %14 = vst [vmem:[#allocation3] sm:$0x1] %v13
  $region1: #{tpu_custom_call.1} parent=0
    #allocation4 [shape = 'u8[2048]{0}', space=vmem, size = 0x800, scoped, tag = 'output window, operand 0']
    #allocation5 [shape = 's32[2]{0}', space=sflag, size = 0x8, scoped, tag = 'scoped memory for tpu_custom_call.1']
    %15 = vsyncpa [#allocation5], 0
    %s16 = scalar_lea.sflag [#allocation5], 1
    %17 = vsyncpa %s16, 0
    loop: start=0, step=1, limit=4
    $region2: #{tpu_custom_call.1} parent=1 // loop_pre_header
      _
    $region3: #{tpu_custom_call.1} parent=1 // loop_header
      %s19 = sphi 0, %s23
      %p20 = scmp.ge.s32.totalorder %s19, 4
      %s29 = sphi 0, %s31
      %s32 = sphi 0, %s29
      %s33 = sphi 0, %s32
      %s49 = sphi 0, %s33
      %s55 = sphi 0, %s57
      %s58 = sphi 0, %s55
      %s59 = sphi 0, %s58
      %s75 = sphi 0, %s59
      %s79 = sphi 0, %s79
      %s81 = sphi 0, %s79
      %s82 = sphi 0, %s81
      %s96 = sphi 0, %s82
      %s100 = sphi 0, %s100
      %s102 = sphi 0, %s100
      %s103 = sphi 0, %s102
      %s117 = sphi 0, %s103
      %s121 = sphi 0, %s121
      %s123 = sphi 0, %s121
      %s124 = sphi 0, %s123
      %s138 = sphi 0, %s124
      %s142 = sphi 0, %s142
      %s144 = sphi 0, %s142
      %s145 = sphi 0, %s144
      %s159 = sphi 0, %s145
      %s163 = sphi 0, %s163
      %s165 = sphi 0, %s163
      %s166 = sphi 0, %s165
      %s180 = sphi 0, %s166
      %s184 = sphi 0, %s184
      %s186 = sphi 0, %s184
      %s187 = sphi 0, %s186
      %s201 = sphi 0, %s187
      %s207 = sphi 0, %s209
      %s210 = sphi 0, %s207
      %s211 = sphi 0, %s210
      %s227 = sphi 0, %s211
    $region4: #{tpu_custom_call.1} parent=1 // loop_header_branch
      %22 = sbr.rel (%p20) target = $region8
    $region5: #{tpu_custom_call.1} parent=1 // loop_body
      %s24 = ssub.s32 %s19, 1
      %s25 = ssub.s32 %s19, 2
      %s26 = sadd.s32 %s19, 1
      %s27 = ssub.s32 %s19, %s26
      %p28 = scmp.eq.s32.totalorder %s27, 0
      %s30 = sadd.s32 %s29, 1
      %s31 = scalar_select %p28, %s29, %s30
      %p34 = pneg %p28
      %p35 = scmp.eq.s32.totalorder %s19, 1
      %p36 = por %p34, %p35
      %p37 = scmp.ne.s32.totalorder %s29, %s32
      %p38 = scmp.eq.s32.totalorder %s19, 0
      %p39 = por %p37, %p38
      %p40 = scmp.ne.s32.totalorder %s29, %s32
      %p41 = scmp.eq.s32.totalorder %s24, 1
      %p42 = por %p40, %p41
      %p43 = scmp.ne.s32.totalorder %s32, %s33
      %p44 = scmp.eq.s32.totalorder %s24, 0
      %p45 = por %p43, %p44
      %p46 = scmp.ne.s32.totalorder %s32, %s33
      %p47 = scmp.eq.s32.totalorder %s25, 1
      %p48 = por %p46, %p47
      %p50 = scmp.ne.s32.totalorder %s33, %s49
      %p51 = scmp.eq.s32.totalorder %s25, 0
      %p52 = por %p50, %p51
      %s53 = ssub.s32 %s19, %s26
      %p54 = scmp.eq.s32.totalorder %s53, 0
      %s56 = sadd.s32 %s55, 1
      %s57 = scalar_select %p54, %s55, %s56
      %p60 = pneg %p54
      %p61 = scmp.eq.s32.totalorder %s19, 1
      %p62 = por %p60, %p61
      %p63 = scmp.ne.s32.totalorder %s55, %s58
      %p64 = scmp.eq.s32.totalorder %s19, 0
      %p65 = por %p63, %p64
      %p66 = scmp.ne.s32.totalorder %s55, %s58
      %p67 = scmp.eq.s32.totalorder %s24, 1
      %p68 = por %p66, %p67
      %p69 = scmp.ne.s32.totalorder %s58, %s59
      %p70 = scmp.eq.s32.totalorder %s24, 0
      %p71 = por %p69, %p70
      %p72 = scmp.ne.s32.totalorder %s58, %s59
      %p73 = scmp.eq.s32.totalorder %s25, 1
      %p74 = por %p72, %p73
      %p76 = scmp.ne.s32.totalorder %s59, %s75
      %p77 = scmp.eq.s32.totalorder %s25, 0
      %p78 = por %p76, %p77
      %s80 = sadd.s32 %s79, 1
      %p83 = scmp.eq.s32.totalorder %s19, 1
      %p84 = scmp.ne.s32.totalorder %s79, %s81
      %p85 = scmp.eq.s32.totalorder %s19, 0
      %p86 = por %p84, %p85
      %p87 = scmp.ne.s32.totalorder %s79, %s81
      %p88 = scmp.eq.s32.totalorder %s24, 1
      %p89 = por %p87, %p88
      %p90 = scmp.ne.s32.totalorder %s81, %s82
      %p91 = scmp.eq.s32.totalorder %s24, 0
      %p92 = por %p90, %p91
      %p93 = scmp.ne.s32.totalorder %s81, %s82
      %p94 = scmp.eq.s32.totalorder %s25, 1
      %p95 = por %p93, %p94
      %p97 = scmp.ne.s32.totalorder %s82, %s96
      %p98 = scmp.eq.s32.totalorder %s25, 0
      %p99 = por %p97, %p98
      %s101 = sadd.s32 %s100, 1
      %p104 = scmp.eq.s32.totalorder %s19, 1
      %p105 = scmp.ne.s32.totalorder %s100, %s102
      %p106 = scmp.eq.s32.totalorder %s19, 0
      %p107 = por %p105, %p106
      %p108 = scmp.ne.s32.totalorder %s100, %s102
      %p109 = scmp.eq.s32.totalorder %s24, 1
      %p110 = por %p108, %p109
      %p111 = scmp.ne.s32.totalorder %s102, %s103
      %p112 = scmp.eq.s32.totalorder %s24, 0
      %p113 = por %p111, %p112
      %p114 = scmp.ne.s32.totalorder %s102, %s103
      %p115 = scmp.eq.s32.totalorder %s25, 1
      %p116 = por %p114, %p115
      %p118 = scmp.ne.s32.totalorder %s103, %s117
      %p119 = scmp.eq.s32.totalorder %s25, 0
      %p120 = por %p118, %p119
      %s122 = sadd.s32 %s121, 1
      %p125 = scmp.eq.s32.totalorder %s19, 1
      %p126 = scmp.ne.s32.totalorder %s121, %s123
      %p127 = scmp.eq.s32.totalorder %s19, 0
      %p128 = por %p126, %p127
      %p129 = scmp.ne.s32.totalorder %s121, %s123
      %p130 = scmp.eq.s32.totalorder %s24, 1
      %p131 = por %p129, %p130
      %p132 = scmp.ne.s32.totalorder %s123, %s124
      %p133 = scmp.eq.s32.totalorder %s24, 0
      %p134 = por %p132, %p133
      %p135 = scmp.ne.s32.totalorder %s123, %s124
      %p136 = scmp.eq.s32.totalorder %s25, 1
      %p137 = por %p135, %p136
      %p139 = scmp.ne.s32.totalorder %s124, %s138
      %p140 = scmp.eq.s32.totalorder %s25, 0
      %p141 = por %p139, %p140
      %s143 = sadd.s32 %s142, 1
      %p146 = scmp.eq.s32.totalorder %s19, 1
      %p147 = scmp.ne.s32.totalorder %s142, %s144
      %p148 = scmp.eq.s32.totalorder %s19, 0
      %p149 = por %p147, %p148
      %p150 = scmp.ne.s32.totalorder %s142, %s144
      %p151 = scmp.eq.s32.totalorder %s24, 1
      %p152 = por %p150, %p151
      %p153 = scmp.ne.s32.totalorder %s144, %s145
      %p154 = scmp.eq.s32.totalorder %s24, 0
      %p155 = por %p153, %p154
      %p156 = scmp.ne.s32.totalorder %s144, %s145
      %p157 = scmp.eq.s32.totalorder %s25, 1
      %p158 = por %p156, %p157
      %p160 = scmp.ne.s32.totalorder %s145, %s159
      %p161 = scmp.eq.s32.totalorder %s25, 0
      %p162 = por %p160, %p161
      %s164 = sadd.s32 %s163, 1
      %p167 = scmp.eq.s32.totalorder %s19, 1
      %p168 = scmp.ne.s32.totalorder %s163, %s165
      %p169 = scmp.eq.s32.totalorder %s19, 0
      %p170 = por %p168, %p169
      %p171 = scmp.ne.s32.totalorder %s163, %s165
      %p172 = scmp.eq.s32.totalorder %s24, 1
      %p173 = por %p171, %p172
      %p174 = scmp.ne.s32.totalorder %s165, %s166
      %p175 = scmp.eq.s32.totalorder %s24, 0
      %p176 = por %p174, %p175
      %p177 = scmp.ne.s32.totalorder %s165, %s166
      %p178 = scmp.eq.s32.totalorder %s25, 1
      %p179 = por %p177, %p178
      %p181 = scmp.ne.s32.totalorder %s166, %s180
      %p182 = scmp.eq.s32.totalorder %s25, 0
      %p183 = por %p181, %p182
      %s185 = sadd.s32 %s184, 1
      %p188 = scmp.eq.s32.totalorder %s19, 1
      %p189 = scmp.ne.s32.totalorder %s184, %s186
      %p190 = scmp.eq.s32.totalorder %s19, 0
      %p191 = por %p189, %p190
      %p192 = scmp.ne.s32.totalorder %s184, %s186
      %p193 = scmp.eq.s32.totalorder %s24, 1
      %p194 = por %p192, %p193
      %p195 = scmp.ne.s32.totalorder %s186, %s187
      %p196 = scmp.eq.s32.totalorder %s24, 0
      %p197 = por %p195, %p196
      %p198 = scmp.ne.s32.totalorder %s186, %s187
      %p199 = scmp.eq.s32.totalorder %s25, 1
      %p200 = por %p198, %p199
      %p202 = scmp.ne.s32.totalorder %s187, %s201
      %p203 = scmp.eq.s32.totalorder %s25, 0
      %p204 = por %p202, %p203
      %s205 = ssub.s32 %s19, %s26
      %p206 = scmp.eq.s32.totalorder %s205, 0
      %s208 = sadd.s32 %s207, 1
      %s209 = scalar_select %p206, %s207, %s208
      %p212 = pneg %p206
      %p213 = scmp.eq.s32.totalorder %s19, 1
      %p214 = por %p212, %p213
      %p215 = scmp.ne.s32.totalorder %s207, %s210
      %p216 = scmp.eq.s32.totalorder %s19, 0
      %p217 = por %p215, %p216
      %p218 = scmp.ne.s32.totalorder %s207, %s210
      %p219 = scmp.eq.s32.totalorder %s24, 1
      %p220 = por %p218, %p219
      %p221 = scmp.ne.s32.totalorder %s210, %s211
      %p222 = scmp.eq.s32.totalorder %s24, 0
      %p223 = por %p221, %p222
      %p224 = scmp.ne.s32.totalorder %s210, %s211
      %p225 = scmp.eq.s32.totalorder %s25, 1
      %p226 = por %p224, %p225
      %p228 = scmp.ne.s32.totalorder %s211, %s227
      %p229 = scmp.eq.s32.totalorder %s25, 0
      %p230 = por %p228, %p229
      %p231 = scmp.le.s32.totalorder 1, %s19
      %p232 = scmp.lt.s32.totalorder %s19, 3
      %p233 = pnand %p231, %p232
      %p234 = pneg %p233
      // Predicated region
      $region9: #{tpu_custom_call.1} parent=5 // pred_check
        _
      $region10: #{tpu_custom_call.1} parent=5 // pred_check_branch
        %236 = sbr.rel (%p233) target = $region12
      $region11: #{tpu_custom_call.1} parent=5 // pred_region
        %s237 = ssub.s32 %s19, 1
        // Predicated region
        $region13: #{tpu_custom_call.1} parent=11 // pred_check
          %p238 = pneg %p92
        $region14: #{tpu_custom_call.1} parent=11 // pred_check_branch
          %240 = sbr.rel (%p238) target = $region16
        $region15: #{tpu_custom_call.1} parent=11 // pred_region
          _
        $region16: #{tpu_custom_call.1} parent=11 // pred_fallthru
          _
        // Predicated region
        $region17: #{tpu_custom_call.1} parent=11 // pred_check
          %p241 = pneg %p113
        $region18: #{tpu_custom_call.1} parent=11 // pred_check_branch
          %243 = sbr.rel (%p241) target = $region20
        $region19: #{tpu_custom_call.1} parent=11 // pred_region
          _
        $region20: #{tpu_custom_call.1} parent=11 // pred_fallthru
          _
        // Predicated region
        $region21: #{tpu_custom_call.1} parent=11 // pred_check
          %p244 = pneg %p134
        $region22: #{tpu_custom_call.1} parent=11 // pred_check_branch
          %246 = sbr.rel (%p244) target = $region24
        $region23: #{tpu_custom_call.1} parent=11 // pred_region
          _
        $region24: #{tpu_custom_call.1} parent=11 // pred_fallthru
          _
        // Predicated region
        $region25: #{tpu_custom_call.1} parent=11 // pred_check
          %p247 = pneg %p155
        $region26: #{tpu_custom_call.1} parent=11 // pred_check_branch
          %249 = sbr.rel (%p247) target = $region28
        $region27: #{tpu_custom_call.1} parent=11 // pred_region
          _
        $region28: #{tpu_custom_call.1} parent=11 // pred_fallthru
          _
        // Predicated region
        $region29: #{tpu_custom_call.1} parent=11 // pred_check
          %p250 = pneg %p176
        $region30: #{tpu_custom_call.1} parent=11 // pred_check_branch
          %252 = sbr.rel (%p250) target = $region32
        $region31: #{tpu_custom_call.1} parent=11 // pred_region
          _
        $region32: #{tpu_custom_call.1} parent=11 // pred_fallthru
          _
        // Predicated region
        $region33: #{tpu_custom_call.1} parent=11 // pred_check
          %p253 = pneg %p197
        $region34: #{tpu_custom_call.1} parent=11 // pred_check_branch
          %255 = sbr.rel (%p253) target = $region36
        $region35: #{tpu_custom_call.1} parent=11 // pred_region
          _
        $region36: #{tpu_custom_call.1} parent=11 // pred_fallthru
          _
      $region12: #{tpu_custom_call.1} parent=5 // pred_fallthru
        _
      %p256 = scmp.lt.s32.totalorder %s19, 2
      // Predicated region
      $region37: #{tpu_custom_call.1} parent=5 // pred_check
        %p257 = pneg %p256
      $region38: #{tpu_custom_call.1} parent=5 // pred_check_branch
        %259 = sbr.rel (%p257) target = $region40
      $region39: #{tpu_custom_call.1} parent=5 // pred_region
        // Predicated region
        $region41: #{tpu_custom_call.1} parent=39 // pred_check
          %p260 = pneg %p39
        $region42: #{tpu_custom_call.1} parent=39 // pred_check_branch
          %262 = sbr.rel (%p260) target = $region44
        $region43: #{tpu_custom_call.1} parent=39 // pred_region
          %s263 = smul.u32 32, %s19
          %p264 = scmp.lt.s32.totalorder %s263, 63
          %s265 = scalar_select %p264, %s263, 63
          %s266 = smul.addr %s265, 8
          %s267 = scalar_lea.vmem %s0, %s266
          %s268 = smul.u32 32, %s19
        $region44: #{tpu_custom_call.1} parent=39 // pred_fallthru
          _
        // Predicated region
        $region45: #{tpu_custom_call.1} parent=39 // pred_check
          %p269 = pneg %p65
        $region46: #{tpu_custom_call.1} parent=39 // pred_check_branch
          %271 = sbr.rel (%p269) target = $region48
        $region47: #{tpu_custom_call.1} parent=39 // pred_region
          %s272 = smul.u32 32, %s19
          %p273 = scmp.lt.s32.totalorder %s272, 63
          %s274 = scalar_select %p273, %s272, 63
          %s275 = smul.addr %s274, 8
          %s276 = scalar_lea.vmem %s1, %s275
          %s277 = smul.u32 32, %s19
        $region48: #{tpu_custom_call.1} parent=39 // pred_fallthru
          _
      $region40: #{tpu_custom_call.1} parent=5 // pred_fallthru
        _
      %p278 = scmp.le.s32.totalorder 1, %s19
      %p279 = scmp.lt.s32.totalorder %s19, 3
      %p280 = pnand %p278, %p279
      %p281 = pneg %p280
      // Predicated region
      $region49: #{tpu_custom_call.1} parent=5 // pred_check
        _
      $region50: #{tpu_custom_call.1} parent=5 // pred_check_branch
        %283 = sbr.rel (%p280) target = $region52
      $region51: #{tpu_custom_call.1} parent=5 // pred_region
        %s284 = ssub.s32 %s19, 1
        %s285 = smul.u32 32, %s24
        %p286 = scmp.lt.s32.totalorder %s285, 63
        %s287 = scalar_select %p286, %s285, 63
        %s288 = smul.addr %s287, 8
        %s289 = scalar_lea.vmem %s0, %s288
        %p290 = pneg %p45
        %p291 = pneg %p42
        %s292 = smul.u32 32, %s24
        %p293 = scmp.lt.s32.totalorder %s292, 63
        %s294 = scalar_select %p293, %s292, 63
        %s295 = smul.addr %s294, 8
        %s296 = scalar_lea.vmem %s1, %s295
        %p297 = pneg %p71
        %p298 = pneg %p68
        %p299 = pneg %p92
        %p300 = pneg %p89
        %p301 = pneg %p113
        %p302 = pneg %p110
        %p303 = pneg %p134
        %p304 = pneg %p131
        %p305 = pneg %p155
        %p306 = pneg %p152
        %p307 = pneg %p176
        %p308 = pneg %p173
        %p309 = pneg %p197
        %p310 = pneg %p194
        %p311 = pneg %p223
        %p312 = pneg %p220
        %s313 = sand.u32 %s210, 1
        %s314 = scalar_lea.sflag [#allocation5], %s313
        %s315 = sand.u32 %s210, 1
        %s316 = smul.addr %s315, 2
        %s317 = scalar_lea.vmem [#allocation4], %s316
        %s318 = smul.u32 32, %s24
        %p319 = scmp.lt.s32.totalorder %s318, 63
        %s320 = scalar_select %p319, %s318, 63
        %s321 = smul.addr %s320, 8
        %s322 = scalar_lea.vmem %s0, %s321
        %s323 = smul.u32 32, %s24
        %s324 = smul.u32 32, %s24
        %p325 = scmp.lt.s32.totalorder %s324, 63
        %s326 = scalar_select %p325, %s324, 63
        %s327 = smul.addr %s326, 8
        %s328 = scalar_lea.vmem %s1, %s327
        %s329 = smul.u32 32, %s24
        %v331 = vld [vmem:[%s2] sm:$0xff]
        %v332 = vld [vmem:[%s2 + $0x8] sm:$0xff]
        %v333 = vld [vmem:[%s2 + $0x10] sm:$0xff]
        %v334 = vld [vmem:[%s2 + $0x18] sm:$0xff]
        %v335 = vld [vmem:[%s2 + $0x20] sm:$0xff]
        %v336 = vld [vmem:[%s2 + $0x28] sm:$0xff]
        %v337 = vld [vmem:[%s2 + $0x30] sm:$0xff]
        %v338 = vld [vmem:[%s2 + $0x38] sm:$0xff]
        %v339 = vld [vmem:[%s3] sm:$0xf]
        %v340 = vld [vmem:[%s322] sm:$0xff]
        %v341 = vld [vmem:[%s322 + $0x8] sm:$0xff]
        %v342 = vld [vmem:[%s322 + $0x10] sm:$0xff]
        %v343 = vld [vmem:[%s322 + $0x18] sm:$0xff]
        %v344 = vld [vmem:[%s322 + $0x20] sm:$0xff]
        %v345 = vld [vmem:[%s322 + $0x28] sm:$0xff]
        %v346 = vld [vmem:[%s322 + $0x30] sm:$0xff]
        %v347 = vld [vmem:[%s322 + $0x38] sm:$0xff]
        %v348 = vld [vmem:[%s322 + $0x40] sm:$0xff]
        %v349 = vld [vmem:[%s322 + $0x48] sm:$0xff]
        %v350 = vld [vmem:[%s322 + $0x50] sm:$0xff]
        %v351 = vld [vmem:[%s322 + $0x58] sm:$0xff]
        %v352 = vld [vmem:[%s322 + $0x60] sm:$0xff]
        %v353 = vld [vmem:[%s322 + $0x68] sm:$0xff]
        %v354 = vld [vmem:[%s322 + $0x70] sm:$0xff]
        %v355 = vld [vmem:[%s322 + $0x78] sm:$0xff]
        %v356 = vld [vmem:[%s322 + $0x80] sm:$0xff]
        %v357 = vld [vmem:[%s322 + $0x88] sm:$0xff]
        %v358 = vld [vmem:[%s322 + $0x90] sm:$0xff]
        %v359 = vld [vmem:[%s322 + $0x98] sm:$0xff]
        %v360 = vld [vmem:[%s322 + $0xa0] sm:$0xff]
        %v361 = vld [vmem:[%s322 + $0xa8] sm:$0xff]
        %v362 = vld [vmem:[%s322 + $0xb0] sm:$0xff]
        %v363 = vld [vmem:[%s322 + $0xb8] sm:$0xff]
        %v364 = vld [vmem:[%s322 + $0xc0] sm:$0xff]
        %v365 = vld [vmem:[%s322 + $0xc8] sm:$0xff]
        %v366 = vld [vmem:[%s322 + $0xd0] sm:$0xff]
        %v367 = vld [vmem:[%s322 + $0xd8] sm:$0xff]
        %v368 = vld [vmem:[%s322 + $0xe0] sm:$0xff]
        %v369 = vld [vmem:[%s322 + $0xe8] sm:$0xff]
        %v370 = vld [vmem:[%s322 + $0xf0] sm:$0xff]
        %v371 = vld [vmem:[%s322 + $0xf8] sm:$0xff]
        %v372 = vpack.c.bf16 %v341, %v340
        %v373 = vpack.c.bf16 %v343, %v342
        %v374 = vpack.c.bf16 %v345, %v344
        %v375 = vpack.c.bf16 %v347, %v346
        %v376 = vpack.c.bf16 %v349, %v348
        %v377 = vpack.c.bf16 %v351, %v350
        %v378 = vpack.c.bf16 %v353, %v352
        %v379 = vpack.c.bf16 %v355, %v354
        %v380 = vpack.c.bf16 %v357, %v356
        %v381 = vpack.c.bf16 %v359, %v358
        %v382 = vpack.c.bf16 %v361, %v360
        %v383 = vpack.c.bf16 %v363, %v362
        %v384 = vpack.c.bf16 %v365, %v364
        %v385 = vpack.c.bf16 %v367, %v366
        %v386 = vpack.c.bf16 %v369, %v368
        %v387 = vpack.c.bf16 %v371, %v370
        %v389 = vlaneseq
        %v390 = vshrl.u32 %v389, 7
        %v391 = vsub.s32 0, %v390
        %v392 = vrot.slane %v339, %v391
        %v393 = vlaneseq
        %v394 = vshrl.u32 %v393, 7
        %v395 = vsub.s32 1, %v394
        %v396 = vrot.slane %v339, %v395
        %v397 = vlaneseq
        %v398 = vshrl.u32 %v397, 7
        %v399 = vsub.s32 2, %v398
        %v400 = vrot.slane %v339, %v399
        %v401 = vlaneseq
        %v402 = vshrl.u32 %v401, 7
        %v403 = vsub.s32 3, %v402
        %v404 = vrot.slane %v339, %v403
        %v417 = vunpack.c.l.b16 %v331
        %v418 = vunpack.c.h.b16 %v331
        %v419 = vunpack.c.l.b16 %v332
        %v420 = vunpack.c.h.b16 %v332
        %v421 = vunpack.c.l.b16 %v333
        %v422 = vunpack.c.h.b16 %v333
        %v423 = vunpack.c.l.b16 %v334
        %v424 = vunpack.c.h.b16 %v334
        %v425 = vunpack.c.l.b16 %v335
        %v426 = vunpack.c.h.b16 %v335
        %v427 = vunpack.c.l.b16 %v336
        %v428 = vunpack.c.h.b16 %v336
        %v429 = vunpack.c.l.b16 %v337
        %v430 = vunpack.c.h.b16 %v337
        %v431 = vunpack.c.l.b16 %v338
        %v432 = vunpack.c.h.b16 %v338
        %v433 = vpack.c.b16 %v421, %v417
        %v434 = vpack.c.b16 %v422, %v418
        %v435 = vpack.c.b16 %v423, %v419
        %v436 = vpack.c.b16 %v424, %v420
        %v437 = vpack.c.b16 %v429, %v425
        %v438 = vpack.c.b16 %v430, %v426
        %v439 = vpack.c.b16 %v431, %v427
        %v440 = vpack.c.b16 %v432, %v428
        %vm449 = vcmask 261120
        %v451 = vsel %vm449, %v372, 0
        %v454 = vsel %vm449, %v373, 0
        %v457 = vsel %vm449, %v374, 0
        %v460 = vsel %vm449, %v375, 0
        %v463 = vsel %vm449, %v376, 0
        %v466 = vsel %vm449, %v377, 0
        %v469 = vsel %vm449, %v378, 0
        %v472 = vsel %vm449, %v379, 0
        %v475 = vsel %vm449, %v380, 0
        %v478 = vsel %vm449, %v381, 0
        %v481 = vsel %vm449, %v382, 0
        %v484 = vsel %vm449, %v383, 0
        %v487 = vsel %vm449, %v384, 0
        %v490 = vsel %vm449, %v385, 0
        %v493 = vsel %vm449, %v386, 0
        %v496 = vsel %vm449, %v387, 0
        %498 = vmatprep.subr.bf16.mxu0 0
        %499 = vmatpush1.bf16.msra.mxu0 0
        %500 = vmatprep.subr.bf16.mxu0 0
        %501 = vmatpush1.bf16.msra.mxu0 0
        %502 = vmatprep.subr.bf16.mxu0 0
        %503 = vmatpush1.bf16.msra.mxu0 0
        %504 = vmatprep.subr.bf16.mxu0 0
        %505 = vmatpush1.bf16.msra.mxu0 0
        %506 = vmatprep.subr.bf16.mxu0 0
        %507 = vmatpush1.bf16.msra.mxu0 0
        %508 = vmatprep.subr.bf16.mxu0 0
        %509 = vmatpush1.bf16.msra.mxu0 0
        %510 = vmatprep.subr.bf16.mxu0 %v438
        %511 = vmatpush1.bf16.msra.mxu0 %v437
        %512 = vmatprep.subr.bf16.mxu0 %v434
        %513 = vmatpush1.bf16.msra.mxu0 %v433
        %514 = vmatprep.subr.bf16.mxu0 0
        %515 = vmatpush2.bf16.msra.mxu0 0
        %516 = vmatprep.subr.bf16.mxu0 0
        %517 = vmatpush2.bf16.msra.mxu0 0
        %518 = vmatprep.subr.bf16.mxu0 0
        %519 = vmatpush2.bf16.msra.mxu0 0
        %520 = vmatprep.subr.bf16.mxu0 0
        %521 = vmatpush2.bf16.msra.mxu0 0
        %522 = vmatprep.subr.bf16.mxu0 0
        %523 = vmatpush2.bf16.msra.mxu0 0
        %524 = vmatprep.subr.bf16.mxu0 0
        %525 = vmatpush2.bf16.msra.mxu0 0
        %526 = vmatprep.subr.bf16.mxu0 0
        %527 = vmatpush2.bf16.msra.mxu0 0
        %528 = vmatprep.subr.bf16.mxu0 0
        %529 = vmatpush2.bf16.msra.mxu0 0
        %530 = vmatprep.mubr.bf16.mxu0 0
        %531 = vmatmul.mubr.bf16.gmra.mxu0 %v451
        %v532 = vpop.f32.mrf.mxu0
        %v533 = vadd.f32 %v392, %v532
        %v534 = vpop.f32.mrf.mxu0
        %v535 = vadd.f32 %v396, %v534
        %v536 = vpop.f32.mrf.mxu0
        %v537 = vadd.f32 %v392, %v536
        %v538 = vpop.f32.mrf.mxu0
        %v539 = vadd.f32 %v396, %v538
        %540 = vmatprep.mubr.bf16.mxu0 0
        %541 = vmatmul.mubr.bf16.gmra.mxu0 %v454
        %v542 = vpop.f32.mrf.mxu0
        %v543 = vadd.f32 %v392, %v542
        %v544 = vpop.f32.mrf.mxu0
        %v545 = vadd.f32 %v396, %v544
        %v546 = vpop.f32.mrf.mxu0
        %v547 = vadd.f32 %v392, %v546
        %v548 = vpop.f32.mrf.mxu0
        %v549 = vadd.f32 %v396, %v548
        %550 = vmatprep.mubr.bf16.mxu0 0
        %551 = vmatmul.mubr.bf16.gmra.mxu0 %v457
        %v552 = vpop.f32.mrf.mxu0
        %v553 = vadd.f32 %v392, %v552
        %v554 = vpop.f32.mrf.mxu0
        %v555 = vadd.f32 %v396, %v554
        %v556 = vpop.f32.mrf.mxu0
        %v557 = vadd.f32 %v392, %v556
        %v558 = vpop.f32.mrf.mxu0
        %v559 = vadd.f32 %v396, %v558
        %560 = vmatprep.mubr.bf16.mxu0 0
        %561 = vmatmul.mubr.bf16.gmra.mxu0 %v460
        %v562 = vpop.f32.mrf.mxu0
        %v563 = vadd.f32 %v392, %v562
        %v564 = vpop.f32.mrf.mxu0
        %v565 = vadd.f32 %v396, %v564
        %v566 = vpop.f32.mrf.mxu0
        %v567 = vadd.f32 %v392, %v566
        %v568 = vpop.f32.mrf.mxu0
        %v569 = vadd.f32 %v396, %v568
        %570 = vmatprep.mubr.bf16.mxu0 0
        %571 = vmatmul.mubr.bf16.gmra.mxu0 %v463
        %v572 = vpop.f32.mrf.mxu0
        %v573 = vadd.f32 %v392, %v572
        %v574 = vpop.f32.mrf.mxu0
        %v575 = vadd.f32 %v396, %v574
        %v576 = vpop.f32.mrf.mxu0
        %v577 = vadd.f32 %v392, %v576
        %v578 = vpop.f32.mrf.mxu0
        %v579 = vadd.f32 %v396, %v578
        %580 = vmatprep.mubr.bf16.mxu0 0
        %581 = vmatmul.mubr.bf16.gmra.mxu0 %v466
        %v582 = vpop.f32.mrf.mxu0
        %v583 = vadd.f32 %v392, %v582
        %v584 = vpop.f32.mrf.mxu0
        %v585 = vadd.f32 %v396, %v584
        %v586 = vpop.f32.mrf.mxu0
        %v587 = vadd.f32 %v392, %v586
        %v588 = vpop.f32.mrf.mxu0
        %v589 = vadd.f32 %v396, %v588
        %590 = vmatprep.mubr.bf16.mxu0 0
        %591 = vmatmul.mubr.bf16.gmra.mxu0 %v469
        %v592 = vpop.f32.mrf.mxu0
        %v593 = vadd.f32 %v392, %v592
        %v594 = vpop.f32.mrf.mxu0
        %v595 = vadd.f32 %v396, %v594
        %v596 = vpop.f32.mrf.mxu0
        %v597 = vadd.f32 %v392, %v596
        %v598 = vpop.f32.mrf.mxu0
        %v599 = vadd.f32 %v396, %v598
        %600 = vmatprep.mubr.bf16.mxu0 0
        %601 = vmatmul.mubr.bf16.gmra.mxu0 %v472
        %v602 = vpop.f32.mrf.mxu0
        %v603 = vadd.f32 %v392, %v602
        %v604 = vpop.f32.mrf.mxu0
        %v605 = vadd.f32 %v396, %v604
        %v606 = vpop.f32.mrf.mxu0
        %v607 = vadd.f32 %v392, %v606
        %v608 = vpop.f32.mrf.mxu0
        %v609 = vadd.f32 %v396, %v608
        %610 = vmatprep.mubr.bf16.mxu0 0
        %611 = vmatmul.mubr.bf16.gmra.mxu0 %v475
        %v612 = vpop.f32.mrf.mxu0
        %v613 = vadd.f32 %v392, %v612
        %v614 = vpop.f32.mrf.mxu0
        %v615 = vadd.f32 %v396, %v614
        %v616 = vpop.f32.mrf.mxu0
        %v617 = vadd.f32 %v392, %v616
        %v618 = vpop.f32.mrf.mxu0
        %v619 = vadd.f32 %v396, %v618
        %620 = vmatprep.mubr.bf16.mxu0 0
        %621 = vmatmul.mubr.bf16.gmra.mxu0 %v478
        %v622 = vpop.f32.mrf.mxu0
        %v623 = vadd.f32 %v392, %v622
        %v624 = vpop.f32.mrf.mxu0
        %v625 = vadd.f32 %v396, %v624
        %v626 = vpop.f32.mrf.mxu0
        %v627 = vadd.f32 %v392, %v626
        %v628 = vpop.f32.mrf.mxu0
        %v629 = vadd.f32 %v396, %v628
        %630 = vmatprep.mubr.bf16.mxu0 0
        %631 = vmatmul.mubr.bf16.gmra.mxu0 %v481
        %v632 = vpop.f32.mrf.mxu0
        %v633 = vadd.f32 %v392, %v632
        %v634 = vpop.f32.mrf.mxu0
        %v635 = vadd.f32 %v396, %v634
        %v636 = vpop.f32.mrf.mxu0
        %v637 = vadd.f32 %v392, %v636
        %v638 = vpop.f32.mrf.mxu0
        %v639 = vadd.f32 %v396, %v638
        %640 = vmatprep.mubr.bf16.mxu0 0
        %641 = vmatmul.mubr.bf16.gmra.mxu0 %v484
        %v642 = vpop.f32.mrf.mxu0
        %v643 = vadd.f32 %v392, %v642
        %v644 = vpop.f32.mrf.mxu0
        %v645 = vadd.f32 %v396, %v644
        %v646 = vpop.f32.mrf.mxu0
        %v647 = vadd.f32 %v392, %v646
        %v648 = vpop.f32.mrf.mxu0
        %v649 = vadd.f32 %v396, %v648
        %650 = vmatprep.mubr.bf16.mxu0 0
        %651 = vmatmul.mubr.bf16.gmra.mxu0 %v487
        %v652 = vpop.f32.mrf.mxu0
        %v653 = vadd.f32 %v392, %v652
        %v654 = vpop.f32.mrf.mxu0
        %v655 = vadd.f32 %v396, %v654
        %v656 = vpop.f32.mrf.mxu0
        %v657 = vadd.f32 %v392, %v656
        %v658 = vpop.f32.mrf.mxu0
        %v659 = vadd.f32 %v396, %v658
        %660 = vmatprep.mubr.bf16.mxu0 0
        %661 = vmatmul.mubr.bf16.gmra.mxu0 %v490
        %v662 = vpop.f32.mrf.mxu0
        %v663 = vadd.f32 %v392, %v662
        %v664 = vpop.f32.mrf.mxu0
        %v665 = vadd.f32 %v396, %v664
        %v666 = vpop.f32.mrf.mxu0
        %v667 = vadd.f32 %v392, %v666
        %v668 = vpop.f32.mrf.mxu0
        %v669 = vadd.f32 %v396, %v668
        %670 = vmatprep.mubr.bf16.mxu0 0
        %671 = vmatmul.mubr.bf16.gmra.mxu0 %v493
        %v672 = vpop.f32.mrf.mxu0
        %v673 = vadd.f32 %v392, %v672
        %v674 = vpop.f32.mrf.mxu0
        %v675 = vadd.f32 %v396, %v674
        %v676 = vpop.f32.mrf.mxu0
        %v677 = vadd.f32 %v392, %v676
        %v678 = vpop.f32.mrf.mxu0
        %v679 = vadd.f32 %v396, %v678
        %680 = vmatprep.mubr.bf16.mxu0 0
        %681 = vmatmul.mubr.bf16.gmra.mxu0 %v496
        %v682 = vpop.f32.mrf.mxu0
        %v683 = vadd.f32 %v392, %v682
        %v684 = vpop.f32.mrf.mxu0
        %v685 = vadd.f32 %v396, %v684
        %v686 = vpop.f32.mrf.mxu0
        %v687 = vadd.f32 %v392, %v686
        %v688 = vpop.f32.mrf.mxu0
        %v689 = vadd.f32 %v396, %v688
        %690 = vdwg.mxu0
        %691 = vmatprep.subr.bf16.mxu0 0
        %692 = vmatpush1.bf16.msra.mxu0 0
        %693 = vmatprep.subr.bf16.mxu0 0
        %694 = vmatpush1.bf16.msra.mxu0 0
        %695 = vmatprep.subr.bf16.mxu0 0
        %696 = vmatpush1.bf16.msra.mxu0 0
        %697 = vmatprep.subr.bf16.mxu0 0
        %698 = vmatpush1.bf16.msra.mxu0 0
        %699 = vmatprep.subr.bf16.mxu0 0
        %700 = vmatpush1.bf16.msra.mxu0 0
        %701 = vmatprep.subr.bf16.mxu0 0
        %702 = vmatpush1.bf16.msra.mxu0 0
        %703 = vmatprep.subr.bf16.mxu0 %v440
        %704 = vmatpush1.bf16.msra.mxu0 %v439
        %705 = vmatprep.subr.bf16.mxu0 %v436
        %706 = vmatpush1.bf16.msra.mxu0 %v435
        %707 = vmatprep.subr.bf16.mxu0 0
        %708 = vmatpush2.bf16.msra.mxu0 0
        %709 = vmatprep.subr.bf16.mxu0 0
        %710 = vmatpush2.bf16.msra.mxu0 0
        %711 = vmatprep.subr.bf16.mxu0 0
        %712 = vmatpush2.bf16.msra.mxu0 0
        %713 = vmatprep.subr.bf16.mxu0 0
        %714 = vmatpush2.bf16.msra.mxu0 0
        %715 = vmatprep.subr.bf16.mxu0 0
        %716 = vmatpush2.bf16.msra.mxu0 0
        %717 = vmatprep.subr.bf16.mxu0 0
        %718 = vmatpush2.bf16.msra.mxu0 0
        %719 = vmatprep.subr.bf16.mxu0 0
        %720 = vmatpush2.bf16.msra.mxu0 0
        %721 = vmatprep.subr.bf16.mxu0 0
        %722 = vmatpush2.bf16.msra.mxu0 0
        %723 = vmatprep.mubr.bf16.mxu0 0
        %724 = vmatmul.mubr.bf16.gmra.mxu0 %v451
        %v725 = vpop.f32.mrf.mxu0
        %v726 = vadd.f32 %v400, %v725
        %v727 = vpop.f32.mrf.mxu0
        %v728 = vadd.f32 %v404, %v727
        %v729 = vpop.f32.mrf.mxu0
        %v730 = vadd.f32 %v400, %v729
        %v731 = vpop.f32.mrf.mxu0
        %v732 = vadd.f32 %v404, %v731
        %733 = vmatprep.mubr.bf16.mxu0 0
        %734 = vmatmul.mubr.bf16.gmra.mxu0 %v454
        %v735 = vpop.f32.mrf.mxu0
        %v736 = vadd.f32 %v400, %v735
        %v737 = vpop.f32.mrf.mxu0
        %v738 = vadd.f32 %v404, %v737
        %v739 = vpop.f32.mrf.mxu0
        %v740 = vadd.f32 %v400, %v739
        %v741 = vpop.f32.mrf.mxu0
        %v742 = vadd.f32 %v404, %v741
        %743 = vmatprep.mubr.bf16.mxu0 0
        %744 = vmatmul.mubr.bf16.gmra.mxu0 %v457
        %v745 = vpop.f32.mrf.mxu0
        %v746 = vadd.f32 %v400, %v745
        %v747 = vpop.f32.mrf.mxu0
        %v748 = vadd.f32 %v404, %v747
        %v749 = vpop.f32.mrf.mxu0
        %v750 = vadd.f32 %v400, %v749
        %v751 = vpop.f32.mrf.mxu0
        %v752 = vadd.f32 %v404, %v751
        %753 = vmatprep.mubr.bf16.mxu0 0
        %754 = vmatmul.mubr.bf16.gmra.mxu0 %v460
        %v755 = vpop.f32.mrf.mxu0
        %v756 = vadd.f32 %v400, %v755
        %v757 = vpop.f32.mrf.mxu0
        %v758 = vadd.f32 %v404, %v757
        %v759 = vpop.f32.mrf.mxu0
        %v760 = vadd.f32 %v400, %v759
        %v761 = vpop.f32.mrf.mxu0
        %v762 = vadd.f32 %v404, %v761
        %763 = vmatprep.mubr.bf16.mxu0 0
        %764 = vmatmul.mubr.bf16.gmra.mxu0 %v463
        %v765 = vpop.f32.mrf.mxu0
        %v766 = vadd.f32 %v400, %v765
        %v767 = vpop.f32.mrf.mxu0
        %v768 = vadd.f32 %v404, %v767
        %v769 = vpop.f32.mrf.mxu0
        %v770 = vadd.f32 %v400, %v769
        %v771 = vpop.f32.mrf.mxu0
        %v772 = vadd.f32 %v404, %v771
        %773 = vmatprep.mubr.bf16.mxu0 0
        %774 = vmatmul.mubr.bf16.gmra.mxu0 %v466
        %v775 = vpop.f32.mrf.mxu0
        %v776 = vadd.f32 %v400, %v775
        %v777 = vpop.f32.mrf.mxu0
        %v778 = vadd.f32 %v404, %v777
        %v779 = vpop.f32.mrf.mxu0
        %v780 = vadd.f32 %v400, %v779
        %v781 = vpop.f32.mrf.mxu0
        %v782 = vadd.f32 %v404, %v781
        %783 = vmatprep.mubr.bf16.mxu0 0
        %784 = vmatmul.mubr.bf16.gmra.mxu0 %v469
        %v785 = vpop.f32.mrf.mxu0
        %v786 = vadd.f32 %v400, %v785
        %v787 = vpop.f32.mrf.mxu0
        %v788 = vadd.f32 %v404, %v787
        %v789 = vpop.f32.mrf.mxu0
        %v790 = vadd.f32 %v400, %v789
        %v791 = vpop.f32.mrf.mxu0
        %v792 = vadd.f32 %v404, %v791
        %793 = vmatprep.mubr.bf16.mxu0 0
        %794 = vmatmul.mubr.bf16.gmra.mxu0 %v472
        %v795 = vpop.f32.mrf.mxu0
        %v796 = vadd.f32 %v400, %v795
        %v797 = vpop.f32.mrf.mxu0
        %v798 = vadd.f32 %v404, %v797
        %v799 = vpop.f32.mrf.mxu0
        %v800 = vadd.f32 %v400, %v799
        %v801 = vpop.f32.mrf.mxu0
        %v802 = vadd.f32 %v404, %v801
        %803 = vmatprep.mubr.bf16.mxu0 0
        %804 = vmatmul.mubr.bf16.gmra.mxu0 %v475
        %v805 = vpop.f32.mrf.mxu0
        %v806 = vadd.f32 %v400, %v805
        %v807 = vpop.f32.mrf.mxu0
        %v808 = vadd.f32 %v404, %v807
        %v809 = vpop.f32.mrf.mxu0
        %v810 = vadd.f32 %v400, %v809
        %v811 = vpop.f32.mrf.mxu0
        %v812 = vadd.f32 %v404, %v811
        %813 = vmatprep.mubr.bf16.mxu0 0
        %814 = vmatmul.mubr.bf16.gmra.mxu0 %v478
        %v815 = vpop.f32.mrf.mxu0
        %v816 = vadd.f32 %v400, %v815
        %v817 = vpop.f32.mrf.mxu0
        %v818 = vadd.f32 %v404, %v817
        %v819 = vpop.f32.mrf.mxu0
        %v820 = vadd.f32 %v400, %v819
        %v821 = vpop.f32.mrf.mxu0
        %v822 = vadd.f32 %v404, %v821
        %823 = vmatprep.mubr.bf16.mxu0 0
        %824 = vmatmul.mubr.bf16.gmra.mxu0 %v481
        %v825 = vpop.f32.mrf.mxu0
        %v826 = vadd.f32 %v400, %v825
        %v827 = vpop.f32.mrf.mxu0
        %v828 = vadd.f32 %v404, %v827
        %v829 = vpop.f32.mrf.mxu0
        %v830 = vadd.f32 %v400, %v829
        %v831 = vpop.f32.mrf.mxu0
        %v832 = vadd.f32 %v404, %v831
        %833 = vmatprep.mubr.bf16.mxu0 0
        %834 = vmatmul.mubr.bf16.gmra.mxu0 %v484
        %v835 = vpop.f32.mrf.mxu0
        %v836 = vadd.f32 %v400, %v835
        %v837 = vpop.f32.mrf.mxu0
        %v838 = vadd.f32 %v404, %v837
        %v839 = vpop.f32.mrf.mxu0
        %v840 = vadd.f32 %v400, %v839
        %v841 = vpop.f32.mrf.mxu0
        %v842 = vadd.f32 %v404, %v841
        %843 = vmatprep.mubr.bf16.mxu0 0
        %844 = vmatmul.mubr.bf16.gmra.mxu0 %v487
        %v845 = vpop.f32.mrf.mxu0
        %v846 = vadd.f32 %v400, %v845
        %v847 = vpop.f32.mrf.mxu0
        %v848 = vadd.f32 %v404, %v847
        %v849 = vpop.f32.mrf.mxu0
        %v850 = vadd.f32 %v400, %v849
        %v851 = vpop.f32.mrf.mxu0
        %v852 = vadd.f32 %v404, %v851
        %853 = vmatprep.mubr.bf16.mxu0 0
        %854 = vmatmul.mubr.bf16.gmra.mxu0 %v490
        %v855 = vpop.f32.mrf.mxu0
        %v856 = vadd.f32 %v400, %v855
        %v857 = vpop.f32.mrf.mxu0
        %v858 = vadd.f32 %v404, %v857
        %v859 = vpop.f32.mrf.mxu0
        %v860 = vadd.f32 %v400, %v859
        %v861 = vpop.f32.mrf.mxu0
        %v862 = vadd.f32 %v404, %v861
        %863 = vmatprep.mubr.bf16.mxu0 0
        %864 = vmatmul.mubr.bf16.gmra.mxu0 %v493
        %v865 = vpop.f32.mrf.mxu0
        %v866 = vadd.f32 %v400, %v865
        %v867 = vpop.f32.mrf.mxu0
        %v868 = vadd.f32 %v404, %v867
        %v869 = vpop.f32.mrf.mxu0
        %v870 = vadd.f32 %v400, %v869
        %v871 = vpop.f32.mrf.mxu0
        %v872 = vadd.f32 %v404, %v871
        %873 = vmatprep.mubr.bf16.mxu0 0
        %874 = vmatmul.mubr.bf16.gmra.mxu0 %v496
        %v875 = vpop.f32.mrf.mxu0
        %v876 = vadd.f32 %v400, %v875
        %v877 = vpop.f32.mrf.mxu0
        %v878 = vadd.f32 %v404, %v877
        %v879 = vpop.f32.mrf.mxu0
        %v880 = vadd.f32 %v400, %v879
        %v881 = vpop.f32.mrf.mxu0
        %v882 = vadd.f32 %v404, %v881
        %883 = vdwg.mxu0
        %v884 = vmul.f32 %v533, 0.2
        %v885 = vmul.f32 %v535, 0.2
        %v886 = vmul.f32 %v726, 0.2
        %v887 = vmul.f32 %v728, 0.2
        %v888 = vmul.f32 %v537, 0.2
        %v889 = vmul.f32 %v539, 0.2
        %v890 = vmul.f32 %v730, 0.2
        %v891 = vmul.f32 %v732, 0.2
        %v892 = vmul.f32 %v543, 0.2
        %v893 = vmul.f32 %v545, 0.2
        %v894 = vmul.f32 %v736, 0.2
        %v895 = vmul.f32 %v738, 0.2
        %v896 = vmul.f32 %v547, 0.2
        %v897 = vmul.f32 %v549, 0.2
        %v898 = vmul.f32 %v740, 0.2
        %v899 = vmul.f32 %v742, 0.2
        %v900 = vmul.f32 %v553, 0.2
        %v901 = vmul.f32 %v555, 0.2
        %v902 = vmul.f32 %v746, 0.2
        %v903 = vmul.f32 %v748, 0.2
        %v904 = vmul.f32 %v557, 0.2
        %v905 = vmul.f32 %v559, 0.2
        %v906 = vmul.f32 %v750, 0.2
        %v907 = vmul.f32 %v752, 0.2
        %v908 = vmul.f32 %v563, 0.2
        %v909 = vmul.f32 %v565, 0.2
        %v910 = vmul.f32 %v756, 0.2
        %v911 = vmul.f32 %v758, 0.2
        %v912 = vmul.f32 %v567, 0.2
        %v913 = vmul.f32 %v569, 0.2
        %v914 = vmul.f32 %v760, 0.2
        %v915 = vmul.f32 %v762, 0.2
        %v916 = vmul.f32 %v573, 0.2
        %v917 = vmul.f32 %v575, 0.2
        %v918 = vmul.f32 %v766, 0.2
        %v919 = vmul.f32 %v768, 0.2
        %v920 = vmul.f32 %v577, 0.2
        %v921 = vmul.f32 %v579, 0.2
        %v922 = vmul.f32 %v770, 0.2
        %v923 = vmul.f32 %v772, 0.2
        %v924 = vmul.f32 %v583, 0.2
        %v925 = vmul.f32 %v585, 0.2
        %v926 = vmul.f32 %v776, 0.2
        %v927 = vmul.f32 %v778, 0.2
        %v928 = vmul.f32 %v587, 0.2
        %v929 = vmul.f32 %v589, 0.2
        %v930 = vmul.f32 %v780, 0.2
        %v931 = vmul.f32 %v782, 0.2
        %v932 = vmul.f32 %v593, 0.2
        %v933 = vmul.f32 %v595, 0.2
        %v934 = vmul.f32 %v786, 0.2
        %v935 = vmul.f32 %v788, 0.2
        %v936 = vmul.f32 %v597, 0.2
        %v937 = vmul.f32 %v599, 0.2
        %v938 = vmul.f32 %v790, 0.2
        %v939 = vmul.f32 %v792, 0.2
        %v940 = vmul.f32 %v603, 0.2
        %v941 = vmul.f32 %v605, 0.2
        %v942 = vmul.f32 %v796, 0.2
        %v943 = vmul.f32 %v798, 0.2
        %v944 = vmul.f32 %v607, 0.2
        %v945 = vmul.f32 %v609, 0.2
        %v946 = vmul.f32 %v800, 0.2
        %v947 = vmul.f32 %v802, 0.2
        %v948 = vmul.f32 %v613, 0.2
        %v949 = vmul.f32 %v615, 0.2
        %v950 = vmul.f32 %v806, 0.2
        %v951 = vmul.f32 %v808, 0.2
        %v952 = vmul.f32 %v617, 0.2
        %v953 = vmul.f32 %v619, 0.2
        %v954 = vmul.f32 %v810, 0.2
        %v955 = vmul.f32 %v812, 0.2
        %v956 = vmul.f32 %v623, 0.2
        %v957 = vmul.f32 %v625, 0.2
        %v958 = vmul.f32 %v816, 0.2
        %v959 = vmul.f32 %v818, 0.2
        %v960 = vmul.f32 %v627, 0.2
        %v961 = vmul.f32 %v629, 0.2
        %v962 = vmul.f32 %v820, 0.2
        %v963 = vmul.f32 %v822, 0.2
        %v964 = vmul.f32 %v633, 0.2
        %v965 = vmul.f32 %v635, 0.2
        %v966 = vmul.f32 %v826, 0.2
        %v967 = vmul.f32 %v828, 0.2
        %v968 = vmul.f32 %v637, 0.2
        %v969 = vmul.f32 %v639, 0.2
        %v970 = vmul.f32 %v830, 0.2
        %v971 = vmul.f32 %v832, 0.2
        %v972 = vmul.f32 %v643, 0.2
        %v973 = vmul.f32 %v645, 0.2
        %v974 = vmul.f32 %v836, 0.2
        %v975 = vmul.f32 %v838, 0.2
        %v976 = vmul.f32 %v647, 0.2
        %v977 = vmul.f32 %v649, 0.2
        %v978 = vmul.f32 %v840, 0.2
        %v979 = vmul.f32 %v842, 0.2
        %v980 = vmul.f32 %v653, 0.2
        %v981 = vmul.f32 %v655, 0.2
        %v982 = vmul.f32 %v846, 0.2
        %v983 = vmul.f32 %v848, 0.2
        %v984 = vmul.f32 %v657, 0.2
        %v985 = vmul.f32 %v659, 0.2
        %v986 = vmul.f32 %v850, 0.2
        %v987 = vmul.f32 %v852, 0.2
        %v988 = vmul.f32 %v663, 0.2
        %v989 = vmul.f32 %v665, 0.2
        %v990 = vmul.f32 %v856, 0.2
        %v991 = vmul.f32 %v858, 0.2
        %v992 = vmul.f32 %v667, 0.2
        %v993 = vmul.f32 %v669, 0.2
        %v994 = vmul.f32 %v860, 0.2
        %v995 = vmul.f32 %v862, 0.2
        %v996 = vmul.f32 %v673, 0.2
        %v997 = vmul.f32 %v675, 0.2
        %v998 = vmul.f32 %v866, 0.2
        %v999 = vmul.f32 %v868, 0.2
        %v1000 = vmul.f32 %v677, 0.2
        %v1001 = vmul.f32 %v679, 0.2
        %v1002 = vmul.f32 %v870, 0.2
        %v1003 = vmul.f32 %v872, 0.2
        %v1004 = vmul.f32 %v683, 0.2
        %v1005 = vmul.f32 %v685, 0.2
        %v1006 = vmul.f32 %v876, 0.2
        %v1007 = vmul.f32 %v878, 0.2
        %v1008 = vmul.f32 %v687, 0.2
        %v1009 = vmul.f32 %v689, 0.2
        %v1010 = vmul.f32 %v880, 0.2
        %v1011 = vmul.f32 %v882, 0.2
        %v1012 = vmax.f32 %v533, %v884
        %v1013 = vmax.f32 %v535, %v885
        %v1014 = vmax.f32 %v726, %v886
        %v1015 = vmax.f32 %v728, %v887
        %v1016 = vmax.f32 %v537, %v888
        %v1017 = vmax.f32 %v539, %v889
        %v1018 = vmax.f32 %v730, %v890
        %v1019 = vmax.f32 %v732, %v891
        %v1020 = vmax.f32 %v543, %v892
        %v1021 = vmax.f32 %v545, %v893
        %v1022 = vmax.f32 %v736, %v894
        %v1023 = vmax.f32 %v738, %v895
        %v1024 = vmax.f32 %v547, %v896
        %v1025 = vmax.f32 %v549, %v897
        %v1026 = vmax.f32 %v740, %v898
        %v1027 = vmax.f32 %v742, %v899
        %v1028 = vmax.f32 %v553, %v900
        %v1029 = vmax.f32 %v555, %v901
        %v1030 = vmax.f32 %v746, %v902
        %v1031 = vmax.f32 %v748, %v903
        %v1032 = vmax.f32 %v557, %v904
        %v1033 = vmax.f32 %v559, %v905
        %v1034 = vmax.f32 %v750, %v906
        %v1035 = vmax.f32 %v752, %v907
        %v1036 = vmax.f32 %v563, %v908
        %v1037 = vmax.f32 %v565, %v909
        %v1038 = vmax.f32 %v756, %v910
        %v1039 = vmax.f32 %v758, %v911
        %v1040 = vmax.f32 %v567, %v912
        %v1041 = vmax.f32 %v569, %v913
        %v1042 = vmax.f32 %v760, %v914
        %v1043 = vmax.f32 %v762, %v915
        %v1044 = vmax.f32 %v573, %v916
        %v1045 = vmax.f32 %v575, %v917
        %v1046 = vmax.f32 %v766, %v918
        %v1047 = vmax.f32 %v768, %v919
        %v1048 = vmax.f32 %v577, %v920
        %v1049 = vmax.f32 %v579, %v921
        %v1050 = vmax.f32 %v770, %v922
        %v1051 = vmax.f32 %v772, %v923
        %v1052 = vmax.f32 %v583, %v924
        %v1053 = vmax.f32 %v585, %v925
        %v1054 = vmax.f32 %v776, %v926
        %v1055 = vmax.f32 %v778, %v927
        %v1056 = vmax.f32 %v587, %v928
        %v1057 = vmax.f32 %v589, %v929
        %v1058 = vmax.f32 %v780, %v930
        %v1059 = vmax.f32 %v782, %v931
        %v1060 = vmax.f32 %v593, %v932
        %v1061 = vmax.f32 %v595, %v933
        %v1062 = vmax.f32 %v786, %v934
        %v1063 = vmax.f32 %v788, %v935
        %v1064 = vmax.f32 %v597, %v936
        %v1065 = vmax.f32 %v599, %v937
        %v1066 = vmax.f32 %v790, %v938
        %v1067 = vmax.f32 %v792, %v939
        %v1068 = vmax.f32 %v603, %v940
        %v1069 = vmax.f32 %v605, %v941
        %v1070 = vmax.f32 %v796, %v942
        %v1071 = vmax.f32 %v798, %v943
        %v1072 = vmax.f32 %v607, %v944
        %v1073 = vmax.f32 %v609, %v945
        %v1074 = vmax.f32 %v800, %v946
        %v1075 = vmax.f32 %v802, %v947
        %v1076 = vmax.f32 %v613, %v948
        %v1077 = vmax.f32 %v615, %v949
        %v1078 = vmax.f32 %v806, %v950
        %v1079 = vmax.f32 %v808, %v951
        %v1080 = vmax.f32 %v617, %v952
        %v1081 = vmax.f32 %v619, %v953
        %v1082 = vmax.f32 %v810, %v954
        %v1083 = vmax.f32 %v812, %v955
        %v1084 = vmax.f32 %v623, %v956
        %v1085 = vmax.f32 %v625, %v957
        %v1086 = vmax.f32 %v816, %v958
        %v1087 = vmax.f32 %v818, %v959
        %v1088 = vmax.f32 %v627, %v960
        %v1089 = vmax.f32 %v629, %v961
        %v1090 = vmax.f32 %v820, %v962
        %v1091 = vmax.f32 %v822, %v963
        %v1092 = vmax.f32 %v633, %v964
        %v1093 = vmax.f32 %v635, %v965
        %v1094 = vmax.f32 %v826, %v966
        %v1095 = vmax.f32 %v828, %v967
        %v1096 = vmax.f32 %v637, %v968
        %v1097 = vmax.f32 %v639, %v969
        %v1098 = vmax.f32 %v830, %v970
        %v1099 = vmax.f32 %v832, %v971
        %v1100 = vmax.f32 %v643, %v972
        %v1101 = vmax.f32 %v645, %v973
        %v1102 = vmax.f32 %v836, %v974
        %v1103 = vmax.f32 %v838, %v975
        %v1104 = vmax.f32 %v647, %v976
        %v1105 = vmax.f32 %v649, %v977
        %v1106 = vmax.f32 %v840, %v978
        %v1107 = vmax.f32 %v842, %v979
        %v1108 = vmax.f32 %v653, %v980
        %v1109 = vmax.f32 %v655, %v981
        %v1110 = vmax.f32 %v846, %v982
        %v1111 = vmax.f32 %v848, %v983
        %v1112 = vmax.f32 %v657, %v984
        %v1113 = vmax.f32 %v659, %v985
        %v1114 = vmax.f32 %v850, %v986
        %v1115 = vmax.f32 %v852, %v987
        %v1116 = vmax.f32 %v663, %v988
        %v1117 = vmax.f32 %v665, %v989
        %v1118 = vmax.f32 %v856, %v990
        %v1119 = vmax.f32 %v858, %v991
        %v1120 = vmax.f32 %v667, %v992
        %v1121 = vmax.f32 %v669, %v993
        %v1122 = vmax.f32 %v860, %v994
        %v1123 = vmax.f32 %v862, %v995
        %v1124 = vmax.f32 %v673, %v996
        %v1125 = vmax.f32 %v675, %v997
        %v1126 = vmax.f32 %v866, %v998
        %v1127 = vmax.f32 %v868, %v999
        %v1128 = vmax.f32 %v677, %v1000
        %v1129 = vmax.f32 %v679, %v1001
        %v1130 = vmax.f32 %v870, %v1002
        %v1131 = vmax.f32 %v872, %v1003
        %v1132 = vmax.f32 %v683, %v1004
        %v1133 = vmax.f32 %v685, %v1005
        %v1134 = vmax.f32 %v876, %v1006
        %v1135 = vmax.f32 %v878, %v1007
        %v1136 = vmax.f32 %v687, %v1008
        %v1137 = vmax.f32 %v689, %v1009
        %v1138 = vmax.f32 %v880, %v1010
        %v1139 = vmax.f32 %v882, %v1011
        %v1140 = vpack.c.bf16 %v1016, %v1012
        %v1141 = vpack.c.bf16 %v1017, %v1013
        %v1142 = vpack.c.bf16 %v1018, %v1014
        %v1143 = vpack.c.bf16 %v1019, %v1015
        %v1144 = vpack.c.bf16 %v1024, %v1020
        %v1145 = vpack.c.bf16 %v1025, %v1021
        %v1146 = vpack.c.bf16 %v1026, %v1022
        %v1147 = vpack.c.bf16 %v1027, %v1023
        %v1148 = vpack.c.bf16 %v1032, %v1028
        %v1149 = vpack.c.bf16 %v1033, %v1029
        %v1150 = vpack.c.bf16 %v1034, %v1030
        %v1151 = vpack.c.bf16 %v1035, %v1031
        %v1152 = vpack.c.bf16 %v1040, %v1036
        %v1153 = vpack.c.bf16 %v1041, %v1037
        %v1154 = vpack.c.bf16 %v1042, %v1038
        %v1155 = vpack.c.bf16 %v1043, %v1039
        %v1156 = vpack.c.bf16 %v1048, %v1044
        %v1157 = vpack.c.bf16 %v1049, %v1045
        %v1158 = vpack.c.bf16 %v1050, %v1046
        %v1159 = vpack.c.bf16 %v1051, %v1047
        %v1160 = vpack.c.bf16 %v1056, %v1052
        %v1161 = vpack.c.bf16 %v1057, %v1053
        %v1162 = vpack.c.bf16 %v1058, %v1054
        %v1163 = vpack.c.bf16 %v1059, %v1055
        %v1164 = vpack.c.bf16 %v1064, %v1060
        %v1165 = vpack.c.bf16 %v1065, %v1061
        %v1166 = vpack.c.bf16 %v1066, %v1062
        %v1167 = vpack.c.bf16 %v1067, %v1063
        %v1168 = vpack.c.bf16 %v1072, %v1068
        %v1169 = vpack.c.bf16 %v1073, %v1069
        %v1170 = vpack.c.bf16 %v1074, %v1070
        %v1171 = vpack.c.bf16 %v1075, %v1071
        %v1172 = vpack.c.bf16 %v1080, %v1076
        %v1173 = vpack.c.bf16 %v1081, %v1077
        %v1174 = vpack.c.bf16 %v1082, %v1078
        %v1175 = vpack.c.bf16 %v1083, %v1079
        %v1176 = vpack.c.bf16 %v1088, %v1084
        %v1177 = vpack.c.bf16 %v1089, %v1085
        %v1178 = vpack.c.bf16 %v1090, %v1086
        %v1179 = vpack.c.bf16 %v1091, %v1087
        %v1180 = vpack.c.bf16 %v1096, %v1092
        %v1181 = vpack.c.bf16 %v1097, %v1093
        %v1182 = vpack.c.bf16 %v1098, %v1094
        %v1183 = vpack.c.bf16 %v1099, %v1095
        %v1184 = vpack.c.bf16 %v1104, %v1100
        %v1185 = vpack.c.bf16 %v1105, %v1101
        %v1186 = vpack.c.bf16 %v1106, %v1102
        %v1187 = vpack.c.bf16 %v1107, %v1103
        %v1188 = vpack.c.bf16 %v1112, %v1108
        %v1189 = vpack.c.bf16 %v1113, %v1109
        %v1190 = vpack.c.bf16 %v1114, %v1110
        %v1191 = vpack.c.bf16 %v1115, %v1111
        %v1192 = vpack.c.bf16 %v1120, %v1116
        %v1193 = vpack.c.bf16 %v1121, %v1117
        %v1194 = vpack.c.bf16 %v1122, %v1118
        %v1195 = vpack.c.bf16 %v1123, %v1119
        %v1196 = vpack.c.bf16 %v1128, %v1124
        %v1197 = vpack.c.bf16 %v1129, %v1125
        %v1198 = vpack.c.bf16 %v1130, %v1126
        %v1199 = vpack.c.bf16 %v1131, %v1127
        %v1200 = vpack.c.bf16 %v1136, %v1132
        %v1201 = vpack.c.bf16 %v1137, %v1133
        %v1202 = vpack.c.bf16 %v1138, %v1134
        %v1203 = vpack.c.bf16 %v1139, %v1135
        %v1268 = vunpack.c.l.b16 %v1140
        %v1269 = vunpack.c.l.b16 %v1141
        %v1270 = vunpack.c.l.b16 %v1142
        %v1271 = vunpack.c.l.b16 %v1143
        %v1272 = vunpack.c.h.b16 %v1140
        %v1273 = vunpack.c.h.b16 %v1141
        %v1274 = vunpack.c.h.b16 %v1142
        %v1275 = vunpack.c.h.b16 %v1143
        %v1276 = vunpack.c.l.b16 %v1144
        %v1277 = vunpack.c.l.b16 %v1145
        %v1278 = vunpack.c.l.b16 %v1146
        %v1279 = vunpack.c.l.b16 %v1147
        %v1280 = vunpack.c.h.b16 %v1144
        %v1281 = vunpack.c.h.b16 %v1145
        %v1282 = vunpack.c.h.b16 %v1146
        %v1283 = vunpack.c.h.b16 %v1147
        %v1284 = vunpack.c.l.b16 %v1148
        %v1285 = vunpack.c.l.b16 %v1149
        %v1286 = vunpack.c.l.b16 %v1150
        %v1287 = vunpack.c.l.b16 %v1151
        %v1288 = vunpack.c.h.b16 %v1148
        %v1289 = vunpack.c.h.b16 %v1149
        %v1290 = vunpack.c.h.b16 %v1150
        %v1291 = vunpack.c.h.b16 %v1151
        %v1292 = vunpack.c.l.b16 %v1152
        %v1293 = vunpack.c.l.b16 %v1153
        %v1294 = vunpack.c.l.b16 %v1154
        %v1295 = vunpack.c.l.b16 %v1155
        %v1296 = vunpack.c.h.b16 %v1152
        %v1297 = vunpack.c.h.b16 %v1153
        %v1298 = vunpack.c.h.b16 %v1154
        %v1299 = vunpack.c.h.b16 %v1155
        %v1300 = vunpack.c.l.b16 %v1156
        %v1301 = vunpack.c.l.b16 %v1157
        %v1302 = vunpack.c.l.b16 %v1158
        %v1303 = vunpack.c.l.b16 %v1159
        %v1304 = vunpack.c.h.b16 %v1156
        %v1305 = vunpack.c.h.b16 %v1157
        %v1306 = vunpack.c.h.b16 %v1158
        %v1307 = vunpack.c.h.b16 %v1159
        %v1308 = vunpack.c.l.b16 %v1160
        %v1309 = vunpack.c.l.b16 %v1161
        %v1310 = vunpack.c.l.b16 %v1162
        %v1311 = vunpack.c.l.b16 %v1163
        %v1312 = vunpack.c.h.b16 %v1160
        %v1313 = vunpack.c.h.b16 %v1161
        %v1314 = vunpack.c.h.b16 %v1162
        %v1315 = vunpack.c.h.b16 %v1163
        %v1316 = vunpack.c.l.b16 %v1164
        %v1317 = vunpack.c.l.b16 %v1165
        %v1318 = vunpack.c.l.b16 %v1166
        %v1319 = vunpack.c.l.b16 %v1167
        %v1320 = vunpack.c.h.b16 %v1164
        %v1321 = vunpack.c.h.b16 %v1165
        %v1322 = vunpack.c.h.b16 %v1166
        %v1323 = vunpack.c.h.b16 %v1167
        %v1324 = vunpack.c.l.b16 %v1168
        %v1325 = vunpack.c.l.b16 %v1169
        %v1326 = vunpack.c.l.b16 %v1170
        %v1327 = vunpack.c.l.b16 %v1171
        %v1328 = vunpack.c.h.b16 %v1168
        %v1329 = vunpack.c.h.b16 %v1169
        %v1330 = vunpack.c.h.b16 %v1170
        %v1331 = vunpack.c.h.b16 %v1171
        %v1332 = vunpack.c.l.b16 %v1172
        %v1333 = vunpack.c.l.b16 %v1173
        %v1334 = vunpack.c.l.b16 %v1174
        %v1335 = vunpack.c.l.b16 %v1175
        %v1336 = vunpack.c.h.b16 %v1172
        %v1337 = vunpack.c.h.b16 %v1173
        %v1338 = vunpack.c.h.b16 %v1174
        %v1339 = vunpack.c.h.b16 %v1175
        %v1340 = vunpack.c.l.b16 %v1176
        %v1341 = vunpack.c.l.b16 %v1177
        %v1342 = vunpack.c.l.b16 %v1178
        %v1343 = vunpack.c.l.b16 %v1179
        %v1344 = vunpack.c.h.b16 %v1176
        %v1345 = vunpack.c.h.b16 %v1177
        %v1346 = vunpack.c.h.b16 %v1178
        %v1347 = vunpack.c.h.b16 %v1179
        %v1348 = vunpack.c.l.b16 %v1180
        %v1349 = vunpack.c.l.b16 %v1181
        %v1350 = vunpack.c.l.b16 %v1182
        %v1351 = vunpack.c.l.b16 %v1183
        %v1352 = vunpack.c.h.b16 %v1180
        %v1353 = vunpack.c.h.b16 %v1181
        %v1354 = vunpack.c.h.b16 %v1182
        %v1355 = vunpack.c.h.b16 %v1183
        %v1356 = vunpack.c.l.b16 %v1184
        %v1357 = vunpack.c.l.b16 %v1185
        %v1358 = vunpack.c.l.b16 %v1186
        %v1359 = vunpack.c.l.b16 %v1187
        %v1360 = vunpack.c.h.b16 %v1184
        %v1361 = vunpack.c.h.b16 %v1185
        %v1362 = vunpack.c.h.b16 %v1186
        %v1363 = vunpack.c.h.b16 %v1187
        %v1364 = vunpack.c.l.b16 %v1188
        %v1365 = vunpack.c.l.b16 %v1189
        %v1366 = vunpack.c.l.b16 %v1190
        %v1367 = vunpack.c.l.b16 %v1191
        %v1368 = vunpack.c.h.b16 %v1188
        %v1369 = vunpack.c.h.b16 %v1189
        %v1370 = vunpack.c.h.b16 %v1190
        %v1371 = vunpack.c.h.b16 %v1191
        %v1372 = vunpack.c.l.b16 %v1192
        %v1373 = vunpack.c.l.b16 %v1193
        %v1374 = vunpack.c.l.b16 %v1194
        %v1375 = vunpack.c.l.b16 %v1195
        %v1376 = vunpack.c.h.b16 %v1192
        %v1377 = vunpack.c.h.b16 %v1193
        %v1378 = vunpack.c.h.b16 %v1194
        %v1379 = vunpack.c.h.b16 %v1195
        %v1380 = vunpack.c.l.b16 %v1196
        %v1381 = vunpack.c.l.b16 %v1197
        %v1382 = vunpack.c.l.b16 %v1198
        %v1383 = vunpack.c.l.b16 %v1199
        %v1384 = vunpack.c.h.b16 %v1196
        %v1385 = vunpack.c.h.b16 %v1197
        %v1386 = vunpack.c.h.b16 %v1198
        %v1387 = vunpack.c.h.b16 %v1199
        %v1388 = vunpack.c.l.b16 %v1200
        %v1389 = vunpack.c.l.b16 %v1201
        %v1390 = vunpack.c.l.b16 %v1202
        %v1391 = vunpack.c.l.b16 %v1203
        %v1392 = vunpack.c.h.b16 %v1200
        %v1393 = vunpack.c.h.b16 %v1201
        %v1394 = vunpack.c.h.b16 %v1202
        %v1395 = vunpack.c.h.b16 %v1203
        %v1396 = vpack.c.b16 %v1269, %v1268
        %v1397 = vpack.c.b16 %v1271, %v1270
        %v1398 = vpack.c.b16 %v1273, %v1272
        %v1399 = vpack.c.b16 %v1275, %v1274
        %v1400 = vpack.c.b16 %v1277, %v1276
        %v1401 = vpack.c.b16 %v1279, %v1278
        %v1402 = vpack.c.b16 %v1281, %v1280
        %v1403 = vpack.c.b16 %v1283, %v1282
        %v1404 = vpack.c.b16 %v1285, %v1284
        %v1405 = vpack.c.b16 %v1287, %v1286
        %v1406 = vpack.c.b16 %v1289, %v1288
        %v1407 = vpack.c.b16 %v1291, %v1290
        %v1408 = vpack.c.b16 %v1293, %v1292
        %v1409 = vpack.c.b16 %v1295, %v1294
        %v1410 = vpack.c.b16 %v1297, %v1296
        %v1411 = vpack.c.b16 %v1299, %v1298
        %v1412 = vpack.c.b16 %v1301, %v1300
        %v1413 = vpack.c.b16 %v1303, %v1302
        %v1414 = vpack.c.b16 %v1305, %v1304
        %v1415 = vpack.c.b16 %v1307, %v1306
        %v1416 = vpack.c.b16 %v1309, %v1308
        %v1417 = vpack.c.b16 %v1311, %v1310
        %v1418 = vpack.c.b16 %v1313, %v1312
        %v1419 = vpack.c.b16 %v1315, %v1314
        %v1420 = vpack.c.b16 %v1317, %v1316
        %v1421 = vpack.c.b16 %v1319, %v1318
        %v1422 = vpack.c.b16 %v1321, %v1320
        %v1423 = vpack.c.b16 %v1323, %v1322
        %v1424 = vpack.c.b16 %v1325, %v1324
        %v1425 = vpack.c.b16 %v1327, %v1326
        %v1426 = vpack.c.b16 %v1329, %v1328
        %v1427 = vpack.c.b16 %v1331, %v1330
        %v1428 = vpack.c.b16 %v1333, %v1332
        %v1429 = vpack.c.b16 %v1335, %v1334
        %v1430 = vpack.c.b16 %v1337, %v1336
        %v1431 = vpack.c.b16 %v1339, %v1338
        %v1432 = vpack.c.b16 %v1341, %v1340
        %v1433 = vpack.c.b16 %v1343, %v1342
        %v1434 = vpack.c.b16 %v1345, %v1344
        %v1435 = vpack.c.b16 %v1347, %v1346
        %v1436 = vpack.c.b16 %v1349, %v1348
        %v1437 = vpack.c.b16 %v1351, %v1350
        %v1438 = vpack.c.b16 %v1353, %v1352
        %v1439 = vpack.c.b16 %v1355, %v1354
        %v1440 = vpack.c.b16 %v1357, %v1356
        %v1441 = vpack.c.b16 %v1359, %v1358
        %v1442 = vpack.c.b16 %v1361, %v1360
        %v1443 = vpack.c.b16 %v1363, %v1362
        %v1444 = vpack.c.b16 %v1365, %v1364
        %v1445 = vpack.c.b16 %v1367, %v1366
        %v1446 = vpack.c.b16 %v1369, %v1368
        %v1447 = vpack.c.b16 %v1371, %v1370
        %v1448 = vpack.c.b16 %v1373, %v1372
        %v1449 = vpack.c.b16 %v1375, %v1374
        %v1450 = vpack.c.b16 %v1377, %v1376
        %v1451 = vpack.c.b16 %v1379, %v1378
        %v1452 = vpack.c.b16 %v1381, %v1380
        %v1453 = vpack.c.b16 %v1383, %v1382
        %v1454 = vpack.c.b16 %v1385, %v1384
        %v1455 = vpack.c.b16 %v1387, %v1386
        %v1456 = vpack.c.b16 %v1389, %v1388
        %v1457 = vpack.c.b16 %v1391, %v1390
        %v1458 = vpack.c.b16 %v1393, %v1392
        %v1459 = vpack.c.b16 %v1395, %v1394
        %1524 = vst [vmem:[#allocation2] sm:$0xff] %v1396
        %1525 = vst [vmem:[#allocation2 + $0x8] sm:$0xff] %v1397
        %1526 = vst [vmem:[#allocation2 + $0x10] sm:$0xff] %v1398
        %1527 = vst [vmem:[#allocation2 + $0x18] sm:$0xff] %v1399
        %1528 = vst [vmem:[#allocation2 + $0x20] sm:$0xff] %v1400
        %1529 = vst [vmem:[#allocation2 + $0x28] sm:$0xff] %v1401
        %1530 = vst [vmem:[#allocation2 + $0x30] sm:$0xff] %v1402
        %1531 = vst [vmem:[#allocation2 + $0x38] sm:$0xff] %v1403
        %1532 = vst [vmem:[#allocation2 + $0x40] sm:$0xff] %v1404
        %1533 = vst [vmem:[#allocation2 + $0x48] sm:$0xff] %v1405
        %1534 = vst [vmem:[#allocation2 + $0x50] sm:$0xff] %v1406
        %1535 = vst [vmem:[#allocation2 + $0x58] sm:$0xff] %v1407
        %1536 = vst [vmem:[#allocation2 + $0x60] sm:$0xff] %v1408
        %1537 = vst [vmem:[#allocation2 + $0x68] sm:$0xff] %v1409
        %1538 = vst [vmem:[#allocation2 + $0x70] sm:$0xff] %v1410
        %1539 = vst [vmem:[#allocation2 + $0x78] sm:$0xff] %v1411
        %1540 = vst [vmem:[#allocation2 + $0x80] sm:$0xff] %v1412
        %1541 = vst [vmem:[#allocation2 + $0x88] sm:$0xff] %v1413
        %1542 = vst [vmem:[#allocation2 + $0x90] sm:$0xff] %v1414
        %1543 = vst [vmem:[#allocation2 + $0x98] sm:$0xff] %v1415
        %1544 = vst [vmem:[#allocation2 + $0xa0] sm:$0xff] %v1416
        %1545 = vst [vmem:[#allocation2 + $0xa8] sm:$0xff] %v1417
        %1546 = vst [vmem:[#allocation2 + $0xb0] sm:$0xff] %v1418
        %1547 = vst [vmem:[#allocation2 + $0xb8] sm:$0xff] %v1419
        %1548 = vst [vmem:[#allocation2 + $0xc0] sm:$0xff] %v1420
        %1549 = vst [vmem:[#allocation2 + $0xc8] sm:$0xff] %v1421
        %1550 = vst [vmem:[#allocation2 + $0xd0] sm:$0xff] %v1422
        %1551 = vst [vmem:[#allocation2 + $0xd8] sm:$0xff] %v1423
        %1552 = vst [vmem:[#allocation2 + $0xe0] sm:$0xff] %v1424
        %1553 = vst [vmem:[#allocation2 + $0xe8] sm:$0xff] %v1425
        %1554 = vst [vmem:[#allocation2 + $0xf0] sm:$0xff] %v1426
        %1555 = vst [vmem:[#allocation2 + $0xf8] sm:$0xff] %v1427
        %1556 = vst [vmem:[#allocation2 + $0x100] sm:$0xff] %v1428
        %1557 = vst [vmem:[#allocation2 + $0x108] sm:$0xff] %v1429
        %1558 = vst [vmem:[#allocation2 + $0x110] sm:$0xff] %v1430
        %1559 = vst [vmem:[#allocation2 + $0x118] sm:$0xff] %v1431
        %1560 = vst [vmem:[#allocation2 + $0x120] sm:$0xff] %v1432
        %1561 = vst [vmem:[#allocation2 + $0x128] sm:$0xff] %v1433
        %1562 = vst [vmem:[#allocation2 + $0x130] sm:$0xff] %v1434
        %1563 = vst [vmem:[#allocation2 + $0x138] sm:$0xff] %v1435
        %1564 = vst [vmem:[#allocation2 + $0x140] sm:$0xff] %v1436
        %1565 = vst [vmem:[#allocation2 + $0x148] sm:$0xff] %v1437
        %1566 = vst [vmem:[#allocation2 + $0x150] sm:$0xff] %v1438
        %1567 = vst [vmem:[#allocation2 + $0x158] sm:$0xff] %v1439
        %1568 = vst [vmem:[#allocation2 + $0x160] sm:$0xff] %v1440
        %1569 = vst [vmem:[#allocation2 + $0x168] sm:$0xff] %v1441
        %1570 = vst [vmem:[#allocation2 + $0x170] sm:$0xff] %v1442
        %1571 = vst [vmem:[#allocation2 + $0x178] sm:$0xff] %v1443
        %1572 = vst [vmem:[#allocation2 + $0x180] sm:$0xff] %v1444
        %1573 = vst [vmem:[#allocation2 + $0x188] sm:$0xff] %v1445
        %1574 = vst [vmem:[#allocation2 + $0x190] sm:$0xff] %v1446
        %1575 = vst [vmem:[#allocation2 + $0x198] sm:$0xff] %v1447
        %1576 = vst [vmem:[#allocation2 + $0x1a0] sm:$0xff] %v1448
        %1577 = vst [vmem:[#allocation2 + $0x1a8] sm:$0xff] %v1449
        %1578 = vst [vmem:[#allocation2 + $0x1b0] sm:$0xff] %v1450
        %1579 = vst [vmem:[#allocation2 + $0x1b8] sm:$0xff] %v1451
        %1580 = vst [vmem:[#allocation2 + $0x1c0] sm:$0xff] %v1452
        %1581 = vst [vmem:[#allocation2 + $0x1c8] sm:$0xff] %v1453
        %1582 = vst [vmem:[#allocation2 + $0x1d0] sm:$0xff] %v1454
        %1583 = vst [vmem:[#allocation2 + $0x1d8] sm:$0xff] %v1455
        %1584 = vst [vmem:[#allocation2 + $0x1e0] sm:$0xff] %v1456
        %1585 = vst [vmem:[#allocation2 + $0x1e8] sm:$0xff] %v1457
        %1586 = vst [vmem:[#allocation2 + $0x1f0] sm:$0xff] %v1458
        %1587 = vst [vmem:[#allocation2 + $0x1f8] sm:$0xff] %v1459
        %v1588 = vld [vmem:[%s328] sm:$0xff]
        %v1589 = vld [vmem:[%s328 + $0x8] sm:$0xff]
        %v1590 = vld [vmem:[%s328 + $0x10] sm:$0xff]
        %v1591 = vld [vmem:[%s328 + $0x18] sm:$0xff]
        %v1592 = vld [vmem:[%s328 + $0x20] sm:$0xff]
        %v1593 = vld [vmem:[%s328 + $0x28] sm:$0xff]
        %v1594 = vld [vmem:[%s328 + $0x30] sm:$0xff]
        %v1595 = vld [vmem:[%s328 + $0x38] sm:$0xff]
        %v1596 = vld [vmem:[%s328 + $0x40] sm:$0xff]
        %v1597 = vld [vmem:[%s328 + $0x48] sm:$0xff]
        %v1598 = vld [vmem:[%s328 + $0x50] sm:$0xff]
        %v1599 = vld [vmem:[%s328 + $0x58] sm:$0xff]
        %v1600 = vld [vmem:[%s328 + $0x60] sm:$0xff]
        %v1601 = vld [vmem:[%s328 + $0x68] sm:$0xff]
        %v1602 = vld [vmem:[%s328 + $0x70] sm:$0xff]
        %v1603 = vld [vmem:[%s328 + $0x78] sm:$0xff]
        %v1604 = vld [vmem:[%s328 + $0x80] sm:$0xff]
        %v1605 = vld [vmem:[%s328 + $0x88] sm:$0xff]
        %v1606 = vld [vmem:[%s328 + $0x90] sm:$0xff]
        %v1607 = vld [vmem:[%s328 + $0x98] sm:$0xff]
        %v1608 = vld [vmem:[%s328 + $0xa0] sm:$0xff]
        %v1609 = vld [vmem:[%s328 + $0xa8] sm:$0xff]
        %v1610 = vld [vmem:[%s328 + $0xb0] sm:$0xff]
        %v1611 = vld [vmem:[%s328 + $0xb8] sm:$0xff]
        %v1612 = vld [vmem:[%s328 + $0xc0] sm:$0xff]
        %v1613 = vld [vmem:[%s328 + $0xc8] sm:$0xff]
        %v1614 = vld [vmem:[%s328 + $0xd0] sm:$0xff]
        %v1615 = vld [vmem:[%s328 + $0xd8] sm:$0xff]
        %v1616 = vld [vmem:[%s328 + $0xe0] sm:$0xff]
        %v1617 = vld [vmem:[%s328 + $0xe8] sm:$0xff]
        %v1618 = vld [vmem:[%s328 + $0xf0] sm:$0xff]
        %v1619 = vld [vmem:[%s328 + $0xf8] sm:$0xff]
        %v1620 = vpack.c.bf16 %v1589, %v1588
        %v1621 = vpack.c.bf16 %v1591, %v1590
        %v1622 = vpack.c.bf16 %v1593, %v1592
        %v1623 = vpack.c.bf16 %v1595, %v1594
        %v1624 = vpack.c.bf16 %v1597, %v1596
        %v1625 = vpack.c.bf16 %v1599, %v1598
        %v1626 = vpack.c.bf16 %v1601, %v1600
        %v1627 = vpack.c.bf16 %v1603, %v1602
        %v1628 = vpack.c.bf16 %v1605, %v1604
        %v1629 = vpack.c.bf16 %v1607, %v1606
        %v1630 = vpack.c.bf16 %v1609, %v1608
        %v1631 = vpack.c.bf16 %v1611, %v1610
        %v1632 = vpack.c.bf16 %v1613, %v1612
        %v1633 = vpack.c.bf16 %v1615, %v1614
        %v1634 = vpack.c.bf16 %v1617, %v1616
        %v1635 = vpack.c.bf16 %v1619, %v1618
        %v1637 = vsel %vm449, %v1620, 0
        %v1640 = vsel %vm449, %v1621, 0
        %v1643 = vsel %vm449, %v1622, 0
        %v1646 = vsel %vm449, %v1623, 0
        %v1649 = vsel %vm449, %v1624, 0
        %v1652 = vsel %vm449, %v1625, 0
        %v1655 = vsel %vm449, %v1626, 0
        %v1658 = vsel %vm449, %v1627, 0
        %v1661 = vsel %vm449, %v1628, 0
        %v1664 = vsel %vm449, %v1629, 0
        %v1667 = vsel %vm449, %v1630, 0
        %v1670 = vsel %vm449, %v1631, 0
        %v1673 = vsel %vm449, %v1632, 0
        %v1676 = vsel %vm449, %v1633, 0
        %v1679 = vsel %vm449, %v1634, 0
        %v1682 = vsel %vm449, %v1635, 0
        %1684 = vmatprep.subr.bf16.mxu0 0
        %1685 = vmatpush1.bf16.msra.mxu0 0
        %1686 = vmatprep.subr.bf16.mxu0 0
        %1687 = vmatpush1.bf16.msra.mxu0 0
        %1688 = vmatprep.subr.bf16.mxu0 0
        %1689 = vmatpush1.bf16.msra.mxu0 0
        %1690 = vmatprep.subr.bf16.mxu0 0
        %1691 = vmatpush1.bf16.msra.mxu0 0
        %1692 = vmatprep.subr.bf16.mxu0 0
        %1693 = vmatpush1.bf16.msra.mxu0 0
        %1694 = vmatprep.subr.bf16.mxu0 0
        %1695 = vmatpush1.bf16.msra.mxu0 0
        %1696 = vmatprep.subr.bf16.mxu0 %v438
        %1697 = vmatpush1.bf16.msra.mxu0 %v437
        %1698 = vmatprep.subr.bf16.mxu0 %v434
        %1699 = vmatpush1.bf16.msra.mxu0 %v433
        %1700 = vmatprep.subr.bf16.mxu0 0
        %1701 = vmatpush2.bf16.msra.mxu0 0
        %1702 = vmatprep.subr.bf16.mxu0 0
        %1703 = vmatpush2.bf16.msra.mxu0 0
        %1704 = vmatprep.subr.bf16.mxu0 0
        %1705 = vmatpush2.bf16.msra.mxu0 0
        %1706 = vmatprep.subr.bf16.mxu0 0
        %1707 = vmatpush2.bf16.msra.mxu0 0
        %1708 = vmatprep.subr.bf16.mxu0 0
        %1709 = vmatpush2.bf16.msra.mxu0 0
        %1710 = vmatprep.subr.bf16.mxu0 0
        %1711 = vmatpush2.bf16.msra.mxu0 0
        %1712 = vmatprep.subr.bf16.mxu0 0
        %1713 = vmatpush2.bf16.msra.mxu0 0
        %1714 = vmatprep.subr.bf16.mxu0 0
        %1715 = vmatpush2.bf16.msra.mxu0 0
        %1716 = vmatprep.mubr.bf16.mxu0 0
        %1717 = vmatmul.mubr.bf16.gmra.mxu0 %v1637
        %v1718 = vpop.f32.mrf.mxu0
        %v1719 = vadd.f32 %v392, %v1718
        %v1720 = vpop.f32.mrf.mxu0
        %v1721 = vadd.f32 %v396, %v1720
        %v1722 = vpop.f32.mrf.mxu0
        %v1723 = vadd.f32 %v392, %v1722
        %v1724 = vpop.f32.mrf.mxu0
        %v1725 = vadd.f32 %v396, %v1724
        %1726 = vmatprep.mubr.bf16.mxu0 0
        %1727 = vmatmul.mubr.bf16.gmra.mxu0 %v1640
        %v1728 = vpop.f32.mrf.mxu0
        %v1729 = vadd.f32 %v392, %v1728
        %v1730 = vpop.f32.mrf.mxu0
        %v1731 = vadd.f32 %v396, %v1730
        %v1732 = vpop.f32.mrf.mxu0
        %v1733 = vadd.f32 %v392, %v1732
        %v1734 = vpop.f32.mrf.mxu0
        %v1735 = vadd.f32 %v396, %v1734
        %1736 = vmatprep.mubr.bf16.mxu0 0
        %1737 = vmatmul.mubr.bf16.gmra.mxu0 %v1643
        %v1738 = vpop.f32.mrf.mxu0
        %v1739 = vadd.f32 %v392, %v1738
        %v1740 = vpop.f32.mrf.mxu0
        %v1741 = vadd.f32 %v396, %v1740
        %v1742 = vpop.f32.mrf.mxu0
        %v1743 = vadd.f32 %v392, %v1742
        %v1744 = vpop.f32.mrf.mxu0
        %v1745 = vadd.f32 %v396, %v1744
        %1746 = vmatprep.mubr.bf16.mxu0 0
        %1747 = vmatmul.mubr.bf16.gmra.mxu0 %v1646
        %v1748 = vpop.f32.mrf.mxu0
        %v1749 = vadd.f32 %v392, %v1748
        %v1750 = vpop.f32.mrf.mxu0
        %v1751 = vadd.f32 %v396, %v1750
        %v1752 = vpop.f32.mrf.mxu0
        %v1753 = vadd.f32 %v392, %v1752
        %v1754 = vpop.f32.mrf.mxu0
        %v1755 = vadd.f32 %v396, %v1754
        %1756 = vmatprep.mubr.bf16.mxu0 0
        %1757 = vmatmul.mubr.bf16.gmra.mxu0 %v1649
        %v1758 = vpop.f32.mrf.mxu0
        %v1759 = vadd.f32 %v392, %v1758
        %v1760 = vpop.f32.mrf.mxu0
        %v1761 = vadd.f32 %v396, %v1760
        %v1762 = vpop.f32.mrf.mxu0
        %v1763 = vadd.f32 %v392, %v1762
        %v1764 = vpop.f32.mrf.mxu0
        %v1765 = vadd.f32 %v396, %v1764
        %1766 = vmatprep.mubr.bf16.mxu0 0
        %1767 = vmatmul.mubr.bf16.gmra.mxu0 %v1652
        %v1768 = vpop.f32.mrf.mxu0
        %v1769 = vadd.f32 %v392, %v1768
        %v1770 = vpop.f32.mrf.mxu0
        %v1771 = vadd.f32 %v396, %v1770
        %v1772 = vpop.f32.mrf.mxu0
        %v1773 = vadd.f32 %v392, %v1772
        %v1774 = vpop.f32.mrf.mxu0
        %v1775 = vadd.f32 %v396, %v1774
        %1776 = vmatprep.mubr.bf16.mxu0 0
        %1777 = vmatmul.mubr.bf16.gmra.mxu0 %v1655
        %v1778 = vpop.f32.mrf.mxu0
        %v1779 = vadd.f32 %v392, %v1778
        %v1780 = vpop.f32.mrf.mxu0
        %v1781 = vadd.f32 %v396, %v1780
        %v1782 = vpop.f32.mrf.mxu0
        %v1783 = vadd.f32 %v392, %v1782
        %v1784 = vpop.f32.mrf.mxu0
        %v1785 = vadd.f32 %v396, %v1784
        %1786 = vmatprep.mubr.bf16.mxu0 0
        %1787 = vmatmul.mubr.bf16.gmra.mxu0 %v1658
        %v1788 = vpop.f32.mrf.mxu0
        %v1789 = vadd.f32 %v392, %v1788
        %v1790 = vpop.f32.mrf.mxu0
        %v1791 = vadd.f32 %v396, %v1790
        %v1792 = vpop.f32.mrf.mxu0
        %v1793 = vadd.f32 %v392, %v1792
        %v1794 = vpop.f32.mrf.mxu0
        %v1795 = vadd.f32 %v396, %v1794
        %1796 = vmatprep.mubr.bf16.mxu0 0
        %1797 = vmatmul.mubr.bf16.gmra.mxu0 %v1661
        %v1798 = vpop.f32.mrf.mxu0
        %v1799 = vadd.f32 %v392, %v1798
        %v1800 = vpop.f32.mrf.mxu0
        %v1801 = vadd.f32 %v396, %v1800
        %v1802 = vpop.f32.mrf.mxu0
        %v1803 = vadd.f32 %v392, %v1802
        %v1804 = vpop.f32.mrf.mxu0
        %v1805 = vadd.f32 %v396, %v1804
        %1806 = vmatprep.mubr.bf16.mxu0 0
        %1807 = vmatmul.mubr.bf16.gmra.mxu0 %v1664
        %v1808 = vpop.f32.mrf.mxu0
        %v1809 = vadd.f32 %v392, %v1808
        %v1810 = vpop.f32.mrf.mxu0
        %v1811 = vadd.f32 %v396, %v1810
        %v1812 = vpop.f32.mrf.mxu0
        %v1813 = vadd.f32 %v392, %v1812
        %v1814 = vpop.f32.mrf.mxu0
        %v1815 = vadd.f32 %v396, %v1814
        %1816 = vmatprep.mubr.bf16.mxu0 0
        %1817 = vmatmul.mubr.bf16.gmra.mxu0 %v1667
        %v1818 = vpop.f32.mrf.mxu0
        %v1819 = vadd.f32 %v392, %v1818
        %v1820 = vpop.f32.mrf.mxu0
        %v1821 = vadd.f32 %v396, %v1820
        %v1822 = vpop.f32.mrf.mxu0
        %v1823 = vadd.f32 %v392, %v1822
        %v1824 = vpop.f32.mrf.mxu0
        %v1825 = vadd.f32 %v396, %v1824
        %1826 = vmatprep.mubr.bf16.mxu0 0
        %1827 = vmatmul.mubr.bf16.gmra.mxu0 %v1670
        %v1828 = vpop.f32.mrf.mxu0
        %v1829 = vadd.f32 %v392, %v1828
        %v1830 = vpop.f32.mrf.mxu0
        %v1831 = vadd.f32 %v396, %v1830
        %v1832 = vpop.f32.mrf.mxu0
        %v1833 = vadd.f32 %v392, %v1832
        %v1834 = vpop.f32.mrf.mxu0
        %v1835 = vadd.f32 %v396, %v1834
        %1836 = vmatprep.mubr.bf16.mxu0 0
        %1837 = vmatmul.mubr.bf16.gmra.mxu0 %v1673
        %v1838 = vpop.f32.mrf.mxu0
        %v1839 = vadd.f32 %v392, %v1838
        %v1840 = vpop.f32.mrf.mxu0
        %v1841 = vadd.f32 %v396, %v1840
        %v1842 = vpop.f32.mrf.mxu0
        %v1843 = vadd.f32 %v392, %v1842
        %v1844 = vpop.f32.mrf.mxu0
        %v1845 = vadd.f32 %v396, %v1844
        %1846 = vmatprep.mubr.bf16.mxu0 0
        %1847 = vmatmul.mubr.bf16.gmra.mxu0 %v1676
        %v1848 = vpop.f32.mrf.mxu0
        %v1849 = vadd.f32 %v392, %v1848
        %v1850 = vpop.f32.mrf.mxu0
        %v1851 = vadd.f32 %v396, %v1850
        %v1852 = vpop.f32.mrf.mxu0
        %v1853 = vadd.f32 %v392, %v1852
        %v1854 = vpop.f32.mrf.mxu0
        %v1855 = vadd.f32 %v396, %v1854
        %1856 = vmatprep.mubr.bf16.mxu0 0
        %1857 = vmatmul.mubr.bf16.gmra.mxu0 %v1679
        %v1858 = vpop.f32.mrf.mxu0
        %v1859 = vadd.f32 %v392, %v1858
        %v1860 = vpop.f32.mrf.mxu0
        %v1861 = vadd.f32 %v396, %v1860
        %v1862 = vpop.f32.mrf.mxu0
        %v1863 = vadd.f32 %v392, %v1862
        %v1864 = vpop.f32.mrf.mxu0
        %v1865 = vadd.f32 %v396, %v1864
        %1866 = vmatprep.mubr.bf16.mxu0 0
        %1867 = vmatmul.mubr.bf16.gmra.mxu0 %v1682
        %v1868 = vpop.f32.mrf.mxu0
        %v1869 = vadd.f32 %v392, %v1868
        %v1870 = vpop.f32.mrf.mxu0
        %v1871 = vadd.f32 %v396, %v1870
        %v1872 = vpop.f32.mrf.mxu0
        %v1873 = vadd.f32 %v392, %v1872
        %v1874 = vpop.f32.mrf.mxu0
        %v1875 = vadd.f32 %v396, %v1874
        %1876 = vdwg.mxu0
        %1877 = vmatprep.subr.bf16.mxu0 0
        %1878 = vmatpush1.bf16.msra.mxu0 0
        %1879 = vmatprep.subr.bf16.mxu0 0
        %1880 = vmatpush1.bf16.msra.mxu0 0
        %1881 = vmatprep.subr.bf16.mxu0 0
        %1882 = vmatpush1.bf16.msra.mxu0 0
        %1883 = vmatprep.subr.bf16.mxu0 0
        %1884 = vmatpush1.bf16.msra.mxu0 0
        %1885 = vmatprep.subr.bf16.mxu0 0
        %1886 = vmatpush1.bf16.msra.mxu0 0
        %1887 = vmatprep.subr.bf16.mxu0 0
        %1888 = vmatpush1.bf16.msra.mxu0 0
        %1889 = vmatprep.subr.bf16.mxu0 %v440
        %1890 = vmatpush1.bf16.msra.mxu0 %v439
        %1891 = vmatprep.subr.bf16.mxu0 %v436
        %1892 = vmatpush1.bf16.msra.mxu0 %v435
        %1893 = vmatprep.subr.bf16.mxu0 0
        %1894 = vmatpush2.bf16.msra.mxu0 0
        %1895 = vmatprep.subr.bf16.mxu0 0
        %1896 = vmatpush2.bf16.msra.mxu0 0
        %1897 = vmatprep.subr.bf16.mxu0 0
        %1898 = vmatpush2.bf16.msra.mxu0 0
        %1899 = vmatprep.subr.bf16.mxu0 0
        %1900 = vmatpush2.bf16.msra.mxu0 0
        %1901 = vmatprep.subr.bf16.mxu0 0
        %1902 = vmatpush2.bf16.msra.mxu0 0
        %1903 = vmatprep.subr.bf16.mxu0 0
        %1904 = vmatpush2.bf16.msra.mxu0 0
        %1905 = vmatprep.subr.bf16.mxu0 0
        %1906 = vmatpush2.bf16.msra.mxu0 0
        %1907 = vmatprep.subr.bf16.mxu0 0
        %1908 = vmatpush2.bf16.msra.mxu0 0
        %1909 = vmatprep.mubr.bf16.mxu0 0
        %1910 = vmatmul.mubr.bf16.gmra.mxu0 %v1637
        %v1911 = vpop.f32.mrf.mxu0
        %v1912 = vadd.f32 %v400, %v1911
        %v1913 = vpop.f32.mrf.mxu0
        %v1914 = vadd.f32 %v404, %v1913
        %v1915 = vpop.f32.mrf.mxu0
        %v1916 = vadd.f32 %v400, %v1915
        %v1917 = vpop.f32.mrf.mxu0
        %v1918 = vadd.f32 %v404, %v1917
        %1919 = vmatprep.mubr.bf16.mxu0 0
        %1920 = vmatmul.mubr.bf16.gmra.mxu0 %v1640
        %v1921 = vpop.f32.mrf.mxu0
        %v1922 = vadd.f32 %v400, %v1921
        %v1923 = vpop.f32.mrf.mxu0
        %v1924 = vadd.f32 %v404, %v1923
        %v1925 = vpop.f32.mrf.mxu0
        %v1926 = vadd.f32 %v400, %v1925
        %v1927 = vpop.f32.mrf.mxu0
        %v1928 = vadd.f32 %v404, %v1927
        %1929 = vmatprep.mubr.bf16.mxu0 0
        %1930 = vmatmul.mubr.bf16.gmra.mxu0 %v1643
        %v1931 = vpop.f32.mrf.mxu0
        %v1932 = vadd.f32 %v400, %v1931
        %v1933 = vpop.f32.mrf.mxu0
        %v1934 = vadd.f32 %v404, %v1933
        %v1935 = vpop.f32.mrf.mxu0
        %v1936 = vadd.f32 %v400, %v1935
        %v1937 = vpop.f32.mrf.mxu0
        %v1938 = vadd.f32 %v404, %v1937
        %1939 = vmatprep.mubr.bf16.mxu0 0
        %1940 = vmatmul.mubr.bf16.gmra.mxu0 %v1646
        %v1941 = vpop.f32.mrf.mxu0
        %v1942 = vadd.f32 %v400, %v1941
        %v1943 = vpop.f32.mrf.mxu0
        %v1944 = vadd.f32 %v404, %v1943
        %v1945 = vpop.f32.mrf.mxu0
        %v1946 = vadd.f32 %v400, %v1945
        %v1947 = vpop.f32.mrf.mxu0
        %v1948 = vadd.f32 %v404, %v1947
        %1949 = vmatprep.mubr.bf16.mxu0 0
        %1950 = vmatmul.mubr.bf16.gmra.mxu0 %v1649
        %v1951 = vpop.f32.mrf.mxu0
        %v1952 = vadd.f32 %v400, %v1951
        %v1953 = vpop.f32.mrf.mxu0
        %v1954 = vadd.f32 %v404, %v1953
        %v1955 = vpop.f32.mrf.mxu0
        %v1956 = vadd.f32 %v400, %v1955
        %v1957 = vpop.f32.mrf.mxu0
        %v1958 = vadd.f32 %v404, %v1957
        %1959 = vmatprep.mubr.bf16.mxu0 0
        %1960 = vmatmul.mubr.bf16.gmra.mxu0 %v1652
        %v1961 = vpop.f32.mrf.mxu0
        %v1962 = vadd.f32 %v400, %v1961
        %v1963 = vpop.f32.mrf.mxu0
        %v1964 = vadd.f32 %v404, %v1963
        %v1965 = vpop.f32.mrf.mxu0
        %v1966 = vadd.f32 %v400, %v1965
        %v1967 = vpop.f32.mrf.mxu0
        %v1968 = vadd.f32 %v404, %v1967
        %1969 = vmatprep.mubr.bf16.mxu0 0
        %1970 = vmatmul.mubr.bf16.gmra.mxu0 %v1655
        %v1971 = vpop.f32.mrf.mxu0
        %v1972 = vadd.f32 %v400, %v1971
        %v1973 = vpop.f32.mrf.mxu0
        %v1974 = vadd.f32 %v404, %v1973
        %v1975 = vpop.f32.mrf.mxu0
        %v1976 = vadd.f32 %v400, %v1975
        %v1977 = vpop.f32.mrf.mxu0
        %v1978 = vadd.f32 %v404, %v1977
        %1979 = vmatprep.mubr.bf16.mxu0 0
        %1980 = vmatmul.mubr.bf16.gmra.mxu0 %v1658
        %v1981 = vpop.f32.mrf.mxu0
        %v1982 = vadd.f32 %v400, %v1981
        %v1983 = vpop.f32.mrf.mxu0
        %v1984 = vadd.f32 %v404, %v1983
        %v1985 = vpop.f32.mrf.mxu0
        %v1986 = vadd.f32 %v400, %v1985
        %v1987 = vpop.f32.mrf.mxu0
        %v1988 = vadd.f32 %v404, %v1987
        %1989 = vmatprep.mubr.bf16.mxu0 0
        %1990 = vmatmul.mubr.bf16.gmra.mxu0 %v1661
        %v1991 = vpop.f32.mrf.mxu0
        %v1992 = vadd.f32 %v400, %v1991
        %v1993 = vpop.f32.mrf.mxu0
        %v1994 = vadd.f32 %v404, %v1993
        %v1995 = vpop.f32.mrf.mxu0
        %v1996 = vadd.f32 %v400, %v1995
        %v1997 = vpop.f32.mrf.mxu0
        %v1998 = vadd.f32 %v404, %v1997
        %1999 = vmatprep.mubr.bf16.mxu0 0
        %2000 = vmatmul.mubr.bf16.gmra.mxu0 %v1664
        %v2001 = vpop.f32.mrf.mxu0
        %v2002 = vadd.f32 %v400, %v2001
        %v2003 = vpop.f32.mrf.mxu0
        %v2004 = vadd.f32 %v404, %v2003
        %v2005 = vpop.f32.mrf.mxu0
        %v2006 = vadd.f32 %v400, %v2005
        %v2007 = vpop.f32.mrf.mxu0
        %v2008 = vadd.f32 %v404, %v2007
        %2009 = vmatprep.mubr.bf16.mxu0 0
        %2010 = vmatmul.mubr.bf16.gmra.mxu0 %v1667
        %v2011 = vpop.f32.mrf.mxu0
        %v2012 = vadd.f32 %v400, %v2011
        %v2013 = vpop.f32.mrf.mxu0
        %v2014 = vadd.f32 %v404, %v2013
        %v2015 = vpop.f32.mrf.mxu0
        %v2016 = vadd.f32 %v400, %v2015
        %v2017 = vpop.f32.mrf.mxu0
        %v2018 = vadd.f32 %v404, %v2017
        %2019 = vmatprep.mubr.bf16.mxu0 0
        %2020 = vmatmul.mubr.bf16.gmra.mxu0 %v1670
        %v2021 = vpop.f32.mrf.mxu0
        %v2022 = vadd.f32 %v400, %v2021
        %v2023 = vpop.f32.mrf.mxu0
        %v2024 = vadd.f32 %v404, %v2023
        %v2025 = vpop.f32.mrf.mxu0
        %v2026 = vadd.f32 %v400, %v2025
        %v2027 = vpop.f32.mrf.mxu0
        %v2028 = vadd.f32 %v404, %v2027
        %2029 = vmatprep.mubr.bf16.mxu0 0
        %2030 = vmatmul.mubr.bf16.gmra.mxu0 %v1673
        %v2031 = vpop.f32.mrf.mxu0
        %v2032 = vadd.f32 %v400, %v2031
        %v2033 = vpop.f32.mrf.mxu0
        %v2034 = vadd.f32 %v404, %v2033
        %v2035 = vpop.f32.mrf.mxu0
        %v2036 = vadd.f32 %v400, %v2035
        %v2037 = vpop.f32.mrf.mxu0
        %v2038 = vadd.f32 %v404, %v2037
        %2039 = vmatprep.mubr.bf16.mxu0 0
        %2040 = vmatmul.mubr.bf16.gmra.mxu0 %v1676
        %v2041 = vpop.f32.mrf.mxu0
        %v2042 = vadd.f32 %v400, %v2041
        %v2043 = vpop.f32.mrf.mxu0
        %v2044 = vadd.f32 %v404, %v2043
        %v2045 = vpop.f32.mrf.mxu0
        %v2046 = vadd.f32 %v400, %v2045
        %v2047 = vpop.f32.mrf.mxu0
        %v2048 = vadd.f32 %v404, %v2047
        %2049 = vmatprep.mubr.bf16.mxu0 0
        %2050 = vmatmul.mubr.bf16.gmra.mxu0 %v1679
        %v2051 = vpop.f32.mrf.mxu0
        %v2052 = vadd.f32 %v400, %v2051
        %v2053 = vpop.f32.mrf.mxu0
        %v2054 = vadd.f32 %v404, %v2053
        %v2055 = vpop.f32.mrf.mxu0
        %v2056 = vadd.f32 %v400, %v2055
        %v2057 = vpop.f32.mrf.mxu0
        %v2058 = vadd.f32 %v404, %v2057
        %2059 = vmatprep.mubr.bf16.mxu0 0
        %2060 = vmatmul.mubr.bf16.gmra.mxu0 %v1682
        %v2061 = vpop.f32.mrf.mxu0
        %v2062 = vadd.f32 %v400, %v2061
        %v2063 = vpop.f32.mrf.mxu0
        %v2064 = vadd.f32 %v404, %v2063
        %v2065 = vpop.f32.mrf.mxu0
        %v2066 = vadd.f32 %v400, %v2065
        %v2067 = vpop.f32.mrf.mxu0
        %v2068 = vadd.f32 %v404, %v2067
        %2069 = vdwg.mxu0
        %v2070 = vmul.f32 %v1719, 0.2
        %v2071 = vmul.f32 %v1721, 0.2
        %v2072 = vmul.f32 %v1912, 0.2
        %v2073 = vmul.f32 %v1914, 0.2
        %v2074 = vmul.f32 %v1723, 0.2
        %v2075 = vmul.f32 %v1725, 0.2
        %v2076 = vmul.f32 %v1916, 0.2
        %v2077 = vmul.f32 %v1918, 0.2
        %v2078 = vmul.f32 %v1729, 0.2
        %v2079 = vmul.f32 %v1731, 0.2
        %v2080 = vmul.f32 %v1922, 0.2
        %v2081 = vmul.f32 %v1924, 0.2
        %v2082 = vmul.f32 %v1733, 0.2
        %v2083 = vmul.f32 %v1735, 0.2
        %v2084 = vmul.f32 %v1926, 0.2
        %v2085 = vmul.f32 %v1928, 0.2
        %v2086 = vmul.f32 %v1739, 0.2
        %v2087 = vmul.f32 %v1741, 0.2
        %v2088 = vmul.f32 %v1932, 0.2
        %v2089 = vmul.f32 %v1934, 0.2
        %v2090 = vmul.f32 %v1743, 0.2
        %v2091 = vmul.f32 %v1745, 0.2
        %v2092 = vmul.f32 %v1936, 0.2
        %v2093 = vmul.f32 %v1938, 0.2
        %v2094 = vmul.f32 %v1749, 0.2
        %v2095 = vmul.f32 %v1751, 0.2
        %v2096 = vmul.f32 %v1942, 0.2
        %v2097 = vmul.f32 %v1944, 0.2
        %v2098 = vmul.f32 %v1753, 0.2
        %v2099 = vmul.f32 %v1755, 0.2
        %v2100 = vmul.f32 %v1946, 0.2
        %v2101 = vmul.f32 %v1948, 0.2
        %v2102 = vmul.f32 %v1759, 0.2
        %v2103 = vmul.f32 %v1761, 0.2
        %v2104 = vmul.f32 %v1952, 0.2
        %v2105 = vmul.f32 %v1954, 0.2
        %v2106 = vmul.f32 %v1763, 0.2
        %v2107 = vmul.f32 %v1765, 0.2
        %v2108 = vmul.f32 %v1956, 0.2
        %v2109 = vmul.f32 %v1958, 0.2
        %v2110 = vmul.f32 %v1769, 0.2
        %v2111 = vmul.f32 %v1771, 0.2
        %v2112 = vmul.f32 %v1962, 0.2
        %v2113 = vmul.f32 %v1964, 0.2
        %v2114 = vmul.f32 %v1773, 0.2
        %v2115 = vmul.f32 %v1775, 0.2
        %v2116 = vmul.f32 %v1966, 0.2
        %v2117 = vmul.f32 %v1968, 0.2
        %v2118 = vmul.f32 %v1779, 0.2
        %v2119 = vmul.f32 %v1781, 0.2
        %v2120 = vmul.f32 %v1972, 0.2
        %v2121 = vmul.f32 %v1974, 0.2
        %v2122 = vmul.f32 %v1783, 0.2
        %v2123 = vmul.f32 %v1785, 0.2
        %v2124 = vmul.f32 %v1976, 0.2
        %v2125 = vmul.f32 %v1978, 0.2
        %v2126 = vmul.f32 %v1789, 0.2
        %v2127 = vmul.f32 %v1791, 0.2
        %v2128 = vmul.f32 %v1982, 0.2
        %v2129 = vmul.f32 %v1984, 0.2
        %v2130 = vmul.f32 %v1793, 0.2
        %v2131 = vmul.f32 %v1795, 0.2
        %v2132 = vmul.f32 %v1986, 0.2
        %v2133 = vmul.f32 %v1988, 0.2
        %v2134 = vmul.f32 %v1799, 0.2
        %v2135 = vmul.f32 %v1801, 0.2
        %v2136 = vmul.f32 %v1992, 0.2
        %v2137 = vmul.f32 %v1994, 0.2
        %v2138 = vmul.f32 %v1803, 0.2
        %v2139 = vmul.f32 %v1805, 0.2
        %v2140 = vmul.f32 %v1996, 0.2
        %v2141 = vmul.f32 %v1998, 0.2
        %v2142 = vmul.f32 %v1809, 0.2
        %v2143 = vmul.f32 %v1811, 0.2
        %v2144 = vmul.f32 %v2002, 0.2
        %v2145 = vmul.f32 %v2004, 0.2
        %v2146 = vmul.f32 %v1813, 0.2
        %v2147 = vmul.f32 %v1815, 0.2
        %v2148 = vmul.f32 %v2006, 0.2
        %v2149 = vmul.f32 %v2008, 0.2
        %v2150 = vmul.f32 %v1819, 0.2
        %v2151 = vmul.f32 %v1821, 0.2
        %v2152 = vmul.f32 %v2012, 0.2
        %v2153 = vmul.f32 %v2014, 0.2
        %v2154 = vmul.f32 %v1823, 0.2
        %v2155 = vmul.f32 %v1825, 0.2
        %v2156 = vmul.f32 %v2016, 0.2
        %v2157 = vmul.f32 %v2018, 0.2
        %v2158 = vmul.f32 %v1829, 0.2
        %v2159 = vmul.f32 %v1831, 0.2
        %v2160 = vmul.f32 %v2022, 0.2
        %v2161 = vmul.f32 %v2024, 0.2
        %v2162 = vmul.f32 %v1833, 0.2
        %v2163 = vmul.f32 %v1835, 0.2
        %v2164 = vmul.f32 %v2026, 0.2
        %v2165 = vmul.f32 %v2028, 0.2
        %v2166 = vmul.f32 %v1839, 0.2
        %v2167 = vmul.f32 %v1841, 0.2
        %v2168 = vmul.f32 %v2032, 0.2
        %v2169 = vmul.f32 %v2034, 0.2
        %v2170 = vmul.f32 %v1843, 0.2
        %v2171 = vmul.f32 %v1845, 0.2
        %v2172 = vmul.f32 %v2036, 0.2
        %v2173 = vmul.f32 %v2038, 0.2
        %v2174 = vmul.f32 %v1849, 0.2
        %v2175 = vmul.f32 %v1851, 0.2
        %v2176 = vmul.f32 %v2042, 0.2
        %v2177 = vmul.f32 %v2044, 0.2
        %v2178 = vmul.f32 %v1853, 0.2
        %v2179 = vmul.f32 %v1855, 0.2
        %v2180 = vmul.f32 %v2046, 0.2
        %v2181 = vmul.f32 %v2048, 0.2
        %v2182 = vmul.f32 %v1859, 0.2
        %v2183 = vmul.f32 %v1861, 0.2
        %v2184 = vmul.f32 %v2052, 0.2
        %v2185 = vmul.f32 %v2054, 0.2
        %v2186 = vmul.f32 %v1863, 0.2
        %v2187 = vmul.f32 %v1865, 0.2
        %v2188 = vmul.f32 %v2056, 0.2
        %v2189 = vmul.f32 %v2058, 0.2
        %v2190 = vmul.f32 %v1869, 0.2
        %v2191 = vmul.f32 %v1871, 0.2
        %v2192 = vmul.f32 %v2062, 0.2
        %v2193 = vmul.f32 %v2064, 0.2
        %v2194 = vmul.f32 %v1873, 0.2
        %v2195 = vmul.f32 %v1875, 0.2
        %v2196 = vmul.f32 %v2066, 0.2
        %v2197 = vmul.f32 %v2068, 0.2
        %v2198 = vmax.f32 %v1719, %v2070
        %v2199 = vmax.f32 %v1721, %v2071
        %v2200 = vmax.f32 %v1912, %v2072
        %v2201 = vmax.f32 %v1914, %v2073
        %v2202 = vmax.f32 %v1723, %v2074
        %v2203 = vmax.f32 %v1725, %v2075
        %v2204 = vmax.f32 %v1916, %v2076
        %v2205 = vmax.f32 %v1918, %v2077
        %v2206 = vmax.f32 %v1729, %v2078
        %v2207 = vmax.f32 %v1731, %v2079
        %v2208 = vmax.f32 %v1922, %v2080
        %v2209 = vmax.f32 %v1924, %v2081
        %v2210 = vmax.f32 %v1733, %v2082
        %v2211 = vmax.f32 %v1735, %v2083
        %v2212 = vmax.f32 %v1926, %v2084
        %v2213 = vmax.f32 %v1928, %v2085
        %v2214 = vmax.f32 %v1739, %v2086
        %v2215 = vmax.f32 %v1741, %v2087
        %v2216 = vmax.f32 %v1932, %v2088
        %v2217 = vmax.f32 %v1934, %v2089
        %v2218 = vmax.f32 %v1743, %v2090
        %v2219 = vmax.f32 %v1745, %v2091
        %v2220 = vmax.f32 %v1936, %v2092
        %v2221 = vmax.f32 %v1938, %v2093
        %v2222 = vmax.f32 %v1749, %v2094
        %v2223 = vmax.f32 %v1751, %v2095
        %v2224 = vmax.f32 %v1942, %v2096
        %v2225 = vmax.f32 %v1944, %v2097
        %v2226 = vmax.f32 %v1753, %v2098
        %v2227 = vmax.f32 %v1755, %v2099
        %v2228 = vmax.f32 %v1946, %v2100
        %v2229 = vmax.f32 %v1948, %v2101
        %v2230 = vmax.f32 %v1759, %v2102
        %v2231 = vmax.f32 %v1761, %v2103
        %v2232 = vmax.f32 %v1952, %v2104
        %v2233 = vmax.f32 %v1954, %v2105
        %v2234 = vmax.f32 %v1763, %v2106
        %v2235 = vmax.f32 %v1765, %v2107
        %v2236 = vmax.f32 %v1956, %v2108
        %v2237 = vmax.f32 %v1958, %v2109
        %v2238 = vmax.f32 %v1769, %v2110
        %v2239 = vmax.f32 %v1771, %v2111
        %v2240 = vmax.f32 %v1962, %v2112
        %v2241 = vmax.f32 %v1964, %v2113
        %v2242 = vmax.f32 %v1773, %v2114
        %v2243 = vmax.f32 %v1775, %v2115
        %v2244 = vmax.f32 %v1966, %v2116
        %v2245 = vmax.f32 %v1968, %v2117
        %v2246 = vmax.f32 %v1779, %v2118
        %v2247 = vmax.f32 %v1781, %v2119
        %v2248 = vmax.f32 %v1972, %v2120
        %v2249 = vmax.f32 %v1974, %v2121
        %v2250 = vmax.f32 %v1783, %v2122
        %v2251 = vmax.f32 %v1785, %v2123
        %v2252 = vmax.f32 %v1976, %v2124
        %v2253 = vmax.f32 %v1978, %v2125
        %v2254 = vmax.f32 %v1789, %v2126
        %v2255 = vmax.f32 %v1791, %v2127
        %v2256 = vmax.f32 %v1982, %v2128
        %v2257 = vmax.f32 %v1984, %v2129
        %v2258 = vmax.f32 %v1793, %v2130
        %v2259 = vmax.f32 %v1795, %v2131
        %v2260 = vmax.f32 %v1986, %v2132
        %v2261 = vmax.f32 %v1988, %v2133
        %v2262 = vmax.f32 %v1799, %v2134
        %v2263 = vmax.f32 %v1801, %v2135
        %v2264 = vmax.f32 %v1992, %v2136
        %v2265 = vmax.f32 %v1994, %v2137
        %v2266 = vmax.f32 %v1803, %v2138
        %v2267 = vmax.f32 %v1805, %v2139
        %v2268 = vmax.f32 %v1996, %v2140
        %v2269 = vmax.f32 %v1998, %v2141
        %v2270 = vmax.f32 %v1809, %v2142
        %v2271 = vmax.f32 %v1811, %v2143
        %v2272 = vmax.f32 %v2002, %v2144
        %v2273 = vmax.f32 %v2004, %v2145
        %v2274 = vmax.f32 %v1813, %v2146
        %v2275 = vmax.f32 %v1815, %v2147
        %v2276 = vmax.f32 %v2006, %v2148
        %v2277 = vmax.f32 %v2008, %v2149
        %v2278 = vmax.f32 %v1819, %v2150
        %v2279 = vmax.f32 %v1821, %v2151
        %v2280 = vmax.f32 %v2012, %v2152
        %v2281 = vmax.f32 %v2014, %v2153
        %v2282 = vmax.f32 %v1823, %v2154
        %v2283 = vmax.f32 %v1825, %v2155
        %v2284 = vmax.f32 %v2016, %v2156
        %v2285 = vmax.f32 %v2018, %v2157
        %v2286 = vmax.f32 %v1829, %v2158
        %v2287 = vmax.f32 %v1831, %v2159
        %v2288 = vmax.f32 %v2022, %v2160
        %v2289 = vmax.f32 %v2024, %v2161
        %v2290 = vmax.f32 %v1833, %v2162
        %v2291 = vmax.f32 %v1835, %v2163
        %v2292 = vmax.f32 %v2026, %v2164
        %v2293 = vmax.f32 %v2028, %v2165
        %v2294 = vmax.f32 %v1839, %v2166
        %v2295 = vmax.f32 %v1841, %v2167
        %v2296 = vmax.f32 %v2032, %v2168
        %v2297 = vmax.f32 %v2034, %v2169
        %v2298 = vmax.f32 %v1843, %v2170
        %v2299 = vmax.f32 %v1845, %v2171
        %v2300 = vmax.f32 %v2036, %v2172
        %v2301 = vmax.f32 %v2038, %v2173
        %v2302 = vmax.f32 %v1849, %v2174
        %v2303 = vmax.f32 %v1851, %v2175
        %v2304 = vmax.f32 %v2042, %v2176
        %v2305 = vmax.f32 %v2044, %v2177
        %v2306 = vmax.f32 %v1853, %v2178
        %v2307 = vmax.f32 %v1855, %v2179
        %v2308 = vmax.f32 %v2046, %v2180
        %v2309 = vmax.f32 %v2048, %v2181
        %v2310 = vmax.f32 %v1859, %v2182
        %v2311 = vmax.f32 %v1861, %v2183
        %v2312 = vmax.f32 %v2052, %v2184
        %v2313 = vmax.f32 %v2054, %v2185
        %v2314 = vmax.f32 %v1863, %v2186
        %v2315 = vmax.f32 %v1865, %v2187
        %v2316 = vmax.f32 %v2056, %v2188
        %v2317 = vmax.f32 %v2058, %v2189
        %v2318 = vmax.f32 %v1869, %v2190
        %v2319 = vmax.f32 %v1871, %v2191
        %v2320 = vmax.f32 %v2062, %v2192
        %v2321 = vmax.f32 %v2064, %v2193
        %v2322 = vmax.f32 %v1873, %v2194
        %v2323 = vmax.f32 %v1875, %v2195
        %v2324 = vmax.f32 %v2066, %v2196
        %v2325 = vmax.f32 %v2068, %v2197
        %v2326 = vpack.c.bf16 %v2202, %v2198
        %v2327 = vpack.c.bf16 %v2203, %v2199
        %v2328 = vpack.c.bf16 %v2204, %v2200
        %v2329 = vpack.c.bf16 %v2205, %v2201
        %v2330 = vpack.c.bf16 %v2210, %v2206
        %v2331 = vpack.c.bf16 %v2211, %v2207
        %v2332 = vpack.c.bf16 %v2212, %v2208
        %v2333 = vpack.c.bf16 %v2213, %v2209
        %v2334 = vpack.c.bf16 %v2218, %v2214
        %v2335 = vpack.c.bf16 %v2219, %v2215
        %v2336 = vpack.c.bf16 %v2220, %v2216
        %v2337 = vpack.c.bf16 %v2221, %v2217
        %v2338 = vpack.c.bf16 %v2226, %v2222
        %v2339 = vpack.c.bf16 %v2227, %v2223
        %v2340 = vpack.c.bf16 %v2228, %v2224
        %v2341 = vpack.c.bf16 %v2229, %v2225
        %v2342 = vpack.c.bf16 %v2234, %v2230
        %v2343 = vpack.c.bf16 %v2235, %v2231
        %v2344 = vpack.c.bf16 %v2236, %v2232
        %v2345 = vpack.c.bf16 %v2237, %v2233
        %v2346 = vpack.c.bf16 %v2242, %v2238
        %v2347 = vpack.c.bf16 %v2243, %v2239
        %v2348 = vpack.c.bf16 %v2244, %v2240
        %v2349 = vpack.c.bf16 %v2245, %v2241
        %v2350 = vpack.c.bf16 %v2250, %v2246
        %v2351 = vpack.c.bf16 %v2251, %v2247
        %v2352 = vpack.c.bf16 %v2252, %v2248
        %v2353 = vpack.c.bf16 %v2253, %v2249
        %v2354 = vpack.c.bf16 %v2258, %v2254
        %v2355 = vpack.c.bf16 %v2259, %v2255
        %v2356 = vpack.c.bf16 %v2260, %v2256
        %v2357 = vpack.c.bf16 %v2261, %v2257
        %v2358 = vpack.c.bf16 %v2266, %v2262
        %v2359 = vpack.c.bf16 %v2267, %v2263
        %v2360 = vpack.c.bf16 %v2268, %v2264
        %v2361 = vpack.c.bf16 %v2269, %v2265
        %v2362 = vpack.c.bf16 %v2274, %v2270
        %v2363 = vpack.c.bf16 %v2275, %v2271
        %v2364 = vpack.c.bf16 %v2276, %v2272
        %v2365 = vpack.c.bf16 %v2277, %v2273
        %v2366 = vpack.c.bf16 %v2282, %v2278
        %v2367 = vpack.c.bf16 %v2283, %v2279
        %v2368 = vpack.c.bf16 %v2284, %v2280
        %v2369 = vpack.c.bf16 %v2285, %v2281
        %v2370 = vpack.c.bf16 %v2290, %v2286
        %v2371 = vpack.c.bf16 %v2291, %v2287
        %v2372 = vpack.c.bf16 %v2292, %v2288
        %v2373 = vpack.c.bf16 %v2293, %v2289
        %v2374 = vpack.c.bf16 %v2298, %v2294
        %v2375 = vpack.c.bf16 %v2299, %v2295
        %v2376 = vpack.c.bf16 %v2300, %v2296
        %v2377 = vpack.c.bf16 %v2301, %v2297
        %v2378 = vpack.c.bf16 %v2306, %v2302
        %v2379 = vpack.c.bf16 %v2307, %v2303
        %v2380 = vpack.c.bf16 %v2308, %v2304
        %v2381 = vpack.c.bf16 %v2309, %v2305
        %v2382 = vpack.c.bf16 %v2314, %v2310
        %v2383 = vpack.c.bf16 %v2315, %v2311
        %v2384 = vpack.c.bf16 %v2316, %v2312
        %v2385 = vpack.c.bf16 %v2317, %v2313
        %v2386 = vpack.c.bf16 %v2322, %v2318
        %v2387 = vpack.c.bf16 %v2323, %v2319
        %v2388 = vpack.c.bf16 %v2324, %v2320
        %v2389 = vpack.c.bf16 %v2325, %v2321
        %v2454 = vunpack.c.l.b16 %v2326
        %v2455 = vunpack.c.l.b16 %v2327
        %v2456 = vunpack.c.l.b16 %v2328
        %v2457 = vunpack.c.l.b16 %v2329
        %v2458 = vunpack.c.h.b16 %v2326
        %v2459 = vunpack.c.h.b16 %v2327
        %v2460 = vunpack.c.h.b16 %v2328
        %v2461 = vunpack.c.h.b16 %v2329
        %v2462 = vunpack.c.l.b16 %v2330
        %v2463 = vunpack.c.l.b16 %v2331
        %v2464 = vunpack.c.l.b16 %v2332
        %v2465 = vunpack.c.l.b16 %v2333
        %v2466 = vunpack.c.h.b16 %v2330
        %v2467 = vunpack.c.h.b16 %v2331
        %v2468 = vunpack.c.h.b16 %v2332
        %v2469 = vunpack.c.h.b16 %v2333
        %v2470 = vunpack.c.l.b16 %v2334
        %v2471 = vunpack.c.l.b16 %v2335
        %v2472 = vunpack.c.l.b16 %v2336
        %v2473 = vunpack.c.l.b16 %v2337
        %v2474 = vunpack.c.h.b16 %v2334
        %v2475 = vunpack.c.h.b16 %v2335
        %v2476 = vunpack.c.h.b16 %v2336
        %v2477 = vunpack.c.h.b16 %v2337
        %v2478 = vunpack.c.l.b16 %v2338
        %v2479 = vunpack.c.l.b16 %v2339
        %v2480 = vunpack.c.l.b16 %v2340
        %v2481 = vunpack.c.l.b16 %v2341
        %v2482 = vunpack.c.h.b16 %v2338
        %v2483 = vunpack.c.h.b16 %v2339
        %v2484 = vunpack.c.h.b16 %v2340
        %v2485 = vunpack.c.h.b16 %v2341
        %v2486 = vunpack.c.l.b16 %v2342
        %v2487 = vunpack.c.l.b16 %v2343
        %v2488 = vunpack.c.l.b16 %v2344
        %v2489 = vunpack.c.l.b16 %v2345
        %v2490 = vunpack.c.h.b16 %v2342
        %v2491 = vunpack.c.h.b16 %v2343
        %v2492 = vunpack.c.h.b16 %v2344
        %v2493 = vunpack.c.h.b16 %v2345
        %v2494 = vunpack.c.l.b16 %v2346
        %v2495 = vunpack.c.l.b16 %v2347
        %v2496 = vunpack.c.l.b16 %v2348
        %v2497 = vunpack.c.l.b16 %v2349
        %v2498 = vunpack.c.h.b16 %v2346
        %v2499 = vunpack.c.h.b16 %v2347
        %v2500 = vunpack.c.h.b16 %v2348
        %v2501 = vunpack.c.h.b16 %v2349
        %v2502 = vunpack.c.l.b16 %v2350
        %v2503 = vunpack.c.l.b16 %v2351
        %v2504 = vunpack.c.l.b16 %v2352
        %v2505 = vunpack.c.l.b16 %v2353
        %v2506 = vunpack.c.h.b16 %v2350
        %v2507 = vunpack.c.h.b16 %v2351
        %v2508 = vunpack.c.h.b16 %v2352
        %v2509 = vunpack.c.h.b16 %v2353
        %v2510 = vunpack.c.l.b16 %v2354
        %v2511 = vunpack.c.l.b16 %v2355
        %v2512 = vunpack.c.l.b16 %v2356
        %v2513 = vunpack.c.l.b16 %v2357
        %v2514 = vunpack.c.h.b16 %v2354
        %v2515 = vunpack.c.h.b16 %v2355
        %v2516 = vunpack.c.h.b16 %v2356
        %v2517 = vunpack.c.h.b16 %v2357
        %v2518 = vunpack.c.l.b16 %v2358
        %v2519 = vunpack.c.l.b16 %v2359
        %v2520 = vunpack.c.l.b16 %v2360
        %v2521 = vunpack.c.l.b16 %v2361
        %v2522 = vunpack.c.h.b16 %v2358
        %v2523 = vunpack.c.h.b16 %v2359
        %v2524 = vunpack.c.h.b16 %v2360
        %v2525 = vunpack.c.h.b16 %v2361
        %v2526 = vunpack.c.l.b16 %v2362
        %v2527 = vunpack.c.l.b16 %v2363
        %v2528 = vunpack.c.l.b16 %v2364
        %v2529 = vunpack.c.l.b16 %v2365
        %v2530 = vunpack.c.h.b16 %v2362
        %v2531 = vunpack.c.h.b16 %v2363
        %v2532 = vunpack.c.h.b16 %v2364
        %v2533 = vunpack.c.h.b16 %v2365
        %v2534 = vunpack.c.l.b16 %v2366
        %v2535 = vunpack.c.l.b16 %v2367
        %v2536 = vunpack.c.l.b16 %v2368
        %v2537 = vunpack.c.l.b16 %v2369
        %v2538 = vunpack.c.h.b16 %v2366
        %v2539 = vunpack.c.h.b16 %v2367
        %v2540 = vunpack.c.h.b16 %v2368
        %v2541 = vunpack.c.h.b16 %v2369
        %v2542 = vunpack.c.l.b16 %v2370
        %v2543 = vunpack.c.l.b16 %v2371
        %v2544 = vunpack.c.l.b16 %v2372
        %v2545 = vunpack.c.l.b16 %v2373
        %v2546 = vunpack.c.h.b16 %v2370
        %v2547 = vunpack.c.h.b16 %v2371
        %v2548 = vunpack.c.h.b16 %v2372
        %v2549 = vunpack.c.h.b16 %v2373
        %v2550 = vunpack.c.l.b16 %v2374
        %v2551 = vunpack.c.l.b16 %v2375
        %v2552 = vunpack.c.l.b16 %v2376
        %v2553 = vunpack.c.l.b16 %v2377
        %v2554 = vunpack.c.h.b16 %v2374
        %v2555 = vunpack.c.h.b16 %v2375
        %v2556 = vunpack.c.h.b16 %v2376
        %v2557 = vunpack.c.h.b16 %v2377
        %v2558 = vunpack.c.l.b16 %v2378
        %v2559 = vunpack.c.l.b16 %v2379
        %v2560 = vunpack.c.l.b16 %v2380
        %v2561 = vunpack.c.l.b16 %v2381
        %v2562 = vunpack.c.h.b16 %v2378
        %v2563 = vunpack.c.h.b16 %v2379
        %v2564 = vunpack.c.h.b16 %v2380
        %v2565 = vunpack.c.h.b16 %v2381
        %v2566 = vunpack.c.l.b16 %v2382
        %v2567 = vunpack.c.l.b16 %v2383
        %v2568 = vunpack.c.l.b16 %v2384
        %v2569 = vunpack.c.l.b16 %v2385
        %v2570 = vunpack.c.h.b16 %v2382
        %v2571 = vunpack.c.h.b16 %v2383
        %v2572 = vunpack.c.h.b16 %v2384
        %v2573 = vunpack.c.h.b16 %v2385
        %v2574 = vunpack.c.l.b16 %v2386
        %v2575 = vunpack.c.l.b16 %v2387
        %v2576 = vunpack.c.l.b16 %v2388
        %v2577 = vunpack.c.l.b16 %v2389
        %v2578 = vunpack.c.h.b16 %v2386
        %v2579 = vunpack.c.h.b16 %v2387
        %v2580 = vunpack.c.h.b16 %v2388
        %v2581 = vunpack.c.h.b16 %v2389
        %v2582 = vpack.c.b16 %v2455, %v2454
        %v2583 = vpack.c.b16 %v2457, %v2456
        %v2584 = vpack.c.b16 %v2459, %v2458
        %v2585 = vpack.c.b16 %v2461, %v2460
        %v2586 = vpack.c.b16 %v2463, %v2462
        %v2587 = vpack.c.b16 %v2465, %v2464
        %v2588 = vpack.c.b16 %v2467, %v2466
        %v2589 = vpack.c.b16 %v2469, %v2468
        %v2590 = vpack.c.b16 %v2471, %v2470
        %v2591 = vpack.c.b16 %v2473, %v2472
        %v2592 = vpack.c.b16 %v2475, %v2474
        %v2593 = vpack.c.b16 %v2477, %v2476
        %v2594 = vpack.c.b16 %v2479, %v2478
        %v2595 = vpack.c.b16 %v2481, %v2480
        %v2596 = vpack.c.b16 %v2483, %v2482
        %v2597 = vpack.c.b16 %v2485, %v2484
        %v2598 = vpack.c.b16 %v2487, %v2486
        %v2599 = vpack.c.b16 %v2489, %v2488
        %v2600 = vpack.c.b16 %v2491, %v2490
        %v2601 = vpack.c.b16 %v2493, %v2492
        %v2602 = vpack.c.b16 %v2495, %v2494
        %v2603 = vpack.c.b16 %v2497, %v2496
        %v2604 = vpack.c.b16 %v2499, %v2498
        %v2605 = vpack.c.b16 %v2501, %v2500
        %v2606 = vpack.c.b16 %v2503, %v2502
        %v2607 = vpack.c.b16 %v2505, %v2504
        %v2608 = vpack.c.b16 %v2507, %v2506
        %v2609 = vpack.c.b16 %v2509, %v2508
        %v2610 = vpack.c.b16 %v2511, %v2510
        %v2611 = vpack.c.b16 %v2513, %v2512
        %v2612 = vpack.c.b16 %v2515, %v2514
        %v2613 = vpack.c.b16 %v2517, %v2516
        %v2614 = vpack.c.b16 %v2519, %v2518
        %v2615 = vpack.c.b16 %v2521, %v2520
        %v2616 = vpack.c.b16 %v2523, %v2522
        %v2617 = vpack.c.b16 %v2525, %v2524
        %v2618 = vpack.c.b16 %v2527, %v2526
        %v2619 = vpack.c.b16 %v2529, %v2528
        %v2620 = vpack.c.b16 %v2531, %v2530
        %v2621 = vpack.c.b16 %v2533, %v2532
        %v2622 = vpack.c.b16 %v2535, %v2534
        %v2623 = vpack.c.b16 %v2537, %v2536
        %v2624 = vpack.c.b16 %v2539, %v2538
        %v2625 = vpack.c.b16 %v2541, %v2540
        %v2626 = vpack.c.b16 %v2543, %v2542
        %v2627 = vpack.c.b16 %v2545, %v2544
        %v2628 = vpack.c.b16 %v2547, %v2546
        %v2629 = vpack.c.b16 %v2549, %v2548
        %v2630 = vpack.c.b16 %v2551, %v2550
        %v2631 = vpack.c.b16 %v2553, %v2552
        %v2632 = vpack.c.b16 %v2555, %v2554
        %v2633 = vpack.c.b16 %v2557, %v2556
        %v2634 = vpack.c.b16 %v2559, %v2558
        %v2635 = vpack.c.b16 %v2561, %v2560
        %v2636 = vpack.c.b16 %v2563, %v2562
        %v2637 = vpack.c.b16 %v2565, %v2564
        %v2638 = vpack.c.b16 %v2567, %v2566
        %v2639 = vpack.c.b16 %v2569, %v2568
        %v2640 = vpack.c.b16 %v2571, %v2570
        %v2641 = vpack.c.b16 %v2573, %v2572
        %v2642 = vpack.c.b16 %v2575, %v2574
        %v2643 = vpack.c.b16 %v2577, %v2576
        %v2644 = vpack.c.b16 %v2579, %v2578
        %v2645 = vpack.c.b16 %v2581, %v2580
        %2710 = vst [vmem:[#allocation2 + $0x200] sm:$0xff] %v2582
        %2711 = vst [vmem:[#allocation2 + $0x208] sm:$0xff] %v2583
        %2712 = vst [vmem:[#allocation2 + $0x210] sm:$0xff] %v2584
        %2713 = vst [vmem:[#allocation2 + $0x218] sm:$0xff] %v2585
        %2714 = vst [vmem:[#allocation2 + $0x220] sm:$0xff] %v2586
        %2715 = vst [vmem:[#allocation2 + $0x228] sm:$0xff] %v2587
        %2716 = vst [vmem:[#allocation2 + $0x230] sm:$0xff] %v2588
        %2717 = vst [vmem:[#allocation2 + $0x238] sm:$0xff] %v2589
        %2718 = vst [vmem:[#allocation2 + $0x240] sm:$0xff] %v2590
        %2719 = vst [vmem:[#allocation2 + $0x248] sm:$0xff] %v2591
        %2720 = vst [vmem:[#allocation2 + $0x250] sm:$0xff] %v2592
        %2721 = vst [vmem:[#allocation2 + $0x258] sm:$0xff] %v2593
        %2722 = vst [vmem:[#allocation2 + $0x260] sm:$0xff] %v2594
        %2723 = vst [vmem:[#allocation2 + $0x268] sm:$0xff] %v2595
        %2724 = vst [vmem:[#allocation2 + $0x270] sm:$0xff] %v2596
        %2725 = vst [vmem:[#allocation2 + $0x278] sm:$0xff] %v2597
        %2726 = vst [vmem:[#allocation2 + $0x280] sm:$0xff] %v2598
        %2727 = vst [vmem:[#allocation2 + $0x288] sm:$0xff] %v2599
        %2728 = vst [vmem:[#allocation2 + $0x290] sm:$0xff] %v2600
        %2729 = vst [vmem:[#allocation2 + $0x298] sm:$0xff] %v2601
        %2730 = vst [vmem:[#allocation2 + $0x2a0] sm:$0xff] %v2602
        %2731 = vst [vmem:[#allocation2 + $0x2a8] sm:$0xff] %v2603
        %2732 = vst [vmem:[#allocation2 + $0x2b0] sm:$0xff] %v2604
        %2733 = vst [vmem:[#allocation2 + $0x2b8] sm:$0xff] %v2605
        %2734 = vst [vmem:[#allocation2 + $0x2c0] sm:$0xff] %v2606
        %2735 = vst [vmem:[#allocation2 + $0x2c8] sm:$0xff] %v2607
        %2736 = vst [vmem:[#allocation2 + $0x2d0] sm:$0xff] %v2608
        %2737 = vst [vmem:[#allocation2 + $0x2d8] sm:$0xff] %v2609
        %2738 = vst [vmem:[#allocation2 + $0x2e0] sm:$0xff] %v2610
        %2739 = vst [vmem:[#allocation2 + $0x2e8] sm:$0xff] %v2611
        %2740 = vst [vmem:[#allocation2 + $0x2f0] sm:$0xff] %v2612
        %2741 = vst [vmem:[#allocation2 + $0x2f8] sm:$0xff] %v2613
        %2742 = vst [vmem:[#allocation2 + $0x300] sm:$0xff] %v2614
        %2743 = vst [vmem:[#allocation2 + $0x308] sm:$0xff] %v2615
        %2744 = vst [vmem:[#allocation2 + $0x310] sm:$0xff] %v2616
        %2745 = vst [vmem:[#allocation2 + $0x318] sm:$0xff] %v2617
        %2746 = vst [vmem:[#allocation2 + $0x320] sm:$0xff] %v2618
        %2747 = vst [vmem:[#allocation2 + $0x328] sm:$0xff] %v2619
        %2748 = vst [vmem:[#allocation2 + $0x330] sm:$0xff] %v2620
        %2749 = vst [vmem:[#allocation2 + $0x338] sm:$0xff] %v2621
        %2750 = vst [vmem:[#allocation2 + $0x340] sm:$0xff] %v2622
        %2751 = vst [vmem:[#allocation2 + $0x348] sm:$0xff] %v2623
        %2752 = vst [vmem:[#allocation2 + $0x350] sm:$0xff] %v2624
        %2753 = vst [vmem:[#allocation2 + $0x358] sm:$0xff] %v2625
        %2754 = vst [vmem:[#allocation2 + $0x360] sm:$0xff] %v2626
        %2755 = vst [vmem:[#allocation2 + $0x368] sm:$0xff] %v2627
        %2756 = vst [vmem:[#allocation2 + $0x370] sm:$0xff] %v2628
        %2757 = vst [vmem:[#allocation2 + $0x378] sm:$0xff] %v2629
        %2758 = vst [vmem:[#allocation2 + $0x380] sm:$0xff] %v2630
        %2759 = vst [vmem:[#allocation2 + $0x388] sm:$0xff] %v2631
        %2760 = vst [vmem:[#allocation2 + $0x390] sm:$0xff] %v2632
        %2761 = vst [vmem:[#allocation2 + $0x398] sm:$0xff] %v2633
        %2762 = vst [vmem:[#allocation2 + $0x3a0] sm:$0xff] %v2634
        %2763 = vst [vmem:[#allocation2 + $0x3a8] sm:$0xff] %v2635
        %2764 = vst [vmem:[#allocation2 + $0x3b0] sm:$0xff] %v2636
        %2765 = vst [vmem:[#allocation2 + $0x3b8] sm:$0xff] %v2637
        %2766 = vst [vmem:[#allocation2 + $0x3c0] sm:$0xff] %v2638
        %2767 = vst [vmem:[#allocation2 + $0x3c8] sm:$0xff] %v2639
        %2768 = vst [vmem:[#allocation2 + $0x3d0] sm:$0xff] %v2640
        %2769 = vst [vmem:[#allocation2 + $0x3d8] sm:$0xff] %v2641
        %2770 = vst [vmem:[#allocation2 + $0x3e0] sm:$0xff] %v2642
        %2771 = vst [vmem:[#allocation2 + $0x3e8] sm:$0xff] %v2643
        %2772 = vst [vmem:[#allocation2 + $0x3f0] sm:$0xff] %v2644
        %2773 = vst [vmem:[#allocation2 + $0x3f8] sm:$0xff] %v2645
        %v2774 = vld [vmem:[#allocation2] sm:$0xff]
        %v2775 = vld [vmem:[#allocation2 + $0x8] sm:$0xff]
        %v2776 = vld [vmem:[#allocation2 + $0x10] sm:$0xff]
        %v2777 = vld [vmem:[#allocation2 + $0x18] sm:$0xff]
        %v2778 = vld [vmem:[#allocation2 + $0x20] sm:$0xff]
        %v2779 = vld [vmem:[#allocation2 + $0x28] sm:$0xff]
        %v2780 = vld [vmem:[#allocation2 + $0x30] sm:$0xff]
        %v2781 = vld [vmem:[#allocation2 + $0x38] sm:$0xff]
        %v2782 = vld [vmem:[#allocation2 + $0x40] sm:$0xff]
        %v2783 = vld [vmem:[#allocation2 + $0x48] sm:$0xff]
        %v2784 = vld [vmem:[#allocation2 + $0x50] sm:$0xff]
        %v2785 = vld [vmem:[#allocation2 + $0x58] sm:$0xff]
        %v2786 = vld [vmem:[#allocation2 + $0x60] sm:$0xff]
        %v2787 = vld [vmem:[#allocation2 + $0x68] sm:$0xff]
        %v2788 = vld [vmem:[#allocation2 + $0x70] sm:$0xff]
        %v2789 = vld [vmem:[#allocation2 + $0x78] sm:$0xff]
        %v2790 = vld [vmem:[#allocation2 + $0x80] sm:$0xff]
        %v2791 = vld [vmem:[#allocation2 + $0x88] sm:$0xff]
        %v2792 = vld [vmem:[#allocation2 + $0x90] sm:$0xff]
        %v2793 = vld [vmem:[#allocation2 + $0x98] sm:$0xff]
        %v2794 = vld [vmem:[#allocation2 + $0xa0] sm:$0xff]
        %v2795 = vld [vmem:[#allocation2 + $0xa8] sm:$0xff]
        %v2796 = vld [vmem:[#allocation2 + $0xb0] sm:$0xff]
        %v2797 = vld [vmem:[#allocation2 + $0xb8] sm:$0xff]
        %v2798 = vld [vmem:[#allocation2 + $0xc0] sm:$0xff]
        %v2799 = vld [vmem:[#allocation2 + $0xc8] sm:$0xff]
        %v2800 = vld [vmem:[#allocation2 + $0xd0] sm:$0xff]
        %v2801 = vld [vmem:[#allocation2 + $0xd8] sm:$0xff]
        %v2802 = vld [vmem:[#allocation2 + $0xe0] sm:$0xff]
        %v2803 = vld [vmem:[#allocation2 + $0xe8] sm:$0xff]
        %v2804 = vld [vmem:[#allocation2 + $0xf0] sm:$0xff]
        %v2805 = vld [vmem:[#allocation2 + $0xf8] sm:$0xff]
        %v2806 = vld [vmem:[#allocation2 + $0x100] sm:$0xff]
        %v2807 = vld [vmem:[#allocation2 + $0x108] sm:$0xff]
        %v2808 = vld [vmem:[#allocation2 + $0x110] sm:$0xff]
        %v2809 = vld [vmem:[#allocation2 + $0x118] sm:$0xff]
        %v2810 = vld [vmem:[#allocation2 + $0x120] sm:$0xff]
        %v2811 = vld [vmem:[#allocation2 + $0x128] sm:$0xff]
        %v2812 = vld [vmem:[#allocation2 + $0x130] sm:$0xff]
        %v2813 = vld [vmem:[#allocation2 + $0x138] sm:$0xff]
        %v2814 = vld [vmem:[#allocation2 + $0x140] sm:$0xff]
        %v2815 = vld [vmem:[#allocation2 + $0x148] sm:$0xff]
        %v2816 = vld [vmem:[#allocation2 + $0x150] sm:$0xff]
        %v2817 = vld [vmem:[#allocation2 + $0x158] sm:$0xff]
        %v2818 = vld [vmem:[#allocation2 + $0x160] sm:$0xff]
        %v2819 = vld [vmem:[#allocation2 + $0x168] sm:$0xff]
        %v2820 = vld [vmem:[#allocation2 + $0x170] sm:$0xff]
        %v2821 = vld [vmem:[#allocation2 + $0x178] sm:$0xff]
        %v2822 = vld [vmem:[#allocation2 + $0x180] sm:$0xff]
        %v2823 = vld [vmem:[#allocation2 + $0x188] sm:$0xff]
        %v2824 = vld [vmem:[#allocation2 + $0x190] sm:$0xff]
        %v2825 = vld [vmem:[#allocation2 + $0x198] sm:$0xff]
        %v2826 = vld [vmem:[#allocation2 + $0x1a0] sm:$0xff]
        %v2827 = vld [vmem:[#allocation2 + $0x1a8] sm:$0xff]
        %v2828 = vld [vmem:[#allocation2 + $0x1b0] sm:$0xff]
        %v2829 = vld [vmem:[#allocation2 + $0x1b8] sm:$0xff]
        %v2830 = vld [vmem:[#allocation2 + $0x1c0] sm:$0xff]
        %v2831 = vld [vmem:[#allocation2 + $0x1c8] sm:$0xff]
        %v2832 = vld [vmem:[#allocation2 + $0x1d0] sm:$0xff]
        %v2833 = vld [vmem:[#allocation2 + $0x1d8] sm:$0xff]
        %v2834 = vld [vmem:[#allocation2 + $0x1e0] sm:$0xff]
        %v2835 = vld [vmem:[#allocation2 + $0x1e8] sm:$0xff]
        %v2836 = vld [vmem:[#allocation2 + $0x1f0] sm:$0xff]
        %v2837 = vld [vmem:[#allocation2 + $0x1f8] sm:$0xff]
        %v2838 = vld [vmem:[#allocation2 + $0x200] sm:$0xff]
        %v2839 = vld [vmem:[#allocation2 + $0x208] sm:$0xff]
        %v2840 = vld [vmem:[#allocation2 + $0x210] sm:$0xff]
        %v2841 = vld [vmem:[#allocation2 + $0x218] sm:$0xff]
        %v2842 = vld [vmem:[#allocation2 + $0x220] sm:$0xff]
        %v2843 = vld [vmem:[#allocation2 + $0x228] sm:$0xff]
        %v2844 = vld [vmem:[#allocation2 + $0x230] sm:$0xff]
        %v2845 = vld [vmem:[#allocation2 + $0x238] sm:$0xff]
        %v2846 = vld [vmem:[#allocation2 + $0x240] sm:$0xff]
        %v2847 = vld [vmem:[#allocation2 + $0x248] sm:$0xff]
        %v2848 = vld [vmem:[#allocation2 + $0x250] sm:$0xff]
        %v2849 = vld [vmem:[#allocation2 + $0x258] sm:$0xff]
        %v2850 = vld [vmem:[#allocation2 + $0x260] sm:$0xff]
        %v2851 = vld [vmem:[#allocation2 + $0x268] sm:$0xff]
        %v2852 = vld [vmem:[#allocation2 + $0x270] sm:$0xff]
        %v2853 = vld [vmem:[#allocation2 + $0x278] sm:$0xff]
        %v2854 = vld [vmem:[#allocation2 + $0x280] sm:$0xff]
        %v2855 = vld [vmem:[#allocation2 + $0x288] sm:$0xff]
        %v2856 = vld [vmem:[#allocation2 + $0x290] sm:$0xff]
        %v2857 = vld [vmem:[#allocation2 + $0x298] sm:$0xff]
        %v2858 = vld [vmem:[#allocation2 + $0x2a0] sm:$0xff]
        %v2859 = vld [vmem:[#allocation2 + $0x2a8] sm:$0xff]
        %v2860 = vld [vmem:[#allocation2 + $0x2b0] sm:$0xff]
        %v2861 = vld [vmem:[#allocation2 + $0x2b8] sm:$0xff]
        %v2862 = vld [vmem:[#allocation2 + $0x2c0] sm:$0xff]
        %v2863 = vld [vmem:[#allocation2 + $0x2c8] sm:$0xff]
        %v2864 = vld [vmem:[#allocation2 + $0x2d0] sm:$0xff]
        %v2865 = vld [vmem:[#allocation2 + $0x2d8] sm:$0xff]
        %v2866 = vld [vmem:[#allocation2 + $0x2e0] sm:$0xff]
        %v2867 = vld [vmem:[#allocation2 + $0x2e8] sm:$0xff]
        %v2868 = vld [vmem:[#allocation2 + $0x2f0] sm:$0xff]
        %v2869 = vld [vmem:[#allocation2 + $0x2f8] sm:$0xff]
        %v2870 = vld [vmem:[#allocation2 + $0x300] sm:$0xff]
        %v2871 = vld [vmem:[#allocation2 + $0x308] sm:$0xff]
        %v2872 = vld [vmem:[#allocation2 + $0x310] sm:$0xff]
        %v2873 = vld [vmem:[#allocation2 + $0x318] sm:$0xff]
        %v2874 = vld [vmem:[#allocation2 + $0x320] sm:$0xff]
        %v2875 = vld [vmem:[#allocation2 + $0x328] sm:$0xff]
        %v2876 = vld [vmem:[#allocation2 + $0x330] sm:$0xff]
        %v2877 = vld [vmem:[#allocation2 + $0x338] sm:$0xff]
        %v2878 = vld [vmem:[#allocation2 + $0x340] sm:$0xff]
        %v2879 = vld [vmem:[#allocation2 + $0x348] sm:$0xff]
        %v2880 = vld [vmem:[#allocation2 + $0x350] sm:$0xff]
        %v2881 = vld [vmem:[#allocation2 + $0x358] sm:$0xff]
        %v2882 = vld [vmem:[#allocation2 + $0x360] sm:$0xff]
        %v2883 = vld [vmem:[#allocation2 + $0x368] sm:$0xff]
        %v2884 = vld [vmem:[#allocation2 + $0x370] sm:$0xff]
        %v2885 = vld [vmem:[#allocation2 + $0x378] sm:$0xff]
        %v2886 = vld [vmem:[#allocation2 + $0x380] sm:$0xff]
        %v2887 = vld [vmem:[#allocation2 + $0x388] sm:$0xff]
        %v2888 = vld [vmem:[#allocation2 + $0x390] sm:$0xff]
        %v2889 = vld [vmem:[#allocation2 + $0x398] sm:$0xff]
        %v2890 = vld [vmem:[#allocation2 + $0x3a0] sm:$0xff]
        %v2891 = vld [vmem:[#allocation2 + $0x3a8] sm:$0xff]
        %v2892 = vld [vmem:[#allocation2 + $0x3b0] sm:$0xff]
        %v2893 = vld [vmem:[#allocation2 + $0x3b8] sm:$0xff]
        %v2894 = vld [vmem:[#allocation2 + $0x3c0] sm:$0xff]
        %v2895 = vld [vmem:[#allocation2 + $0x3c8] sm:$0xff]
        %v2896 = vld [vmem:[#allocation2 + $0x3d0] sm:$0xff]
        %v2897 = vld [vmem:[#allocation2 + $0x3d8] sm:$0xff]
        %v2898 = vld [vmem:[#allocation2 + $0x3e0] sm:$0xff]
        %v2899 = vld [vmem:[#allocation2 + $0x3e8] sm:$0xff]
        %v2900 = vld [vmem:[#allocation2 + $0x3f0] sm:$0xff]
        %v2901 = vld [vmem:[#allocation2 + $0x3f8] sm:$0xff]
        %v2902 = vld [vmem:[%s4] sm:$0xff]
        %v2903 = vld [vmem:[%s4 + $0x8] sm:$0xff]
        %v2904 = vld [vmem:[%s4 + $0x10] sm:$0xff]
        %v2905 = vld [vmem:[%s4 + $0x18] sm:$0xff]
        %v2906 = vld [vmem:[%s4 + $0x20] sm:$0xff]
        %v2907 = vld [vmem:[%s4 + $0x28] sm:$0xff]
        %v2908 = vld [vmem:[%s4 + $0x30] sm:$0xff]
        %v2909 = vld [vmem:[%s4 + $0x38] sm:$0xff]
        %v2910 = vld [vmem:[%s4 + $0x40] sm:$0xff]
        %v2911 = vld [vmem:[%s4 + $0x48] sm:$0xff]
        %v2912 = vld [vmem:[%s4 + $0x50] sm:$0xff]
        %v2913 = vld [vmem:[%s4 + $0x58] sm:$0xff]
        %v2914 = vld [vmem:[%s4 + $0x60] sm:$0xff]
        %v2915 = vld [vmem:[%s4 + $0x68] sm:$0xff]
        %v2916 = vld [vmem:[%s4 + $0x70] sm:$0xff]
        %v2917 = vld [vmem:[%s4 + $0x78] sm:$0xff]
        %v2918 = vld [vmem:[%s4 + $0x80] sm:$0xff]
        %v2919 = vld [vmem:[%s4 + $0x88] sm:$0xff]
        %v2920 = vld [vmem:[%s4 + $0x90] sm:$0xff]
        %v2921 = vld [vmem:[%s4 + $0x98] sm:$0xff]
        %v2922 = vld [vmem:[%s4 + $0xa0] sm:$0xff]
        %v2923 = vld [vmem:[%s4 + $0xa8] sm:$0xff]
        %v2924 = vld [vmem:[%s4 + $0xb0] sm:$0xff]
        %v2925 = vld [vmem:[%s4 + $0xb8] sm:$0xff]
        %v2926 = vld [vmem:[%s4 + $0xc0] sm:$0xff]
        %v2927 = vld [vmem:[%s4 + $0xc8] sm:$0xff]
        %v2928 = vld [vmem:[%s4 + $0xd0] sm:$0xff]
        %v2929 = vld [vmem:[%s4 + $0xd8] sm:$0xff]
        %v2930 = vld [vmem:[%s4 + $0xe0] sm:$0xff]
        %v2931 = vld [vmem:[%s4 + $0xe8] sm:$0xff]
        %v2932 = vld [vmem:[%s4 + $0xf0] sm:$0xff]
        %v2933 = vld [vmem:[%s4 + $0xf8] sm:$0xff]
        %v2934 = vld [vmem:[%s4 + $0x100] sm:$0xff]
        %v2935 = vld [vmem:[%s4 + $0x108] sm:$0xff]
        %v2936 = vld [vmem:[%s4 + $0x110] sm:$0xff]
        %v2937 = vld [vmem:[%s4 + $0x118] sm:$0xff]
        %v2938 = vld [vmem:[%s4 + $0x120] sm:$0xff]
        %v2939 = vld [vmem:[%s4 + $0x128] sm:$0xff]
        %v2940 = vld [vmem:[%s4 + $0x130] sm:$0xff]
        %v2941 = vld [vmem:[%s4 + $0x138] sm:$0xff]
        %v2942 = vld [vmem:[%s4 + $0x140] sm:$0xff]
        %v2943 = vld [vmem:[%s4 + $0x148] sm:$0xff]
        %v2944 = vld [vmem:[%s4 + $0x150] sm:$0xff]
        %v2945 = vld [vmem:[%s4 + $0x158] sm:$0xff]
        %v2946 = vld [vmem:[%s4 + $0x160] sm:$0xff]
        %v2947 = vld [vmem:[%s4 + $0x168] sm:$0xff]
        %v2948 = vld [vmem:[%s4 + $0x170] sm:$0xff]
        %v2949 = vld [vmem:[%s4 + $0x178] sm:$0xff]
        %v2950 = vld [vmem:[%s4 + $0x180] sm:$0xff]
        %v2951 = vld [vmem:[%s4 + $0x188] sm:$0xff]
        %v2952 = vld [vmem:[%s4 + $0x190] sm:$0xff]
        %v2953 = vld [vmem:[%s4 + $0x198] sm:$0xff]
        %v2954 = vld [vmem:[%s4 + $0x1a0] sm:$0xff]
        %v2955 = vld [vmem:[%s4 + $0x1a8] sm:$0xff]
        %v2956 = vld [vmem:[%s4 + $0x1b0] sm:$0xff]
        %v2957 = vld [vmem:[%s4 + $0x1b8] sm:$0xff]
        %v2958 = vld [vmem:[%s4 + $0x1c0] sm:$0xff]
        %v2959 = vld [vmem:[%s4 + $0x1c8] sm:$0xff]
        %v2960 = vld [vmem:[%s4 + $0x1d0] sm:$0xff]
        %v2961 = vld [vmem:[%s4 + $0x1d8] sm:$0xff]
        %v2962 = vld [vmem:[%s4 + $0x1e0] sm:$0xff]
        %v2963 = vld [vmem:[%s4 + $0x1e8] sm:$0xff]
        %v2964 = vld [vmem:[%s4 + $0x1f0] sm:$0xff]
        %v2965 = vld [vmem:[%s4 + $0x1f8] sm:$0xff]
        %v2966 = vld [vmem:[%s5] sm:$0x3]
        %v2968 = vlaneseq
        %v2969 = vshrl.u32 %v2968, 7
        %v2970 = vsub.s32 0, %v2969
        %v2971 = vrot.slane %v2966, %v2970
        %v2972 = vlaneseq
        %v2973 = vshrl.u32 %v2972, 7
        %v2974 = vsub.s32 1, %v2973
        %v2975 = vrot.slane %v2966, %v2974
        %v3106 = vunpack.c.l.b16 %v2774
        %v3107 = vunpack.c.h.b16 %v2774
        %v3108 = vunpack.c.l.b16 %v2775
        %v3109 = vunpack.c.h.b16 %v2775
        %v3110 = vunpack.c.l.b16 %v2776
        %v3111 = vunpack.c.h.b16 %v2776
        %v3112 = vunpack.c.l.b16 %v2777
        %v3113 = vunpack.c.h.b16 %v2777
        %v3114 = vunpack.c.l.b16 %v2778
        %v3115 = vunpack.c.h.b16 %v2778
        %v3116 = vunpack.c.l.b16 %v2779
        %v3117 = vunpack.c.h.b16 %v2779
        %v3118 = vunpack.c.l.b16 %v2780
        %v3119 = vunpack.c.h.b16 %v2780
        %v3120 = vunpack.c.l.b16 %v2781
        %v3121 = vunpack.c.h.b16 %v2781
        %v3122 = vunpack.c.l.b16 %v2782
        %v3123 = vunpack.c.h.b16 %v2782
        %v3124 = vunpack.c.l.b16 %v2783
        %v3125 = vunpack.c.h.b16 %v2783
        %v3126 = vunpack.c.l.b16 %v2784
        %v3127 = vunpack.c.h.b16 %v2784
        %v3128 = vunpack.c.l.b16 %v2785
        %v3129 = vunpack.c.h.b16 %v2785
        %v3130 = vunpack.c.l.b16 %v2786
        %v3131 = vunpack.c.h.b16 %v2786
        %v3132 = vunpack.c.l.b16 %v2787
        %v3133 = vunpack.c.h.b16 %v2787
        %v3134 = vunpack.c.l.b16 %v2788
        %v3135 = vunpack.c.h.b16 %v2788
        %v3136 = vunpack.c.l.b16 %v2789
        %v3137 = vunpack.c.h.b16 %v2789
        %v3138 = vunpack.c.l.b16 %v2790
        %v3139 = vunpack.c.h.b16 %v2790
        %v3140 = vunpack.c.l.b16 %v2791
        %v3141 = vunpack.c.h.b16 %v2791
        %v3142 = vunpack.c.l.b16 %v2792
        %v3143 = vunpack.c.h.b16 %v2792
        %v3144 = vunpack.c.l.b16 %v2793
        %v3145 = vunpack.c.h.b16 %v2793
        %v3146 = vunpack.c.l.b16 %v2794
        %v3147 = vunpack.c.h.b16 %v2794
        %v3148 = vunpack.c.l.b16 %v2795
        %v3149 = vunpack.c.h.b16 %v2795
        %v3150 = vunpack.c.l.b16 %v2796
        %v3151 = vunpack.c.h.b16 %v2796
        %v3152 = vunpack.c.l.b16 %v2797
        %v3153 = vunpack.c.h.b16 %v2797
        %v3154 = vunpack.c.l.b16 %v2798
        %v3155 = vunpack.c.h.b16 %v2798
        %v3156 = vunpack.c.l.b16 %v2799
        %v3157 = vunpack.c.h.b16 %v2799
        %v3158 = vunpack.c.l.b16 %v2800
        %v3159 = vunpack.c.h.b16 %v2800
        %v3160 = vunpack.c.l.b16 %v2801
        %v3161 = vunpack.c.h.b16 %v2801
        %v3162 = vunpack.c.l.b16 %v2802
        %v3163 = vunpack.c.h.b16 %v2802
        %v3164 = vunpack.c.l.b16 %v2803
        %v3165 = vunpack.c.h.b16 %v2803
        %v3166 = vunpack.c.l.b16 %v2804
        %v3167 = vunpack.c.h.b16 %v2804
        %v3168 = vunpack.c.l.b16 %v2805
        %v3169 = vunpack.c.h.b16 %v2805
        %v3170 = vunpack.c.l.b16 %v2806
        %v3171 = vunpack.c.h.b16 %v2806
        %v3172 = vunpack.c.l.b16 %v2807
        %v3173 = vunpack.c.h.b16 %v2807
        %v3174 = vunpack.c.l.b16 %v2808
        %v3175 = vunpack.c.h.b16 %v2808
        %v3176 = vunpack.c.l.b16 %v2809
        %v3177 = vunpack.c.h.b16 %v2809
        %v3178 = vunpack.c.l.b16 %v2810
        %v3179 = vunpack.c.h.b16 %v2810
        %v3180 = vunpack.c.l.b16 %v2811
        %v3181 = vunpack.c.h.b16 %v2811
        %v3182 = vunpack.c.l.b16 %v2812
        %v3183 = vunpack.c.h.b16 %v2812
        %v3184 = vunpack.c.l.b16 %v2813
        %v3185 = vunpack.c.h.b16 %v2813
        %v3186 = vunpack.c.l.b16 %v2814
        %v3187 = vunpack.c.h.b16 %v2814
        %v3188 = vunpack.c.l.b16 %v2815
        %v3189 = vunpack.c.h.b16 %v2815
        %v3190 = vunpack.c.l.b16 %v2816
        %v3191 = vunpack.c.h.b16 %v2816
        %v3192 = vunpack.c.l.b16 %v2817
        %v3193 = vunpack.c.h.b16 %v2817
        %v3194 = vunpack.c.l.b16 %v2818
        %v3195 = vunpack.c.h.b16 %v2818
        %v3196 = vunpack.c.l.b16 %v2819
        %v3197 = vunpack.c.h.b16 %v2819
        %v3198 = vunpack.c.l.b16 %v2820
        %v3199 = vunpack.c.h.b16 %v2820
        %v3200 = vunpack.c.l.b16 %v2821
        %v3201 = vunpack.c.h.b16 %v2821
        %v3202 = vunpack.c.l.b16 %v2822
        %v3203 = vunpack.c.h.b16 %v2822
        %v3204 = vunpack.c.l.b16 %v2823
        %v3205 = vunpack.c.h.b16 %v2823
        %v3206 = vunpack.c.l.b16 %v2824
        %v3207 = vunpack.c.h.b16 %v2824
        %v3208 = vunpack.c.l.b16 %v2825
        %v3209 = vunpack.c.h.b16 %v2825
        %v3210 = vunpack.c.l.b16 %v2826
        %v3211 = vunpack.c.h.b16 %v2826
        %v3212 = vunpack.c.l.b16 %v2827
        %v3213 = vunpack.c.h.b16 %v2827
        %v3214 = vunpack.c.l.b16 %v2828
        %v3215 = vunpack.c.h.b16 %v2828
        %v3216 = vunpack.c.l.b16 %v2829
        %v3217 = vunpack.c.h.b16 %v2829
        %v3218 = vunpack.c.l.b16 %v2830
        %v3219 = vunpack.c.h.b16 %v2830
        %v3220 = vunpack.c.l.b16 %v2831
        %v3221 = vunpack.c.h.b16 %v2831
        %v3222 = vunpack.c.l.b16 %v2832
        %v3223 = vunpack.c.h.b16 %v2832
        %v3224 = vunpack.c.l.b16 %v2833
        %v3225 = vunpack.c.h.b16 %v2833
        %v3226 = vunpack.c.l.b16 %v2834
        %v3227 = vunpack.c.h.b16 %v2834
        %v3228 = vunpack.c.l.b16 %v2835
        %v3229 = vunpack.c.h.b16 %v2835
        %v3230 = vunpack.c.l.b16 %v2836
        %v3231 = vunpack.c.h.b16 %v2836
        %v3232 = vunpack.c.l.b16 %v2837
        %v3233 = vunpack.c.h.b16 %v2837
        %v3234 = vunpack.c.l.b16 %v2838
        %v3235 = vunpack.c.h.b16 %v2838
        %v3236 = vunpack.c.l.b16 %v2839
        %v3237 = vunpack.c.h.b16 %v2839
        %v3238 = vunpack.c.l.b16 %v2840
        %v3239 = vunpack.c.h.b16 %v2840
        %v3240 = vunpack.c.l.b16 %v2841
        %v3241 = vunpack.c.h.b16 %v2841
        %v3242 = vunpack.c.l.b16 %v2842
        %v3243 = vunpack.c.h.b16 %v2842
        %v3244 = vunpack.c.l.b16 %v2843
        %v3245 = vunpack.c.h.b16 %v2843
        %v3246 = vunpack.c.l.b16 %v2844
        %v3247 = vunpack.c.h.b16 %v2844
        %v3248 = vunpack.c.l.b16 %v2845
        %v3249 = vunpack.c.h.b16 %v2845
        %v3250 = vunpack.c.l.b16 %v2846
        %v3251 = vunpack.c.h.b16 %v2846
        %v3252 = vunpack.c.l.b16 %v2847
        %v3253 = vunpack.c.h.b16 %v2847
        %v3254 = vunpack.c.l.b16 %v2848
        %v3255 = vunpack.c.h.b16 %v2848
        %v3256 = vunpack.c.l.b16 %v2849
        %v3257 = vunpack.c.h.b16 %v2849
        %v3258 = vunpack.c.l.b16 %v2850
        %v3259 = vunpack.c.h.b16 %v2850
        %v3260 = vunpack.c.l.b16 %v2851
        %v3261 = vunpack.c.h.b16 %v2851
        %v3262 = vunpack.c.l.b16 %v2852
        %v3263 = vunpack.c.h.b16 %v2852
        %v3264 = vunpack.c.l.b16 %v2853
        %v3265 = vunpack.c.h.b16 %v2853
        %v3266 = vunpack.c.l.b16 %v2854
        %v3267 = vunpack.c.h.b16 %v2854
        %v3268 = vunpack.c.l.b16 %v2855
        %v3269 = vunpack.c.h.b16 %v2855
        %v3270 = vunpack.c.l.b16 %v2856
        %v3271 = vunpack.c.h.b16 %v2856
        %v3272 = vunpack.c.l.b16 %v2857
        %v3273 = vunpack.c.h.b16 %v2857
        %v3274 = vunpack.c.l.b16 %v2858
        %v3275 = vunpack.c.h.b16 %v2858
        %v3276 = vunpack.c.l.b16 %v2859
        %v3277 = vunpack.c.h.b16 %v2859
        %v3278 = vunpack.c.l.b16 %v2860
        %v3279 = vunpack.c.h.b16 %v2860
        %v3280 = vunpack.c.l.b16 %v2861
        %v3281 = vunpack.c.h.b16 %v2861
        %v3282 = vunpack.c.l.b16 %v2862
        %v3283 = vunpack.c.h.b16 %v2862
        %v3284 = vunpack.c.l.b16 %v2863
        %v3285 = vunpack.c.h.b16 %v2863
        %v3286 = vunpack.c.l.b16 %v2864
        %v3287 = vunpack.c.h.b16 %v2864
        %v3288 = vunpack.c.l.b16 %v2865
        %v3289 = vunpack.c.h.b16 %v2865
        %v3290 = vunpack.c.l.b16 %v2866
        %v3291 = vunpack.c.h.b16 %v2866
        %v3292 = vunpack.c.l.b16 %v2867
        %v3293 = vunpack.c.h.b16 %v2867
        %v3294 = vunpack.c.l.b16 %v2868
        %v3295 = vunpack.c.h.b16 %v2868
        %v3296 = vunpack.c.l.b16 %v2869
        %v3297 = vunpack.c.h.b16 %v2869
        %v3298 = vunpack.c.l.b16 %v2870
        %v3299 = vunpack.c.h.b16 %v2870
        %v3300 = vunpack.c.l.b16 %v2871
        %v3301 = vunpack.c.h.b16 %v2871
        %v3302 = vunpack.c.l.b16 %v2872
        %v3303 = vunpack.c.h.b16 %v2872
        %v3304 = vunpack.c.l.b16 %v2873
        %v3305 = vunpack.c.h.b16 %v2873
        %v3306 = vunpack.c.l.b16 %v2874
        %v3307 = vunpack.c.h.b16 %v2874
        %v3308 = vunpack.c.l.b16 %v2875
        %v3309 = vunpack.c.h.b16 %v2875
        %v3310 = vunpack.c.l.b16 %v2876
        %v3311 = vunpack.c.h.b16 %v2876
        %v3312 = vunpack.c.l.b16 %v2877
        %v3313 = vunpack.c.h.b16 %v2877
        %v3314 = vunpack.c.l.b16 %v2878
        %v3315 = vunpack.c.h.b16 %v2878
        %v3316 = vunpack.c.l.b16 %v2879
        %v3317 = vunpack.c.h.b16 %v2879
        %v3318 = vunpack.c.l.b16 %v2880
        %v3319 = vunpack.c.h.b16 %v2880
        %v3320 = vunpack.c.l.b16 %v2881
        %v3321 = vunpack.c.h.b16 %v2881
        %v3322 = vunpack.c.l.b16 %v2882
        %v3323 = vunpack.c.h.b16 %v2882
        %v3324 = vunpack.c.l.b16 %v2883
        %v3325 = vunpack.c.h.b16 %v2883
        %v3326 = vunpack.c.l.b16 %v2884
        %v3327 = vunpack.c.h.b16 %v2884
        %v3328 = vunpack.c.l.b16 %v2885
        %v3329 = vunpack.c.h.b16 %v2885
        %v3330 = vunpack.c.l.b16 %v2886
        %v3331 = vunpack.c.h.b16 %v2886
        %v3332 = vunpack.c.l.b16 %v2887
        %v3333 = vunpack.c.h.b16 %v2887
        %v3334 = vunpack.c.l.b16 %v2888
        %v3335 = vunpack.c.h.b16 %v2888
        %v3336 = vunpack.c.l.b16 %v2889
        %v3337 = vunpack.c.h.b16 %v2889
        %v3338 = vunpack.c.l.b16 %v2890
        %v3339 = vunpack.c.h.b16 %v2890
        %v3340 = vunpack.c.l.b16 %v2891
        %v3341 = vunpack.c.h.b16 %v2891
        %v3342 = vunpack.c.l.b16 %v2892
        %v3343 = vunpack.c.h.b16 %v2892
        %v3344 = vunpack.c.l.b16 %v2893
        %v3345 = vunpack.c.h.b16 %v2893
        %v3346 = vunpack.c.l.b16 %v2894
        %v3347 = vunpack.c.h.b16 %v2894
        %v3348 = vunpack.c.l.b16 %v2895
        %v3349 = vunpack.c.h.b16 %v2895
        %v3350 = vunpack.c.l.b16 %v2896
        %v3351 = vunpack.c.h.b16 %v2896
        %v3352 = vunpack.c.l.b16 %v2897
        %v3353 = vunpack.c.h.b16 %v2897
        %v3354 = vunpack.c.l.b16 %v2898
        %v3355 = vunpack.c.h.b16 %v2898
        %v3356 = vunpack.c.l.b16 %v2899
        %v3357 = vunpack.c.h.b16 %v2899
        %v3358 = vunpack.c.l.b16 %v2900
        %v3359 = vunpack.c.h.b16 %v2900
        %v3360 = vunpack.c.l.b16 %v2901
        %v3361 = vunpack.c.h.b16 %v2901
        %v3362 = vpack.c.b16 %v3110, %v3106
        %v3363 = vpack.c.b16 %v3111, %v3107
        %v3364 = vpack.c.b16 %v3112, %v3108
        %v3365 = vpack.c.b16 %v3113, %v3109
        %v3366 = vpack.c.b16 %v3118, %v3114
        %v3367 = vpack.c.b16 %v3119, %v3115
        %v3368 = vpack.c.b16 %v3120, %v3116
        %v3369 = vpack.c.b16 %v3121, %v3117
        %v3370 = vpack.c.b16 %v3126, %v3122
        %v3371 = vpack.c.b16 %v3127, %v3123
        %v3372 = vpack.c.b16 %v3128, %v3124
        %v3373 = vpack.c.b16 %v3129, %v3125
        %v3374 = vpack.c.b16 %v3134, %v3130
        %v3375 = vpack.c.b16 %v3135, %v3131
        %v3376 = vpack.c.b16 %v3136, %v3132
        %v3377 = vpack.c.b16 %v3137, %v3133
        %v3378 = vpack.c.b16 %v3142, %v3138
        %v3379 = vpack.c.b16 %v3143, %v3139
        %v3380 = vpack.c.b16 %v3144, %v3140
        %v3381 = vpack.c.b16 %v3145, %v3141
        %v3382 = vpack.c.b16 %v3150, %v3146
        %v3383 = vpack.c.b16 %v3151, %v3147
        %v3384 = vpack.c.b16 %v3152, %v3148
        %v3385 = vpack.c.b16 %v3153, %v3149
        %v3386 = vpack.c.b16 %v3158, %v3154
        %v3387 = vpack.c.b16 %v3159, %v3155
        %v3388 = vpack.c.b16 %v3160, %v3156
        %v3389 = vpack.c.b16 %v3161, %v3157
        %v3390 = vpack.c.b16 %v3166, %v3162
        %v3391 = vpack.c.b16 %v3167, %v3163
        %v3392 = vpack.c.b16 %v3168, %v3164
        %v3393 = vpack.c.b16 %v3169, %v3165
        %v3394 = vpack.c.b16 %v3174, %v3170
        %v3395 = vpack.c.b16 %v3175, %v3171
        %v3396 = vpack.c.b16 %v3176, %v3172
        %v3397 = vpack.c.b16 %v3177, %v3173
        %v3398 = vpack.c.b16 %v3182, %v3178
        %v3399 = vpack.c.b16 %v3183, %v3179
        %v3400 = vpack.c.b16 %v3184, %v3180
        %v3401 = vpack.c.b16 %v3185, %v3181
        %v3402 = vpack.c.b16 %v3190, %v3186
        %v3403 = vpack.c.b16 %v3191, %v3187
        %v3404 = vpack.c.b16 %v3192, %v3188
        %v3405 = vpack.c.b16 %v3193, %v3189
        %v3406 = vpack.c.b16 %v3198, %v3194
        %v3407 = vpack.c.b16 %v3199, %v3195
        %v3408 = vpack.c.b16 %v3200, %v3196
        %v3409 = vpack.c.b16 %v3201, %v3197
        %v3410 = vpack.c.b16 %v3206, %v3202
        %v3411 = vpack.c.b16 %v3207, %v3203
        %v3412 = vpack.c.b16 %v3208, %v3204
        %v3413 = vpack.c.b16 %v3209, %v3205
        %v3414 = vpack.c.b16 %v3214, %v3210
        %v3415 = vpack.c.b16 %v3215, %v3211
        %v3416 = vpack.c.b16 %v3216, %v3212
        %v3417 = vpack.c.b16 %v3217, %v3213
        %v3418 = vpack.c.b16 %v3222, %v3218
        %v3419 = vpack.c.b16 %v3223, %v3219
        %v3420 = vpack.c.b16 %v3224, %v3220
        %v3421 = vpack.c.b16 %v3225, %v3221
        %v3422 = vpack.c.b16 %v3230, %v3226
        %v3423 = vpack.c.b16 %v3231, %v3227
        %v3424 = vpack.c.b16 %v3232, %v3228
        %v3425 = vpack.c.b16 %v3233, %v3229
        %v3426 = vpack.c.b16 %v3238, %v3234
        %v3427 = vpack.c.b16 %v3239, %v3235
        %v3428 = vpack.c.b16 %v3240, %v3236
        %v3429 = vpack.c.b16 %v3241, %v3237
        %v3430 = vpack.c.b16 %v3246, %v3242
        %v3431 = vpack.c.b16 %v3247, %v3243
        %v3432 = vpack.c.b16 %v3248, %v3244
        %v3433 = vpack.c.b16 %v3249, %v3245
        %v3434 = vpack.c.b16 %v3254, %v3250
        %v3435 = vpack.c.b16 %v3255, %v3251
        %v3436 = vpack.c.b16 %v3256, %v3252
        %v3437 = vpack.c.b16 %v3257, %v3253
        %v3438 = vpack.c.b16 %v3262, %v3258
        %v3439 = vpack.c.b16 %v3263, %v3259
        %v3440 = vpack.c.b16 %v3264, %v3260
        %v3441 = vpack.c.b16 %v3265, %v3261
        %v3442 = vpack.c.b16 %v3270, %v3266
        %v3443 = vpack.c.b16 %v3271, %v3267
        %v3444 = vpack.c.b16 %v3272, %v3268
        %v3445 = vpack.c.b16 %v3273, %v3269
        %v3446 = vpack.c.b16 %v3278, %v3274
        %v3447 = vpack.c.b16 %v3279, %v3275
        %v3448 = vpack.c.b16 %v3280, %v3276
        %v3449 = vpack.c.b16 %v3281, %v3277
        %v3450 = vpack.c.b16 %v3286, %v3282
        %v3451 = vpack.c.b16 %v3287, %v3283
        %v3452 = vpack.c.b16 %v3288, %v3284
        %v3453 = vpack.c.b16 %v3289, %v3285
        %v3454 = vpack.c.b16 %v3294, %v3290
        %v3455 = vpack.c.b16 %v3295, %v3291
        %v3456 = vpack.c.b16 %v3296, %v3292
        %v3457 = vpack.c.b16 %v3297, %v3293
        %v3458 = vpack.c.b16 %v3302, %v3298
        %v3459 = vpack.c.b16 %v3303, %v3299
        %v3460 = vpack.c.b16 %v3304, %v3300
        %v3461 = vpack.c.b16 %v3305, %v3301
        %v3462 = vpack.c.b16 %v3310, %v3306
        %v3463 = vpack.c.b16 %v3311, %v3307
        %v3464 = vpack.c.b16 %v3312, %v3308
        %v3465 = vpack.c.b16 %v3313, %v3309
        %v3466 = vpack.c.b16 %v3318, %v3314
        %v3467 = vpack.c.b16 %v3319, %v3315
        %v3468 = vpack.c.b16 %v3320, %v3316
        %v3469 = vpack.c.b16 %v3321, %v3317
        %v3470 = vpack.c.b16 %v3326, %v3322
        %v3471 = vpack.c.b16 %v3327, %v3323
        %v3472 = vpack.c.b16 %v3328, %v3324
        %v3473 = vpack.c.b16 %v3329, %v3325
        %v3474 = vpack.c.b16 %v3334, %v3330
        %v3475 = vpack.c.b16 %v3335, %v3331
        %v3476 = vpack.c.b16 %v3336, %v3332
        %v3477 = vpack.c.b16 %v3337, %v3333
        %v3478 = vpack.c.b16 %v3342, %v3338
        %v3479 = vpack.c.b16 %v3343, %v3339
        %v3480 = vpack.c.b16 %v3344, %v3340
        %v3481 = vpack.c.b16 %v3345, %v3341
        %v3482 = vpack.c.b16 %v3350, %v3346
        %v3483 = vpack.c.b16 %v3351, %v3347
        %v3484 = vpack.c.b16 %v3352, %v3348
        %v3485 = vpack.c.b16 %v3353, %v3349
        %v3486 = vpack.c.b16 %v3358, %v3354
        %v3487 = vpack.c.b16 %v3359, %v3355
        %v3488 = vpack.c.b16 %v3360, %v3356
        %v3489 = vpack.c.b16 %v3361, %v3357
        %v3682 = vunpack.c.l.b16 %v2902
        %v3683 = vunpack.c.h.b16 %v2902
        %v3684 = vunpack.c.l.b16 %v2903
        %v3685 = vunpack.c.h.b16 %v2903
        %v3686 = vunpack.c.l.b16 %v2904
        %v3687 = vunpack.c.h.b16 %v2904
        %v3688 = vunpack.c.l.b16 %v2905
        %v3689 = vunpack.c.h.b16 %v2905
        %v3690 = vunpack.c.l.b16 %v2906
        %v3691 = vunpack.c.h.b16 %v2906
        %v3692 = vunpack.c.l.b16 %v2907
        %v3693 = vunpack.c.h.b16 %v2907
        %v3694 = vunpack.c.l.b16 %v2908
        %v3695 = vunpack.c.h.b16 %v2908
        %v3696 = vunpack.c.l.b16 %v2909
        %v3697 = vunpack.c.h.b16 %v2909
        %v3698 = vunpack.c.l.b16 %v2910
        %v3699 = vunpack.c.h.b16 %v2910
        %v3700 = vunpack.c.l.b16 %v2911
        %v3701 = vunpack.c.h.b16 %v2911
        %v3702 = vunpack.c.l.b16 %v2912
        %v3703 = vunpack.c.h.b16 %v2912
        %v3704 = vunpack.c.l.b16 %v2913
        %v3705 = vunpack.c.h.b16 %v2913
        %v3706 = vunpack.c.l.b16 %v2914
        %v3707 = vunpack.c.h.b16 %v2914
        %v3708 = vunpack.c.l.b16 %v2915
        %v3709 = vunpack.c.h.b16 %v2915
        %v3710 = vunpack.c.l.b16 %v2916
        %v3711 = vunpack.c.h.b16 %v2916
        %v3712 = vunpack.c.l.b16 %v2917
        %v3713 = vunpack.c.h.b16 %v2917
        %v3714 = vunpack.c.l.b16 %v2918
        %v3715 = vunpack.c.h.b16 %v2918
        %v3716 = vunpack.c.l.b16 %v2919
        %v3717 = vunpack.c.h.b16 %v2919
        %v3718 = vunpack.c.l.b16 %v2920
        %v3719 = vunpack.c.h.b16 %v2920
        %v3720 = vunpack.c.l.b16 %v2921
        %v3721 = vunpack.c.h.b16 %v2921
        %v3722 = vunpack.c.l.b16 %v2922
        %v3723 = vunpack.c.h.b16 %v2922
        %v3724 = vunpack.c.l.b16 %v2923
        %v3725 = vunpack.c.h.b16 %v2923
        %v3726 = vunpack.c.l.b16 %v2924
        %v3727 = vunpack.c.h.b16 %v2924
        %v3728 = vunpack.c.l.b16 %v2925
        %v3729 = vunpack.c.h.b16 %v2925
        %v3730 = vunpack.c.l.b16 %v2926
        %v3731 = vunpack.c.h.b16 %v2926
        %v3732 = vunpack.c.l.b16 %v2927
        %v3733 = vunpack.c.h.b16 %v2927
        %v3734 = vunpack.c.l.b16 %v2928
        %v3735 = vunpack.c.h.b16 %v2928
        %v3736 = vunpack.c.l.b16 %v2929
        %v3737 = vunpack.c.h.b16 %v2929
        %v3738 = vunpack.c.l.b16 %v2930
        %v3739 = vunpack.c.h.b16 %v2930
        %v3740 = vunpack.c.l.b16 %v2931
        %v3741 = vunpack.c.h.b16 %v2931
        %v3742 = vunpack.c.l.b16 %v2932
        %v3743 = vunpack.c.h.b16 %v2932
        %v3744 = vunpack.c.l.b16 %v2933
        %v3745 = vunpack.c.h.b16 %v2933
        %v3746 = vunpack.c.l.b16 %v2934
        %v3747 = vunpack.c.h.b16 %v2934
        %v3748 = vunpack.c.l.b16 %v2935
        %v3749 = vunpack.c.h.b16 %v2935
        %v3750 = vunpack.c.l.b16 %v2936
        %v3751 = vunpack.c.h.b16 %v2936
        %v3752 = vunpack.c.l.b16 %v2937
        %v3753 = vunpack.c.h.b16 %v2937
        %v3754 = vunpack.c.l.b16 %v2938
        %v3755 = vunpack.c.h.b16 %v2938
        %v3756 = vunpack.c.l.b16 %v2939
        %v3757 = vunpack.c.h.b16 %v2939
        %v3758 = vunpack.c.l.b16 %v2940
        %v3759 = vunpack.c.h.b16 %v2940
        %v3760 = vunpack.c.l.b16 %v2941
        %v3761 = vunpack.c.h.b16 %v2941
        %v3762 = vunpack.c.l.b16 %v2942
        %v3763 = vunpack.c.h.b16 %v2942
        %v3764 = vunpack.c.l.b16 %v2943
        %v3765 = vunpack.c.h.b16 %v2943
        %v3766 = vunpack.c.l.b16 %v2944
        %v3767 = vunpack.c.h.b16 %v2944
        %v3768 = vunpack.c.l.b16 %v2945
        %v3769 = vunpack.c.h.b16 %v2945
        %v3770 = vunpack.c.l.b16 %v2946
        %v3771 = vunpack.c.h.b16 %v2946
        %v3772 = vunpack.c.l.b16 %v2947
        %v3773 = vunpack.c.h.b16 %v2947
        %v3774 = vunpack.c.l.b16 %v2948
        %v3775 = vunpack.c.h.b16 %v2948
        %v3776 = vunpack.c.l.b16 %v2949
        %v3777 = vunpack.c.h.b16 %v2949
        %v3778 = vunpack.c.l.b16 %v2950
        %v3779 = vunpack.c.h.b16 %v2950
        %v3780 = vunpack.c.l.b16 %v2951
        %v3781 = vunpack.c.h.b16 %v2951
        %v3782 = vunpack.c.l.b16 %v2952
        %v3783 = vunpack.c.h.b16 %v2952
        %v3784 = vunpack.c.l.b16 %v2953
        %v3785 = vunpack.c.h.b16 %v2953
        %v3786 = vunpack.c.l.b16 %v2954
        %v3787 = vunpack.c.h.b16 %v2954
        %v3788 = vunpack.c.l.b16 %v2955
        %v3789 = vunpack.c.h.b16 %v2955
        %v3790 = vunpack.c.l.b16 %v2956
        %v3791 = vunpack.c.h.b16 %v2956
        %v3792 = vunpack.c.l.b16 %v2957
        %v3793 = vunpack.c.h.b16 %v2957
        %v3794 = vunpack.c.l.b16 %v2958
        %v3795 = vunpack.c.h.b16 %v2958
        %v3796 = vunpack.c.l.b16 %v2959
        %v3797 = vunpack.c.h.b16 %v2959
        %v3798 = vunpack.c.l.b16 %v2960
        %v3799 = vunpack.c.h.b16 %v2960
        %v3800 = vunpack.c.l.b16 %v2961
        %v3801 = vunpack.c.h.b16 %v2961
        %v3802 = vunpack.c.l.b16 %v2962
        %v3803 = vunpack.c.h.b16 %v2962
        %v3804 = vunpack.c.l.b16 %v2963
        %v3805 = vunpack.c.h.b16 %v2963
        %v3806 = vunpack.c.l.b16 %v2964
        %v3807 = vunpack.c.h.b16 %v2964
        %v3808 = vunpack.c.l.b16 %v2965
        %v3809 = vunpack.c.h.b16 %v2965
        %v3810 = vpack.c.b16 %v3684, %v3682
        %v3811 = vpack.c.b16 %v3685, %v3683
        %v3812 = vpack.c.b16 %v3688, %v3686
        %v3813 = vpack.c.b16 %v3689, %v3687
        %v3814 = vpack.c.b16 %v3692, %v3690
        %v3815 = vpack.c.b16 %v3693, %v3691
        %v3816 = vpack.c.b16 %v3696, %v3694
        %v3817 = vpack.c.b16 %v3697, %v3695
        %v3818 = vpack.c.b16 %v3700, %v3698
        %v3819 = vpack.c.b16 %v3701, %v3699
        %v3820 = vpack.c.b16 %v3704, %v3702
        %v3821 = vpack.c.b16 %v3705, %v3703
        %v3822 = vpack.c.b16 %v3708, %v3706
        %v3823 = vpack.c.b16 %v3709, %v3707
        %v3824 = vpack.c.b16 %v3712, %v3710
        %v3825 = vpack.c.b16 %v3713, %v3711
        %v3826 = vpack.c.b16 %v3716, %v3714
        %v3827 = vpack.c.b16 %v3717, %v3715
        %v3828 = vpack.c.b16 %v3720, %v3718
        %v3829 = vpack.c.b16 %v3721, %v3719
        %v3830 = vpack.c.b16 %v3724, %v3722
        %v3831 = vpack.c.b16 %v3725, %v3723
        %v3832 = vpack.c.b16 %v3728, %v3726
        %v3833 = vpack.c.b16 %v3729, %v3727
        %v3834 = vpack.c.b16 %v3732, %v3730
        %v3835 = vpack.c.b16 %v3733, %v3731
        %v3836 = vpack.c.b16 %v3736, %v3734
        %v3837 = vpack.c.b16 %v3737, %v3735
        %v3838 = vpack.c.b16 %v3740, %v3738
        %v3839 = vpack.c.b16 %v3741, %v3739
        %v3840 = vpack.c.b16 %v3744, %v3742
        %v3841 = vpack.c.b16 %v3745, %v3743
        %v3842 = vpack.c.b16 %v3748, %v3746
        %v3843 = vpack.c.b16 %v3749, %v3747
        %v3844 = vpack.c.b16 %v3752, %v3750
        %v3845 = vpack.c.b16 %v3753, %v3751
        %v3846 = vpack.c.b16 %v3756, %v3754
        %v3847 = vpack.c.b16 %v3757, %v3755
        %v3848 = vpack.c.b16 %v3760, %v3758
        %v3849 = vpack.c.b16 %v3761, %v3759
        %v3850 = vpack.c.b16 %v3764, %v3762
        %v3851 = vpack.c.b16 %v3765, %v3763
        %v3852 = vpack.c.b16 %v3768, %v3766
        %v3853 = vpack.c.b16 %v3769, %v3767
        %v3854 = vpack.c.b16 %v3772, %v3770
        %v3855 = vpack.c.b16 %v3773, %v3771
        %v3856 = vpack.c.b16 %v3776, %v3774
        %v3857 = vpack.c.b16 %v3777, %v3775
        %v3858 = vpack.c.b16 %v3780, %v3778
        %v3859 = vpack.c.b16 %v3781, %v3779
        %v3860 = vpack.c.b16 %v3784, %v3782
        %v3861 = vpack.c.b16 %v3785, %v3783
        %v3862 = vpack.c.b16 %v3788, %v3786
        %v3863 = vpack.c.b16 %v3789, %v3787
        %v3864 = vpack.c.b16 %v3792, %v3790
        %v3865 = vpack.c.b16 %v3793, %v3791
        %v3866 = vpack.c.b16 %v3796, %v3794
        %v3867 = vpack.c.b16 %v3797, %v3795
        %v3868 = vpack.c.b16 %v3800, %v3798
        %v3869 = vpack.c.b16 %v3801, %v3799
        %v3870 = vpack.c.b16 %v3804, %v3802
        %v3871 = vpack.c.b16 %v3805, %v3803
        %v3872 = vpack.c.b16 %v3808, %v3806
        %v3873 = vpack.c.b16 %v3809, %v3807
        %3938 = vmatprep.subr.bf16.mxu0 %v3825
        %3939 = vmatpush1.bf16.msra.mxu0 %v3824
        %3940 = vmatprep.subr.bf16.mxu0 %v3823
        %3941 = vmatpush1.bf16.msra.mxu0 %v3822
        %3942 = vmatprep.subr.bf16.mxu0 %v3821
        %3943 = vmatpush1.bf16.msra.mxu0 %v3820
        %3944 = vmatprep.subr.bf16.mxu0 %v3819
        %3945 = vmatpush1.bf16.msra.mxu0 %v3818
        %3946 = vmatprep.subr.bf16.mxu0 %v3817
        %3947 = vmatpush1.bf16.msra.mxu0 %v3816
        %3948 = vmatprep.subr.bf16.mxu0 %v3815
        %3949 = vmatpush1.bf16.msra.mxu0 %v3814
        %3950 = vmatprep.subr.bf16.mxu0 %v3813
        %3951 = vmatpush1.bf16.msra.mxu0 %v3812
        %3952 = vmatprep.subr.bf16.mxu0 %v3811
        %3953 = vmatpush1.bf16.msra.mxu0 %v3810
        %3954 = vmatprep.subr.bf16.mxu0 %v3841
        %3955 = vmatpush2.bf16.msra.mxu0 %v3840
        %3956 = vmatprep.subr.bf16.mxu0 %v3839
        %3957 = vmatpush2.bf16.msra.mxu0 %v3838
        %3958 = vmatprep.subr.bf16.mxu0 %v3837
        %3959 = vmatpush2.bf16.msra.mxu0 %v3836
        %3960 = vmatprep.subr.bf16.mxu0 %v3835
        %3961 = vmatpush2.bf16.msra.mxu0 %v3834
        %3962 = vmatprep.subr.bf16.mxu0 %v3833
        %3963 = vmatpush2.bf16.msra.mxu0 %v3832
        %3964 = vmatprep.subr.bf16.mxu0 %v3831
        %3965 = vmatpush2.bf16.msra.mxu0 %v3830
        %3966 = vmatprep.subr.bf16.mxu0 %v3829
        %3967 = vmatpush2.bf16.msra.mxu0 %v3828
        %3968 = vmatprep.subr.bf16.mxu0 %v3827
        %3969 = vmatpush2.bf16.msra.mxu0 %v3826
        %3970 = vmatprep.mubr.bf16.mxu0 %v3363
        %3971 = vmatmul.mubr.bf16.gmra.mxu0 %v3362
        %v3972 = vpop.f32.mrf.mxu0
        %v3973 = vadd.f32 %v2971, %v3972
        %v3974 = vpop.f32.mrf.mxu0
        %v3975 = vadd.f32 %v2975, %v3974
        %v3976 = vpop.f32.mrf.mxu0
        %v3977 = vadd.f32 %v2971, %v3976
        %v3978 = vpop.f32.mrf.mxu0
        %v3979 = vadd.f32 %v2975, %v3978
        %3980 = vmatprep.mubr.bf16.mxu0 %v3367
        %3981 = vmatmul.mubr.bf16.gmra.mxu0 %v3366
        %v3982 = vpop.f32.mrf.mxu0
        %v3983 = vadd.f32 %v2971, %v3982
        %v3984 = vpop.f32.mrf.mxu0
        %v3985 = vadd.f32 %v2975, %v3984
        %v3986 = vpop.f32.mrf.mxu0
        %v3987 = vadd.f32 %v2971, %v3986
        %v3988 = vpop.f32.mrf.mxu0
        %v3989 = vadd.f32 %v2975, %v3988
        %3990 = vmatprep.mubr.bf16.mxu0 %v3371
        %3991 = vmatmul.mubr.bf16.gmra.mxu0 %v3370
        %v3992 = vpop.f32.mrf.mxu0
        %v3993 = vadd.f32 %v2971, %v3992
        %v3994 = vpop.f32.mrf.mxu0
        %v3995 = vadd.f32 %v2975, %v3994
        %v3996 = vpop.f32.mrf.mxu0
        %v3997 = vadd.f32 %v2971, %v3996
        %v3998 = vpop.f32.mrf.mxu0
        %v3999 = vadd.f32 %v2975, %v3998
        %4000 = vmatprep.mubr.bf16.mxu0 %v3375
        %4001 = vmatmul.mubr.bf16.gmra.mxu0 %v3374
        %v4002 = vpop.f32.mrf.mxu0
        %v4003 = vadd.f32 %v2971, %v4002
        %v4004 = vpop.f32.mrf.mxu0
        %v4005 = vadd.f32 %v2975, %v4004
        %v4006 = vpop.f32.mrf.mxu0
        %v4007 = vadd.f32 %v2971, %v4006
        %v4008 = vpop.f32.mrf.mxu0
        %v4009 = vadd.f32 %v2975, %v4008
        %4010 = vmatprep.mubr.bf16.mxu0 %v3379
        %4011 = vmatmul.mubr.bf16.gmra.mxu0 %v3378
        %v4012 = vpop.f32.mrf.mxu0
        %v4013 = vadd.f32 %v2971, %v4012
        %v4014 = vpop.f32.mrf.mxu0
        %v4015 = vadd.f32 %v2975, %v4014
        %v4016 = vpop.f32.mrf.mxu0
        %v4017 = vadd.f32 %v2971, %v4016
        %v4018 = vpop.f32.mrf.mxu0
        %v4019 = vadd.f32 %v2975, %v4018
        %4020 = vmatprep.mubr.bf16.mxu0 %v3383
        %4021 = vmatmul.mubr.bf16.gmra.mxu0 %v3382
        %v4022 = vpop.f32.mrf.mxu0
        %v4023 = vadd.f32 %v2971, %v4022
        %v4024 = vpop.f32.mrf.mxu0
        %v4025 = vadd.f32 %v2975, %v4024
        %v4026 = vpop.f32.mrf.mxu0
        %v4027 = vadd.f32 %v2971, %v4026
        %v4028 = vpop.f32.mrf.mxu0
        %v4029 = vadd.f32 %v2975, %v4028
        %4030 = vmatprep.mubr.bf16.mxu0 %v3387
        %4031 = vmatmul.mubr.bf16.gmra.mxu0 %v3386
        %v4032 = vpop.f32.mrf.mxu0
        %v4033 = vadd.f32 %v2971, %v4032
        %v4034 = vpop.f32.mrf.mxu0
        %v4035 = vadd.f32 %v2975, %v4034
        %v4036 = vpop.f32.mrf.mxu0
        %v4037 = vadd.f32 %v2971, %v4036
        %v4038 = vpop.f32.mrf.mxu0
        %v4039 = vadd.f32 %v2975, %v4038
        %4040 = vmatprep.mubr.bf16.mxu0 %v3391
        %4041 = vmatmul.mubr.bf16.gmra.mxu0 %v3390
        %v4042 = vpop.f32.mrf.mxu0
        %v4043 = vadd.f32 %v2971, %v4042
        %v4044 = vpop.f32.mrf.mxu0
        %v4045 = vadd.f32 %v2975, %v4044
        %v4046 = vpop.f32.mrf.mxu0
        %v4047 = vadd.f32 %v2971, %v4046
        %v4048 = vpop.f32.mrf.mxu0
        %v4049 = vadd.f32 %v2975, %v4048
        %4050 = vmatprep.mubr.bf16.mxu0 %v3395
        %4051 = vmatmul.mubr.bf16.gmra.mxu0 %v3394
        %v4052 = vpop.f32.mrf.mxu0
        %v4053 = vadd.f32 %v2971, %v4052
        %v4054 = vpop.f32.mrf.mxu0
        %v4055 = vadd.f32 %v2975, %v4054
        %v4056 = vpop.f32.mrf.mxu0
        %v4057 = vadd.f32 %v2971, %v4056
        %v4058 = vpop.f32.mrf.mxu0
        %v4059 = vadd.f32 %v2975, %v4058
        %4060 = vmatprep.mubr.bf16.mxu0 %v3399
        %4061 = vmatmul.mubr.bf16.gmra.mxu0 %v3398
        %v4062 = vpop.f32.mrf.mxu0
        %v4063 = vadd.f32 %v2971, %v4062
        %v4064 = vpop.f32.mrf.mxu0
        %v4065 = vadd.f32 %v2975, %v4064
        %v4066 = vpop.f32.mrf.mxu0
        %v4067 = vadd.f32 %v2971, %v4066
        %v4068 = vpop.f32.mrf.mxu0
        %v4069 = vadd.f32 %v2975, %v4068
        %4070 = vmatprep.mubr.bf16.mxu0 %v3403
        %4071 = vmatmul.mubr.bf16.gmra.mxu0 %v3402
        %v4072 = vpop.f32.mrf.mxu0
        %v4073 = vadd.f32 %v2971, %v4072
        %v4074 = vpop.f32.mrf.mxu0
        %v4075 = vadd.f32 %v2975, %v4074
        %v4076 = vpop.f32.mrf.mxu0
        %v4077 = vadd.f32 %v2971, %v4076
        %v4078 = vpop.f32.mrf.mxu0
        %v4079 = vadd.f32 %v2975, %v4078
        %4080 = vmatprep.mubr.bf16.mxu0 %v3407
        %4081 = vmatmul.mubr.bf16.gmra.mxu0 %v3406
        %v4082 = vpop.f32.mrf.mxu0
        %v4083 = vadd.f32 %v2971, %v4082
        %v4084 = vpop.f32.mrf.mxu0
        %v4085 = vadd.f32 %v2975, %v4084
        %v4086 = vpop.f32.mrf.mxu0
        %v4087 = vadd.f32 %v2971, %v4086
        %v4088 = vpop.f32.mrf.mxu0
        %v4089 = vadd.f32 %v2975, %v4088
        %4090 = vmatprep.mubr.bf16.mxu0 %v3411
        %4091 = vmatmul.mubr.bf16.gmra.mxu0 %v3410
        %v4092 = vpop.f32.mrf.mxu0
        %v4093 = vadd.f32 %v2971, %v4092
        %v4094 = vpop.f32.mrf.mxu0
        %v4095 = vadd.f32 %v2975, %v4094
        %v4096 = vpop.f32.mrf.mxu0
        %v4097 = vadd.f32 %v2971, %v4096
        %v4098 = vpop.f32.mrf.mxu0
        %v4099 = vadd.f32 %v2975, %v4098
        %4100 = vmatprep.mubr.bf16.mxu0 %v3415
        %4101 = vmatmul.mubr.bf16.gmra.mxu0 %v3414
        %v4102 = vpop.f32.mrf.mxu0
        %v4103 = vadd.f32 %v2971, %v4102
        %v4104 = vpop.f32.mrf.mxu0
        %v4105 = vadd.f32 %v2975, %v4104
        %v4106 = vpop.f32.mrf.mxu0
        %v4107 = vadd.f32 %v2971, %v4106
        %v4108 = vpop.f32.mrf.mxu0
        %v4109 = vadd.f32 %v2975, %v4108
        %4110 = vmatprep.mubr.bf16.mxu0 %v3419
        %4111 = vmatmul.mubr.bf16.gmra.mxu0 %v3418
        %v4112 = vpop.f32.mrf.mxu0
        %v4113 = vadd.f32 %v2971, %v4112
        %v4114 = vpop.f32.mrf.mxu0
        %v4115 = vadd.f32 %v2975, %v4114
        %v4116 = vpop.f32.mrf.mxu0
        %v4117 = vadd.f32 %v2971, %v4116
        %v4118 = vpop.f32.mrf.mxu0
        %v4119 = vadd.f32 %v2975, %v4118
        %4120 = vmatprep.mubr.bf16.mxu0 %v3423
        %4121 = vmatmul.mubr.bf16.gmra.mxu0 %v3422
        %v4122 = vpop.f32.mrf.mxu0
        %v4123 = vadd.f32 %v2971, %v4122
        %v4124 = vpop.f32.mrf.mxu0
        %v4125 = vadd.f32 %v2975, %v4124
        %v4126 = vpop.f32.mrf.mxu0
        %v4127 = vadd.f32 %v2971, %v4126
        %v4128 = vpop.f32.mrf.mxu0
        %v4129 = vadd.f32 %v2975, %v4128
        %4130 = vmatprep.mubr.bf16.mxu0 %v3427
        %4131 = vmatmul.mubr.bf16.gmra.mxu0 %v3426
        %v4132 = vpop.f32.mrf.mxu0
        %v4133 = vadd.f32 %v2971, %v4132
        %v4134 = vpop.f32.mrf.mxu0
        %v4135 = vadd.f32 %v2975, %v4134
        %v4136 = vpop.f32.mrf.mxu0
        %v4137 = vadd.f32 %v2971, %v4136
        %v4138 = vpop.f32.mrf.mxu0
        %v4139 = vadd.f32 %v2975, %v4138
        %4140 = vmatprep.mubr.bf16.mxu0 %v3431
        %4141 = vmatmul.mubr.bf16.gmra.mxu0 %v3430
        %v4142 = vpop.f32.mrf.mxu0
        %v4143 = vadd.f32 %v2971, %v4142
        %v4144 = vpop.f32.mrf.mxu0
        %v4145 = vadd.f32 %v2975, %v4144
        %v4146 = vpop.f32.mrf.mxu0
        %v4147 = vadd.f32 %v2971, %v4146
        %v4148 = vpop.f32.mrf.mxu0
        %v4149 = vadd.f32 %v2975, %v4148
        %4150 = vmatprep.mubr.bf16.mxu0 %v3435
        %4151 = vmatmul.mubr.bf16.gmra.mxu0 %v3434
        %v4152 = vpop.f32.mrf.mxu0
        %v4153 = vadd.f32 %v2971, %v4152
        %v4154 = vpop.f32.mrf.mxu0
        %v4155 = vadd.f32 %v2975, %v4154
        %v4156 = vpop.f32.mrf.mxu0
        %v4157 = vadd.f32 %v2971, %v4156
        %v4158 = vpop.f32.mrf.mxu0
        %v4159 = vadd.f32 %v2975, %v4158
        %4160 = vmatprep.mubr.bf16.mxu0 %v3439
        %4161 = vmatmul.mubr.bf16.gmra.mxu0 %v3438
        %v4162 = vpop.f32.mrf.mxu0
        %v4163 = vadd.f32 %v2971, %v4162
        %v4164 = vpop.f32.mrf.mxu0
        %v4165 = vadd.f32 %v2975, %v4164
        %v4166 = vpop.f32.mrf.mxu0
        %v4167 = vadd.f32 %v2971, %v4166
        %v4168 = vpop.f32.mrf.mxu0
        %v4169 = vadd.f32 %v2975, %v4168
        %4170 = vmatprep.mubr.bf16.mxu0 %v3443
        %4171 = vmatmul.mubr.bf16.gmra.mxu0 %v3442
        %v4172 = vpop.f32.mrf.mxu0
        %v4173 = vadd.f32 %v2971, %v4172
        %v4174 = vpop.f32.mrf.mxu0
        %v4175 = vadd.f32 %v2975, %v4174
        %v4176 = vpop.f32.mrf.mxu0
        %v4177 = vadd.f32 %v2971, %v4176
        %v4178 = vpop.f32.mrf.mxu0
        %v4179 = vadd.f32 %v2975, %v4178
        %4180 = vmatprep.mubr.bf16.mxu0 %v3447
        %4181 = vmatmul.mubr.bf16.gmra.mxu0 %v3446
        %v4182 = vpop.f32.mrf.mxu0
        %v4183 = vadd.f32 %v2971, %v4182
        %v4184 = vpop.f32.mrf.mxu0
        %v4185 = vadd.f32 %v2975, %v4184
        %v4186 = vpop.f32.mrf.mxu0
        %v4187 = vadd.f32 %v2971, %v4186
        %v4188 = vpop.f32.mrf.mxu0
        %v4189 = vadd.f32 %v2975, %v4188
        %4190 = vmatprep.mubr.bf16.mxu0 %v3451
        %4191 = vmatmul.mubr.bf16.gmra.mxu0 %v3450
        %v4192 = vpop.f32.mrf.mxu0
        %v4193 = vadd.f32 %v2971, %v4192
        %v4194 = vpop.f32.mrf.mxu0
        %v4195 = vadd.f32 %v2975, %v4194
        %v4196 = vpop.f32.mrf.mxu0
        %v4197 = vadd.f32 %v2971, %v4196
        %v4198 = vpop.f32.mrf.mxu0
        %v4199 = vadd.f32 %v2975, %v4198
        %4200 = vmatprep.mubr.bf16.mxu0 %v3455
        %4201 = vmatmul.mubr.bf16.gmra.mxu0 %v3454
        %v4202 = vpop.f32.mrf.mxu0
        %v4203 = vadd.f32 %v2971, %v4202
        %v4204 = vpop.f32.mrf.mxu0
        %v4205 = vadd.f32 %v2975, %v4204
        %v4206 = vpop.f32.mrf.mxu0
        %v4207 = vadd.f32 %v2971, %v4206
        %v4208 = vpop.f32.mrf.mxu0
        %v4209 = vadd.f32 %v2975, %v4208
        %4210 = vmatprep.mubr.bf16.mxu0 %v3459
        %4211 = vmatmul.mubr.bf16.gmra.mxu0 %v3458
        %v4212 = vpop.f32.mrf.mxu0
        %v4213 = vadd.f32 %v2971, %v4212
        %v4214 = vpop.f32.mrf.mxu0
        %v4215 = vadd.f32 %v2975, %v4214
        %v4216 = vpop.f32.mrf.mxu0
        %v4217 = vadd.f32 %v2971, %v4216
        %v4218 = vpop.f32.mrf.mxu0
        %v4219 = vadd.f32 %v2975, %v4218
        %4220 = vmatprep.mubr.bf16.mxu0 %v3463
        %4221 = vmatmul.mubr.bf16.gmra.mxu0 %v3462
        %v4222 = vpop.f32.mrf.mxu0
        %v4223 = vadd.f32 %v2971, %v4222
        %v4224 = vpop.f32.mrf.mxu0
        %v4225 = vadd.f32 %v2975, %v4224
        %v4226 = vpop.f32.mrf.mxu0
        %v4227 = vadd.f32 %v2971, %v4226
        %v4228 = vpop.f32.mrf.mxu0
        %v4229 = vadd.f32 %v2975, %v4228
        %4230 = vmatprep.mubr.bf16.mxu0 %v3467
        %4231 = vmatmul.mubr.bf16.gmra.mxu0 %v3466
        %v4232 = vpop.f32.mrf.mxu0
        %v4233 = vadd.f32 %v2971, %v4232
        %v4234 = vpop.f32.mrf.mxu0
        %v4235 = vadd.f32 %v2975, %v4234
        %v4236 = vpop.f32.mrf.mxu0
        %v4237 = vadd.f32 %v2971, %v4236
        %v4238 = vpop.f32.mrf.mxu0
        %v4239 = vadd.f32 %v2975, %v4238
        %4240 = vmatprep.mubr.bf16.mxu0 %v3471
        %4241 = vmatmul.mubr.bf16.gmra.mxu0 %v3470
        %v4242 = vpop.f32.mrf.mxu0
        %v4243 = vadd.f32 %v2971, %v4242
        %v4244 = vpop.f32.mrf.mxu0
        %v4245 = vadd.f32 %v2975, %v4244
        %v4246 = vpop.f32.mrf.mxu0
        %v4247 = vadd.f32 %v2971, %v4246
        %v4248 = vpop.f32.mrf.mxu0
        %v4249 = vadd.f32 %v2975, %v4248
        %4250 = vmatprep.mubr.bf16.mxu0 %v3475
        %4251 = vmatmul.mubr.bf16.gmra.mxu0 %v3474
        %v4252 = vpop.f32.mrf.mxu0
        %v4253 = vadd.f32 %v2971, %v4252
        %v4254 = vpop.f32.mrf.mxu0
        %v4255 = vadd.f32 %v2975, %v4254
        %v4256 = vpop.f32.mrf.mxu0
        %v4257 = vadd.f32 %v2971, %v4256
        %v4258 = vpop.f32.mrf.mxu0
        %v4259 = vadd.f32 %v2975, %v4258
        %4260 = vmatprep.mubr.bf16.mxu0 %v3479
        %4261 = vmatmul.mubr.bf16.gmra.mxu0 %v3478
        %v4262 = vpop.f32.mrf.mxu0
        %v4263 = vadd.f32 %v2971, %v4262
        %v4264 = vpop.f32.mrf.mxu0
        %v4265 = vadd.f32 %v2975, %v4264
        %v4266 = vpop.f32.mrf.mxu0
        %v4267 = vadd.f32 %v2971, %v4266
        %v4268 = vpop.f32.mrf.mxu0
        %v4269 = vadd.f32 %v2975, %v4268
        %4270 = vmatprep.mubr.bf16.mxu0 %v3483
        %4271 = vmatmul.mubr.bf16.gmra.mxu0 %v3482
        %v4272 = vpop.f32.mrf.mxu0
        %v4273 = vadd.f32 %v2971, %v4272
        %v4274 = vpop.f32.mrf.mxu0
        %v4275 = vadd.f32 %v2975, %v4274
        %v4276 = vpop.f32.mrf.mxu0
        %v4277 = vadd.f32 %v2971, %v4276
        %v4278 = vpop.f32.mrf.mxu0
        %v4279 = vadd.f32 %v2975, %v4278
        %4280 = vmatprep.mubr.bf16.mxu0 %v3487
        %4281 = vmatmul.mubr.bf16.gmra.mxu0 %v3486
        %v4282 = vpop.f32.mrf.mxu0
        %v4283 = vadd.f32 %v2971, %v4282
        %v4284 = vpop.f32.mrf.mxu0
        %v4285 = vadd.f32 %v2975, %v4284
        %v4286 = vpop.f32.mrf.mxu0
        %v4287 = vadd.f32 %v2971, %v4286
        %v4288 = vpop.f32.mrf.mxu0
        %v4289 = vadd.f32 %v2975, %v4288
        %4290 = vdwg.mxu0
        %4291 = vmatprep.subr.bf16.mxu0 %v3857
        %4292 = vmatpush1.bf16.msra.mxu0 %v3856
        %4293 = vmatprep.subr.bf16.mxu0 %v3855
        %4294 = vmatpush1.bf16.msra.mxu0 %v3854
        %4295 = vmatprep.subr.bf16.mxu0 %v3853
        %4296 = vmatpush1.bf16.msra.mxu0 %v3852
        %4297 = vmatprep.subr.bf16.mxu0 %v3851
        %4298 = vmatpush1.bf16.msra.mxu0 %v3850
        %4299 = vmatprep.subr.bf16.mxu0 %v3849
        %4300 = vmatpush1.bf16.msra.mxu0 %v3848
        %4301 = vmatprep.subr.bf16.mxu0 %v3847
        %4302 = vmatpush1.bf16.msra.mxu0 %v3846
        %4303 = vmatprep.subr.bf16.mxu0 %v3845
        %4304 = vmatpush1.bf16.msra.mxu0 %v3844
        %4305 = vmatprep.subr.bf16.mxu0 %v3843
        %4306 = vmatpush1.bf16.msra.mxu0 %v3842
        %4307 = vmatprep.subr.bf16.mxu0 %v3873
        %4308 = vmatpush2.bf16.msra.mxu0 %v3872
        %4309 = vmatprep.subr.bf16.mxu0 %v3871
        %4310 = vmatpush2.bf16.msra.mxu0 %v3870
        %4311 = vmatprep.subr.bf16.mxu0 %v3869
        %4312 = vmatpush2.bf16.msra.mxu0 %v3868
        %4313 = vmatprep.subr.bf16.mxu0 %v3867
        %4314 = vmatpush2.bf16.msra.mxu0 %v3866
        %4315 = vmatprep.subr.bf16.mxu0 %v3865
        %4316 = vmatpush2.bf16.msra.mxu0 %v3864
        %4317 = vmatprep.subr.bf16.mxu0 %v3863
        %4318 = vmatpush2.bf16.msra.mxu0 %v3862
        %4319 = vmatprep.subr.bf16.mxu0 %v3861
        %4320 = vmatpush2.bf16.msra.mxu0 %v3860
        %4321 = vmatprep.subr.bf16.mxu0 %v3859
        %4322 = vmatpush2.bf16.msra.mxu0 %v3858
        %4323 = vmatprep.mubr.bf16.mxu0 %v3365
        %4324 = vmatmul.mubr.bf16.gmra.mxu0 %v3364
        %v4325 = vpop.f32.mrf.mxu0
        %v4326 = vadd.f32 %v3973, %v4325
        %v4327 = vpop.f32.mrf.mxu0
        %v4328 = vadd.f32 %v3975, %v4327
        %v4329 = vpop.f32.mrf.mxu0
        %v4330 = vadd.f32 %v3977, %v4329
        %v4331 = vpop.f32.mrf.mxu0
        %v4332 = vadd.f32 %v3979, %v4331
        %4333 = vmatprep.mubr.bf16.mxu0 %v3369
        %4334 = vmatmul.mubr.bf16.gmra.mxu0 %v3368
        %v4335 = vpop.f32.mrf.mxu0
        %v4336 = vadd.f32 %v3983, %v4335
        %v4337 = vpop.f32.mrf.mxu0
        %v4338 = vadd.f32 %v3985, %v4337
        %v4339 = vpop.f32.mrf.mxu0
        %v4340 = vadd.f32 %v3987, %v4339
        %v4341 = vpop.f32.mrf.mxu0
        %v4342 = vadd.f32 %v3989, %v4341
        %4343 = vmatprep.mubr.bf16.mxu0 %v3373
        %4344 = vmatmul.mubr.bf16.gmra.mxu0 %v3372
        %v4345 = vpop.f32.mrf.mxu0
        %v4346 = vadd.f32 %v3993, %v4345
        %v4347 = vpop.f32.mrf.mxu0
        %v4348 = vadd.f32 %v3995, %v4347
        %v4349 = vpop.f32.mrf.mxu0
        %v4350 = vadd.f32 %v3997, %v4349
        %v4351 = vpop.f32.mrf.mxu0
        %v4352 = vadd.f32 %v3999, %v4351
        %4353 = vmatprep.mubr.bf16.mxu0 %v3377
        %4354 = vmatmul.mubr.bf16.gmra.mxu0 %v3376
        %v4355 = vpop.f32.mrf.mxu0
        %v4356 = vadd.f32 %v4003, %v4355
        %v4357 = vpop.f32.mrf.mxu0
        %v4358 = vadd.f32 %v4005, %v4357
        %v4359 = vpop.f32.mrf.mxu0
        %v4360 = vadd.f32 %v4007, %v4359
        %v4361 = vpop.f32.mrf.mxu0
        %v4362 = vadd.f32 %v4009, %v4361
        %4363 = vmatprep.mubr.bf16.mxu0 %v3381
        %4364 = vmatmul.mubr.bf16.gmra.mxu0 %v3380
        %v4365 = vpop.f32.mrf.mxu0
        %v4366 = vadd.f32 %v4013, %v4365
        %v4367 = vpop.f32.mrf.mxu0
        %v4368 = vadd.f32 %v4015, %v4367
        %v4369 = vpop.f32.mrf.mxu0
        %v4370 = vadd.f32 %v4017, %v4369
        %v4371 = vpop.f32.mrf.mxu0
        %v4372 = vadd.f32 %v4019, %v4371
        %4373 = vmatprep.mubr.bf16.mxu0 %v3385
        %4374 = vmatmul.mubr.bf16.gmra.mxu0 %v3384
        %v4375 = vpop.f32.mrf.mxu0
        %v4376 = vadd.f32 %v4023, %v4375
        %v4377 = vpop.f32.mrf.mxu0
        %v4378 = vadd.f32 %v4025, %v4377
        %v4379 = vpop.f32.mrf.mxu0
        %v4380 = vadd.f32 %v4027, %v4379
        %v4381 = vpop.f32.mrf.mxu0
        %v4382 = vadd.f32 %v4029, %v4381
        %4383 = vmatprep.mubr.bf16.mxu0 %v3389
        %4384 = vmatmul.mubr.bf16.gmra.mxu0 %v3388
        %v4385 = vpop.f32.mrf.mxu0
        %v4386 = vadd.f32 %v4033, %v4385
        %v4387 = vpop.f32.mrf.mxu0
        %v4388 = vadd.f32 %v4035, %v4387
        %v4389 = vpop.f32.mrf.mxu0
        %v4390 = vadd.f32 %v4037, %v4389
        %v4391 = vpop.f32.mrf.mxu0
        %v4392 = vadd.f32 %v4039, %v4391
        %4393 = vmatprep.mubr.bf16.mxu0 %v3393
        %4394 = vmatmul.mubr.bf16.gmra.mxu0 %v3392
        %v4395 = vpop.f32.mrf.mxu0
        %v4396 = vadd.f32 %v4043, %v4395
        %v4397 = vpop.f32.mrf.mxu0
        %v4398 = vadd.f32 %v4045, %v4397
        %v4399 = vpop.f32.mrf.mxu0
        %v4400 = vadd.f32 %v4047, %v4399
        %v4401 = vpop.f32.mrf.mxu0
        %v4402 = vadd.f32 %v4049, %v4401
        %4403 = vmatprep.mubr.bf16.mxu0 %v3397
        %4404 = vmatmul.mubr.bf16.gmra.mxu0 %v3396
        %v4405 = vpop.f32.mrf.mxu0
        %v4406 = vadd.f32 %v4053, %v4405
        %v4407 = vpop.f32.mrf.mxu0
        %v4408 = vadd.f32 %v4055, %v4407
        %v4409 = vpop.f32.mrf.mxu0
        %v4410 = vadd.f32 %v4057, %v4409
        %v4411 = vpop.f32.mrf.mxu0
        %v4412 = vadd.f32 %v4059, %v4411
        %4413 = vmatprep.mubr.bf16.mxu0 %v3401
        %4414 = vmatmul.mubr.bf16.gmra.mxu0 %v3400
        %v4415 = vpop.f32.mrf.mxu0
        %v4416 = vadd.f32 %v4063, %v4415
        %v4417 = vpop.f32.mrf.mxu0
        %v4418 = vadd.f32 %v4065, %v4417
        %v4419 = vpop.f32.mrf.mxu0
        %v4420 = vadd.f32 %v4067, %v4419
        %v4421 = vpop.f32.mrf.mxu0
        %v4422 = vadd.f32 %v4069, %v4421
        %4423 = vmatprep.mubr.bf16.mxu0 %v3405
        %4424 = vmatmul.mubr.bf16.gmra.mxu0 %v3404
        %v4425 = vpop.f32.mrf.mxu0
        %v4426 = vadd.f32 %v4073, %v4425
        %v4427 = vpop.f32.mrf.mxu0
        %v4428 = vadd.f32 %v4075, %v4427
        %v4429 = vpop.f32.mrf.mxu0
        %v4430 = vadd.f32 %v4077, %v4429
        %v4431 = vpop.f32.mrf.mxu0
        %v4432 = vadd.f32 %v4079, %v4431
        %4433 = vmatprep.mubr.bf16.mxu0 %v3409
        %4434 = vmatmul.mubr.bf16.gmra.mxu0 %v3408
        %v4435 = vpop.f32.mrf.mxu0
        %v4436 = vadd.f32 %v4083, %v4435
        %v4437 = vpop.f32.mrf.mxu0
        %v4438 = vadd.f32 %v4085, %v4437
        %v4439 = vpop.f32.mrf.mxu0
        %v4440 = vadd.f32 %v4087, %v4439
        %v4441 = vpop.f32.mrf.mxu0
        %v4442 = vadd.f32 %v4089, %v4441
        %4443 = vmatprep.mubr.bf16.mxu0 %v3413
        %4444 = vmatmul.mubr.bf16.gmra.mxu0 %v3412
        %v4445 = vpop.f32.mrf.mxu0
        %v4446 = vadd.f32 %v4093, %v4445
        %v4447 = vpop.f32.mrf.mxu0
        %v4448 = vadd.f32 %v4095, %v4447
        %v4449 = vpop.f32.mrf.mxu0
        %v4450 = vadd.f32 %v4097, %v4449
        %v4451 = vpop.f32.mrf.mxu0
        %v4452 = vadd.f32 %v4099, %v4451
        %4453 = vmatprep.mubr.bf16.mxu0 %v3417
        %4454 = vmatmul.mubr.bf16.gmra.mxu0 %v3416
        %v4455 = vpop.f32.mrf.mxu0
        %v4456 = vadd.f32 %v4103, %v4455
        %v4457 = vpop.f32.mrf.mxu0
        %v4458 = vadd.f32 %v4105, %v4457
        %v4459 = vpop.f32.mrf.mxu0
        %v4460 = vadd.f32 %v4107, %v4459
        %v4461 = vpop.f32.mrf.mxu0
        %v4462 = vadd.f32 %v4109, %v4461
        %4463 = vmatprep.mubr.bf16.mxu0 %v3421
        %4464 = vmatmul.mubr.bf16.gmra.mxu0 %v3420
        %v4465 = vpop.f32.mrf.mxu0
        %v4466 = vadd.f32 %v4113, %v4465
        %v4467 = vpop.f32.mrf.mxu0
        %v4468 = vadd.f32 %v4115, %v4467
        %v4469 = vpop.f32.mrf.mxu0
        %v4470 = vadd.f32 %v4117, %v4469
        %v4471 = vpop.f32.mrf.mxu0
        %v4472 = vadd.f32 %v4119, %v4471
        %4473 = vmatprep.mubr.bf16.mxu0 %v3425
        %4474 = vmatmul.mubr.bf16.gmra.mxu0 %v3424
        %v4475 = vpop.f32.mrf.mxu0
        %v4476 = vadd.f32 %v4123, %v4475
        %v4477 = vpop.f32.mrf.mxu0
        %v4478 = vadd.f32 %v4125, %v4477
        %v4479 = vpop.f32.mrf.mxu0
        %v4480 = vadd.f32 %v4127, %v4479
        %v4481 = vpop.f32.mrf.mxu0
        %v4482 = vadd.f32 %v4129, %v4481
        %4483 = vmatprep.mubr.bf16.mxu0 %v3429
        %4484 = vmatmul.mubr.bf16.gmra.mxu0 %v3428
        %v4485 = vpop.f32.mrf.mxu0
        %v4486 = vadd.f32 %v4133, %v4485
        %v4487 = vpop.f32.mrf.mxu0
        %v4488 = vadd.f32 %v4135, %v4487
        %v4489 = vpop.f32.mrf.mxu0
        %v4490 = vadd.f32 %v4137, %v4489
        %v4491 = vpop.f32.mrf.mxu0
        %v4492 = vadd.f32 %v4139, %v4491
        %4493 = vmatprep.mubr.bf16.mxu0 %v3433
        %4494 = vmatmul.mubr.bf16.gmra.mxu0 %v3432
        %v4495 = vpop.f32.mrf.mxu0
        %v4496 = vadd.f32 %v4143, %v4495
        %v4497 = vpop.f32.mrf.mxu0
        %v4498 = vadd.f32 %v4145, %v4497
        %v4499 = vpop.f32.mrf.mxu0
        %v4500 = vadd.f32 %v4147, %v4499
        %v4501 = vpop.f32.mrf.mxu0
        %v4502 = vadd.f32 %v4149, %v4501
        %4503 = vmatprep.mubr.bf16.mxu0 %v3437
        %4504 = vmatmul.mubr.bf16.gmra.mxu0 %v3436
        %v4505 = vpop.f32.mrf.mxu0
        %v4506 = vadd.f32 %v4153, %v4505
        %v4507 = vpop.f32.mrf.mxu0
        %v4508 = vadd.f32 %v4155, %v4507
        %v4509 = vpop.f32.mrf.mxu0
        %v4510 = vadd.f32 %v4157, %v4509
        %v4511 = vpop.f32.mrf.mxu0
        %v4512 = vadd.f32 %v4159, %v4511
        %4513 = vmatprep.mubr.bf16.mxu0 %v3441
        %4514 = vmatmul.mubr.bf16.gmra.mxu0 %v3440
        %v4515 = vpop.f32.mrf.mxu0
        %v4516 = vadd.f32 %v4163, %v4515
        %v4517 = vpop.f32.mrf.mxu0
        %v4518 = vadd.f32 %v4165, %v4517
        %v4519 = vpop.f32.mrf.mxu0
        %v4520 = vadd.f32 %v4167, %v4519
        %v4521 = vpop.f32.mrf.mxu0
        %v4522 = vadd.f32 %v4169, %v4521
        %4523 = vmatprep.mubr.bf16.mxu0 %v3445
        %4524 = vmatmul.mubr.bf16.gmra.mxu0 %v3444
        %v4525 = vpop.f32.mrf.mxu0
        %v4526 = vadd.f32 %v4173, %v4525
        %v4527 = vpop.f32.mrf.mxu0
        %v4528 = vadd.f32 %v4175, %v4527
        %v4529 = vpop.f32.mrf.mxu0
        %v4530 = vadd.f32 %v4177, %v4529
        %v4531 = vpop.f32.mrf.mxu0
        %v4532 = vadd.f32 %v4179, %v4531
        %4533 = vmatprep.mubr.bf16.mxu0 %v3449
        %4534 = vmatmul.mubr.bf16.gmra.mxu0 %v3448
        %v4535 = vpop.f32.mrf.mxu0
        %v4536 = vadd.f32 %v4183, %v4535
        %v4537 = vpop.f32.mrf.mxu0
        %v4538 = vadd.f32 %v4185, %v4537
        %v4539 = vpop.f32.mrf.mxu0
        %v4540 = vadd.f32 %v4187, %v4539
        %v4541 = vpop.f32.mrf.mxu0
        %v4542 = vadd.f32 %v4189, %v4541
        %4543 = vmatprep.mubr.bf16.mxu0 %v3453
        %4544 = vmatmul.mubr.bf16.gmra.mxu0 %v3452
        %v4545 = vpop.f32.mrf.mxu0
        %v4546 = vadd.f32 %v4193, %v4545
        %v4547 = vpop.f32.mrf.mxu0
        %v4548 = vadd.f32 %v4195, %v4547
        %v4549 = vpop.f32.mrf.mxu0
        %v4550 = vadd.f32 %v4197, %v4549
        %v4551 = vpop.f32.mrf.mxu0
        %v4552 = vadd.f32 %v4199, %v4551
        %4553 = vmatprep.mubr.bf16.mxu0 %v3457
        %4554 = vmatmul.mubr.bf16.gmra.mxu0 %v3456
        %v4555 = vpop.f32.mrf.mxu0
        %v4556 = vadd.f32 %v4203, %v4555
        %v4557 = vpop.f32.mrf.mxu0
        %v4558 = vadd.f32 %v4205, %v4557
        %v4559 = vpop.f32.mrf.mxu0
        %v4560 = vadd.f32 %v4207, %v4559
        %v4561 = vpop.f32.mrf.mxu0
        %v4562 = vadd.f32 %v4209, %v4561
        %4563 = vmatprep.mubr.bf16.mxu0 %v3461
        %4564 = vmatmul.mubr.bf16.gmra.mxu0 %v3460
        %v4565 = vpop.f32.mrf.mxu0
        %v4566 = vadd.f32 %v4213, %v4565
        %v4567 = vpop.f32.mrf.mxu0
        %v4568 = vadd.f32 %v4215, %v4567
        %v4569 = vpop.f32.mrf.mxu0
        %v4570 = vadd.f32 %v4217, %v4569
        %v4571 = vpop.f32.mrf.mxu0
        %v4572 = vadd.f32 %v4219, %v4571
        %4573 = vmatprep.mubr.bf16.mxu0 %v3465
        %4574 = vmatmul.mubr.bf16.gmra.mxu0 %v3464
        %v4575 = vpop.f32.mrf.mxu0
        %v4576 = vadd.f32 %v4223, %v4575
        %v4577 = vpop.f32.mrf.mxu0
        %v4578 = vadd.f32 %v4225, %v4577
        %v4579 = vpop.f32.mrf.mxu0
        %v4580 = vadd.f32 %v4227, %v4579
        %v4581 = vpop.f32.mrf.mxu0
        %v4582 = vadd.f32 %v4229, %v4581
        %4583 = vmatprep.mubr.bf16.mxu0 %v3469
        %4584 = vmatmul.mubr.bf16.gmra.mxu0 %v3468
        %v4585 = vpop.f32.mrf.mxu0
        %v4586 = vadd.f32 %v4233, %v4585
        %v4587 = vpop.f32.mrf.mxu0
        %v4588 = vadd.f32 %v4235, %v4587
        %v4589 = vpop.f32.mrf.mxu0
        %v4590 = vadd.f32 %v4237, %v4589
        %v4591 = vpop.f32.mrf.mxu0
        %v4592 = vadd.f32 %v4239, %v4591
        %4593 = vmatprep.mubr.bf16.mxu0 %v3473
        %4594 = vmatmul.mubr.bf16.gmra.mxu0 %v3472
        %v4595 = vpop.f32.mrf.mxu0
        %v4596 = vadd.f32 %v4243, %v4595
        %v4597 = vpop.f32.mrf.mxu0
        %v4598 = vadd.f32 %v4245, %v4597
        %v4599 = vpop.f32.mrf.mxu0
        %v4600 = vadd.f32 %v4247, %v4599
        %v4601 = vpop.f32.mrf.mxu0
        %v4602 = vadd.f32 %v4249, %v4601
        %4603 = vmatprep.mubr.bf16.mxu0 %v3477
        %4604 = vmatmul.mubr.bf16.gmra.mxu0 %v3476
        %v4605 = vpop.f32.mrf.mxu0
        %v4606 = vadd.f32 %v4253, %v4605
        %v4607 = vpop.f32.mrf.mxu0
        %v4608 = vadd.f32 %v4255, %v4607
        %v4609 = vpop.f32.mrf.mxu0
        %v4610 = vadd.f32 %v4257, %v4609
        %v4611 = vpop.f32.mrf.mxu0
        %v4612 = vadd.f32 %v4259, %v4611
        %4613 = vmatprep.mubr.bf16.mxu0 %v3481
        %4614 = vmatmul.mubr.bf16.gmra.mxu0 %v3480
        %v4615 = vpop.f32.mrf.mxu0
        %v4616 = vadd.f32 %v4263, %v4615
        %v4617 = vpop.f32.mrf.mxu0
        %v4618 = vadd.f32 %v4265, %v4617
        %v4619 = vpop.f32.mrf.mxu0
        %v4620 = vadd.f32 %v4267, %v4619
        %v4621 = vpop.f32.mrf.mxu0
        %v4622 = vadd.f32 %v4269, %v4621
        %4623 = vmatprep.mubr.bf16.mxu0 %v3485
        %4624 = vmatmul.mubr.bf16.gmra.mxu0 %v3484
        %v4625 = vpop.f32.mrf.mxu0
        %v4626 = vadd.f32 %v4273, %v4625
        %v4627 = vpop.f32.mrf.mxu0
        %v4628 = vadd.f32 %v4275, %v4627
        %v4629 = vpop.f32.mrf.mxu0
        %v4630 = vadd.f32 %v4277, %v4629
        %v4631 = vpop.f32.mrf.mxu0
        %v4632 = vadd.f32 %v4279, %v4631
        %4633 = vmatprep.mubr.bf16.mxu0 %v3489
        %4634 = vmatmul.mubr.bf16.gmra.mxu0 %v3488
        %v4635 = vpop.f32.mrf.mxu0
        %v4636 = vadd.f32 %v4283, %v4635
        %v4637 = vpop.f32.mrf.mxu0
        %v4638 = vadd.f32 %v4285, %v4637
        %v4639 = vpop.f32.mrf.mxu0
        %v4640 = vadd.f32 %v4287, %v4639
        %v4641 = vpop.f32.mrf.mxu0
        %v4642 = vadd.f32 %v4289, %v4641
        %4643 = vdwg.mxu0
        %v4644 = vmul.f32 %v4326, 0.2
        %v4645 = vmul.f32 %v4328, 0.2
        %v4646 = vmul.f32 %v4330, 0.2
        %v4647 = vmul.f32 %v4332, 0.2
        %v4648 = vmul.f32 %v4336, 0.2
        %v4649 = vmul.f32 %v4338, 0.2
        %v4650 = vmul.f32 %v4340, 0.2
        %v4651 = vmul.f32 %v4342, 0.2
        %v4652 = vmul.f32 %v4346, 0.2
        %v4653 = vmul.f32 %v4348, 0.2
        %v4654 = vmul.f32 %v4350, 0.2
        %v4655 = vmul.f32 %v4352, 0.2
        %v4656 = vmul.f32 %v4356, 0.2
        %v4657 = vmul.f32 %v4358, 0.2
        %v4658 = vmul.f32 %v4360, 0.2
        %v4659 = vmul.f32 %v4362, 0.2
        %v4660 = vmul.f32 %v4366, 0.2
        %v4661 = vmul.f32 %v4368, 0.2
        %v4662 = vmul.f32 %v4370, 0.2
        %v4663 = vmul.f32 %v4372, 0.2
        %v4664 = vmul.f32 %v4376, 0.2
        %v4665 = vmul.f32 %v4378, 0.2
        %v4666 = vmul.f32 %v4380, 0.2
        %v4667 = vmul.f32 %v4382, 0.2
        %v4668 = vmul.f32 %v4386, 0.2
        %v4669 = vmul.f32 %v4388, 0.2
        %v4670 = vmul.f32 %v4390, 0.2
        %v4671 = vmul.f32 %v4392, 0.2
        %v4672 = vmul.f32 %v4396, 0.2
        %v4673 = vmul.f32 %v4398, 0.2
        %v4674 = vmul.f32 %v4400, 0.2
        %v4675 = vmul.f32 %v4402, 0.2
        %v4676 = vmul.f32 %v4406, 0.2
        %v4677 = vmul.f32 %v4408, 0.2
        %v4678 = vmul.f32 %v4410, 0.2
        %v4679 = vmul.f32 %v4412, 0.2
        %v4680 = vmul.f32 %v4416, 0.2
        %v4681 = vmul.f32 %v4418, 0.2
        %v4682 = vmul.f32 %v4420, 0.2
        %v4683 = vmul.f32 %v4422, 0.2
        %v4684 = vmul.f32 %v4426, 0.2
        %v4685 = vmul.f32 %v4428, 0.2
        %v4686 = vmul.f32 %v4430, 0.2
        %v4687 = vmul.f32 %v4432, 0.2
        %v4688 = vmul.f32 %v4436, 0.2
        %v4689 = vmul.f32 %v4438, 0.2
        %v4690 = vmul.f32 %v4440, 0.2
        %v4691 = vmul.f32 %v4442, 0.2
        %v4692 = vmul.f32 %v4446, 0.2
        %v4693 = vmul.f32 %v4448, 0.2
        %v4694 = vmul.f32 %v4450, 0.2
        %v4695 = vmul.f32 %v4452, 0.2
        %v4696 = vmul.f32 %v4456, 0.2
        %v4697 = vmul.f32 %v4458, 0.2
        %v4698 = vmul.f32 %v4460, 0.2
        %v4699 = vmul.f32 %v4462, 0.2
        %v4700 = vmul.f32 %v4466, 0.2
        %v4701 = vmul.f32 %v4468, 0.2
        %v4702 = vmul.f32 %v4470, 0.2
        %v4703 = vmul.f32 %v4472, 0.2
        %v4704 = vmul.f32 %v4476, 0.2
        %v4705 = vmul.f32 %v4478, 0.2
        %v4706 = vmul.f32 %v4480, 0.2
        %v4707 = vmul.f32 %v4482, 0.2
        %v4708 = vmul.f32 %v4486, 0.2
        %v4709 = vmul.f32 %v4488, 0.2
        %v4710 = vmul.f32 %v4490, 0.2
        %v4711 = vmul.f32 %v4492, 0.2
        %v4712 = vmul.f32 %v4496, 0.2
        %v4713 = vmul.f32 %v4498, 0.2
        %v4714 = vmul.f32 %v4500, 0.2
        %v4715 = vmul.f32 %v4502, 0.2
        %v4716 = vmul.f32 %v4506, 0.2
        %v4717 = vmul.f32 %v4508, 0.2
        %v4718 = vmul.f32 %v4510, 0.2
        %v4719 = vmul.f32 %v4512, 0.2
        %v4720 = vmul.f32 %v4516, 0.2
        %v4721 = vmul.f32 %v4518, 0.2
        %v4722 = vmul.f32 %v4520, 0.2
        %v4723 = vmul.f32 %v4522, 0.2
        %v4724 = vmul.f32 %v4526, 0.2
        %v4725 = vmul.f32 %v4528, 0.2
        %v4726 = vmul.f32 %v4530, 0.2
        %v4727 = vmul.f32 %v4532, 0.2
        %v4728 = vmul.f32 %v4536, 0.2
        %v4729 = vmul.f32 %v4538, 0.2
        %v4730 = vmul.f32 %v4540, 0.2
        %v4731 = vmul.f32 %v4542, 0.2
        %v4732 = vmul.f32 %v4546, 0.2
        %v4733 = vmul.f32 %v4548, 0.2
        %v4734 = vmul.f32 %v4550, 0.2
        %v4735 = vmul.f32 %v4552, 0.2
        %v4736 = vmul.f32 %v4556, 0.2
        %v4737 = vmul.f32 %v4558, 0.2
        %v4738 = vmul.f32 %v4560, 0.2
        %v4739 = vmul.f32 %v4562, 0.2
        %v4740 = vmul.f32 %v4566, 0.2
        %v4741 = vmul.f32 %v4568, 0.2
        %v4742 = vmul.f32 %v4570, 0.2
        %v4743 = vmul.f32 %v4572, 0.2
        %v4744 = vmul.f32 %v4576, 0.2
        %v4745 = vmul.f32 %v4578, 0.2
        %v4746 = vmul.f32 %v4580, 0.2
        %v4747 = vmul.f32 %v4582, 0.2
        %v4748 = vmul.f32 %v4586, 0.2
        %v4749 = vmul.f32 %v4588, 0.2
        %v4750 = vmul.f32 %v4590, 0.2
        %v4751 = vmul.f32 %v4592, 0.2
        %v4752 = vmul.f32 %v4596, 0.2
        %v4753 = vmul.f32 %v4598, 0.2
        %v4754 = vmul.f32 %v4600, 0.2
        %v4755 = vmul.f32 %v4602, 0.2
        %v4756 = vmul.f32 %v4606, 0.2
        %v4757 = vmul.f32 %v4608, 0.2
        %v4758 = vmul.f32 %v4610, 0.2
        %v4759 = vmul.f32 %v4612, 0.2
        %v4760 = vmul.f32 %v4616, 0.2
        %v4761 = vmul.f32 %v4618, 0.2
        %v4762 = vmul.f32 %v4620, 0.2
        %v4763 = vmul.f32 %v4622, 0.2
        %v4764 = vmul.f32 %v4626, 0.2
        %v4765 = vmul.f32 %v4628, 0.2
        %v4766 = vmul.f32 %v4630, 0.2
        %v4767 = vmul.f32 %v4632, 0.2
        %v4768 = vmul.f32 %v4636, 0.2
        %v4769 = vmul.f32 %v4638, 0.2
        %v4770 = vmul.f32 %v4640, 0.2
        %v4771 = vmul.f32 %v4642, 0.2
        %v4772 = vmax.f32 %v4326, %v4644
        %v4773 = vmax.f32 %v4328, %v4645
        %v4774 = vmax.f32 %v4330, %v4646
        %v4775 = vmax.f32 %v4332, %v4647
        %v4776 = vmax.f32 %v4336, %v4648
        %v4777 = vmax.f32 %v4338, %v4649
        %v4778 = vmax.f32 %v4340, %v4650
        %v4779 = vmax.f32 %v4342, %v4651
        %v4780 = vmax.f32 %v4346, %v4652
        %v4781 = vmax.f32 %v4348, %v4653
        %v4782 = vmax.f32 %v4350, %v4654
        %v4783 = vmax.f32 %v4352, %v4655
        %v4784 = vmax.f32 %v4356, %v4656
        %v4785 = vmax.f32 %v4358, %v4657
        %v4786 = vmax.f32 %v4360, %v4658
        %v4787 = vmax.f32 %v4362, %v4659
        %v4788 = vmax.f32 %v4366, %v4660
        %v4789 = vmax.f32 %v4368, %v4661
        %v4790 = vmax.f32 %v4370, %v4662
        %v4791 = vmax.f32 %v4372, %v4663
        %v4792 = vmax.f32 %v4376, %v4664
        %v4793 = vmax.f32 %v4378, %v4665
        %v4794 = vmax.f32 %v4380, %v4666
        %v4795 = vmax.f32 %v4382, %v4667
        %v4796 = vmax.f32 %v4386, %v4668
        %v4797 = vmax.f32 %v4388, %v4669
        %v4798 = vmax.f32 %v4390, %v4670
        %v4799 = vmax.f32 %v4392, %v4671
        %v4800 = vmax.f32 %v4396, %v4672
        %v4801 = vmax.f32 %v4398, %v4673
        %v4802 = vmax.f32 %v4400, %v4674
        %v4803 = vmax.f32 %v4402, %v4675
        %v4804 = vmax.f32 %v4406, %v4676
        %v4805 = vmax.f32 %v4408, %v4677
        %v4806 = vmax.f32 %v4410, %v4678
        %v4807 = vmax.f32 %v4412, %v4679
        %v4808 = vmax.f32 %v4416, %v4680
        %v4809 = vmax.f32 %v4418, %v4681
        %v4810 = vmax.f32 %v4420, %v4682
        %v4811 = vmax.f32 %v4422, %v4683
        %v4812 = vmax.f32 %v4426, %v4684
        %v4813 = vmax.f32 %v4428, %v4685
        %v4814 = vmax.f32 %v4430, %v4686
        %v4815 = vmax.f32 %v4432, %v4687
        %v4816 = vmax.f32 %v4436, %v4688
        %v4817 = vmax.f32 %v4438, %v4689
        %v4818 = vmax.f32 %v4440, %v4690
        %v4819 = vmax.f32 %v4442, %v4691
        %v4820 = vmax.f32 %v4446, %v4692
        %v4821 = vmax.f32 %v4448, %v4693
        %v4822 = vmax.f32 %v4450, %v4694
        %v4823 = vmax.f32 %v4452, %v4695
        %v4824 = vmax.f32 %v4456, %v4696
        %v4825 = vmax.f32 %v4458, %v4697
        %v4826 = vmax.f32 %v4460, %v4698
        %v4827 = vmax.f32 %v4462, %v4699
        %v4828 = vmax.f32 %v4466, %v4700
        %v4829 = vmax.f32 %v4468, %v4701
        %v4830 = vmax.f32 %v4470, %v4702
        %v4831 = vmax.f32 %v4472, %v4703
        %v4832 = vmax.f32 %v4476, %v4704
        %v4833 = vmax.f32 %v4478, %v4705
        %v4834 = vmax.f32 %v4480, %v4706
        %v4835 = vmax.f32 %v4482, %v4707
        %v4836 = vmax.f32 %v4486, %v4708
        %v4837 = vmax.f32 %v4488, %v4709
        %v4838 = vmax.f32 %v4490, %v4710
        %v4839 = vmax.f32 %v4492, %v4711
        %v4840 = vmax.f32 %v4496, %v4712
        %v4841 = vmax.f32 %v4498, %v4713
        %v4842 = vmax.f32 %v4500, %v4714
        %v4843 = vmax.f32 %v4502, %v4715
        %v4844 = vmax.f32 %v4506, %v4716
        %v4845 = vmax.f32 %v4508, %v4717
        %v4846 = vmax.f32 %v4510, %v4718
        %v4847 = vmax.f32 %v4512, %v4719
        %v4848 = vmax.f32 %v4516, %v4720
        %v4849 = vmax.f32 %v4518, %v4721
        %v4850 = vmax.f32 %v4520, %v4722
        %v4851 = vmax.f32 %v4522, %v4723
        %v4852 = vmax.f32 %v4526, %v4724
        %v4853 = vmax.f32 %v4528, %v4725
        %v4854 = vmax.f32 %v4530, %v4726
        %v4855 = vmax.f32 %v4532, %v4727
        %v4856 = vmax.f32 %v4536, %v4728
        %v4857 = vmax.f32 %v4538, %v4729
        %v4858 = vmax.f32 %v4540, %v4730
        %v4859 = vmax.f32 %v4542, %v4731
        %v4860 = vmax.f32 %v4546, %v4732
        %v4861 = vmax.f32 %v4548, %v4733
        %v4862 = vmax.f32 %v4550, %v4734
        %v4863 = vmax.f32 %v4552, %v4735
        %v4864 = vmax.f32 %v4556, %v4736
        %v4865 = vmax.f32 %v4558, %v4737
        %v4866 = vmax.f32 %v4560, %v4738
        %v4867 = vmax.f32 %v4562, %v4739
        %v4868 = vmax.f32 %v4566, %v4740
        %v4869 = vmax.f32 %v4568, %v4741
        %v4870 = vmax.f32 %v4570, %v4742
        %v4871 = vmax.f32 %v4572, %v4743
        %v4872 = vmax.f32 %v4576, %v4744
        %v4873 = vmax.f32 %v4578, %v4745
        %v4874 = vmax.f32 %v4580, %v4746
        %v4875 = vmax.f32 %v4582, %v4747
        %v4876 = vmax.f32 %v4586, %v4748
        %v4877 = vmax.f32 %v4588, %v4749
        %v4878 = vmax.f32 %v4590, %v4750
        %v4879 = vmax.f32 %v4592, %v4751
        %v4880 = vmax.f32 %v4596, %v4752
        %v4881 = vmax.f32 %v4598, %v4753
        %v4882 = vmax.f32 %v4600, %v4754
        %v4883 = vmax.f32 %v4602, %v4755
        %v4884 = vmax.f32 %v4606, %v4756
        %v4885 = vmax.f32 %v4608, %v4757
        %v4886 = vmax.f32 %v4610, %v4758
        %v4887 = vmax.f32 %v4612, %v4759
        %v4888 = vmax.f32 %v4616, %v4760
        %v4889 = vmax.f32 %v4618, %v4761
        %v4890 = vmax.f32 %v4620, %v4762
        %v4891 = vmax.f32 %v4622, %v4763
        %v4892 = vmax.f32 %v4626, %v4764
        %v4893 = vmax.f32 %v4628, %v4765
        %v4894 = vmax.f32 %v4630, %v4766
        %v4895 = vmax.f32 %v4632, %v4767
        %v4896 = vmax.f32 %v4636, %v4768
        %v4897 = vmax.f32 %v4638, %v4769
        %v4898 = vmax.f32 %v4640, %v4770
        %v4899 = vmax.f32 %v4642, %v4771
        %v4900 = vld [vmem:[%s6] sm:$0x3]
        %v4902 = vlaneseq
        %v4903 = vshrl.u32 %v4902, 7
        %v4904 = vsub.s32 0, %v4903
        %v4905 = vrot.slane %v4900, %v4904
        %v4906 = vlaneseq
        %v4907 = vshrl.u32 %v4906, 7
        %v4908 = vsub.s32 1, %v4907
        %v4909 = vrot.slane %v4900, %v4908
        %v4912 = vmul.f32 %v4772, %v4905
        %v4913 = vmul.f32 %v4773, %v4909
        %v4914 = vmul.f32 %v4774, %v4905
        %v4915 = vmul.f32 %v4775, %v4909
        %v4916 = vmul.f32 %v4776, %v4905
        %v4917 = vmul.f32 %v4777, %v4909
        %v4918 = vmul.f32 %v4778, %v4905
        %v4919 = vmul.f32 %v4779, %v4909
        %v4920 = vmul.f32 %v4780, %v4905
        %v4921 = vmul.f32 %v4781, %v4909
        %v4922 = vmul.f32 %v4782, %v4905
        %v4923 = vmul.f32 %v4783, %v4909
        %v4924 = vmul.f32 %v4784, %v4905
        %v4925 = vmul.f32 %v4785, %v4909
        %v4926 = vmul.f32 %v4786, %v4905
        %v4927 = vmul.f32 %v4787, %v4909
        %v4928 = vmul.f32 %v4788, %v4905
        %v4929 = vmul.f32 %v4789, %v4909
        %v4930 = vmul.f32 %v4790, %v4905
        %v4931 = vmul.f32 %v4791, %v4909
        %v4932 = vmul.f32 %v4792, %v4905
        %v4933 = vmul.f32 %v4793, %v4909
        %v4934 = vmul.f32 %v4794, %v4905
        %v4935 = vmul.f32 %v4795, %v4909
        %v4936 = vmul.f32 %v4796, %v4905
        %v4937 = vmul.f32 %v4797, %v4909
        %v4938 = vmul.f32 %v4798, %v4905
        %v4939 = vmul.f32 %v4799, %v4909
        %v4940 = vmul.f32 %v4800, %v4905
        %v4941 = vmul.f32 %v4801, %v4909
        %v4942 = vmul.f32 %v4802, %v4905
        %v4943 = vmul.f32 %v4803, %v4909
        %v4944 = vmul.f32 %v4804, %v4905
        %v4945 = vmul.f32 %v4805, %v4909
        %v4946 = vmul.f32 %v4806, %v4905
        %v4947 = vmul.f32 %v4807, %v4909
        %v4948 = vmul.f32 %v4808, %v4905
        %v4949 = vmul.f32 %v4809, %v4909
        %v4950 = vmul.f32 %v4810, %v4905
        %v4951 = vmul.f32 %v4811, %v4909
        %v4952 = vmul.f32 %v4812, %v4905
        %v4953 = vmul.f32 %v4813, %v4909
        %v4954 = vmul.f32 %v4814, %v4905
        %v4955 = vmul.f32 %v4815, %v4909
        %v4956 = vmul.f32 %v4816, %v4905
        %v4957 = vmul.f32 %v4817, %v4909
        %v4958 = vmul.f32 %v4818, %v4905
        %v4959 = vmul.f32 %v4819, %v4909
        %v4960 = vmul.f32 %v4820, %v4905
        %v4961 = vmul.f32 %v4821, %v4909
        %v4962 = vmul.f32 %v4822, %v4905
        %v4963 = vmul.f32 %v4823, %v4909
        %v4964 = vmul.f32 %v4824, %v4905
        %v4965 = vmul.f32 %v4825, %v4909
        %v4966 = vmul.f32 %v4826, %v4905
        %v4967 = vmul.f32 %v4827, %v4909
        %v4968 = vmul.f32 %v4828, %v4905
        %v4969 = vmul.f32 %v4829, %v4909
        %v4970 = vmul.f32 %v4830, %v4905
        %v4971 = vmul.f32 %v4831, %v4909
        %v4972 = vmul.f32 %v4832, %v4905
        %v4973 = vmul.f32 %v4833, %v4909
        %v4974 = vmul.f32 %v4834, %v4905
        %v4975 = vmul.f32 %v4835, %v4909
        %v4976 = vmul.f32 %v4836, %v4905
        %v4977 = vmul.f32 %v4837, %v4909
        %v4978 = vmul.f32 %v4838, %v4905
        %v4979 = vmul.f32 %v4839, %v4909
        %v4980 = vmul.f32 %v4840, %v4905
        %v4981 = vmul.f32 %v4841, %v4909
        %v4982 = vmul.f32 %v4842, %v4905
        %v4983 = vmul.f32 %v4843, %v4909
        %v4984 = vmul.f32 %v4844, %v4905
        %v4985 = vmul.f32 %v4845, %v4909
        %v4986 = vmul.f32 %v4846, %v4905
        %v4987 = vmul.f32 %v4847, %v4909
        %v4988 = vmul.f32 %v4848, %v4905
        %v4989 = vmul.f32 %v4849, %v4909
        %v4990 = vmul.f32 %v4850, %v4905
        %v4991 = vmul.f32 %v4851, %v4909
        %v4992 = vmul.f32 %v4852, %v4905
        %v4993 = vmul.f32 %v4853, %v4909
        %v4994 = vmul.f32 %v4854, %v4905
        %v4995 = vmul.f32 %v4855, %v4909
        %v4996 = vmul.f32 %v4856, %v4905
        %v4997 = vmul.f32 %v4857, %v4909
        %v4998 = vmul.f32 %v4858, %v4905
        %v4999 = vmul.f32 %v4859, %v4909
        %v5000 = vmul.f32 %v4860, %v4905
        %v5001 = vmul.f32 %v4861, %v4909
        %v5002 = vmul.f32 %v4862, %v4905
        %v5003 = vmul.f32 %v4863, %v4909
        %v5004 = vmul.f32 %v4864, %v4905
        %v5005 = vmul.f32 %v4865, %v4909
        %v5006 = vmul.f32 %v4866, %v4905
        %v5007 = vmul.f32 %v4867, %v4909
        %v5008 = vmul.f32 %v4868, %v4905
        %v5009 = vmul.f32 %v4869, %v4909
        %v5010 = vmul.f32 %v4870, %v4905
        %v5011 = vmul.f32 %v4871, %v4909
        %v5012 = vmul.f32 %v4872, %v4905
        %v5013 = vmul.f32 %v4873, %v4909
        %v5014 = vmul.f32 %v4874, %v4905
        %v5015 = vmul.f32 %v4875, %v4909
        %v5016 = vmul.f32 %v4876, %v4905
        %v5017 = vmul.f32 %v4877, %v4909
        %v5018 = vmul.f32 %v4878, %v4905
        %v5019 = vmul.f32 %v4879, %v4909
        %v5020 = vmul.f32 %v4880, %v4905
        %v5021 = vmul.f32 %v4881, %v4909
        %v5022 = vmul.f32 %v4882, %v4905
        %v5023 = vmul.f32 %v4883, %v4909
        %v5024 = vmul.f32 %v4884, %v4905
        %v5025 = vmul.f32 %v4885, %v4909
        %v5026 = vmul.f32 %v4886, %v4905
        %v5027 = vmul.f32 %v4887, %v4909
        %v5028 = vmul.f32 %v4888, %v4905
        %v5029 = vmul.f32 %v4889, %v4909
        %v5030 = vmul.f32 %v4890, %v4905
        %v5031 = vmul.f32 %v4891, %v4909
        %v5032 = vmul.f32 %v4892, %v4905
        %v5033 = vmul.f32 %v4893, %v4909
        %v5034 = vmul.f32 %v4894, %v4905
        %v5035 = vmul.f32 %v4895, %v4909
        %v5036 = vmul.f32 %v4896, %v4905
        %v5037 = vmul.f32 %v4897, %v4909
        %v5038 = vmul.f32 %v4898, %v4905
        %v5039 = vmul.f32 %v4899, %v4909
        %v5040 = vadd.f32 %v4912, %v4913
        %5041 = vadd.xlane.f32.xlu0 %v5040
        %v5042 = vpop.xlane.xlu0 %5041
        %v5043 = vadd.f32 %v4914, %v4915
        %5044 = vadd.xlane.f32.xlu0 %v5043
        %v5045 = vpop.xlane.xlu0 %5044
        %v5046 = vadd.f32 %v4916, %v4917
        %5047 = vadd.xlane.f32.xlu0 %v5046
        %v5048 = vpop.xlane.xlu0 %5047
        %v5049 = vadd.f32 %v4918, %v4919
        %5050 = vadd.xlane.f32.xlu0 %v5049
        %v5051 = vpop.xlane.xlu0 %5050
        %v5052 = vadd.f32 %v4920, %v4921
        %5053 = vadd.xlane.f32.xlu0 %v5052
        %v5054 = vpop.xlane.xlu0 %5053
        %v5055 = vadd.f32 %v4922, %v4923
        %5056 = vadd.xlane.f32.xlu0 %v5055
        %v5057 = vpop.xlane.xlu0 %5056
        %v5058 = vadd.f32 %v4924, %v4925
        %5059 = vadd.xlane.f32.xlu0 %v5058
        %v5060 = vpop.xlane.xlu0 %5059
        %v5061 = vadd.f32 %v4926, %v4927
        %5062 = vadd.xlane.f32.xlu0 %v5061
        %v5063 = vpop.xlane.xlu0 %5062
        %v5064 = vadd.f32 %v4928, %v4929
        %5065 = vadd.xlane.f32.xlu0 %v5064
        %v5066 = vpop.xlane.xlu0 %5065
        %v5067 = vadd.f32 %v4930, %v4931
        %5068 = vadd.xlane.f32.xlu0 %v5067
        %v5069 = vpop.xlane.xlu0 %5068
        %v5070 = vadd.f32 %v4932, %v4933
        %5071 = vadd.xlane.f32.xlu0 %v5070
        %v5072 = vpop.xlane.xlu0 %5071
        %v5073 = vadd.f32 %v4934, %v4935
        %5074 = vadd.xlane.f32.xlu0 %v5073
        %v5075 = vpop.xlane.xlu0 %5074
        %v5076 = vadd.f32 %v4936, %v4937
        %5077 = vadd.xlane.f32.xlu0 %v5076
        %v5078 = vpop.xlane.xlu0 %5077
        %v5079 = vadd.f32 %v4938, %v4939
        %5080 = vadd.xlane.f32.xlu0 %v5079
        %v5081 = vpop.xlane.xlu0 %5080
        %v5082 = vadd.f32 %v4940, %v4941
        %5083 = vadd.xlane.f32.xlu0 %v5082
        %v5084 = vpop.xlane.xlu0 %5083
        %v5085 = vadd.f32 %v4942, %v4943
        %5086 = vadd.xlane.f32.xlu0 %v5085
        %v5087 = vpop.xlane.xlu0 %5086
        %v5088 = vadd.f32 %v4944, %v4945
        %5089 = vadd.xlane.f32.xlu0 %v5088
        %v5090 = vpop.xlane.xlu0 %5089
        %v5091 = vadd.f32 %v4946, %v4947
        %5092 = vadd.xlane.f32.xlu0 %v5091
        %v5093 = vpop.xlane.xlu0 %5092
        %v5094 = vadd.f32 %v4948, %v4949
        %5095 = vadd.xlane.f32.xlu0 %v5094
        %v5096 = vpop.xlane.xlu0 %5095
        %v5097 = vadd.f32 %v4950, %v4951
        %5098 = vadd.xlane.f32.xlu0 %v5097
        %v5099 = vpop.xlane.xlu0 %5098
        %v5100 = vadd.f32 %v4952, %v4953
        %5101 = vadd.xlane.f32.xlu0 %v5100
        %v5102 = vpop.xlane.xlu0 %5101
        %v5103 = vadd.f32 %v4954, %v4955
        %5104 = vadd.xlane.f32.xlu0 %v5103
        %v5105 = vpop.xlane.xlu0 %5104
        %v5106 = vadd.f32 %v4956, %v4957
        %5107 = vadd.xlane.f32.xlu0 %v5106
        %v5108 = vpop.xlane.xlu0 %5107
        %v5109 = vadd.f32 %v4958, %v4959
        %5110 = vadd.xlane.f32.xlu0 %v5109
        %v5111 = vpop.xlane.xlu0 %5110
        %v5112 = vadd.f32 %v4960, %v4961
        %5113 = vadd.xlane.f32.xlu0 %v5112
        %v5114 = vpop.xlane.xlu0 %5113
        %v5115 = vadd.f32 %v4962, %v4963
        %5116 = vadd.xlane.f32.xlu0 %v5115
        %v5117 = vpop.xlane.xlu0 %5116
        %v5118 = vadd.f32 %v4964, %v4965
        %5119 = vadd.xlane.f32.xlu0 %v5118
        %v5120 = vpop.xlane.xlu0 %5119
        %v5121 = vadd.f32 %v4966, %v4967
        %5122 = vadd.xlane.f32.xlu0 %v5121
        %v5123 = vpop.xlane.xlu0 %5122
        %v5124 = vadd.f32 %v4968, %v4969
        %5125 = vadd.xlane.f32.xlu0 %v5124
        %v5126 = vpop.xlane.xlu0 %5125
        %v5127 = vadd.f32 %v4970, %v4971
        %5128 = vadd.xlane.f32.xlu0 %v5127
        %v5129 = vpop.xlane.xlu0 %5128
        %v5130 = vadd.f32 %v4972, %v4973
        %5131 = vadd.xlane.f32.xlu0 %v5130
        %v5132 = vpop.xlane.xlu0 %5131
        %v5133 = vadd.f32 %v4974, %v4975
        %5134 = vadd.xlane.f32.xlu0 %v5133
        %v5135 = vpop.xlane.xlu0 %5134
        %v5136 = vadd.f32 %v4976, %v4977
        %5137 = vadd.xlane.f32.xlu0 %v5136
        %v5138 = vpop.xlane.xlu0 %5137
        %v5139 = vadd.f32 %v4978, %v4979
        %5140 = vadd.xlane.f32.xlu0 %v5139
        %v5141 = vpop.xlane.xlu0 %5140
        %v5142 = vadd.f32 %v4980, %v4981
        %5143 = vadd.xlane.f32.xlu0 %v5142
        %v5144 = vpop.xlane.xlu0 %5143
        %v5145 = vadd.f32 %v4982, %v4983
        %5146 = vadd.xlane.f32.xlu0 %v5145
        %v5147 = vpop.xlane.xlu0 %5146
        %v5148 = vadd.f32 %v4984, %v4985
        %5149 = vadd.xlane.f32.xlu0 %v5148
        %v5150 = vpop.xlane.xlu0 %5149
        %v5151 = vadd.f32 %v4986, %v4987
        %5152 = vadd.xlane.f32.xlu0 %v5151
        %v5153 = vpop.xlane.xlu0 %5152
        %v5154 = vadd.f32 %v4988, %v4989
        %5155 = vadd.xlane.f32.xlu0 %v5154
        %v5156 = vpop.xlane.xlu0 %5155
        %v5157 = vadd.f32 %v4990, %v4991
        %5158 = vadd.xlane.f32.xlu0 %v5157
        %v5159 = vpop.xlane.xlu0 %5158
        %v5160 = vadd.f32 %v4992, %v4993
        %5161 = vadd.xlane.f32.xlu0 %v5160
        %v5162 = vpop.xlane.xlu0 %5161
        %v5163 = vadd.f32 %v4994, %v4995
        %5164 = vadd.xlane.f32.xlu0 %v5163
        %v5165 = vpop.xlane.xlu0 %5164
        %v5166 = vadd.f32 %v4996, %v4997
        %5167 = vadd.xlane.f32.xlu0 %v5166
        %v5168 = vpop.xlane.xlu0 %5167
        %v5169 = vadd.f32 %v4998, %v4999
        %5170 = vadd.xlane.f32.xlu0 %v5169
        %v5171 = vpop.xlane.xlu0 %5170
        %v5172 = vadd.f32 %v5000, %v5001
        %5173 = vadd.xlane.f32.xlu0 %v5172
        %v5174 = vpop.xlane.xlu0 %5173
        %v5175 = vadd.f32 %v5002, %v5003
        %5176 = vadd.xlane.f32.xlu0 %v5175
        %v5177 = vpop.xlane.xlu0 %5176
        %v5178 = vadd.f32 %v5004, %v5005
        %5179 = vadd.xlane.f32.xlu0 %v5178
        %v5180 = vpop.xlane.xlu0 %5179
        %v5181 = vadd.f32 %v5006, %v5007
        %5182 = vadd.xlane.f32.xlu0 %v5181
        %v5183 = vpop.xlane.xlu0 %5182
        %v5184 = vadd.f32 %v5008, %v5009
        %5185 = vadd.xlane.f32.xlu0 %v5184
        %v5186 = vpop.xlane.xlu0 %5185
        %v5187 = vadd.f32 %v5010, %v5011
        %5188 = vadd.xlane.f32.xlu0 %v5187
        %v5189 = vpop.xlane.xlu0 %5188
        %v5190 = vadd.f32 %v5012, %v5013
        %5191 = vadd.xlane.f32.xlu0 %v5190
        %v5192 = vpop.xlane.xlu0 %5191
        %v5193 = vadd.f32 %v5014, %v5015
        %5194 = vadd.xlane.f32.xlu0 %v5193
        %v5195 = vpop.xlane.xlu0 %5194
        %v5196 = vadd.f32 %v5016, %v5017
        %5197 = vadd.xlane.f32.xlu0 %v5196
        %v5198 = vpop.xlane.xlu0 %5197
        %v5199 = vadd.f32 %v5018, %v5019
        %5200 = vadd.xlane.f32.xlu0 %v5199
        %v5201 = vpop.xlane.xlu0 %5200
        %v5202 = vadd.f32 %v5020, %v5021
        %5203 = vadd.xlane.f32.xlu0 %v5202
        %v5204 = vpop.xlane.xlu0 %5203
        %v5205 = vadd.f32 %v5022, %v5023
        %5206 = vadd.xlane.f32.xlu0 %v5205
        %v5207 = vpop.xlane.xlu0 %5206
        %v5208 = vadd.f32 %v5024, %v5025
        %5209 = vadd.xlane.f32.xlu0 %v5208
        %v5210 = vpop.xlane.xlu0 %5209
        %v5211 = vadd.f32 %v5026, %v5027
        %5212 = vadd.xlane.f32.xlu0 %v5211
        %v5213 = vpop.xlane.xlu0 %5212
        %v5214 = vadd.f32 %v5028, %v5029
        %5215 = vadd.xlane.f32.xlu0 %v5214
        %v5216 = vpop.xlane.xlu0 %5215
        %v5217 = vadd.f32 %v5030, %v5031
        %5218 = vadd.xlane.f32.xlu0 %v5217
        %v5219 = vpop.xlane.xlu0 %5218
        %v5220 = vadd.f32 %v5032, %v5033
        %5221 = vadd.xlane.f32.xlu0 %v5220
        %v5222 = vpop.xlane.xlu0 %5221
        %v5223 = vadd.f32 %v5034, %v5035
        %5224 = vadd.xlane.f32.xlu0 %v5223
        %v5225 = vpop.xlane.xlu0 %5224
        %v5226 = vadd.f32 %v5036, %v5037
        %5227 = vadd.xlane.f32.xlu0 %v5226
        %v5228 = vpop.xlane.xlu0 %5227
        %v5229 = vadd.f32 %v5038, %v5039
        %5230 = vadd.xlane.f32.xlu0 %v5229
        %v5231 = vpop.xlane.xlu0 %5230
        %v5232 = vld [vmem:[#allocation3] sm:$0x1]
        %5234 = vset.pattern.permute.xlu0 0
        %5235 = vperm.xlu0 %5234, %v5232
        %v5236 = vpop.permute.xlu0 %5235
        %v5238 = vlaneseq
        %v5239 = vshrl.u32 %v5238, 7
        %v5240 = vsub.s32 0, %v5239
        %v5241 = vrot.slane %v5236, %v5240
        %v5242 = vadd.f32 %v5042, %v5241
        %v5243 = vadd.f32 %v5045, %v5241
        %v5244 = vadd.f32 %v5048, %v5241
        %v5245 = vadd.f32 %v5051, %v5241
        %v5246 = vadd.f32 %v5054, %v5241
        %v5247 = vadd.f32 %v5057, %v5241
        %v5248 = vadd.f32 %v5060, %v5241
        %v5249 = vadd.f32 %v5063, %v5241
        %v5250 = vadd.f32 %v5066, %v5241
        %v5251 = vadd.f32 %v5069, %v5241
        %v5252 = vadd.f32 %v5072, %v5241
        %v5253 = vadd.f32 %v5075, %v5241
        %v5254 = vadd.f32 %v5078, %v5241
        %v5255 = vadd.f32 %v5081, %v5241
        %v5256 = vadd.f32 %v5084, %v5241
        %v5257 = vadd.f32 %v5087, %v5241
        %v5258 = vadd.f32 %v5090, %v5241
        %v5259 = vadd.f32 %v5093, %v5241
        %v5260 = vadd.f32 %v5096, %v5241
        %v5261 = vadd.f32 %v5099, %v5241
        %v5262 = vadd.f32 %v5102, %v5241
        %v5263 = vadd.f32 %v5105, %v5241
        %v5264 = vadd.f32 %v5108, %v5241
        %v5265 = vadd.f32 %v5111, %v5241
        %v5266 = vadd.f32 %v5114, %v5241
        %v5267 = vadd.f32 %v5117, %v5241
        %v5268 = vadd.f32 %v5120, %v5241
        %v5269 = vadd.f32 %v5123, %v5241
        %v5270 = vadd.f32 %v5126, %v5241
        %v5271 = vadd.f32 %v5129, %v5241
        %v5272 = vadd.f32 %v5132, %v5241
        %v5273 = vadd.f32 %v5135, %v5241
        %v5274 = vadd.f32 %v5138, %v5241
        %v5275 = vadd.f32 %v5141, %v5241
        %v5276 = vadd.f32 %v5144, %v5241
        %v5277 = vadd.f32 %v5147, %v5241
        %v5278 = vadd.f32 %v5150, %v5241
        %v5279 = vadd.f32 %v5153, %v5241
        %v5280 = vadd.f32 %v5156, %v5241
        %v5281 = vadd.f32 %v5159, %v5241
        %v5282 = vadd.f32 %v5162, %v5241
        %v5283 = vadd.f32 %v5165, %v5241
        %v5284 = vadd.f32 %v5168, %v5241
        %v5285 = vadd.f32 %v5171, %v5241
        %v5286 = vadd.f32 %v5174, %v5241
        %v5287 = vadd.f32 %v5177, %v5241
        %v5288 = vadd.f32 %v5180, %v5241
        %v5289 = vadd.f32 %v5183, %v5241
        %v5290 = vadd.f32 %v5186, %v5241
        %v5291 = vadd.f32 %v5189, %v5241
        %v5292 = vadd.f32 %v5192, %v5241
        %v5293 = vadd.f32 %v5195, %v5241
        %v5294 = vadd.f32 %v5198, %v5241
        %v5295 = vadd.f32 %v5201, %v5241
        %v5296 = vadd.f32 %v5204, %v5241
        %v5297 = vadd.f32 %v5207, %v5241
        %v5298 = vadd.f32 %v5210, %v5241
        %v5299 = vadd.f32 %v5213, %v5241
        %v5300 = vadd.f32 %v5216, %v5241
        %v5301 = vadd.f32 %v5219, %v5241
        %v5302 = vadd.f32 %v5222, %v5241
        %v5303 = vadd.f32 %v5225, %v5241
        %v5304 = vadd.f32 %v5228, %v5241
        %v5305 = vadd.f32 %v5231, %v5241
        %v5306 = vxor.u32 %v5242, 2147483648
        %v5307 = vxor.u32 %v5243, 2147483648
        %v5308 = vxor.u32 %v5244, 2147483648
        %v5309 = vxor.u32 %v5245, 2147483648
        %v5310 = vxor.u32 %v5246, 2147483648
        %v5311 = vxor.u32 %v5247, 2147483648
        %v5312 = vxor.u32 %v5248, 2147483648
        %v5313 = vxor.u32 %v5249, 2147483648
        %v5314 = vxor.u32 %v5250, 2147483648
        %v5315 = vxor.u32 %v5251, 2147483648
        %v5316 = vxor.u32 %v5252, 2147483648
        %v5317 = vxor.u32 %v5253, 2147483648
        %v5318 = vxor.u32 %v5254, 2147483648
        %v5319 = vxor.u32 %v5255, 2147483648
        %v5320 = vxor.u32 %v5256, 2147483648
        %v5321 = vxor.u32 %v5257, 2147483648
        %v5322 = vxor.u32 %v5258, 2147483648
        %v5323 = vxor.u32 %v5259, 2147483648
        %v5324 = vxor.u32 %v5260, 2147483648
        %v5325 = vxor.u32 %v5261, 2147483648
        %v5326 = vxor.u32 %v5262, 2147483648
        %v5327 = vxor.u32 %v5263, 2147483648
        %v5328 = vxor.u32 %v5264, 2147483648
        %v5329 = vxor.u32 %v5265, 2147483648
        %v5330 = vxor.u32 %v5266, 2147483648
        %v5331 = vxor.u32 %v5267, 2147483648
        %v5332 = vxor.u32 %v5268, 2147483648
        %v5333 = vxor.u32 %v5269, 2147483648
        %v5334 = vxor.u32 %v5270, 2147483648
        %v5335 = vxor.u32 %v5271, 2147483648
        %v5336 = vxor.u32 %v5272, 2147483648
        %v5337 = vxor.u32 %v5273, 2147483648
        %v5338 = vxor.u32 %v5274, 2147483648
        %v5339 = vxor.u32 %v5275, 2147483648
        %v5340 = vxor.u32 %v5276, 2147483648
        %v5341 = vxor.u32 %v5277, 2147483648
        %v5342 = vxor.u32 %v5278, 2147483648
        %v5343 = vxor.u32 %v5279, 2147483648
        %v5344 = vxor.u32 %v5280, 2147483648
        %v5345 = vxor.u32 %v5281, 2147483648
        %v5346 = vxor.u32 %v5282, 2147483648
        %v5347 = vxor.u32 %v5283, 2147483648
        %v5348 = vxor.u32 %v5284, 2147483648
        %v5349 = vxor.u32 %v5285, 2147483648
        %v5350 = vxor.u32 %v5286, 2147483648
        %v5351 = vxor.u32 %v5287, 2147483648
        %v5352 = vxor.u32 %v5288, 2147483648
        %v5353 = vxor.u32 %v5289, 2147483648
        %v5354 = vxor.u32 %v5290, 2147483648
        %v5355 = vxor.u32 %v5291, 2147483648
        %v5356 = vxor.u32 %v5292, 2147483648
        %v5357 = vxor.u32 %v5293, 2147483648
        %v5358 = vxor.u32 %v5294, 2147483648
        %v5359 = vxor.u32 %v5295, 2147483648
        %v5360 = vxor.u32 %v5296, 2147483648
        %v5361 = vxor.u32 %v5297, 2147483648
        %v5362 = vxor.u32 %v5298, 2147483648
        %v5363 = vxor.u32 %v5299, 2147483648
        %v5364 = vxor.u32 %v5300, 2147483648
        %v5365 = vxor.u32 %v5301, 2147483648
        %v5366 = vxor.u32 %v5302, 2147483648
        %v5367 = vxor.u32 %v5303, 2147483648
        %v5368 = vxor.u32 %v5304, 2147483648
        %v5369 = vxor.u32 %v5305, 2147483648
        %v5370 = vmul.f32 %v5306, 1.442695
        %v5371 = vpow.pop %v5370
        %v5372 = vmul.f32 %v5307, 1.442695
        %v5373 = vpow.pop %v5372
        %v5374 = vmul.f32 %v5308, 1.442695
        %v5375 = vpow.pop %v5374
        %v5376 = vmul.f32 %v5309, 1.442695
        %v5377 = vpow.pop %v5376
        %v5378 = vmul.f32 %v5310, 1.442695
        %v5379 = vpow.pop %v5378
        %v5380 = vmul.f32 %v5311, 1.442695
        %v5381 = vpow.pop %v5380
        %v5382 = vmul.f32 %v5312, 1.442695
        %v5383 = vpow.pop %v5382
        %v5384 = vmul.f32 %v5313, 1.442695
        %v5385 = vpow.pop %v5384
        %v5386 = vmul.f32 %v5314, 1.442695
        %v5387 = vpow.pop %v5386
        %v5388 = vmul.f32 %v5315, 1.442695
        %v5389 = vpow.pop %v5388
        %v5390 = vmul.f32 %v5316, 1.442695
        %v5391 = vpow.pop %v5390
        %v5392 = vmul.f32 %v5317, 1.442695
        %v5393 = vpow.pop %v5392
        %v5394 = vmul.f32 %v5318, 1.442695
        %v5395 = vpow.pop %v5394
        %v5396 = vmul.f32 %v5319, 1.442695
        %v5397 = vpow.pop %v5396
        %v5398 = vmul.f32 %v5320, 1.442695
        %v5399 = vpow.pop %v5398
        %v5400 = vmul.f32 %v5321, 1.442695
        %v5401 = vpow.pop %v5400
        %v5402 = vmul.f32 %v5322, 1.442695
        %v5403 = vpow.pop %v5402
        %v5404 = vmul.f32 %v5323, 1.442695
        %v5405 = vpow.pop %v5404
        %v5406 = vmul.f32 %v5324, 1.442695
        %v5407 = vpow.pop %v5406
        %v5408 = vmul.f32 %v5325, 1.442695
        %v5409 = vpow.pop %v5408
        %v5410 = vmul.f32 %v5326, 1.442695
        %v5411 = vpow.pop %v5410
        %v5412 = vmul.f32 %v5327, 1.442695
        %v5413 = vpow.pop %v5412
        %v5414 = vmul.f32 %v5328, 1.442695
        %v5415 = vpow.pop %v5414
        %v5416 = vmul.f32 %v5329, 1.442695
        %v5417 = vpow.pop %v5416
        %v5418 = vmul.f32 %v5330, 1.442695
        %v5419 = vpow.pop %v5418
        %v5420 = vmul.f32 %v5331, 1.442695
        %v5421 = vpow.pop %v5420
        %v5422 = vmul.f32 %v5332, 1.442695
        %v5423 = vpow.pop %v5422
        %v5424 = vmul.f32 %v5333, 1.442695
        %v5425 = vpow.pop %v5424
        %v5426 = vmul.f32 %v5334, 1.442695
        %v5427 = vpow.pop %v5426
        %v5428 = vmul.f32 %v5335, 1.442695
        %v5429 = vpow.pop %v5428
        %v5430 = vmul.f32 %v5336, 1.442695
        %v5431 = vpow.pop %v5430
        %v5432 = vmul.f32 %v5337, 1.442695
        %v5433 = vpow.pop %v5432
        %v5434 = vmul.f32 %v5338, 1.442695
        %v5435 = vpow.pop %v5434
        %v5436 = vmul.f32 %v5339, 1.442695
        %v5437 = vpow.pop %v5436
        %v5438 = vmul.f32 %v5340, 1.442695
        %v5439 = vpow.pop %v5438
        %v5440 = vmul.f32 %v5341, 1.442695
        %v5441 = vpow.pop %v5440
        %v5442 = vmul.f32 %v5342, 1.442695
        %v5443 = vpow.pop %v5442
        %v5444 = vmul.f32 %v5343, 1.442695
        %v5445 = vpow.pop %v5444
        %v5446 = vmul.f32 %v5344, 1.442695
        %v5447 = vpow.pop %v5446
        %v5448 = vmul.f32 %v5345, 1.442695
        %v5449 = vpow.pop %v5448
        %v5450 = vmul.f32 %v5346, 1.442695
        %v5451 = vpow.pop %v5450
        %v5452 = vmul.f32 %v5347, 1.442695
        %v5453 = vpow.pop %v5452
        %v5454 = vmul.f32 %v5348, 1.442695
        %v5455 = vpow.pop %v5454
        %v5456 = vmul.f32 %v5349, 1.442695
        %v5457 = vpow.pop %v5456
        %v5458 = vmul.f32 %v5350, 1.442695
        %v5459 = vpow.pop %v5458
        %v5460 = vmul.f32 %v5351, 1.442695
        %v5461 = vpow.pop %v5460
        %v5462 = vmul.f32 %v5352, 1.442695
        %v5463 = vpow.pop %v5462
        %v5464 = vmul.f32 %v5353, 1.442695
        %v5465 = vpow.pop %v5464
        %v5466 = vmul.f32 %v5354, 1.442695
        %v5467 = vpow.pop %v5466
        %v5468 = vmul.f32 %v5355, 1.442695
        %v5469 = vpow.pop %v5468
        %v5470 = vmul.f32 %v5356, 1.442695
        %v5471 = vpow.pop %v5470
        %v5472 = vmul.f32 %v5357, 1.442695
        %v5473 = vpow.pop %v5472
        %v5474 = vmul.f32 %v5358, 1.442695
        %v5475 = vpow.pop %v5474
        %v5476 = vmul.f32 %v5359, 1.442695
        %v5477 = vpow.pop %v5476
        %v5478 = vmul.f32 %v5360, 1.442695
        %v5479 = vpow.pop %v5478
        %v5480 = vmul.f32 %v5361, 1.442695
        %v5481 = vpow.pop %v5480
        %v5482 = vmul.f32 %v5362, 1.442695
        %v5483 = vpow.pop %v5482
        %v5484 = vmul.f32 %v5363, 1.442695
        %v5485 = vpow.pop %v5484
        %v5486 = vmul.f32 %v5364, 1.442695
        %v5487 = vpow.pop %v5486
        %v5488 = vmul.f32 %v5365, 1.442695
        %v5489 = vpow.pop %v5488
        %v5490 = vmul.f32 %v5366, 1.442695
        %v5491 = vpow.pop %v5490
        %v5492 = vmul.f32 %v5367, 1.442695
        %v5493 = vpow.pop %v5492
        %v5494 = vmul.f32 %v5368, 1.442695
        %v5495 = vpow.pop %v5494
        %v5496 = vmul.f32 %v5369, 1.442695
        %v5497 = vpow.pop %v5496
        %v5498 = vadd.f32 %v5371, 1.0
        %v5499 = vadd.f32 %v5373, 1.0
        %v5500 = vadd.f32 %v5375, 1.0
        %v5501 = vadd.f32 %v5377, 1.0
        %v5502 = vadd.f32 %v5379, 1.0
        %v5503 = vadd.f32 %v5381, 1.0
        %v5504 = vadd.f32 %v5383, 1.0
        %v5505 = vadd.f32 %v5385, 1.0
        %v5506 = vadd.f32 %v5387, 1.0
        %v5507 = vadd.f32 %v5389, 1.0
        %v5508 = vadd.f32 %v5391, 1.0
        %v5509 = vadd.f32 %v5393, 1.0
        %v5510 = vadd.f32 %v5395, 1.0
        %v5511 = vadd.f32 %v5397, 1.0
        %v5512 = vadd.f32 %v5399, 1.0
        %v5513 = vadd.f32 %v5401, 1.0
        %v5514 = vadd.f32 %v5403, 1.0
        %v5515 = vadd.f32 %v5405, 1.0
        %v5516 = vadd.f32 %v5407, 1.0
        %v5517 = vadd.f32 %v5409, 1.0
        %v5518 = vadd.f32 %v5411, 1.0
        %v5519 = vadd.f32 %v5413, 1.0
        %v5520 = vadd.f32 %v5415, 1.0
        %v5521 = vadd.f32 %v5417, 1.0
        %v5522 = vadd.f32 %v5419, 1.0
        %v5523 = vadd.f32 %v5421, 1.0
        %v5524 = vadd.f32 %v5423, 1.0
        %v5525 = vadd.f32 %v5425, 1.0
        %v5526 = vadd.f32 %v5427, 1.0
        %v5527 = vadd.f32 %v5429, 1.0
        %v5528 = vadd.f32 %v5431, 1.0
        %v5529 = vadd.f32 %v5433, 1.0
        %v5530 = vadd.f32 %v5435, 1.0
        %v5531 = vadd.f32 %v5437, 1.0
        %v5532 = vadd.f32 %v5439, 1.0
        %v5533 = vadd.f32 %v5441, 1.0
        %v5534 = vadd.f32 %v5443, 1.0
        %v5535 = vadd.f32 %v5445, 1.0
        %v5536 = vadd.f32 %v5447, 1.0
        %v5537 = vadd.f32 %v5449, 1.0
        %v5538 = vadd.f32 %v5451, 1.0
        %v5539 = vadd.f32 %v5453, 1.0
        %v5540 = vadd.f32 %v5455, 1.0
        %v5541 = vadd.f32 %v5457, 1.0
        %v5542 = vadd.f32 %v5459, 1.0
        %v5543 = vadd.f32 %v5461, 1.0
        %v5544 = vadd.f32 %v5463, 1.0
        %v5545 = vadd.f32 %v5465, 1.0
        %v5546 = vadd.f32 %v5467, 1.0
        %v5547 = vadd.f32 %v5469, 1.0
        %v5548 = vadd.f32 %v5471, 1.0
        %v5549 = vadd.f32 %v5473, 1.0
        %v5550 = vadd.f32 %v5475, 1.0
        %v5551 = vadd.f32 %v5477, 1.0
        %v5552 = vadd.f32 %v5479, 1.0
        %v5553 = vadd.f32 %v5481, 1.0
        %v5554 = vadd.f32 %v5483, 1.0
        %v5555 = vadd.f32 %v5485, 1.0
        %v5556 = vadd.f32 %v5487, 1.0
        %v5557 = vadd.f32 %v5489, 1.0
        %v5558 = vadd.f32 %v5491, 1.0
        %v5559 = vadd.f32 %v5493, 1.0
        %v5560 = vadd.f32 %v5495, 1.0
        %v5561 = vadd.f32 %v5497, 1.0
        %v5562 = vrcp.pop %v5498
        %v5563 = vmul.f32 1.0, %v5562
        %v5564 = vrcp.pop %v5499
        %v5565 = vmul.f32 1.0, %v5564
        %v5566 = vrcp.pop %v5500
        %v5567 = vmul.f32 1.0, %v5566
        %v5568 = vrcp.pop %v5501
        %v5569 = vmul.f32 1.0, %v5568
        %v5570 = vrcp.pop %v5502
        %v5571 = vmul.f32 1.0, %v5570
        %v5572 = vrcp.pop %v5503
        %v5573 = vmul.f32 1.0, %v5572
        %v5574 = vrcp.pop %v5504
        %v5575 = vmul.f32 1.0, %v5574
        %v5576 = vrcp.pop %v5505
        %v5577 = vmul.f32 1.0, %v5576
        %v5578 = vrcp.pop %v5506
        %v5579 = vmul.f32 1.0, %v5578
        %v5580 = vrcp.pop %v5507
        %v5581 = vmul.f32 1.0, %v5580
        %v5582 = vrcp.pop %v5508
        %v5583 = vmul.f32 1.0, %v5582
        %v5584 = vrcp.pop %v5509
        %v5585 = vmul.f32 1.0, %v5584
        %v5586 = vrcp.pop %v5510
        %v5587 = vmul.f32 1.0, %v5586
        %v5588 = vrcp.pop %v5511
        %v5589 = vmul.f32 1.0, %v5588
        %v5590 = vrcp.pop %v5512
        %v5591 = vmul.f32 1.0, %v5590
        %v5592 = vrcp.pop %v5513
        %v5593 = vmul.f32 1.0, %v5592
        %v5594 = vrcp.pop %v5514
        %v5595 = vmul.f32 1.0, %v5594
        %v5596 = vrcp.pop %v5515
        %v5597 = vmul.f32 1.0, %v5596
        %v5598 = vrcp.pop %v5516
        %v5599 = vmul.f32 1.0, %v5598
        %v5600 = vrcp.pop %v5517
        %v5601 = vmul.f32 1.0, %v5600
        %v5602 = vrcp.pop %v5518
        %v5603 = vmul.f32 1.0, %v5602
        %v5604 = vrcp.pop %v5519
        %v5605 = vmul.f32 1.0, %v5604
        %v5606 = vrcp.pop %v5520
        %v5607 = vmul.f32 1.0, %v5606
        %v5608 = vrcp.pop %v5521
        %v5609 = vmul.f32 1.0, %v5608
        %v5610 = vrcp.pop %v5522
        %v5611 = vmul.f32 1.0, %v5610
        %v5612 = vrcp.pop %v5523
        %v5613 = vmul.f32 1.0, %v5612
        %v5614 = vrcp.pop %v5524
        %v5615 = vmul.f32 1.0, %v5614
        %v5616 = vrcp.pop %v5525
        %v5617 = vmul.f32 1.0, %v5616
        %v5618 = vrcp.pop %v5526
        %v5619 = vmul.f32 1.0, %v5618
        %v5620 = vrcp.pop %v5527
        %v5621 = vmul.f32 1.0, %v5620
        %v5622 = vrcp.pop %v5528
        %v5623 = vmul.f32 1.0, %v5622
        %v5624 = vrcp.pop %v5529
        %v5625 = vmul.f32 1.0, %v5624
        %v5626 = vrcp.pop %v5530
        %v5627 = vmul.f32 1.0, %v5626
        %v5628 = vrcp.pop %v5531
        %v5629 = vmul.f32 1.0, %v5628
        %v5630 = vrcp.pop %v5532
        %v5631 = vmul.f32 1.0, %v5630
        %v5632 = vrcp.pop %v5533
        %v5633 = vmul.f32 1.0, %v5632
        %v5634 = vrcp.pop %v5534
        %v5635 = vmul.f32 1.0, %v5634
        %v5636 = vrcp.pop %v5535
        %v5637 = vmul.f32 1.0, %v5636
        %v5638 = vrcp.pop %v5536
        %v5639 = vmul.f32 1.0, %v5638
        %v5640 = vrcp.pop %v5537
        %v5641 = vmul.f32 1.0, %v5640
        %v5642 = vrcp.pop %v5538
        %v5643 = vmul.f32 1.0, %v5642
        %v5644 = vrcp.pop %v5539
        %v5645 = vmul.f32 1.0, %v5644
        %v5646 = vrcp.pop %v5540
        %v5647 = vmul.f32 1.0, %v5646
        %v5648 = vrcp.pop %v5541
        %v5649 = vmul.f32 1.0, %v5648
        %v5650 = vrcp.pop %v5542
        %v5651 = vmul.f32 1.0, %v5650
        %v5652 = vrcp.pop %v5543
        %v5653 = vmul.f32 1.0, %v5652
        %v5654 = vrcp.pop %v5544
        %v5655 = vmul.f32 1.0, %v5654
        %v5656 = vrcp.pop %v5545
        %v5657 = vmul.f32 1.0, %v5656
        %v5658 = vrcp.pop %v5546
        %v5659 = vmul.f32 1.0, %v5658
        %v5660 = vrcp.pop %v5547
        %v5661 = vmul.f32 1.0, %v5660
        %v5662 = vrcp.pop %v5548
        %v5663 = vmul.f32 1.0, %v5662
        %v5664 = vrcp.pop %v5549
        %v5665 = vmul.f32 1.0, %v5664
        %v5666 = vrcp.pop %v5550
        %v5667 = vmul.f32 1.0, %v5666
        %v5668 = vrcp.pop %v5551
        %v5669 = vmul.f32 1.0, %v5668
        %v5670 = vrcp.pop %v5552
        %v5671 = vmul.f32 1.0, %v5670
        %v5672 = vrcp.pop %v5553
        %v5673 = vmul.f32 1.0, %v5672
        %v5674 = vrcp.pop %v5554
        %v5675 = vmul.f32 1.0, %v5674
        %v5676 = vrcp.pop %v5555
        %v5677 = vmul.f32 1.0, %v5676
        %v5678 = vrcp.pop %v5556
        %v5679 = vmul.f32 1.0, %v5678
        %v5680 = vrcp.pop %v5557
        %v5681 = vmul.f32 1.0, %v5680
        %v5682 = vrcp.pop %v5558
        %v5683 = vmul.f32 1.0, %v5682
        %v5684 = vrcp.pop %v5559
        %v5685 = vmul.f32 1.0, %v5684
        %v5686 = vrcp.pop %v5560
        %v5687 = vmul.f32 1.0, %v5686
        %v5688 = vrcp.pop %v5561
        %v5689 = vmul.f32 1.0, %v5688
        %v5690 = vsub.f32 %v5563, %v5627
        %v5691 = vsub.f32 %v5565, %v5629
        %v5692 = vsub.f32 %v5567, %v5631
        %v5693 = vsub.f32 %v5569, %v5633
        %v5694 = vsub.f32 %v5571, %v5635
        %v5695 = vsub.f32 %v5573, %v5637
        %v5696 = vsub.f32 %v5575, %v5639
        %v5697 = vsub.f32 %v5577, %v5641
        %v5698 = vsub.f32 %v5579, %v5643
        %v5699 = vsub.f32 %v5581, %v5645
        %v5700 = vsub.f32 %v5583, %v5647
        %v5701 = vsub.f32 %v5585, %v5649
        %v5702 = vsub.f32 %v5587, %v5651
        %v5703 = vsub.f32 %v5589, %v5653
        %v5704 = vsub.f32 %v5591, %v5655
        %v5705 = vsub.f32 %v5593, %v5657
        %v5706 = vsub.f32 %v5595, %v5659
        %v5707 = vsub.f32 %v5597, %v5661
        %v5708 = vsub.f32 %v5599, %v5663
        %v5709 = vsub.f32 %v5601, %v5665
        %v5710 = vsub.f32 %v5603, %v5667
        %v5711 = vsub.f32 %v5605, %v5669
        %v5712 = vsub.f32 %v5607, %v5671
        %v5713 = vsub.f32 %v5609, %v5673
        %v5714 = vsub.f32 %v5611, %v5675
        %v5715 = vsub.f32 %v5613, %v5677
        %v5716 = vsub.f32 %v5615, %v5679
        %v5717 = vsub.f32 %v5617, %v5681
        %v5718 = vsub.f32 %v5619, %v5683
        %v5719 = vsub.f32 %v5621, %v5685
        %v5720 = vsub.f32 %v5623, %v5687
        %v5721 = vsub.f32 %v5625, %v5689
        %v5722 = vxor.u32 %v5690, 2147483648
        %v5723 = vxor.u32 %v5691, 2147483648
        %v5724 = vxor.u32 %v5692, 2147483648
        %v5725 = vxor.u32 %v5693, 2147483648
        %v5726 = vxor.u32 %v5694, 2147483648
        %v5727 = vxor.u32 %v5695, 2147483648
        %v5728 = vxor.u32 %v5696, 2147483648
        %v5729 = vxor.u32 %v5697, 2147483648
        %v5730 = vxor.u32 %v5698, 2147483648
        %v5731 = vxor.u32 %v5699, 2147483648
        %v5732 = vxor.u32 %v5700, 2147483648
        %v5733 = vxor.u32 %v5701, 2147483648
        %v5734 = vxor.u32 %v5702, 2147483648
        %v5735 = vxor.u32 %v5703, 2147483648
        %v5736 = vxor.u32 %v5704, 2147483648
        %v5737 = vxor.u32 %v5705, 2147483648
        %v5738 = vxor.u32 %v5706, 2147483648
        %v5739 = vxor.u32 %v5707, 2147483648
        %v5740 = vxor.u32 %v5708, 2147483648
        %v5741 = vxor.u32 %v5709, 2147483648
        %v5742 = vxor.u32 %v5710, 2147483648
        %v5743 = vxor.u32 %v5711, 2147483648
        %v5744 = vxor.u32 %v5712, 2147483648
        %v5745 = vxor.u32 %v5713, 2147483648
        %v5746 = vxor.u32 %v5714, 2147483648
        %v5747 = vxor.u32 %v5715, 2147483648
        %v5748 = vxor.u32 %v5716, 2147483648
        %v5749 = vxor.u32 %v5717, 2147483648
        %v5750 = vxor.u32 %v5718, 2147483648
        %v5751 = vxor.u32 %v5719, 2147483648
        %v5752 = vxor.u32 %v5720, 2147483648
        %v5753 = vxor.u32 %v5721, 2147483648
        %v5754 = vmul.f32 %v5722, 1.442695
        %v5755 = vpow.pop %v5754
        %v5756 = vmul.f32 %v5723, 1.442695
        %v5757 = vpow.pop %v5756
        %v5758 = vmul.f32 %v5724, 1.442695
        %v5759 = vpow.pop %v5758
        %v5760 = vmul.f32 %v5725, 1.442695
        %v5761 = vpow.pop %v5760
        %v5762 = vmul.f32 %v5726, 1.442695
        %v5763 = vpow.pop %v5762
        %v5764 = vmul.f32 %v5727, 1.442695
        %v5765 = vpow.pop %v5764
        %v5766 = vmul.f32 %v5728, 1.442695
        %v5767 = vpow.pop %v5766
        %v5768 = vmul.f32 %v5729, 1.442695
        %v5769 = vpow.pop %v5768
        %v5770 = vmul.f32 %v5730, 1.442695
        %v5771 = vpow.pop %v5770
        %v5772 = vmul.f32 %v5731, 1.442695
        %v5773 = vpow.pop %v5772
        %v5774 = vmul.f32 %v5732, 1.442695
        %v5775 = vpow.pop %v5774
        %v5776 = vmul.f32 %v5733, 1.442695
        %v5777 = vpow.pop %v5776
        %v5778 = vmul.f32 %v5734, 1.442695
        %v5779 = vpow.pop %v5778
        %v5780 = vmul.f32 %v5735, 1.442695
        %v5781 = vpow.pop %v5780
        %v5782 = vmul.f32 %v5736, 1.442695
        %v5783 = vpow.pop %v5782
        %v5784 = vmul.f32 %v5737, 1.442695
        %v5785 = vpow.pop %v5784
        %v5786 = vmul.f32 %v5738, 1.442695
        %v5787 = vpow.pop %v5786
        %v5788 = vmul.f32 %v5739, 1.442695
        %v5789 = vpow.pop %v5788
        %v5790 = vmul.f32 %v5740, 1.442695
        %v5791 = vpow.pop %v5790
        %v5792 = vmul.f32 %v5741, 1.442695
        %v5793 = vpow.pop %v5792
        %v5794 = vmul.f32 %v5742, 1.442695
        %v5795 = vpow.pop %v5794
        %v5796 = vmul.f32 %v5743, 1.442695
        %v5797 = vpow.pop %v5796
        %v5798 = vmul.f32 %v5744, 1.442695
        %v5799 = vpow.pop %v5798
        %v5800 = vmul.f32 %v5745, 1.442695
        %v5801 = vpow.pop %v5800
        %v5802 = vmul.f32 %v5746, 1.442695
        %v5803 = vpow.pop %v5802
        %v5804 = vmul.f32 %v5747, 1.442695
        %v5805 = vpow.pop %v5804
        %v5806 = vmul.f32 %v5748, 1.442695
        %v5807 = vpow.pop %v5806
        %v5808 = vmul.f32 %v5749, 1.442695
        %v5809 = vpow.pop %v5808
        %v5810 = vmul.f32 %v5750, 1.442695
        %v5811 = vpow.pop %v5810
        %v5812 = vmul.f32 %v5751, 1.442695
        %v5813 = vpow.pop %v5812
        %v5814 = vmul.f32 %v5752, 1.442695
        %v5815 = vpow.pop %v5814
        %v5816 = vmul.f32 %v5753, 1.442695
        %v5817 = vpow.pop %v5816
        %v5818 = vadd.f32 %v5755, 1.0
        %v5819 = vadd.f32 %v5757, 1.0
        %v5820 = vadd.f32 %v5759, 1.0
        %v5821 = vadd.f32 %v5761, 1.0
        %v5822 = vadd.f32 %v5763, 1.0
        %v5823 = vadd.f32 %v5765, 1.0
        %v5824 = vadd.f32 %v5767, 1.0
        %v5825 = vadd.f32 %v5769, 1.0
        %v5826 = vadd.f32 %v5771, 1.0
        %v5827 = vadd.f32 %v5773, 1.0
        %v5828 = vadd.f32 %v5775, 1.0
        %v5829 = vadd.f32 %v5777, 1.0
        %v5830 = vadd.f32 %v5779, 1.0
        %v5831 = vadd.f32 %v5781, 1.0
        %v5832 = vadd.f32 %v5783, 1.0
        %v5833 = vadd.f32 %v5785, 1.0
        %v5834 = vadd.f32 %v5787, 1.0
        %v5835 = vadd.f32 %v5789, 1.0
        %v5836 = vadd.f32 %v5791, 1.0
        %v5837 = vadd.f32 %v5793, 1.0
        %v5838 = vadd.f32 %v5795, 1.0
        %v5839 = vadd.f32 %v5797, 1.0
        %v5840 = vadd.f32 %v5799, 1.0
        %v5841 = vadd.f32 %v5801, 1.0
        %v5842 = vadd.f32 %v5803, 1.0
        %v5843 = vadd.f32 %v5805, 1.0
        %v5844 = vadd.f32 %v5807, 1.0
        %v5845 = vadd.f32 %v5809, 1.0
        %v5846 = vadd.f32 %v5811, 1.0
        %v5847 = vadd.f32 %v5813, 1.0
        %v5848 = vadd.f32 %v5815, 1.0
        %v5849 = vadd.f32 %v5817, 1.0
        %v5850 = vrcp.pop %v5818
        %v5851 = vmul.f32 1.0, %v5850
        %v5852 = vrcp.pop %v5819
        %v5853 = vmul.f32 1.0, %v5852
        %v5854 = vrcp.pop %v5820
        %v5855 = vmul.f32 1.0, %v5854
        %v5856 = vrcp.pop %v5821
        %v5857 = vmul.f32 1.0, %v5856
        %v5858 = vrcp.pop %v5822
        %v5859 = vmul.f32 1.0, %v5858
        %v5860 = vrcp.pop %v5823
        %v5861 = vmul.f32 1.0, %v5860
        %v5862 = vrcp.pop %v5824
        %v5863 = vmul.f32 1.0, %v5862
        %v5864 = vrcp.pop %v5825
        %v5865 = vmul.f32 1.0, %v5864
        %v5866 = vrcp.pop %v5826
        %v5867 = vmul.f32 1.0, %v5866
        %v5868 = vrcp.pop %v5827
        %v5869 = vmul.f32 1.0, %v5868
        %v5870 = vrcp.pop %v5828
        %v5871 = vmul.f32 1.0, %v5870
        %v5872 = vrcp.pop %v5829
        %v5873 = vmul.f32 1.0, %v5872
        %v5874 = vrcp.pop %v5830
        %v5875 = vmul.f32 1.0, %v5874
        %v5876 = vrcp.pop %v5831
        %v5877 = vmul.f32 1.0, %v5876
        %v5878 = vrcp.pop %v5832
        %v5879 = vmul.f32 1.0, %v5878
        %v5880 = vrcp.pop %v5833
        %v5881 = vmul.f32 1.0, %v5880
        %v5882 = vrcp.pop %v5834
        %v5883 = vmul.f32 1.0, %v5882
        %v5884 = vrcp.pop %v5835
        %v5885 = vmul.f32 1.0, %v5884
        %v5886 = vrcp.pop %v5836
        %v5887 = vmul.f32 1.0, %v5886
        %v5888 = vrcp.pop %v5837
        %v5889 = vmul.f32 1.0, %v5888
        %v5890 = vrcp.pop %v5838
        %v5891 = vmul.f32 1.0, %v5890
        %v5892 = vrcp.pop %v5839
        %v5893 = vmul.f32 1.0, %v5892
        %v5894 = vrcp.pop %v5840
        %v5895 = vmul.f32 1.0, %v5894
        %v5896 = vrcp.pop %v5841
        %v5897 = vmul.f32 1.0, %v5896
        %v5898 = vrcp.pop %v5842
        %v5899 = vmul.f32 1.0, %v5898
        %v5900 = vrcp.pop %v5843
        %v5901 = vmul.f32 1.0, %v5900
        %v5902 = vrcp.pop %v5844
        %v5903 = vmul.f32 1.0, %v5902
        %v5904 = vrcp.pop %v5845
        %v5905 = vmul.f32 1.0, %v5904
        %v5906 = vrcp.pop %v5846
        %v5907 = vmul.f32 1.0, %v5906
        %v5908 = vrcp.pop %v5847
        %v5909 = vmul.f32 1.0, %v5908
        %v5910 = vrcp.pop %v5848
        %v5911 = vmul.f32 1.0, %v5910
        %v5912 = vrcp.pop %v5849
        %v5913 = vmul.f32 1.0, %v5912
        %v5946 = vlaneseq
        %v5947 = vshrl.u32 %v5946, 7
        %v5948 = vsub.s32 0, %v5947
        %v5949 = vrot.slane %v5851, %v5948
        %v5950 = vlaneseq
        %v5951 = vshrl.u32 %v5950, 7
        %v5952 = vsub.s32 1, %v5951
        %v5953 = vrot.slane %v5851, %v5952
        %v5954 = vlaneseq
        %v5955 = vshrl.u32 %v5954, 7
        %v5956 = vsub.s32 2, %v5955
        %v5957 = vrot.slane %v5851, %v5956
        %v5958 = vlaneseq
        %v5959 = vshrl.u32 %v5958, 7
        %v5960 = vsub.s32 3, %v5959
        %v5961 = vrot.slane %v5851, %v5960
        %v5962 = vlaneseq
        %v5963 = vshrl.u32 %v5962, 7
        %v5964 = vsub.s32 4, %v5963
        %v5965 = vrot.slane %v5851, %v5964
        %v5966 = vlaneseq
        %v5967 = vshrl.u32 %v5966, 7
        %v5968 = vsub.s32 5, %v5967
        %v5969 = vrot.slane %v5851, %v5968
        %v5970 = vlaneseq
        %v5971 = vshrl.u32 %v5970, 7
        %v5972 = vsub.s32 6, %v5971
        %v5973 = vrot.slane %v5851, %v5972
        %v5974 = vlaneseq
        %v5975 = vshrl.u32 %v5974, 7
        %v5976 = vsub.s32 7, %v5975
        %v5977 = vrot.slane %v5851, %v5976
        %v5978 = vlaneseq
        %v5979 = vshrl.u32 %v5978, 7
        %v5980 = vsub.s32 0, %v5979
        %v5981 = vrot.slane %v5853, %v5980
        %v5982 = vlaneseq
        %v5983 = vshrl.u32 %v5982, 7
        %v5984 = vsub.s32 1, %v5983
        %v5985 = vrot.slane %v5853, %v5984
        %v5986 = vlaneseq
        %v5987 = vshrl.u32 %v5986, 7
        %v5988 = vsub.s32 2, %v5987
        %v5989 = vrot.slane %v5853, %v5988
        %v5990 = vlaneseq
        %v5991 = vshrl.u32 %v5990, 7
        %v5992 = vsub.s32 3, %v5991
        %v5993 = vrot.slane %v5853, %v5992
        %v5994 = vlaneseq
        %v5995 = vshrl.u32 %v5994, 7
        %v5996 = vsub.s32 4, %v5995
        %v5997 = vrot.slane %v5853, %v5996
        %v5998 = vlaneseq
        %v5999 = vshrl.u32 %v5998, 7
        %v6000 = vsub.s32 5, %v5999
        %v6001 = vrot.slane %v5853, %v6000
        %v6002 = vlaneseq
        %v6003 = vshrl.u32 %v6002, 7
        %v6004 = vsub.s32 6, %v6003
        %v6005 = vrot.slane %v5853, %v6004
        %v6006 = vlaneseq
        %v6007 = vshrl.u32 %v6006, 7
        %v6008 = vsub.s32 7, %v6007
        %v6009 = vrot.slane %v5853, %v6008
        %v6010 = vlaneseq
        %v6011 = vshrl.u32 %v6010, 7
        %v6012 = vsub.s32 0, %v6011
        %v6013 = vrot.slane %v5855, %v6012
        %v6014 = vlaneseq
        %v6015 = vshrl.u32 %v6014, 7
        %v6016 = vsub.s32 1, %v6015
        %v6017 = vrot.slane %v5855, %v6016
        %v6018 = vlaneseq
        %v6019 = vshrl.u32 %v6018, 7
        %v6020 = vsub.s32 2, %v6019
        %v6021 = vrot.slane %v5855, %v6020
        %v6022 = vlaneseq
        %v6023 = vshrl.u32 %v6022, 7
        %v6024 = vsub.s32 3, %v6023
        %v6025 = vrot.slane %v5855, %v6024
        %v6026 = vlaneseq
        %v6027 = vshrl.u32 %v6026, 7
        %v6028 = vsub.s32 4, %v6027
        %v6029 = vrot.slane %v5855, %v6028
        %v6030 = vlaneseq
        %v6031 = vshrl.u32 %v6030, 7
        %v6032 = vsub.s32 5, %v6031
        %v6033 = vrot.slane %v5855, %v6032
        %v6034 = vlaneseq
        %v6035 = vshrl.u32 %v6034, 7
        %v6036 = vsub.s32 6, %v6035
        %v6037 = vrot.slane %v5855, %v6036
        %v6038 = vlaneseq
        %v6039 = vshrl.u32 %v6038, 7
        %v6040 = vsub.s32 7, %v6039
        %v6041 = vrot.slane %v5855, %v6040
        %v6042 = vlaneseq
        %v6043 = vshrl.u32 %v6042, 7
        %v6044 = vsub.s32 0, %v6043
        %v6045 = vrot.slane %v5857, %v6044
        %v6046 = vlaneseq
        %v6047 = vshrl.u32 %v6046, 7
        %v6048 = vsub.s32 1, %v6047
        %v6049 = vrot.slane %v5857, %v6048
        %v6050 = vlaneseq
        %v6051 = vshrl.u32 %v6050, 7
        %v6052 = vsub.s32 2, %v6051
        %v6053 = vrot.slane %v5857, %v6052
        %v6054 = vlaneseq
        %v6055 = vshrl.u32 %v6054, 7
        %v6056 = vsub.s32 3, %v6055
        %v6057 = vrot.slane %v5857, %v6056
        %v6058 = vlaneseq
        %v6059 = vshrl.u32 %v6058, 7
        %v6060 = vsub.s32 4, %v6059
        %v6061 = vrot.slane %v5857, %v6060
        %v6062 = vlaneseq
        %v6063 = vshrl.u32 %v6062, 7
        %v6064 = vsub.s32 5, %v6063
        %v6065 = vrot.slane %v5857, %v6064
        %v6066 = vlaneseq
        %v6067 = vshrl.u32 %v6066, 7
        %v6068 = vsub.s32 6, %v6067
        %v6069 = vrot.slane %v5857, %v6068
        %v6070 = vlaneseq
        %v6071 = vshrl.u32 %v6070, 7
        %v6072 = vsub.s32 7, %v6071
        %v6073 = vrot.slane %v5857, %v6072
        %v6074 = vlaneseq
        %v6075 = vshrl.u32 %v6074, 7
        %v6076 = vsub.s32 0, %v6075
        %v6077 = vrot.slane %v5859, %v6076
        %v6078 = vlaneseq
        %v6079 = vshrl.u32 %v6078, 7
        %v6080 = vsub.s32 1, %v6079
        %v6081 = vrot.slane %v5859, %v6080
        %v6082 = vlaneseq
        %v6083 = vshrl.u32 %v6082, 7
        %v6084 = vsub.s32 2, %v6083
        %v6085 = vrot.slane %v5859, %v6084
        %v6086 = vlaneseq
        %v6087 = vshrl.u32 %v6086, 7
        %v6088 = vsub.s32 3, %v6087
        %v6089 = vrot.slane %v5859, %v6088
        %v6090 = vlaneseq
        %v6091 = vshrl.u32 %v6090, 7
        %v6092 = vsub.s32 4, %v6091
        %v6093 = vrot.slane %v5859, %v6092
        %v6094 = vlaneseq
        %v6095 = vshrl.u32 %v6094, 7
        %v6096 = vsub.s32 5, %v6095
        %v6097 = vrot.slane %v5859, %v6096
        %v6098 = vlaneseq
        %v6099 = vshrl.u32 %v6098, 7
        %v6100 = vsub.s32 6, %v6099
        %v6101 = vrot.slane %v5859, %v6100
        %v6102 = vlaneseq
        %v6103 = vshrl.u32 %v6102, 7
        %v6104 = vsub.s32 7, %v6103
        %v6105 = vrot.slane %v5859, %v6104
        %v6106 = vlaneseq
        %v6107 = vshrl.u32 %v6106, 7
        %v6108 = vsub.s32 0, %v6107
        %v6109 = vrot.slane %v5861, %v6108
        %v6110 = vlaneseq
        %v6111 = vshrl.u32 %v6110, 7
        %v6112 = vsub.s32 1, %v6111
        %v6113 = vrot.slane %v5861, %v6112
        %v6114 = vlaneseq
        %v6115 = vshrl.u32 %v6114, 7
        %v6116 = vsub.s32 2, %v6115
        %v6117 = vrot.slane %v5861, %v6116
        %v6118 = vlaneseq
        %v6119 = vshrl.u32 %v6118, 7
        %v6120 = vsub.s32 3, %v6119
        %v6121 = vrot.slane %v5861, %v6120
        %v6122 = vlaneseq
        %v6123 = vshrl.u32 %v6122, 7
        %v6124 = vsub.s32 4, %v6123
        %v6125 = vrot.slane %v5861, %v6124
        %v6126 = vlaneseq
        %v6127 = vshrl.u32 %v6126, 7
        %v6128 = vsub.s32 5, %v6127
        %v6129 = vrot.slane %v5861, %v6128
        %v6130 = vlaneseq
        %v6131 = vshrl.u32 %v6130, 7
        %v6132 = vsub.s32 6, %v6131
        %v6133 = vrot.slane %v5861, %v6132
        %v6134 = vlaneseq
        %v6135 = vshrl.u32 %v6134, 7
        %v6136 = vsub.s32 7, %v6135
        %v6137 = vrot.slane %v5861, %v6136
        %v6138 = vlaneseq
        %v6139 = vshrl.u32 %v6138, 7
        %v6140 = vsub.s32 0, %v6139
        %v6141 = vrot.slane %v5863, %v6140
        %v6142 = vlaneseq
        %v6143 = vshrl.u32 %v6142, 7
        %v6144 = vsub.s32 1, %v6143
        %v6145 = vrot.slane %v5863, %v6144
        %v6146 = vlaneseq
        %v6147 = vshrl.u32 %v6146, 7
        %v6148 = vsub.s32 2, %v6147
        %v6149 = vrot.slane %v5863, %v6148
        %v6150 = vlaneseq
        %v6151 = vshrl.u32 %v6150, 7
        %v6152 = vsub.s32 3, %v6151
        %v6153 = vrot.slane %v5863, %v6152
        %v6154 = vlaneseq
        %v6155 = vshrl.u32 %v6154, 7
        %v6156 = vsub.s32 4, %v6155
        %v6157 = vrot.slane %v5863, %v6156
        %v6158 = vlaneseq
        %v6159 = vshrl.u32 %v6158, 7
        %v6160 = vsub.s32 5, %v6159
        %v6161 = vrot.slane %v5863, %v6160
        %v6162 = vlaneseq
        %v6163 = vshrl.u32 %v6162, 7
        %v6164 = vsub.s32 6, %v6163
        %v6165 = vrot.slane %v5863, %v6164
        %v6166 = vlaneseq
        %v6167 = vshrl.u32 %v6166, 7
        %v6168 = vsub.s32 7, %v6167
        %v6169 = vrot.slane %v5863, %v6168
        %v6170 = vlaneseq
        %v6171 = vshrl.u32 %v6170, 7
        %v6172 = vsub.s32 0, %v6171
        %v6173 = vrot.slane %v5865, %v6172
        %v6174 = vlaneseq
        %v6175 = vshrl.u32 %v6174, 7
        %v6176 = vsub.s32 1, %v6175
        %v6177 = vrot.slane %v5865, %v6176
        %v6178 = vlaneseq
        %v6179 = vshrl.u32 %v6178, 7
        %v6180 = vsub.s32 2, %v6179
        %v6181 = vrot.slane %v5865, %v6180
        %v6182 = vlaneseq
        %v6183 = vshrl.u32 %v6182, 7
        %v6184 = vsub.s32 3, %v6183
        %v6185 = vrot.slane %v5865, %v6184
        %v6186 = vlaneseq
        %v6187 = vshrl.u32 %v6186, 7
        %v6188 = vsub.s32 4, %v6187
        %v6189 = vrot.slane %v5865, %v6188
        %v6190 = vlaneseq
        %v6191 = vshrl.u32 %v6190, 7
        %v6192 = vsub.s32 5, %v6191
        %v6193 = vrot.slane %v5865, %v6192
        %v6194 = vlaneseq
        %v6195 = vshrl.u32 %v6194, 7
        %v6196 = vsub.s32 6, %v6195
        %v6197 = vrot.slane %v5865, %v6196
        %v6198 = vlaneseq
        %v6199 = vshrl.u32 %v6198, 7
        %v6200 = vsub.s32 7, %v6199
        %v6201 = vrot.slane %v5865, %v6200
        %v6202 = vlaneseq
        %v6203 = vshrl.u32 %v6202, 7
        %v6204 = vsub.s32 0, %v6203
        %v6205 = vrot.slane %v5867, %v6204
        %v6206 = vlaneseq
        %v6207 = vshrl.u32 %v6206, 7
        %v6208 = vsub.s32 1, %v6207
        %v6209 = vrot.slane %v5867, %v6208
        %v6210 = vlaneseq
        %v6211 = vshrl.u32 %v6210, 7
        %v6212 = vsub.s32 2, %v6211
        %v6213 = vrot.slane %v5867, %v6212
        %v6214 = vlaneseq
        %v6215 = vshrl.u32 %v6214, 7
        %v6216 = vsub.s32 3, %v6215
        %v6217 = vrot.slane %v5867, %v6216
        %v6218 = vlaneseq
        %v6219 = vshrl.u32 %v6218, 7
        %v6220 = vsub.s32 4, %v6219
        %v6221 = vrot.slane %v5867, %v6220
        %v6222 = vlaneseq
        %v6223 = vshrl.u32 %v6222, 7
        %v6224 = vsub.s32 5, %v6223
        %v6225 = vrot.slane %v5867, %v6224
        %v6226 = vlaneseq
        %v6227 = vshrl.u32 %v6226, 7
        %v6228 = vsub.s32 6, %v6227
        %v6229 = vrot.slane %v5867, %v6228
        %v6230 = vlaneseq
        %v6231 = vshrl.u32 %v6230, 7
        %v6232 = vsub.s32 7, %v6231
        %v6233 = vrot.slane %v5867, %v6232
        %v6234 = vlaneseq
        %v6235 = vshrl.u32 %v6234, 7
        %v6236 = vsub.s32 0, %v6235
        %v6237 = vrot.slane %v5869, %v6236
        %v6238 = vlaneseq
        %v6239 = vshrl.u32 %v6238, 7
        %v6240 = vsub.s32 1, %v6239
        %v6241 = vrot.slane %v5869, %v6240
        %v6242 = vlaneseq
        %v6243 = vshrl.u32 %v6242, 7
        %v6244 = vsub.s32 2, %v6243
        %v6245 = vrot.slane %v5869, %v6244
        %v6246 = vlaneseq
        %v6247 = vshrl.u32 %v6246, 7
        %v6248 = vsub.s32 3, %v6247
        %v6249 = vrot.slane %v5869, %v6248
        %v6250 = vlaneseq
        %v6251 = vshrl.u32 %v6250, 7
        %v6252 = vsub.s32 4, %v6251
        %v6253 = vrot.slane %v5869, %v6252
        %v6254 = vlaneseq
        %v6255 = vshrl.u32 %v6254, 7
        %v6256 = vsub.s32 5, %v6255
        %v6257 = vrot.slane %v5869, %v6256
        %v6258 = vlaneseq
        %v6259 = vshrl.u32 %v6258, 7
        %v6260 = vsub.s32 6, %v6259
        %v6261 = vrot.slane %v5869, %v6260
        %v6262 = vlaneseq
        %v6263 = vshrl.u32 %v6262, 7
        %v6264 = vsub.s32 7, %v6263
        %v6265 = vrot.slane %v5869, %v6264
        %v6266 = vlaneseq
        %v6267 = vshrl.u32 %v6266, 7
        %v6268 = vsub.s32 0, %v6267
        %v6269 = vrot.slane %v5871, %v6268
        %v6270 = vlaneseq
        %v6271 = vshrl.u32 %v6270, 7
        %v6272 = vsub.s32 1, %v6271
        %v6273 = vrot.slane %v5871, %v6272
        %v6274 = vlaneseq
        %v6275 = vshrl.u32 %v6274, 7
        %v6276 = vsub.s32 2, %v6275
        %v6277 = vrot.slane %v5871, %v6276
        %v6278 = vlaneseq
        %v6279 = vshrl.u32 %v6278, 7
        %v6280 = vsub.s32 3, %v6279
        %v6281 = vrot.slane %v5871, %v6280
        %v6282 = vlaneseq
        %v6283 = vshrl.u32 %v6282, 7
        %v6284 = vsub.s32 4, %v6283
        %v6285 = vrot.slane %v5871, %v6284
        %v6286 = vlaneseq
        %v6287 = vshrl.u32 %v6286, 7
        %v6288 = vsub.s32 5, %v6287
        %v6289 = vrot.slane %v5871, %v6288
        %v6290 = vlaneseq
        %v6291 = vshrl.u32 %v6290, 7
        %v6292 = vsub.s32 6, %v6291
        %v6293 = vrot.slane %v5871, %v6292
        %v6294 = vlaneseq
        %v6295 = vshrl.u32 %v6294, 7
        %v6296 = vsub.s32 7, %v6295
        %v6297 = vrot.slane %v5871, %v6296
        %v6298 = vlaneseq
        %v6299 = vshrl.u32 %v6298, 7
        %v6300 = vsub.s32 0, %v6299
        %v6301 = vrot.slane %v5873, %v6300
        %v6302 = vlaneseq
        %v6303 = vshrl.u32 %v6302, 7
        %v6304 = vsub.s32 1, %v6303
        %v6305 = vrot.slane %v5873, %v6304
        %v6306 = vlaneseq
        %v6307 = vshrl.u32 %v6306, 7
        %v6308 = vsub.s32 2, %v6307
        %v6309 = vrot.slane %v5873, %v6308
        %v6310 = vlaneseq
        %v6311 = vshrl.u32 %v6310, 7
        %v6312 = vsub.s32 3, %v6311
        %v6313 = vrot.slane %v5873, %v6312
        %v6314 = vlaneseq
        %v6315 = vshrl.u32 %v6314, 7
        %v6316 = vsub.s32 4, %v6315
        %v6317 = vrot.slane %v5873, %v6316
        %v6318 = vlaneseq
        %v6319 = vshrl.u32 %v6318, 7
        %v6320 = vsub.s32 5, %v6319
        %v6321 = vrot.slane %v5873, %v6320
        %v6322 = vlaneseq
        %v6323 = vshrl.u32 %v6322, 7
        %v6324 = vsub.s32 6, %v6323
        %v6325 = vrot.slane %v5873, %v6324
        %v6326 = vlaneseq
        %v6327 = vshrl.u32 %v6326, 7
        %v6328 = vsub.s32 7, %v6327
        %v6329 = vrot.slane %v5873, %v6328
        %v6330 = vlaneseq
        %v6331 = vshrl.u32 %v6330, 7
        %v6332 = vsub.s32 0, %v6331
        %v6333 = vrot.slane %v5875, %v6332
        %v6334 = vlaneseq
        %v6335 = vshrl.u32 %v6334, 7
        %v6336 = vsub.s32 1, %v6335
        %v6337 = vrot.slane %v5875, %v6336
        %v6338 = vlaneseq
        %v6339 = vshrl.u32 %v6338, 7
        %v6340 = vsub.s32 2, %v6339
        %v6341 = vrot.slane %v5875, %v6340
        %v6342 = vlaneseq
        %v6343 = vshrl.u32 %v6342, 7
        %v6344 = vsub.s32 3, %v6343
        %v6345 = vrot.slane %v5875, %v6344
        %v6346 = vlaneseq
        %v6347 = vshrl.u32 %v6346, 7
        %v6348 = vsub.s32 4, %v6347
        %v6349 = vrot.slane %v5875, %v6348
        %v6350 = vlaneseq
        %v6351 = vshrl.u32 %v6350, 7
        %v6352 = vsub.s32 5, %v6351
        %v6353 = vrot.slane %v5875, %v6352
        %v6354 = vlaneseq
        %v6355 = vshrl.u32 %v6354, 7
        %v6356 = vsub.s32 6, %v6355
        %v6357 = vrot.slane %v5875, %v6356
        %v6358 = vlaneseq
        %v6359 = vshrl.u32 %v6358, 7
        %v6360 = vsub.s32 7, %v6359
        %v6361 = vrot.slane %v5875, %v6360
        %v6362 = vlaneseq
        %v6363 = vshrl.u32 %v6362, 7
        %v6364 = vsub.s32 0, %v6363
        %v6365 = vrot.slane %v5877, %v6364
        %v6366 = vlaneseq
        %v6367 = vshrl.u32 %v6366, 7
        %v6368 = vsub.s32 1, %v6367
        %v6369 = vrot.slane %v5877, %v6368
        %v6370 = vlaneseq
        %v6371 = vshrl.u32 %v6370, 7
        %v6372 = vsub.s32 2, %v6371
        %v6373 = vrot.slane %v5877, %v6372
        %v6374 = vlaneseq
        %v6375 = vshrl.u32 %v6374, 7
        %v6376 = vsub.s32 3, %v6375
        %v6377 = vrot.slane %v5877, %v6376
        %v6378 = vlaneseq
        %v6379 = vshrl.u32 %v6378, 7
        %v6380 = vsub.s32 4, %v6379
        %v6381 = vrot.slane %v5877, %v6380
        %v6382 = vlaneseq
        %v6383 = vshrl.u32 %v6382, 7
        %v6384 = vsub.s32 5, %v6383
        %v6385 = vrot.slane %v5877, %v6384
        %v6386 = vlaneseq
        %v6387 = vshrl.u32 %v6386, 7
        %v6388 = vsub.s32 6, %v6387
        %v6389 = vrot.slane %v5877, %v6388
        %v6390 = vlaneseq
        %v6391 = vshrl.u32 %v6390, 7
        %v6392 = vsub.s32 7, %v6391
        %v6393 = vrot.slane %v5877, %v6392
        %v6394 = vlaneseq
        %v6395 = vshrl.u32 %v6394, 7
        %v6396 = vsub.s32 0, %v6395
        %v6397 = vrot.slane %v5879, %v6396
        %v6398 = vlaneseq
        %v6399 = vshrl.u32 %v6398, 7
        %v6400 = vsub.s32 1, %v6399
        %v6401 = vrot.slane %v5879, %v6400
        %v6402 = vlaneseq
        %v6403 = vshrl.u32 %v6402, 7
        %v6404 = vsub.s32 2, %v6403
        %v6405 = vrot.slane %v5879, %v6404
        %v6406 = vlaneseq
        %v6407 = vshrl.u32 %v6406, 7
        %v6408 = vsub.s32 3, %v6407
        %v6409 = vrot.slane %v5879, %v6408
        %v6410 = vlaneseq
        %v6411 = vshrl.u32 %v6410, 7
        %v6412 = vsub.s32 4, %v6411
        %v6413 = vrot.slane %v5879, %v6412
        %v6414 = vlaneseq
        %v6415 = vshrl.u32 %v6414, 7
        %v6416 = vsub.s32 5, %v6415
        %v6417 = vrot.slane %v5879, %v6416
        %v6418 = vlaneseq
        %v6419 = vshrl.u32 %v6418, 7
        %v6420 = vsub.s32 6, %v6419
        %v6421 = vrot.slane %v5879, %v6420
        %v6422 = vlaneseq
        %v6423 = vshrl.u32 %v6422, 7
        %v6424 = vsub.s32 7, %v6423
        %v6425 = vrot.slane %v5879, %v6424
        %v6426 = vlaneseq
        %v6427 = vshrl.u32 %v6426, 7
        %v6428 = vsub.s32 0, %v6427
        %v6429 = vrot.slane %v5881, %v6428
        %v6430 = vlaneseq
        %v6431 = vshrl.u32 %v6430, 7
        %v6432 = vsub.s32 1, %v6431
        %v6433 = vrot.slane %v5881, %v6432
        %v6434 = vlaneseq
        %v6435 = vshrl.u32 %v6434, 7
        %v6436 = vsub.s32 2, %v6435
        %v6437 = vrot.slane %v5881, %v6436
        %v6438 = vlaneseq
        %v6439 = vshrl.u32 %v6438, 7
        %v6440 = vsub.s32 3, %v6439
        %v6441 = vrot.slane %v5881, %v6440
        %v6442 = vlaneseq
        %v6443 = vshrl.u32 %v6442, 7
        %v6444 = vsub.s32 4, %v6443
        %v6445 = vrot.slane %v5881, %v6444
        %v6446 = vlaneseq
        %v6447 = vshrl.u32 %v6446, 7
        %v6448 = vsub.s32 5, %v6447
        %v6449 = vrot.slane %v5881, %v6448
        %v6450 = vlaneseq
        %v6451 = vshrl.u32 %v6450, 7
        %v6452 = vsub.s32 6, %v6451
        %v6453 = vrot.slane %v5881, %v6452
        %v6454 = vlaneseq
        %v6455 = vshrl.u32 %v6454, 7
        %v6456 = vsub.s32 7, %v6455
        %v6457 = vrot.slane %v5881, %v6456
        %v6458 = vlaneseq
        %v6459 = vshrl.u32 %v6458, 7
        %v6460 = vsub.s32 0, %v6459
        %v6461 = vrot.slane %v5883, %v6460
        %v6462 = vlaneseq
        %v6463 = vshrl.u32 %v6462, 7
        %v6464 = vsub.s32 1, %v6463
        %v6465 = vrot.slane %v5883, %v6464
        %v6466 = vlaneseq
        %v6467 = vshrl.u32 %v6466, 7
        %v6468 = vsub.s32 2, %v6467
        %v6469 = vrot.slane %v5883, %v6468
        %v6470 = vlaneseq
        %v6471 = vshrl.u32 %v6470, 7
        %v6472 = vsub.s32 3, %v6471
        %v6473 = vrot.slane %v5883, %v6472
        %v6474 = vlaneseq
        %v6475 = vshrl.u32 %v6474, 7
        %v6476 = vsub.s32 4, %v6475
        %v6477 = vrot.slane %v5883, %v6476
        %v6478 = vlaneseq
        %v6479 = vshrl.u32 %v6478, 7
        %v6480 = vsub.s32 5, %v6479
        %v6481 = vrot.slane %v5883, %v6480
        %v6482 = vlaneseq
        %v6483 = vshrl.u32 %v6482, 7
        %v6484 = vsub.s32 6, %v6483
        %v6485 = vrot.slane %v5883, %v6484
        %v6486 = vlaneseq
        %v6487 = vshrl.u32 %v6486, 7
        %v6488 = vsub.s32 7, %v6487
        %v6489 = vrot.slane %v5883, %v6488
        %v6490 = vlaneseq
        %v6491 = vshrl.u32 %v6490, 7
        %v6492 = vsub.s32 0, %v6491
        %v6493 = vrot.slane %v5885, %v6492
        %v6494 = vlaneseq
        %v6495 = vshrl.u32 %v6494, 7
        %v6496 = vsub.s32 1, %v6495
        %v6497 = vrot.slane %v5885, %v6496
        %v6498 = vlaneseq
        %v6499 = vshrl.u32 %v6498, 7
        %v6500 = vsub.s32 2, %v6499
        %v6501 = vrot.slane %v5885, %v6500
        %v6502 = vlaneseq
        %v6503 = vshrl.u32 %v6502, 7
        %v6504 = vsub.s32 3, %v6503
        %v6505 = vrot.slane %v5885, %v6504
        %v6506 = vlaneseq
        %v6507 = vshrl.u32 %v6506, 7
        %v6508 = vsub.s32 4, %v6507
        %v6509 = vrot.slane %v5885, %v6508
        %v6510 = vlaneseq
        %v6511 = vshrl.u32 %v6510, 7
        %v6512 = vsub.s32 5, %v6511
        %v6513 = vrot.slane %v5885, %v6512
        %v6514 = vlaneseq
        %v6515 = vshrl.u32 %v6514, 7
        %v6516 = vsub.s32 6, %v6515
        %v6517 = vrot.slane %v5885, %v6516
        %v6518 = vlaneseq
        %v6519 = vshrl.u32 %v6518, 7
        %v6520 = vsub.s32 7, %v6519
        %v6521 = vrot.slane %v5885, %v6520
        %v6522 = vlaneseq
        %v6523 = vshrl.u32 %v6522, 7
        %v6524 = vsub.s32 0, %v6523
        %v6525 = vrot.slane %v5887, %v6524
        %v6526 = vlaneseq
        %v6527 = vshrl.u32 %v6526, 7
        %v6528 = vsub.s32 1, %v6527
        %v6529 = vrot.slane %v5887, %v6528
        %v6530 = vlaneseq
        %v6531 = vshrl.u32 %v6530, 7
        %v6532 = vsub.s32 2, %v6531
        %v6533 = vrot.slane %v5887, %v6532
        %v6534 = vlaneseq
        %v6535 = vshrl.u32 %v6534, 7
        %v6536 = vsub.s32 3, %v6535
        %v6537 = vrot.slane %v5887, %v6536
        %v6538 = vlaneseq
        %v6539 = vshrl.u32 %v6538, 7
        %v6540 = vsub.s32 4, %v6539
        %v6541 = vrot.slane %v5887, %v6540
        %v6542 = vlaneseq
        %v6543 = vshrl.u32 %v6542, 7
        %v6544 = vsub.s32 5, %v6543
        %v6545 = vrot.slane %v5887, %v6544
        %v6546 = vlaneseq
        %v6547 = vshrl.u32 %v6546, 7
        %v6548 = vsub.s32 6, %v6547
        %v6549 = vrot.slane %v5887, %v6548
        %v6550 = vlaneseq
        %v6551 = vshrl.u32 %v6550, 7
        %v6552 = vsub.s32 7, %v6551
        %v6553 = vrot.slane %v5887, %v6552
        %v6554 = vlaneseq
        %v6555 = vshrl.u32 %v6554, 7
        %v6556 = vsub.s32 0, %v6555
        %v6557 = vrot.slane %v5889, %v6556
        %v6558 = vlaneseq
        %v6559 = vshrl.u32 %v6558, 7
        %v6560 = vsub.s32 1, %v6559
        %v6561 = vrot.slane %v5889, %v6560
        %v6562 = vlaneseq
        %v6563 = vshrl.u32 %v6562, 7
        %v6564 = vsub.s32 2, %v6563
        %v6565 = vrot.slane %v5889, %v6564
        %v6566 = vlaneseq
        %v6567 = vshrl.u32 %v6566, 7
        %v6568 = vsub.s32 3, %v6567
        %v6569 = vrot.slane %v5889, %v6568
        %v6570 = vlaneseq
        %v6571 = vshrl.u32 %v6570, 7
        %v6572 = vsub.s32 4, %v6571
        %v6573 = vrot.slane %v5889, %v6572
        %v6574 = vlaneseq
        %v6575 = vshrl.u32 %v6574, 7
        %v6576 = vsub.s32 5, %v6575
        %v6577 = vrot.slane %v5889, %v6576
        %v6578 = vlaneseq
        %v6579 = vshrl.u32 %v6578, 7
        %v6580 = vsub.s32 6, %v6579
        %v6581 = vrot.slane %v5889, %v6580
        %v6582 = vlaneseq
        %v6583 = vshrl.u32 %v6582, 7
        %v6584 = vsub.s32 7, %v6583
        %v6585 = vrot.slane %v5889, %v6584
        %v6586 = vlaneseq
        %v6587 = vshrl.u32 %v6586, 7
        %v6588 = vsub.s32 0, %v6587
        %v6589 = vrot.slane %v5891, %v6588
        %v6590 = vlaneseq
        %v6591 = vshrl.u32 %v6590, 7
        %v6592 = vsub.s32 1, %v6591
        %v6593 = vrot.slane %v5891, %v6592
        %v6594 = vlaneseq
        %v6595 = vshrl.u32 %v6594, 7
        %v6596 = vsub.s32 2, %v6595
        %v6597 = vrot.slane %v5891, %v6596
        %v6598 = vlaneseq
        %v6599 = vshrl.u32 %v6598, 7
        %v6600 = vsub.s32 3, %v6599
        %v6601 = vrot.slane %v5891, %v6600
        %v6602 = vlaneseq
        %v6603 = vshrl.u32 %v6602, 7
        %v6604 = vsub.s32 4, %v6603
        %v6605 = vrot.slane %v5891, %v6604
        %v6606 = vlaneseq
        %v6607 = vshrl.u32 %v6606, 7
        %v6608 = vsub.s32 5, %v6607
        %v6609 = vrot.slane %v5891, %v6608
        %v6610 = vlaneseq
        %v6611 = vshrl.u32 %v6610, 7
        %v6612 = vsub.s32 6, %v6611
        %v6613 = vrot.slane %v5891, %v6612
        %v6614 = vlaneseq
        %v6615 = vshrl.u32 %v6614, 7
        %v6616 = vsub.s32 7, %v6615
        %v6617 = vrot.slane %v5891, %v6616
        %v6618 = vlaneseq
        %v6619 = vshrl.u32 %v6618, 7
        %v6620 = vsub.s32 0, %v6619
        %v6621 = vrot.slane %v5893, %v6620
        %v6622 = vlaneseq
        %v6623 = vshrl.u32 %v6622, 7
        %v6624 = vsub.s32 1, %v6623
        %v6625 = vrot.slane %v5893, %v6624
        %v6626 = vlaneseq
        %v6627 = vshrl.u32 %v6626, 7
        %v6628 = vsub.s32 2, %v6627
        %v6629 = vrot.slane %v5893, %v6628
        %v6630 = vlaneseq
        %v6631 = vshrl.u32 %v6630, 7
        %v6632 = vsub.s32 3, %v6631
        %v6633 = vrot.slane %v5893, %v6632
        %v6634 = vlaneseq
        %v6635 = vshrl.u32 %v6634, 7
        %v6636 = vsub.s32 4, %v6635
        %v6637 = vrot.slane %v5893, %v6636
        %v6638 = vlaneseq
        %v6639 = vshrl.u32 %v6638, 7
        %v6640 = vsub.s32 5, %v6639
        %v6641 = vrot.slane %v5893, %v6640
        %v6642 = vlaneseq
        %v6643 = vshrl.u32 %v6642, 7
        %v6644 = vsub.s32 6, %v6643
        %v6645 = vrot.slane %v5893, %v6644
        %v6646 = vlaneseq
        %v6647 = vshrl.u32 %v6646, 7
        %v6648 = vsub.s32 7, %v6647
        %v6649 = vrot.slane %v5893, %v6648
        %v6650 = vlaneseq
        %v6651 = vshrl.u32 %v6650, 7
        %v6652 = vsub.s32 0, %v6651
        %v6653 = vrot.slane %v5895, %v6652
        %v6654 = vlaneseq
        %v6655 = vshrl.u32 %v6654, 7
        %v6656 = vsub.s32 1, %v6655
        %v6657 = vrot.slane %v5895, %v6656
        %v6658 = vlaneseq
        %v6659 = vshrl.u32 %v6658, 7
        %v6660 = vsub.s32 2, %v6659
        %v6661 = vrot.slane %v5895, %v6660
        %v6662 = vlaneseq
        %v6663 = vshrl.u32 %v6662, 7
        %v6664 = vsub.s32 3, %v6663
        %v6665 = vrot.slane %v5895, %v6664
        %v6666 = vlaneseq
        %v6667 = vshrl.u32 %v6666, 7
        %v6668 = vsub.s32 4, %v6667
        %v6669 = vrot.slane %v5895, %v6668
        %v6670 = vlaneseq
        %v6671 = vshrl.u32 %v6670, 7
        %v6672 = vsub.s32 5, %v6671
        %v6673 = vrot.slane %v5895, %v6672
        %v6674 = vlaneseq
        %v6675 = vshrl.u32 %v6674, 7
        %v6676 = vsub.s32 6, %v6675
        %v6677 = vrot.slane %v5895, %v6676
        %v6678 = vlaneseq
        %v6679 = vshrl.u32 %v6678, 7
        %v6680 = vsub.s32 7, %v6679
        %v6681 = vrot.slane %v5895, %v6680
        %v6682 = vlaneseq
        %v6683 = vshrl.u32 %v6682, 7
        %v6684 = vsub.s32 0, %v6683
        %v6685 = vrot.slane %v5897, %v6684
        %v6686 = vlaneseq
        %v6687 = vshrl.u32 %v6686, 7
        %v6688 = vsub.s32 1, %v6687
        %v6689 = vrot.slane %v5897, %v6688
        %v6690 = vlaneseq
        %v6691 = vshrl.u32 %v6690, 7
        %v6692 = vsub.s32 2, %v6691
        %v6693 = vrot.slane %v5897, %v6692
        %v6694 = vlaneseq
        %v6695 = vshrl.u32 %v6694, 7
        %v6696 = vsub.s32 3, %v6695
        %v6697 = vrot.slane %v5897, %v6696
        %v6698 = vlaneseq
        %v6699 = vshrl.u32 %v6698, 7
        %v6700 = vsub.s32 4, %v6699
        %v6701 = vrot.slane %v5897, %v6700
        %v6702 = vlaneseq
        %v6703 = vshrl.u32 %v6702, 7
        %v6704 = vsub.s32 5, %v6703
        %v6705 = vrot.slane %v5897, %v6704
        %v6706 = vlaneseq
        %v6707 = vshrl.u32 %v6706, 7
        %v6708 = vsub.s32 6, %v6707
        %v6709 = vrot.slane %v5897, %v6708
        %v6710 = vlaneseq
        %v6711 = vshrl.u32 %v6710, 7
        %v6712 = vsub.s32 7, %v6711
        %v6713 = vrot.slane %v5897, %v6712
        %v6714 = vlaneseq
        %v6715 = vshrl.u32 %v6714, 7
        %v6716 = vsub.s32 0, %v6715
        %v6717 = vrot.slane %v5899, %v6716
        %v6718 = vlaneseq
        %v6719 = vshrl.u32 %v6718, 7
        %v6720 = vsub.s32 1, %v6719
        %v6721 = vrot.slane %v5899, %v6720
        %v6722 = vlaneseq
        %v6723 = vshrl.u32 %v6722, 7
        %v6724 = vsub.s32 2, %v6723
        %v6725 = vrot.slane %v5899, %v6724
        %v6726 = vlaneseq
        %v6727 = vshrl.u32 %v6726, 7
        %v6728 = vsub.s32 3, %v6727
        %v6729 = vrot.slane %v5899, %v6728
        %v6730 = vlaneseq
        %v6731 = vshrl.u32 %v6730, 7
        %v6732 = vsub.s32 4, %v6731
        %v6733 = vrot.slane %v5899, %v6732
        %v6734 = vlaneseq
        %v6735 = vshrl.u32 %v6734, 7
        %v6736 = vsub.s32 5, %v6735
        %v6737 = vrot.slane %v5899, %v6736
        %v6738 = vlaneseq
        %v6739 = vshrl.u32 %v6738, 7
        %v6740 = vsub.s32 6, %v6739
        %v6741 = vrot.slane %v5899, %v6740
        %v6742 = vlaneseq
        %v6743 = vshrl.u32 %v6742, 7
        %v6744 = vsub.s32 7, %v6743
        %v6745 = vrot.slane %v5899, %v6744
        %v6746 = vlaneseq
        %v6747 = vshrl.u32 %v6746, 7
        %v6748 = vsub.s32 0, %v6747
        %v6749 = vrot.slane %v5901, %v6748
        %v6750 = vlaneseq
        %v6751 = vshrl.u32 %v6750, 7
        %v6752 = vsub.s32 1, %v6751
        %v6753 = vrot.slane %v5901, %v6752
        %v6754 = vlaneseq
        %v6755 = vshrl.u32 %v6754, 7
        %v6756 = vsub.s32 2, %v6755
        %v6757 = vrot.slane %v5901, %v6756
        %v6758 = vlaneseq
        %v6759 = vshrl.u32 %v6758, 7
        %v6760 = vsub.s32 3, %v6759
        %v6761 = vrot.slane %v5901, %v6760
        %v6762 = vlaneseq
        %v6763 = vshrl.u32 %v6762, 7
        %v6764 = vsub.s32 4, %v6763
        %v6765 = vrot.slane %v5901, %v6764
        %v6766 = vlaneseq
        %v6767 = vshrl.u32 %v6766, 7
        %v6768 = vsub.s32 5, %v6767
        %v6769 = vrot.slane %v5901, %v6768
        %v6770 = vlaneseq
        %v6771 = vshrl.u32 %v6770, 7
        %v6772 = vsub.s32 6, %v6771
        %v6773 = vrot.slane %v5901, %v6772
        %v6774 = vlaneseq
        %v6775 = vshrl.u32 %v6774, 7
        %v6776 = vsub.s32 7, %v6775
        %v6777 = vrot.slane %v5901, %v6776
        %v6778 = vlaneseq
        %v6779 = vshrl.u32 %v6778, 7
        %v6780 = vsub.s32 0, %v6779
        %v6781 = vrot.slane %v5903, %v6780
        %v6782 = vlaneseq
        %v6783 = vshrl.u32 %v6782, 7
        %v6784 = vsub.s32 1, %v6783
        %v6785 = vrot.slane %v5903, %v6784
        %v6786 = vlaneseq
        %v6787 = vshrl.u32 %v6786, 7
        %v6788 = vsub.s32 2, %v6787
        %v6789 = vrot.slane %v5903, %v6788
        %v6790 = vlaneseq
        %v6791 = vshrl.u32 %v6790, 7
        %v6792 = vsub.s32 3, %v6791
        %v6793 = vrot.slane %v5903, %v6792
        %v6794 = vlaneseq
        %v6795 = vshrl.u32 %v6794, 7
        %v6796 = vsub.s32 4, %v6795
        %v6797 = vrot.slane %v5903, %v6796
        %v6798 = vlaneseq
        %v6799 = vshrl.u32 %v6798, 7
        %v6800 = vsub.s32 5, %v6799
        %v6801 = vrot.slane %v5903, %v6800
        %v6802 = vlaneseq
        %v6803 = vshrl.u32 %v6802, 7
        %v6804 = vsub.s32 6, %v6803
        %v6805 = vrot.slane %v5903, %v6804
        %v6806 = vlaneseq
        %v6807 = vshrl.u32 %v6806, 7
        %v6808 = vsub.s32 7, %v6807
        %v6809 = vrot.slane %v5903, %v6808
        %v6810 = vlaneseq
        %v6811 = vshrl.u32 %v6810, 7
        %v6812 = vsub.s32 0, %v6811
        %v6813 = vrot.slane %v5905, %v6812
        %v6814 = vlaneseq
        %v6815 = vshrl.u32 %v6814, 7
        %v6816 = vsub.s32 1, %v6815
        %v6817 = vrot.slane %v5905, %v6816
        %v6818 = vlaneseq
        %v6819 = vshrl.u32 %v6818, 7
        %v6820 = vsub.s32 2, %v6819
        %v6821 = vrot.slane %v5905, %v6820
        %v6822 = vlaneseq
        %v6823 = vshrl.u32 %v6822, 7
        %v6824 = vsub.s32 3, %v6823
        %v6825 = vrot.slane %v5905, %v6824
        %v6826 = vlaneseq
        %v6827 = vshrl.u32 %v6826, 7
        %v6828 = vsub.s32 4, %v6827
        %v6829 = vrot.slane %v5905, %v6828
        %v6830 = vlaneseq
        %v6831 = vshrl.u32 %v6830, 7
        %v6832 = vsub.s32 5, %v6831
        %v6833 = vrot.slane %v5905, %v6832
        %v6834 = vlaneseq
        %v6835 = vshrl.u32 %v6834, 7
        %v6836 = vsub.s32 6, %v6835
        %v6837 = vrot.slane %v5905, %v6836
        %v6838 = vlaneseq
        %v6839 = vshrl.u32 %v6838, 7
        %v6840 = vsub.s32 7, %v6839
        %v6841 = vrot.slane %v5905, %v6840
        %v6842 = vlaneseq
        %v6843 = vshrl.u32 %v6842, 7
        %v6844 = vsub.s32 0, %v6843
        %v6845 = vrot.slane %v5907, %v6844
        %v6846 = vlaneseq
        %v6847 = vshrl.u32 %v6846, 7
        %v6848 = vsub.s32 1, %v6847
        %v6849 = vrot.slane %v5907, %v6848
        %v6850 = vlaneseq
        %v6851 = vshrl.u32 %v6850, 7
        %v6852 = vsub.s32 2, %v6851
        %v6853 = vrot.slane %v5907, %v6852
        %v6854 = vlaneseq
        %v6855 = vshrl.u32 %v6854, 7
        %v6856 = vsub.s32 3, %v6855
        %v6857 = vrot.slane %v5907, %v6856
        %v6858 = vlaneseq
        %v6859 = vshrl.u32 %v6858, 7
        %v6860 = vsub.s32 4, %v6859
        %v6861 = vrot.slane %v5907, %v6860
        %v6862 = vlaneseq
        %v6863 = vshrl.u32 %v6862, 7
        %v6864 = vsub.s32 5, %v6863
        %v6865 = vrot.slane %v5907, %v6864
        %v6866 = vlaneseq
        %v6867 = vshrl.u32 %v6866, 7
        %v6868 = vsub.s32 6, %v6867
        %v6869 = vrot.slane %v5907, %v6868
        %v6870 = vlaneseq
        %v6871 = vshrl.u32 %v6870, 7
        %v6872 = vsub.s32 7, %v6871
        %v6873 = vrot.slane %v5907, %v6872
        %v6874 = vlaneseq
        %v6875 = vshrl.u32 %v6874, 7
        %v6876 = vsub.s32 0, %v6875
        %v6877 = vrot.slane %v5909, %v6876
        %v6878 = vlaneseq
        %v6879 = vshrl.u32 %v6878, 7
        %v6880 = vsub.s32 1, %v6879
        %v6881 = vrot.slane %v5909, %v6880
        %v6882 = vlaneseq
        %v6883 = vshrl.u32 %v6882, 7
        %v6884 = vsub.s32 2, %v6883
        %v6885 = vrot.slane %v5909, %v6884
        %v6886 = vlaneseq
        %v6887 = vshrl.u32 %v6886, 7
        %v6888 = vsub.s32 3, %v6887
        %v6889 = vrot.slane %v5909, %v6888
        %v6890 = vlaneseq
        %v6891 = vshrl.u32 %v6890, 7
        %v6892 = vsub.s32 4, %v6891
        %v6893 = vrot.slane %v5909, %v6892
        %v6894 = vlaneseq
        %v6895 = vshrl.u32 %v6894, 7
        %v6896 = vsub.s32 5, %v6895
        %v6897 = vrot.slane %v5909, %v6896
        %v6898 = vlaneseq
        %v6899 = vshrl.u32 %v6898, 7
        %v6900 = vsub.s32 6, %v6899
        %v6901 = vrot.slane %v5909, %v6900
        %v6902 = vlaneseq
        %v6903 = vshrl.u32 %v6902, 7
        %v6904 = vsub.s32 7, %v6903
        %v6905 = vrot.slane %v5909, %v6904
        %v6906 = vlaneseq
        %v6907 = vshrl.u32 %v6906, 7
        %v6908 = vsub.s32 0, %v6907
        %v6909 = vrot.slane %v5911, %v6908
        %v6910 = vlaneseq
        %v6911 = vshrl.u32 %v6910, 7
        %v6912 = vsub.s32 1, %v6911
        %v6913 = vrot.slane %v5911, %v6912
        %v6914 = vlaneseq
        %v6915 = vshrl.u32 %v6914, 7
        %v6916 = vsub.s32 2, %v6915
        %v6917 = vrot.slane %v5911, %v6916
        %v6918 = vlaneseq
        %v6919 = vshrl.u32 %v6918, 7
        %v6920 = vsub.s32 3, %v6919
        %v6921 = vrot.slane %v5911, %v6920
        %v6922 = vlaneseq
        %v6923 = vshrl.u32 %v6922, 7
        %v6924 = vsub.s32 4, %v6923
        %v6925 = vrot.slane %v5911, %v6924
        %v6926 = vlaneseq
        %v6927 = vshrl.u32 %v6926, 7
        %v6928 = vsub.s32 5, %v6927
        %v6929 = vrot.slane %v5911, %v6928
        %v6930 = vlaneseq
        %v6931 = vshrl.u32 %v6930, 7
        %v6932 = vsub.s32 6, %v6931
        %v6933 = vrot.slane %v5911, %v6932
        %v6934 = vlaneseq
        %v6935 = vshrl.u32 %v6934, 7
        %v6936 = vsub.s32 7, %v6935
        %v6937 = vrot.slane %v5911, %v6936
        %v6938 = vlaneseq
        %v6939 = vshrl.u32 %v6938, 7
        %v6940 = vsub.s32 0, %v6939
        %v6941 = vrot.slane %v5913, %v6940
        %v6942 = vlaneseq
        %v6943 = vshrl.u32 %v6942, 7
        %v6944 = vsub.s32 1, %v6943
        %v6945 = vrot.slane %v5913, %v6944
        %v6946 = vlaneseq
        %v6947 = vshrl.u32 %v6946, 7
        %v6948 = vsub.s32 2, %v6947
        %v6949 = vrot.slane %v5913, %v6948
        %v6950 = vlaneseq
        %v6951 = vshrl.u32 %v6950, 7
        %v6952 = vsub.s32 3, %v6951
        %v6953 = vrot.slane %v5913, %v6952
        %v6954 = vlaneseq
        %v6955 = vshrl.u32 %v6954, 7
        %v6956 = vsub.s32 4, %v6955
        %v6957 = vrot.slane %v5913, %v6956
        %v6958 = vlaneseq
        %v6959 = vshrl.u32 %v6958, 7
        %v6960 = vsub.s32 5, %v6959
        %v6961 = vrot.slane %v5913, %v6960
        %v6962 = vlaneseq
        %v6963 = vshrl.u32 %v6962, 7
        %v6964 = vsub.s32 6, %v6963
        %v6965 = vrot.slane %v5913, %v6964
        %v6966 = vlaneseq
        %v6967 = vshrl.u32 %v6966, 7
        %v6968 = vsub.s32 7, %v6967
        %v6969 = vrot.slane %v5913, %v6968
        %v6970 = vcombine.low %v5949, %v5953
        %v6971 = vcombine.low %v5957, %v5961
        %v6972 = vcombine.low %v5965, %v5969
        %v6973 = vcombine.low %v5973, %v5977
        %v6975 = vunpack.c.l.s4 1966171168
        %v6976 = vunpack.c.0.s8 %v6975
        %v6977 = vlaneseq
        %v6978 = vshrl.u32 %v6977, 7
        %v6979 = vsub.s32 %v6976, %v6978
        %v6980 = vrot.slane %v6970, %v6979
        %v6982 = vunpack.c.l.s4 1966171168
        %v6983 = vunpack.c.0.s8 %v6982
        %v6984 = vlaneseq
        %v6985 = vshrl.u32 %v6984, 7
        %v6986 = vsub.s32 %v6983, %v6985
        %v6987 = vrot.slane %v6971, %v6986
        %v6989 = vunpack.c.l.s4 1966171168
        %v6990 = vunpack.c.0.s8 %v6989
        %v6991 = vlaneseq
        %v6992 = vshrl.u32 %v6991, 7
        %v6993 = vsub.s32 %v6990, %v6992
        %v6994 = vrot.slane %v6972, %v6993
        %v6996 = vunpack.c.l.s4 1966171168
        %v6997 = vunpack.c.0.s8 %v6996
        %v6998 = vlaneseq
        %v6999 = vshrl.u32 %v6998, 7
        %v7000 = vsub.s32 %v6997, %v6999
        %v7001 = vrot.slane %v6973, %v7000
        %v7002 = vcombine.low %v6980, %v6987
        %v7003 = vcombine.low %v6994, %v7001
        %v7005 = vunpack.c.l.s4 1966171168
        %v7006 = vunpack.c.0.s8 %v7005
        %v7007 = vlaneseq
        %v7008 = vshrl.u32 %v7007, 7
        %v7009 = vsub.s32 %v7006, %v7008
        %v7010 = vrot.slane %v7002, %v7009
        %v7012 = vunpack.c.l.s4 1966171168
        %v7013 = vunpack.c.0.s8 %v7012
        %v7014 = vlaneseq
        %v7015 = vshrl.u32 %v7014, 7
        %v7016 = vsub.s32 %v7013, %v7015
        %v7017 = vrot.slane %v7003, %v7016
        %v7018 = vcombine.low %v7010, %v7017
        %v7019 = vcombine.low %v5981, %v5985
        %v7020 = vcombine.low %v5989, %v5993
        %v7021 = vcombine.low %v5997, %v6001
        %v7022 = vcombine.low %v6005, %v6009
        %v7024 = vunpack.c.l.s4 1966171168
        %v7025 = vunpack.c.0.s8 %v7024
        %v7026 = vlaneseq
        %v7027 = vshrl.u32 %v7026, 7
        %v7028 = vsub.s32 %v7025, %v7027
        %v7029 = vrot.slane %v7019, %v7028
        %v7031 = vunpack.c.l.s4 1966171168
        %v7032 = vunpack.c.0.s8 %v7031
        %v7033 = vlaneseq
        %v7034 = vshrl.u32 %v7033, 7
        %v7035 = vsub.s32 %v7032, %v7034
        %v7036 = vrot.slane %v7020, %v7035
        %v7038 = vunpack.c.l.s4 1966171168
        %v7039 = vunpack.c.0.s8 %v7038
        %v7040 = vlaneseq
        %v7041 = vshrl.u32 %v7040, 7
        %v7042 = vsub.s32 %v7039, %v7041
        %v7043 = vrot.slane %v7021, %v7042
        %v7045 = vunpack.c.l.s4 1966171168
        %v7046 = vunpack.c.0.s8 %v7045
        %v7047 = vlaneseq
        %v7048 = vshrl.u32 %v7047, 7
        %v7049 = vsub.s32 %v7046, %v7048
        %v7050 = vrot.slane %v7022, %v7049
        %v7051 = vcombine.low %v7029, %v7036
        %v7052 = vcombine.low %v7043, %v7050
        %v7054 = vunpack.c.l.s4 1966171168
        %v7055 = vunpack.c.0.s8 %v7054
        %v7056 = vlaneseq
        %v7057 = vshrl.u32 %v7056, 7
        %v7058 = vsub.s32 %v7055, %v7057
        %v7059 = vrot.slane %v7051, %v7058
        %v7061 = vunpack.c.l.s4 1966171168
        %v7062 = vunpack.c.0.s8 %v7061
        %v7063 = vlaneseq
        %v7064 = vshrl.u32 %v7063, 7
        %v7065 = vsub.s32 %v7062, %v7064
        %v7066 = vrot.slane %v7052, %v7065
        %v7067 = vcombine.low %v7059, %v7066
        %v7068 = vcombine.low %v6013, %v6017
        %v7069 = vcombine.low %v6021, %v6025
        %v7070 = vcombine.low %v6029, %v6033
        %v7071 = vcombine.low %v6037, %v6041
        %v7073 = vunpack.c.l.s4 1966171168
        %v7074 = vunpack.c.0.s8 %v7073
        %v7075 = vlaneseq
        %v7076 = vshrl.u32 %v7075, 7
        %v7077 = vsub.s32 %v7074, %v7076
        %v7078 = vrot.slane %v7068, %v7077
        %v7080 = vunpack.c.l.s4 1966171168
        %v7081 = vunpack.c.0.s8 %v7080
        %v7082 = vlaneseq
        %v7083 = vshrl.u32 %v7082, 7
        %v7084 = vsub.s32 %v7081, %v7083
        %v7085 = vrot.slane %v7069, %v7084
        %v7087 = vunpack.c.l.s4 1966171168
        %v7088 = vunpack.c.0.s8 %v7087
        %v7089 = vlaneseq
        %v7090 = vshrl.u32 %v7089, 7
        %v7091 = vsub.s32 %v7088, %v7090
        %v7092 = vrot.slane %v7070, %v7091
        %v7094 = vunpack.c.l.s4 1966171168
        %v7095 = vunpack.c.0.s8 %v7094
        %v7096 = vlaneseq
        %v7097 = vshrl.u32 %v7096, 7
        %v7098 = vsub.s32 %v7095, %v7097
        %v7099 = vrot.slane %v7071, %v7098
        %v7100 = vcombine.low %v7078, %v7085
        %v7101 = vcombine.low %v7092, %v7099
        %v7103 = vunpack.c.l.s4 1966171168
        %v7104 = vunpack.c.0.s8 %v7103
        %v7105 = vlaneseq
        %v7106 = vshrl.u32 %v7105, 7
        %v7107 = vsub.s32 %v7104, %v7106
        %v7108 = vrot.slane %v7100, %v7107
        %v7110 = vunpack.c.l.s4 1966171168
        %v7111 = vunpack.c.0.s8 %v7110
        %v7112 = vlaneseq
        %v7113 = vshrl.u32 %v7112, 7
        %v7114 = vsub.s32 %v7111, %v7113
        %v7115 = vrot.slane %v7101, %v7114
        %v7116 = vcombine.low %v7108, %v7115
        %v7117 = vcombine.low %v6045, %v6049
        %v7118 = vcombine.low %v6053, %v6057
        %v7119 = vcombine.low %v6061, %v6065
        %v7120 = vcombine.low %v6069, %v6073
        %v7122 = vunpack.c.l.s4 1966171168
        %v7123 = vunpack.c.0.s8 %v7122
        %v7124 = vlaneseq
        %v7125 = vshrl.u32 %v7124, 7
        %v7126 = vsub.s32 %v7123, %v7125
        %v7127 = vrot.slane %v7117, %v7126
        %v7129 = vunpack.c.l.s4 1966171168
        %v7130 = vunpack.c.0.s8 %v7129
        %v7131 = vlaneseq
        %v7132 = vshrl.u32 %v7131, 7
        %v7133 = vsub.s32 %v7130, %v7132
        %v7134 = vrot.slane %v7118, %v7133
        %v7136 = vunpack.c.l.s4 1966171168
        %v7137 = vunpack.c.0.s8 %v7136
        %v7138 = vlaneseq
        %v7139 = vshrl.u32 %v7138, 7
        %v7140 = vsub.s32 %v7137, %v7139
        %v7141 = vrot.slane %v7119, %v7140
        %v7143 = vunpack.c.l.s4 1966171168
        %v7144 = vunpack.c.0.s8 %v7143
        %v7145 = vlaneseq
        %v7146 = vshrl.u32 %v7145, 7
        %v7147 = vsub.s32 %v7144, %v7146
        %v7148 = vrot.slane %v7120, %v7147
        %v7149 = vcombine.low %v7127, %v7134
        %v7150 = vcombine.low %v7141, %v7148
        %v7152 = vunpack.c.l.s4 1966171168
        %v7153 = vunpack.c.0.s8 %v7152
        %v7154 = vlaneseq
        %v7155 = vshrl.u32 %v7154, 7
        %v7156 = vsub.s32 %v7153, %v7155
        %v7157 = vrot.slane %v7149, %v7156
        %v7159 = vunpack.c.l.s4 1966171168
        %v7160 = vunpack.c.0.s8 %v7159
        %v7161 = vlaneseq
        %v7162 = vshrl.u32 %v7161, 7
        %v7163 = vsub.s32 %v7160, %v7162
        %v7164 = vrot.slane %v7150, %v7163
        %v7165 = vcombine.low %v7157, %v7164
        %v7166 = vcombine.low %v6077, %v6081
        %v7167 = vcombine.low %v6085, %v6089
        %v7168 = vcombine.low %v6093, %v6097
        %v7169 = vcombine.low %v6101, %v6105
        %v7171 = vunpack.c.l.s4 1966171168
        %v7172 = vunpack.c.0.s8 %v7171
        %v7173 = vlaneseq
        %v7174 = vshrl.u32 %v7173, 7
        %v7175 = vsub.s32 %v7172, %v7174
        %v7176 = vrot.slane %v7166, %v7175
        %v7178 = vunpack.c.l.s4 1966171168
        %v7179 = vunpack.c.0.s8 %v7178
        %v7180 = vlaneseq
        %v7181 = vshrl.u32 %v7180, 7
        %v7182 = vsub.s32 %v7179, %v7181
        %v7183 = vrot.slane %v7167, %v7182
        %v7185 = vunpack.c.l.s4 1966171168
        %v7186 = vunpack.c.0.s8 %v7185
        %v7187 = vlaneseq
        %v7188 = vshrl.u32 %v7187, 7
        %v7189 = vsub.s32 %v7186, %v7188
        %v7190 = vrot.slane %v7168, %v7189
        %v7192 = vunpack.c.l.s4 1966171168
        %v7193 = vunpack.c.0.s8 %v7192
        %v7194 = vlaneseq
        %v7195 = vshrl.u32 %v7194, 7
        %v7196 = vsub.s32 %v7193, %v7195
        %v7197 = vrot.slane %v7169, %v7196
        %v7198 = vcombine.low %v7176, %v7183
        %v7199 = vcombine.low %v7190, %v7197
        %v7201 = vunpack.c.l.s4 1966171168
        %v7202 = vunpack.c.0.s8 %v7201
        %v7203 = vlaneseq
        %v7204 = vshrl.u32 %v7203, 7
        %v7205 = vsub.s32 %v7202, %v7204
        %v7206 = vrot.slane %v7198, %v7205
        %v7208 = vunpack.c.l.s4 1966171168
        %v7209 = vunpack.c.0.s8 %v7208
        %v7210 = vlaneseq
        %v7211 = vshrl.u32 %v7210, 7
        %v7212 = vsub.s32 %v7209, %v7211
        %v7213 = vrot.slane %v7199, %v7212
        %v7214 = vcombine.low %v7206, %v7213
        %v7215 = vcombine.low %v6109, %v6113
        %v7216 = vcombine.low %v6117, %v6121
        %v7217 = vcombine.low %v6125, %v6129
        %v7218 = vcombine.low %v6133, %v6137
        %v7220 = vunpack.c.l.s4 1966171168
        %v7221 = vunpack.c.0.s8 %v7220
        %v7222 = vlaneseq
        %v7223 = vshrl.u32 %v7222, 7
        %v7224 = vsub.s32 %v7221, %v7223
        %v7225 = vrot.slane %v7215, %v7224
        %v7227 = vunpack.c.l.s4 1966171168
        %v7228 = vunpack.c.0.s8 %v7227
        %v7229 = vlaneseq
        %v7230 = vshrl.u32 %v7229, 7
        %v7231 = vsub.s32 %v7228, %v7230
        %v7232 = vrot.slane %v7216, %v7231
        %v7234 = vunpack.c.l.s4 1966171168
        %v7235 = vunpack.c.0.s8 %v7234
        %v7236 = vlaneseq
        %v7237 = vshrl.u32 %v7236, 7
        %v7238 = vsub.s32 %v7235, %v7237
        %v7239 = vrot.slane %v7217, %v7238
        %v7241 = vunpack.c.l.s4 1966171168
        %v7242 = vunpack.c.0.s8 %v7241
        %v7243 = vlaneseq
        %v7244 = vshrl.u32 %v7243, 7
        %v7245 = vsub.s32 %v7242, %v7244
        %v7246 = vrot.slane %v7218, %v7245
        %v7247 = vcombine.low %v7225, %v7232
        %v7248 = vcombine.low %v7239, %v7246
        %v7250 = vunpack.c.l.s4 1966171168
        %v7251 = vunpack.c.0.s8 %v7250
        %v7252 = vlaneseq
        %v7253 = vshrl.u32 %v7252, 7
        %v7254 = vsub.s32 %v7251, %v7253
        %v7255 = vrot.slane %v7247, %v7254
        %v7257 = vunpack.c.l.s4 1966171168
        %v7258 = vunpack.c.0.s8 %v7257
        %v7259 = vlaneseq
        %v7260 = vshrl.u32 %v7259, 7
        %v7261 = vsub.s32 %v7258, %v7260
        %v7262 = vrot.slane %v7248, %v7261
        %v7263 = vcombine.low %v7255, %v7262
        %v7264 = vcombine.low %v6141, %v6145
        %v7265 = vcombine.low %v6149, %v6153
        %v7266 = vcombine.low %v6157, %v6161
        %v7267 = vcombine.low %v6165, %v6169
        %v7269 = vunpack.c.l.s4 1966171168
        %v7270 = vunpack.c.0.s8 %v7269
        %v7271 = vlaneseq
        %v7272 = vshrl.u32 %v7271, 7
        %v7273 = vsub.s32 %v7270, %v7272
        %v7274 = vrot.slane %v7264, %v7273
        %v7276 = vunpack.c.l.s4 1966171168
        %v7277 = vunpack.c.0.s8 %v7276
        %v7278 = vlaneseq
        %v7279 = vshrl.u32 %v7278, 7
        %v7280 = vsub.s32 %v7277, %v7279
        %v7281 = vrot.slane %v7265, %v7280
        %v7283 = vunpack.c.l.s4 1966171168
        %v7284 = vunpack.c.0.s8 %v7283
        %v7285 = vlaneseq
        %v7286 = vshrl.u32 %v7285, 7
        %v7287 = vsub.s32 %v7284, %v7286
        %v7288 = vrot.slane %v7266, %v7287
        %v7290 = vunpack.c.l.s4 1966171168
        %v7291 = vunpack.c.0.s8 %v7290
        %v7292 = vlaneseq
        %v7293 = vshrl.u32 %v7292, 7
        %v7294 = vsub.s32 %v7291, %v7293
        %v7295 = vrot.slane %v7267, %v7294
        %v7296 = vcombine.low %v7274, %v7281
        %v7297 = vcombine.low %v7288, %v7295
        %v7299 = vunpack.c.l.s4 1966171168
        %v7300 = vunpack.c.0.s8 %v7299
        %v7301 = vlaneseq
        %v7302 = vshrl.u32 %v7301, 7
        %v7303 = vsub.s32 %v7300, %v7302
        %v7304 = vrot.slane %v7296, %v7303
        %v7306 = vunpack.c.l.s4 1966171168
        %v7307 = vunpack.c.0.s8 %v7306
        %v7308 = vlaneseq
        %v7309 = vshrl.u32 %v7308, 7
        %v7310 = vsub.s32 %v7307, %v7309
        %v7311 = vrot.slane %v7297, %v7310
        %v7312 = vcombine.low %v7304, %v7311
        %v7313 = vcombine.low %v6173, %v6177
        %v7314 = vcombine.low %v6181, %v6185
        %v7315 = vcombine.low %v6189, %v6193
        %v7316 = vcombine.low %v6197, %v6201
        %v7318 = vunpack.c.l.s4 1966171168
        %v7319 = vunpack.c.0.s8 %v7318
        %v7320 = vlaneseq
        %v7321 = vshrl.u32 %v7320, 7
        %v7322 = vsub.s32 %v7319, %v7321
        %v7323 = vrot.slane %v7313, %v7322
        %v7325 = vunpack.c.l.s4 1966171168
        %v7326 = vunpack.c.0.s8 %v7325
        %v7327 = vlaneseq
        %v7328 = vshrl.u32 %v7327, 7
        %v7329 = vsub.s32 %v7326, %v7328
        %v7330 = vrot.slane %v7314, %v7329
        %v7332 = vunpack.c.l.s4 1966171168
        %v7333 = vunpack.c.0.s8 %v7332
        %v7334 = vlaneseq
        %v7335 = vshrl.u32 %v7334, 7
        %v7336 = vsub.s32 %v7333, %v7335
        %v7337 = vrot.slane %v7315, %v7336
        %v7339 = vunpack.c.l.s4 1966171168
        %v7340 = vunpack.c.0.s8 %v7339
        %v7341 = vlaneseq
        %v7342 = vshrl.u32 %v7341, 7
        %v7343 = vsub.s32 %v7340, %v7342
        %v7344 = vrot.slane %v7316, %v7343
        %v7345 = vcombine.low %v7323, %v7330
        %v7346 = vcombine.low %v7337, %v7344
        %v7348 = vunpack.c.l.s4 1966171168
        %v7349 = vunpack.c.0.s8 %v7348
        %v7350 = vlaneseq
        %v7351 = vshrl.u32 %v7350, 7
        %v7352 = vsub.s32 %v7349, %v7351
        %v7353 = vrot.slane %v7345, %v7352
        %v7355 = vunpack.c.l.s4 1966171168
        %v7356 = vunpack.c.0.s8 %v7355
        %v7357 = vlaneseq
        %v7358 = vshrl.u32 %v7357, 7
        %v7359 = vsub.s32 %v7356, %v7358
        %v7360 = vrot.slane %v7346, %v7359
        %v7361 = vcombine.low %v7353, %v7360
        %v7362 = vcombine.low %v6205, %v6209
        %v7363 = vcombine.low %v6213, %v6217
        %v7364 = vcombine.low %v6221, %v6225
        %v7365 = vcombine.low %v6229, %v6233
        %v7367 = vunpack.c.l.s4 1966171168
        %v7368 = vunpack.c.0.s8 %v7367
        %v7369 = vlaneseq
        %v7370 = vshrl.u32 %v7369, 7
        %v7371 = vsub.s32 %v7368, %v7370
        %v7372 = vrot.slane %v7362, %v7371
        %v7374 = vunpack.c.l.s4 1966171168
        %v7375 = vunpack.c.0.s8 %v7374
        %v7376 = vlaneseq
        %v7377 = vshrl.u32 %v7376, 7
        %v7378 = vsub.s32 %v7375, %v7377
        %v7379 = vrot.slane %v7363, %v7378
        %v7381 = vunpack.c.l.s4 1966171168
        %v7382 = vunpack.c.0.s8 %v7381
        %v7383 = vlaneseq
        %v7384 = vshrl.u32 %v7383, 7
        %v7385 = vsub.s32 %v7382, %v7384
        %v7386 = vrot.slane %v7364, %v7385
        %v7388 = vunpack.c.l.s4 1966171168
        %v7389 = vunpack.c.0.s8 %v7388
        %v7390 = vlaneseq
        %v7391 = vshrl.u32 %v7390, 7
        %v7392 = vsub.s32 %v7389, %v7391
        %v7393 = vrot.slane %v7365, %v7392
        %v7394 = vcombine.low %v7372, %v7379
        %v7395 = vcombine.low %v7386, %v7393
        %v7397 = vunpack.c.l.s4 1966171168
        %v7398 = vunpack.c.0.s8 %v7397
        %v7399 = vlaneseq
        %v7400 = vshrl.u32 %v7399, 7
        %v7401 = vsub.s32 %v7398, %v7400
        %v7402 = vrot.slane %v7394, %v7401
        %v7404 = vunpack.c.l.s4 1966171168
        %v7405 = vunpack.c.0.s8 %v7404
        %v7406 = vlaneseq
        %v7407 = vshrl.u32 %v7406, 7
        %v7408 = vsub.s32 %v7405, %v7407
        %v7409 = vrot.slane %v7395, %v7408
        %v7410 = vcombine.low %v7402, %v7409
        %v7411 = vcombine.low %v6237, %v6241
        %v7412 = vcombine.low %v6245, %v6249
        %v7413 = vcombine.low %v6253, %v6257
        %v7414 = vcombine.low %v6261, %v6265
        %v7416 = vunpack.c.l.s4 1966171168
        %v7417 = vunpack.c.0.s8 %v7416
        %v7418 = vlaneseq
        %v7419 = vshrl.u32 %v7418, 7
        %v7420 = vsub.s32 %v7417, %v7419
        %v7421 = vrot.slane %v7411, %v7420
        %v7423 = vunpack.c.l.s4 1966171168
        %v7424 = vunpack.c.0.s8 %v7423
        %v7425 = vlaneseq
        %v7426 = vshrl.u32 %v7425, 7
        %v7427 = vsub.s32 %v7424, %v7426
        %v7428 = vrot.slane %v7412, %v7427
        %v7430 = vunpack.c.l.s4 1966171168
        %v7431 = vunpack.c.0.s8 %v7430
        %v7432 = vlaneseq
        %v7433 = vshrl.u32 %v7432, 7
        %v7434 = vsub.s32 %v7431, %v7433
        %v7435 = vrot.slane %v7413, %v7434
        %v7437 = vunpack.c.l.s4 1966171168
        %v7438 = vunpack.c.0.s8 %v7437
        %v7439 = vlaneseq
        %v7440 = vshrl.u32 %v7439, 7
        %v7441 = vsub.s32 %v7438, %v7440
        %v7442 = vrot.slane %v7414, %v7441
        %v7443 = vcombine.low %v7421, %v7428
        %v7444 = vcombine.low %v7435, %v7442
        %v7446 = vunpack.c.l.s4 1966171168
        %v7447 = vunpack.c.0.s8 %v7446
        %v7448 = vlaneseq
        %v7449 = vshrl.u32 %v7448, 7
        %v7450 = vsub.s32 %v7447, %v7449
        %v7451 = vrot.slane %v7443, %v7450
        %v7453 = vunpack.c.l.s4 1966171168
        %v7454 = vunpack.c.0.s8 %v7453
        %v7455 = vlaneseq
        %v7456 = vshrl.u32 %v7455, 7
        %v7457 = vsub.s32 %v7454, %v7456
        %v7458 = vrot.slane %v7444, %v7457
        %v7459 = vcombine.low %v7451, %v7458
        %v7460 = vcombine.low %v6269, %v6273
        %v7461 = vcombine.low %v6277, %v6281
        %v7462 = vcombine.low %v6285, %v6289
        %v7463 = vcombine.low %v6293, %v6297
        %v7465 = vunpack.c.l.s4 1966171168
        %v7466 = vunpack.c.0.s8 %v7465
        %v7467 = vlaneseq
        %v7468 = vshrl.u32 %v7467, 7
        %v7469 = vsub.s32 %v7466, %v7468
        %v7470 = vrot.slane %v7460, %v7469
        %v7472 = vunpack.c.l.s4 1966171168
        %v7473 = vunpack.c.0.s8 %v7472
        %v7474 = vlaneseq
        %v7475 = vshrl.u32 %v7474, 7
        %v7476 = vsub.s32 %v7473, %v7475
        %v7477 = vrot.slane %v7461, %v7476
        %v7479 = vunpack.c.l.s4 1966171168
        %v7480 = vunpack.c.0.s8 %v7479
        %v7481 = vlaneseq
        %v7482 = vshrl.u32 %v7481, 7
        %v7483 = vsub.s32 %v7480, %v7482
        %v7484 = vrot.slane %v7462, %v7483
        %v7486 = vunpack.c.l.s4 1966171168
        %v7487 = vunpack.c.0.s8 %v7486
        %v7488 = vlaneseq
        %v7489 = vshrl.u32 %v7488, 7
        %v7490 = vsub.s32 %v7487, %v7489
        %v7491 = vrot.slane %v7463, %v7490
        %v7492 = vcombine.low %v7470, %v7477
        %v7493 = vcombine.low %v7484, %v7491
        %v7495 = vunpack.c.l.s4 1966171168
        %v7496 = vunpack.c.0.s8 %v7495
        %v7497 = vlaneseq
        %v7498 = vshrl.u32 %v7497, 7
        %v7499 = vsub.s32 %v7496, %v7498
        %v7500 = vrot.slane %v7492, %v7499
        %v7502 = vunpack.c.l.s4 1966171168
        %v7503 = vunpack.c.0.s8 %v7502
        %v7504 = vlaneseq
        %v7505 = vshrl.u32 %v7504, 7
        %v7506 = vsub.s32 %v7503, %v7505
        %v7507 = vrot.slane %v7493, %v7506
        %v7508 = vcombine.low %v7500, %v7507
        %v7509 = vcombine.low %v6301, %v6305
        %v7510 = vcombine.low %v6309, %v6313
        %v7511 = vcombine.low %v6317, %v6321
        %v7512 = vcombine.low %v6325, %v6329
        %v7514 = vunpack.c.l.s4 1966171168
        %v7515 = vunpack.c.0.s8 %v7514
        %v7516 = vlaneseq
        %v7517 = vshrl.u32 %v7516, 7
        %v7518 = vsub.s32 %v7515, %v7517
        %v7519 = vrot.slane %v7509, %v7518
        %v7521 = vunpack.c.l.s4 1966171168
        %v7522 = vunpack.c.0.s8 %v7521
        %v7523 = vlaneseq
        %v7524 = vshrl.u32 %v7523, 7
        %v7525 = vsub.s32 %v7522, %v7524
        %v7526 = vrot.slane %v7510, %v7525
        %v7528 = vunpack.c.l.s4 1966171168
        %v7529 = vunpack.c.0.s8 %v7528
        %v7530 = vlaneseq
        %v7531 = vshrl.u32 %v7530, 7
        %v7532 = vsub.s32 %v7529, %v7531
        %v7533 = vrot.slane %v7511, %v7532
        %v7535 = vunpack.c.l.s4 1966171168
        %v7536 = vunpack.c.0.s8 %v7535
        %v7537 = vlaneseq
        %v7538 = vshrl.u32 %v7537, 7
        %v7539 = vsub.s32 %v7536, %v7538
        %v7540 = vrot.slane %v7512, %v7539
        %v7541 = vcombine.low %v7519, %v7526
        %v7542 = vcombine.low %v7533, %v7540
        %v7544 = vunpack.c.l.s4 1966171168
        %v7545 = vunpack.c.0.s8 %v7544
        %v7546 = vlaneseq
        %v7547 = vshrl.u32 %v7546, 7
        %v7548 = vsub.s32 %v7545, %v7547
        %v7549 = vrot.slane %v7541, %v7548
        %v7551 = vunpack.c.l.s4 1966171168
        %v7552 = vunpack.c.0.s8 %v7551
        %v7553 = vlaneseq
        %v7554 = vshrl.u32 %v7553, 7
        %v7555 = vsub.s32 %v7552, %v7554
        %v7556 = vrot.slane %v7542, %v7555
        %v7557 = vcombine.low %v7549, %v7556
        %v7558 = vcombine.low %v6333, %v6337
        %v7559 = vcombine.low %v6341, %v6345
        %v7560 = vcombine.low %v6349, %v6353
        %v7561 = vcombine.low %v6357, %v6361
        %v7563 = vunpack.c.l.s4 1966171168
        %v7564 = vunpack.c.0.s8 %v7563
        %v7565 = vlaneseq
        %v7566 = vshrl.u32 %v7565, 7
        %v7567 = vsub.s32 %v7564, %v7566
        %v7568 = vrot.slane %v7558, %v7567
        %v7570 = vunpack.c.l.s4 1966171168
        %v7571 = vunpack.c.0.s8 %v7570
        %v7572 = vlaneseq
        %v7573 = vshrl.u32 %v7572, 7
        %v7574 = vsub.s32 %v7571, %v7573
        %v7575 = vrot.slane %v7559, %v7574
        %v7577 = vunpack.c.l.s4 1966171168
        %v7578 = vunpack.c.0.s8 %v7577
        %v7579 = vlaneseq
        %v7580 = vshrl.u32 %v7579, 7
        %v7581 = vsub.s32 %v7578, %v7580
        %v7582 = vrot.slane %v7560, %v7581
        %v7584 = vunpack.c.l.s4 1966171168
        %v7585 = vunpack.c.0.s8 %v7584
        %v7586 = vlaneseq
        %v7587 = vshrl.u32 %v7586, 7
        %v7588 = vsub.s32 %v7585, %v7587
        %v7589 = vrot.slane %v7561, %v7588
        %v7590 = vcombine.low %v7568, %v7575
        %v7591 = vcombine.low %v7582, %v7589
        %v7593 = vunpack.c.l.s4 1966171168
        %v7594 = vunpack.c.0.s8 %v7593
        %v7595 = vlaneseq
        %v7596 = vshrl.u32 %v7595, 7
        %v7597 = vsub.s32 %v7594, %v7596
        %v7598 = vrot.slane %v7590, %v7597
        %v7600 = vunpack.c.l.s4 1966171168
        %v7601 = vunpack.c.0.s8 %v7600
        %v7602 = vlaneseq
        %v7603 = vshrl.u32 %v7602, 7
        %v7604 = vsub.s32 %v7601, %v7603
        %v7605 = vrot.slane %v7591, %v7604
        %v7606 = vcombine.low %v7598, %v7605
        %v7607 = vcombine.low %v6365, %v6369
        %v7608 = vcombine.low %v6373, %v6377
        %v7609 = vcombine.low %v6381, %v6385
        %v7610 = vcombine.low %v6389, %v6393
        %v7612 = vunpack.c.l.s4 1966171168
        %v7613 = vunpack.c.0.s8 %v7612
        %v7614 = vlaneseq
        %v7615 = vshrl.u32 %v7614, 7
        %v7616 = vsub.s32 %v7613, %v7615
        %v7617 = vrot.slane %v7607, %v7616
        %v7619 = vunpack.c.l.s4 1966171168
        %v7620 = vunpack.c.0.s8 %v7619
        %v7621 = vlaneseq
        %v7622 = vshrl.u32 %v7621, 7
        %v7623 = vsub.s32 %v7620, %v7622
        %v7624 = vrot.slane %v7608, %v7623
        %v7626 = vunpack.c.l.s4 1966171168
        %v7627 = vunpack.c.0.s8 %v7626
        %v7628 = vlaneseq
        %v7629 = vshrl.u32 %v7628, 7
        %v7630 = vsub.s32 %v7627, %v7629
        %v7631 = vrot.slane %v7609, %v7630
        %v7633 = vunpack.c.l.s4 1966171168
        %v7634 = vunpack.c.0.s8 %v7633
        %v7635 = vlaneseq
        %v7636 = vshrl.u32 %v7635, 7
        %v7637 = vsub.s32 %v7634, %v7636
        %v7638 = vrot.slane %v7610, %v7637
        %v7639 = vcombine.low %v7617, %v7624
        %v7640 = vcombine.low %v7631, %v7638
        %v7642 = vunpack.c.l.s4 1966171168
        %v7643 = vunpack.c.0.s8 %v7642
        %v7644 = vlaneseq
        %v7645 = vshrl.u32 %v7644, 7
        %v7646 = vsub.s32 %v7643, %v7645
        %v7647 = vrot.slane %v7639, %v7646
        %v7649 = vunpack.c.l.s4 1966171168
        %v7650 = vunpack.c.0.s8 %v7649
        %v7651 = vlaneseq
        %v7652 = vshrl.u32 %v7651, 7
        %v7653 = vsub.s32 %v7650, %v7652
        %v7654 = vrot.slane %v7640, %v7653
        %v7655 = vcombine.low %v7647, %v7654
        %v7656 = vcombine.low %v6397, %v6401
        %v7657 = vcombine.low %v6405, %v6409
        %v7658 = vcombine.low %v6413, %v6417
        %v7659 = vcombine.low %v6421, %v6425
        %v7661 = vunpack.c.l.s4 1966171168
        %v7662 = vunpack.c.0.s8 %v7661
        %v7663 = vlaneseq
        %v7664 = vshrl.u32 %v7663, 7
        %v7665 = vsub.s32 %v7662, %v7664
        %v7666 = vrot.slane %v7656, %v7665
        %v7668 = vunpack.c.l.s4 1966171168
        %v7669 = vunpack.c.0.s8 %v7668
        %v7670 = vlaneseq
        %v7671 = vshrl.u32 %v7670, 7
        %v7672 = vsub.s32 %v7669, %v7671
        %v7673 = vrot.slane %v7657, %v7672
        %v7675 = vunpack.c.l.s4 1966171168
        %v7676 = vunpack.c.0.s8 %v7675
        %v7677 = vlaneseq
        %v7678 = vshrl.u32 %v7677, 7
        %v7679 = vsub.s32 %v7676, %v7678
        %v7680 = vrot.slane %v7658, %v7679
        %v7682 = vunpack.c.l.s4 1966171168
        %v7683 = vunpack.c.0.s8 %v7682
        %v7684 = vlaneseq
        %v7685 = vshrl.u32 %v7684, 7
        %v7686 = vsub.s32 %v7683, %v7685
        %v7687 = vrot.slane %v7659, %v7686
        %v7688 = vcombine.low %v7666, %v7673
        %v7689 = vcombine.low %v7680, %v7687
        %v7691 = vunpack.c.l.s4 1966171168
        %v7692 = vunpack.c.0.s8 %v7691
        %v7693 = vlaneseq
        %v7694 = vshrl.u32 %v7693, 7
        %v7695 = vsub.s32 %v7692, %v7694
        %v7696 = vrot.slane %v7688, %v7695
        %v7698 = vunpack.c.l.s4 1966171168
        %v7699 = vunpack.c.0.s8 %v7698
        %v7700 = vlaneseq
        %v7701 = vshrl.u32 %v7700, 7
        %v7702 = vsub.s32 %v7699, %v7701
        %v7703 = vrot.slane %v7689, %v7702
        %v7704 = vcombine.low %v7696, %v7703
        %v7705 = vcombine.low %v6429, %v6433
        %v7706 = vcombine.low %v6437, %v6441
        %v7707 = vcombine.low %v6445, %v6449
        %v7708 = vcombine.low %v6453, %v6457
        %v7710 = vunpack.c.l.s4 1966171168
        %v7711 = vunpack.c.0.s8 %v7710
        %v7712 = vlaneseq
        %v7713 = vshrl.u32 %v7712, 7
        %v7714 = vsub.s32 %v7711, %v7713
        %v7715 = vrot.slane %v7705, %v7714
        %v7717 = vunpack.c.l.s4 1966171168
        %v7718 = vunpack.c.0.s8 %v7717
        %v7719 = vlaneseq
        %v7720 = vshrl.u32 %v7719, 7
        %v7721 = vsub.s32 %v7718, %v7720
        %v7722 = vrot.slane %v7706, %v7721
        %v7724 = vunpack.c.l.s4 1966171168
        %v7725 = vunpack.c.0.s8 %v7724
        %v7726 = vlaneseq
        %v7727 = vshrl.u32 %v7726, 7
        %v7728 = vsub.s32 %v7725, %v7727
        %v7729 = vrot.slane %v7707, %v7728
        %v7731 = vunpack.c.l.s4 1966171168
        %v7732 = vunpack.c.0.s8 %v7731
        %v7733 = vlaneseq
        %v7734 = vshrl.u32 %v7733, 7
        %v7735 = vsub.s32 %v7732, %v7734
        %v7736 = vrot.slane %v7708, %v7735
        %v7737 = vcombine.low %v7715, %v7722
        %v7738 = vcombine.low %v7729, %v7736
        %v7740 = vunpack.c.l.s4 1966171168
        %v7741 = vunpack.c.0.s8 %v7740
        %v7742 = vlaneseq
        %v7743 = vshrl.u32 %v7742, 7
        %v7744 = vsub.s32 %v7741, %v7743
        %v7745 = vrot.slane %v7737, %v7744
        %v7747 = vunpack.c.l.s4 1966171168
        %v7748 = vunpack.c.0.s8 %v7747
        %v7749 = vlaneseq
        %v7750 = vshrl.u32 %v7749, 7
        %v7751 = vsub.s32 %v7748, %v7750
        %v7752 = vrot.slane %v7738, %v7751
        %v7753 = vcombine.low %v7745, %v7752
        %v7754 = vcombine.low %v6461, %v6465
        %v7755 = vcombine.low %v6469, %v6473
        %v7756 = vcombine.low %v6477, %v6481
        %v7757 = vcombine.low %v6485, %v6489
        %v7759 = vunpack.c.l.s4 1966171168
        %v7760 = vunpack.c.0.s8 %v7759
        %v7761 = vlaneseq
        %v7762 = vshrl.u32 %v7761, 7
        %v7763 = vsub.s32 %v7760, %v7762
        %v7764 = vrot.slane %v7754, %v7763
        %v7766 = vunpack.c.l.s4 1966171168
        %v7767 = vunpack.c.0.s8 %v7766
        %v7768 = vlaneseq
        %v7769 = vshrl.u32 %v7768, 7
        %v7770 = vsub.s32 %v7767, %v7769
        %v7771 = vrot.slane %v7755, %v7770
        %v7773 = vunpack.c.l.s4 1966171168
        %v7774 = vunpack.c.0.s8 %v7773
        %v7775 = vlaneseq
        %v7776 = vshrl.u32 %v7775, 7
        %v7777 = vsub.s32 %v7774, %v7776
        %v7778 = vrot.slane %v7756, %v7777
        %v7780 = vunpack.c.l.s4 1966171168
        %v7781 = vunpack.c.0.s8 %v7780
        %v7782 = vlaneseq
        %v7783 = vshrl.u32 %v7782, 7
        %v7784 = vsub.s32 %v7781, %v7783
        %v7785 = vrot.slane %v7757, %v7784
        %v7786 = vcombine.low %v7764, %v7771
        %v7787 = vcombine.low %v7778, %v7785
        %v7789 = vunpack.c.l.s4 1966171168
        %v7790 = vunpack.c.0.s8 %v7789
        %v7791 = vlaneseq
        %v7792 = vshrl.u32 %v7791, 7
        %v7793 = vsub.s32 %v7790, %v7792
        %v7794 = vrot.slane %v7786, %v7793
        %v7796 = vunpack.c.l.s4 1966171168
        %v7797 = vunpack.c.0.s8 %v7796
        %v7798 = vlaneseq
        %v7799 = vshrl.u32 %v7798, 7
        %v7800 = vsub.s32 %v7797, %v7799
        %v7801 = vrot.slane %v7787, %v7800
        %v7802 = vcombine.low %v7794, %v7801
        %v7803 = vcombine.low %v6493, %v6497
        %v7804 = vcombine.low %v6501, %v6505
        %v7805 = vcombine.low %v6509, %v6513
        %v7806 = vcombine.low %v6517, %v6521
        %v7808 = vunpack.c.l.s4 1966171168
        %v7809 = vunpack.c.0.s8 %v7808
        %v7810 = vlaneseq
        %v7811 = vshrl.u32 %v7810, 7
        %v7812 = vsub.s32 %v7809, %v7811
        %v7813 = vrot.slane %v7803, %v7812
        %v7815 = vunpack.c.l.s4 1966171168
        %v7816 = vunpack.c.0.s8 %v7815
        %v7817 = vlaneseq
        %v7818 = vshrl.u32 %v7817, 7
        %v7819 = vsub.s32 %v7816, %v7818
        %v7820 = vrot.slane %v7804, %v7819
        %v7822 = vunpack.c.l.s4 1966171168
        %v7823 = vunpack.c.0.s8 %v7822
        %v7824 = vlaneseq
        %v7825 = vshrl.u32 %v7824, 7
        %v7826 = vsub.s32 %v7823, %v7825
        %v7827 = vrot.slane %v7805, %v7826
        %v7829 = vunpack.c.l.s4 1966171168
        %v7830 = vunpack.c.0.s8 %v7829
        %v7831 = vlaneseq
        %v7832 = vshrl.u32 %v7831, 7
        %v7833 = vsub.s32 %v7830, %v7832
        %v7834 = vrot.slane %v7806, %v7833
        %v7835 = vcombine.low %v7813, %v7820
        %v7836 = vcombine.low %v7827, %v7834
        %v7838 = vunpack.c.l.s4 1966171168
        %v7839 = vunpack.c.0.s8 %v7838
        %v7840 = vlaneseq
        %v7841 = vshrl.u32 %v7840, 7
        %v7842 = vsub.s32 %v7839, %v7841
        %v7843 = vrot.slane %v7835, %v7842
        %v7845 = vunpack.c.l.s4 1966171168
        %v7846 = vunpack.c.0.s8 %v7845
        %v7847 = vlaneseq
        %v7848 = vshrl.u32 %v7847, 7
        %v7849 = vsub.s32 %v7846, %v7848
        %v7850 = vrot.slane %v7836, %v7849
        %v7851 = vcombine.low %v7843, %v7850
        %v7852 = vcombine.low %v6525, %v6529
        %v7853 = vcombine.low %v6533, %v6537
        %v7854 = vcombine.low %v6541, %v6545
        %v7855 = vcombine.low %v6549, %v6553
        %v7857 = vunpack.c.l.s4 1966171168
        %v7858 = vunpack.c.0.s8 %v7857
        %v7859 = vlaneseq
        %v7860 = vshrl.u32 %v7859, 7
        %v7861 = vsub.s32 %v7858, %v7860
        %v7862 = vrot.slane %v7852, %v7861
        %v7864 = vunpack.c.l.s4 1966171168
        %v7865 = vunpack.c.0.s8 %v7864
        %v7866 = vlaneseq
        %v7867 = vshrl.u32 %v7866, 7
        %v7868 = vsub.s32 %v7865, %v7867
        %v7869 = vrot.slane %v7853, %v7868
        %v7871 = vunpack.c.l.s4 1966171168
        %v7872 = vunpack.c.0.s8 %v7871
        %v7873 = vlaneseq
        %v7874 = vshrl.u32 %v7873, 7
        %v7875 = vsub.s32 %v7872, %v7874
        %v7876 = vrot.slane %v7854, %v7875
        %v7878 = vunpack.c.l.s4 1966171168
        %v7879 = vunpack.c.0.s8 %v7878
        %v7880 = vlaneseq
        %v7881 = vshrl.u32 %v7880, 7
        %v7882 = vsub.s32 %v7879, %v7881
        %v7883 = vrot.slane %v7855, %v7882
        %v7884 = vcombine.low %v7862, %v7869
        %v7885 = vcombine.low %v7876, %v7883
        %v7887 = vunpack.c.l.s4 1966171168
        %v7888 = vunpack.c.0.s8 %v7887
        %v7889 = vlaneseq
        %v7890 = vshrl.u32 %v7889, 7
        %v7891 = vsub.s32 %v7888, %v7890
        %v7892 = vrot.slane %v7884, %v7891
        %v7894 = vunpack.c.l.s4 1966171168
        %v7895 = vunpack.c.0.s8 %v7894
        %v7896 = vlaneseq
        %v7897 = vshrl.u32 %v7896, 7
        %v7898 = vsub.s32 %v7895, %v7897
        %v7899 = vrot.slane %v7885, %v7898
        %v7900 = vcombine.low %v7892, %v7899
        %v7901 = vcombine.low %v6557, %v6561
        %v7902 = vcombine.low %v6565, %v6569
        %v7903 = vcombine.low %v6573, %v6577
        %v7904 = vcombine.low %v6581, %v6585
        %v7906 = vunpack.c.l.s4 1966171168
        %v7907 = vunpack.c.0.s8 %v7906
        %v7908 = vlaneseq
        %v7909 = vshrl.u32 %v7908, 7
        %v7910 = vsub.s32 %v7907, %v7909
        %v7911 = vrot.slane %v7901, %v7910
        %v7913 = vunpack.c.l.s4 1966171168
        %v7914 = vunpack.c.0.s8 %v7913
        %v7915 = vlaneseq
        %v7916 = vshrl.u32 %v7915, 7
        %v7917 = vsub.s32 %v7914, %v7916
        %v7918 = vrot.slane %v7902, %v7917
        %v7920 = vunpack.c.l.s4 1966171168
        %v7921 = vunpack.c.0.s8 %v7920
        %v7922 = vlaneseq
        %v7923 = vshrl.u32 %v7922, 7
        %v7924 = vsub.s32 %v7921, %v7923
        %v7925 = vrot.slane %v7903, %v7924
        %v7927 = vunpack.c.l.s4 1966171168
        %v7928 = vunpack.c.0.s8 %v7927
        %v7929 = vlaneseq
        %v7930 = vshrl.u32 %v7929, 7
        %v7931 = vsub.s32 %v7928, %v7930
        %v7932 = vrot.slane %v7904, %v7931
        %v7933 = vcombine.low %v7911, %v7918
        %v7934 = vcombine.low %v7925, %v7932
        %v7936 = vunpack.c.l.s4 1966171168
        %v7937 = vunpack.c.0.s8 %v7936
        %v7938 = vlaneseq
        %v7939 = vshrl.u32 %v7938, 7
        %v7940 = vsub.s32 %v7937, %v7939
        %v7941 = vrot.slane %v7933, %v7940
        %v7943 = vunpack.c.l.s4 1966171168
        %v7944 = vunpack.c.0.s8 %v7943
        %v7945 = vlaneseq
        %v7946 = vshrl.u32 %v7945, 7
        %v7947 = vsub.s32 %v7944, %v7946
        %v7948 = vrot.slane %v7934, %v7947
        %v7949 = vcombine.low %v7941, %v7948
        %v7950 = vcombine.low %v6589, %v6593
        %v7951 = vcombine.low %v6597, %v6601
        %v7952 = vcombine.low %v6605, %v6609
        %v7953 = vcombine.low %v6613, %v6617
        %v7955 = vunpack.c.l.s4 1966171168
        %v7956 = vunpack.c.0.s8 %v7955
        %v7957 = vlaneseq
        %v7958 = vshrl.u32 %v7957, 7
        %v7959 = vsub.s32 %v7956, %v7958
        %v7960 = vrot.slane %v7950, %v7959
        %v7962 = vunpack.c.l.s4 1966171168
        %v7963 = vunpack.c.0.s8 %v7962
        %v7964 = vlaneseq
        %v7965 = vshrl.u32 %v7964, 7
        %v7966 = vsub.s32 %v7963, %v7965
        %v7967 = vrot.slane %v7951, %v7966
        %v7969 = vunpack.c.l.s4 1966171168
        %v7970 = vunpack.c.0.s8 %v7969
        %v7971 = vlaneseq
        %v7972 = vshrl.u32 %v7971, 7
        %v7973 = vsub.s32 %v7970, %v7972
        %v7974 = vrot.slane %v7952, %v7973
        %v7976 = vunpack.c.l.s4 1966171168
        %v7977 = vunpack.c.0.s8 %v7976
        %v7978 = vlaneseq
        %v7979 = vshrl.u32 %v7978, 7
        %v7980 = vsub.s32 %v7977, %v7979
        %v7981 = vrot.slane %v7953, %v7980
        %v7982 = vcombine.low %v7960, %v7967
        %v7983 = vcombine.low %v7974, %v7981
        %v7985 = vunpack.c.l.s4 1966171168
        %v7986 = vunpack.c.0.s8 %v7985
        %v7987 = vlaneseq
        %v7988 = vshrl.u32 %v7987, 7
        %v7989 = vsub.s32 %v7986, %v7988
        %v7990 = vrot.slane %v7982, %v7989
        %v7992 = vunpack.c.l.s4 1966171168
        %v7993 = vunpack.c.0.s8 %v7992
        %v7994 = vlaneseq
        %v7995 = vshrl.u32 %v7994, 7
        %v7996 = vsub.s32 %v7993, %v7995
        %v7997 = vrot.slane %v7983, %v7996
        %v7998 = vcombine.low %v7990, %v7997
        %v7999 = vcombine.low %v6621, %v6625
        %v8000 = vcombine.low %v6629, %v6633
        %v8001 = vcombine.low %v6637, %v6641
        %v8002 = vcombine.low %v6645, %v6649
        %v8004 = vunpack.c.l.s4 1966171168
        %v8005 = vunpack.c.0.s8 %v8004
        %v8006 = vlaneseq
        %v8007 = vshrl.u32 %v8006, 7
        %v8008 = vsub.s32 %v8005, %v8007
        %v8009 = vrot.slane %v7999, %v8008
        %v8011 = vunpack.c.l.s4 1966171168
        %v8012 = vunpack.c.0.s8 %v8011
        %v8013 = vlaneseq
        %v8014 = vshrl.u32 %v8013, 7
        %v8015 = vsub.s32 %v8012, %v8014
        %v8016 = vrot.slane %v8000, %v8015
        %v8018 = vunpack.c.l.s4 1966171168
        %v8019 = vunpack.c.0.s8 %v8018
        %v8020 = vlaneseq
        %v8021 = vshrl.u32 %v8020, 7
        %v8022 = vsub.s32 %v8019, %v8021
        %v8023 = vrot.slane %v8001, %v8022
        %v8025 = vunpack.c.l.s4 1966171168
        %v8026 = vunpack.c.0.s8 %v8025
        %v8027 = vlaneseq
        %v8028 = vshrl.u32 %v8027, 7
        %v8029 = vsub.s32 %v8026, %v8028
        %v8030 = vrot.slane %v8002, %v8029
        %v8031 = vcombine.low %v8009, %v8016
        %v8032 = vcombine.low %v8023, %v8030
        %v8034 = vunpack.c.l.s4 1966171168
        %v8035 = vunpack.c.0.s8 %v8034
        %v8036 = vlaneseq
        %v8037 = vshrl.u32 %v8036, 7
        %v8038 = vsub.s32 %v8035, %v8037
        %v8039 = vrot.slane %v8031, %v8038
        %v8041 = vunpack.c.l.s4 1966171168
        %v8042 = vunpack.c.0.s8 %v8041
        %v8043 = vlaneseq
        %v8044 = vshrl.u32 %v8043, 7
        %v8045 = vsub.s32 %v8042, %v8044
        %v8046 = vrot.slane %v8032, %v8045
        %v8047 = vcombine.low %v8039, %v8046
        %v8048 = vcombine.low %v6653, %v6657
        %v8049 = vcombine.low %v6661, %v6665
        %v8050 = vcombine.low %v6669, %v6673
        %v8051 = vcombine.low %v6677, %v6681
        %v8053 = vunpack.c.l.s4 1966171168
        %v8054 = vunpack.c.0.s8 %v8053
        %v8055 = vlaneseq
        %v8056 = vshrl.u32 %v8055, 7
        %v8057 = vsub.s32 %v8054, %v8056
        %v8058 = vrot.slane %v8048, %v8057
        %v8060 = vunpack.c.l.s4 1966171168
        %v8061 = vunpack.c.0.s8 %v8060
        %v8062 = vlaneseq
        %v8063 = vshrl.u32 %v8062, 7
        %v8064 = vsub.s32 %v8061, %v8063
        %v8065 = vrot.slane %v8049, %v8064
        %v8067 = vunpack.c.l.s4 1966171168
        %v8068 = vunpack.c.0.s8 %v8067
        %v8069 = vlaneseq
        %v8070 = vshrl.u32 %v8069, 7
        %v8071 = vsub.s32 %v8068, %v8070
        %v8072 = vrot.slane %v8050, %v8071
        %v8074 = vunpack.c.l.s4 1966171168
        %v8075 = vunpack.c.0.s8 %v8074
        %v8076 = vlaneseq
        %v8077 = vshrl.u32 %v8076, 7
        %v8078 = vsub.s32 %v8075, %v8077
        %v8079 = vrot.slane %v8051, %v8078
        %v8080 = vcombine.low %v8058, %v8065
        %v8081 = vcombine.low %v8072, %v8079
        %v8083 = vunpack.c.l.s4 1966171168
        %v8084 = vunpack.c.0.s8 %v8083
        %v8085 = vlaneseq
        %v8086 = vshrl.u32 %v8085, 7
        %v8087 = vsub.s32 %v8084, %v8086
        %v8088 = vrot.slane %v8080, %v8087
        %v8090 = vunpack.c.l.s4 1966171168
        %v8091 = vunpack.c.0.s8 %v8090
        %v8092 = vlaneseq
        %v8093 = vshrl.u32 %v8092, 7
        %v8094 = vsub.s32 %v8091, %v8093
        %v8095 = vrot.slane %v8081, %v8094
        %v8096 = vcombine.low %v8088, %v8095
        %v8097 = vcombine.low %v6685, %v6689
        %v8098 = vcombine.low %v6693, %v6697
        %v8099 = vcombine.low %v6701, %v6705
        %v8100 = vcombine.low %v6709, %v6713
        %v8102 = vunpack.c.l.s4 1966171168
        %v8103 = vunpack.c.0.s8 %v8102
        %v8104 = vlaneseq
        %v8105 = vshrl.u32 %v8104, 7
        %v8106 = vsub.s32 %v8103, %v8105
        %v8107 = vrot.slane %v8097, %v8106
        %v8109 = vunpack.c.l.s4 1966171168
        %v8110 = vunpack.c.0.s8 %v8109
        %v8111 = vlaneseq
        %v8112 = vshrl.u32 %v8111, 7
        %v8113 = vsub.s32 %v8110, %v8112
        %v8114 = vrot.slane %v8098, %v8113
        %v8116 = vunpack.c.l.s4 1966171168
        %v8117 = vunpack.c.0.s8 %v8116
        %v8118 = vlaneseq
        %v8119 = vshrl.u32 %v8118, 7
        %v8120 = vsub.s32 %v8117, %v8119
        %v8121 = vrot.slane %v8099, %v8120
        %v8123 = vunpack.c.l.s4 1966171168
        %v8124 = vunpack.c.0.s8 %v8123
        %v8125 = vlaneseq
        %v8126 = vshrl.u32 %v8125, 7
        %v8127 = vsub.s32 %v8124, %v8126
        %v8128 = vrot.slane %v8100, %v8127
        %v8129 = vcombine.low %v8107, %v8114
        %v8130 = vcombine.low %v8121, %v8128
        %v8132 = vunpack.c.l.s4 1966171168
        %v8133 = vunpack.c.0.s8 %v8132
        %v8134 = vlaneseq
        %v8135 = vshrl.u32 %v8134, 7
        %v8136 = vsub.s32 %v8133, %v8135
        %v8137 = vrot.slane %v8129, %v8136
        %v8139 = vunpack.c.l.s4 1966171168
        %v8140 = vunpack.c.0.s8 %v8139
        %v8141 = vlaneseq
        %v8142 = vshrl.u32 %v8141, 7
        %v8143 = vsub.s32 %v8140, %v8142
        %v8144 = vrot.slane %v8130, %v8143
        %v8145 = vcombine.low %v8137, %v8144
        %v8146 = vcombine.low %v6717, %v6721
        %v8147 = vcombine.low %v6725, %v6729
        %v8148 = vcombine.low %v6733, %v6737
        %v8149 = vcombine.low %v6741, %v6745
        %v8151 = vunpack.c.l.s4 1966171168
        %v8152 = vunpack.c.0.s8 %v8151
        %v8153 = vlaneseq
        %v8154 = vshrl.u32 %v8153, 7
        %v8155 = vsub.s32 %v8152, %v8154
        %v8156 = vrot.slane %v8146, %v8155
        %v8158 = vunpack.c.l.s4 1966171168
        %v8159 = vunpack.c.0.s8 %v8158
        %v8160 = vlaneseq
        %v8161 = vshrl.u32 %v8160, 7
        %v8162 = vsub.s32 %v8159, %v8161
        %v8163 = vrot.slane %v8147, %v8162
        %v8165 = vunpack.c.l.s4 1966171168
        %v8166 = vunpack.c.0.s8 %v8165
        %v8167 = vlaneseq
        %v8168 = vshrl.u32 %v8167, 7
        %v8169 = vsub.s32 %v8166, %v8168
        %v8170 = vrot.slane %v8148, %v8169
        %v8172 = vunpack.c.l.s4 1966171168
        %v8173 = vunpack.c.0.s8 %v8172
        %v8174 = vlaneseq
        %v8175 = vshrl.u32 %v8174, 7
        %v8176 = vsub.s32 %v8173, %v8175
        %v8177 = vrot.slane %v8149, %v8176
        %v8178 = vcombine.low %v8156, %v8163
        %v8179 = vcombine.low %v8170, %v8177
        %v8181 = vunpack.c.l.s4 1966171168
        %v8182 = vunpack.c.0.s8 %v8181
        %v8183 = vlaneseq
        %v8184 = vshrl.u32 %v8183, 7
        %v8185 = vsub.s32 %v8182, %v8184
        %v8186 = vrot.slane %v8178, %v8185
        %v8188 = vunpack.c.l.s4 1966171168
        %v8189 = vunpack.c.0.s8 %v8188
        %v8190 = vlaneseq
        %v8191 = vshrl.u32 %v8190, 7
        %v8192 = vsub.s32 %v8189, %v8191
        %v8193 = vrot.slane %v8179, %v8192
        %v8194 = vcombine.low %v8186, %v8193
        %v8195 = vcombine.low %v6749, %v6753
        %v8196 = vcombine.low %v6757, %v6761
        %v8197 = vcombine.low %v6765, %v6769
        %v8198 = vcombine.low %v6773, %v6777
        %v8200 = vunpack.c.l.s4 1966171168
        %v8201 = vunpack.c.0.s8 %v8200
        %v8202 = vlaneseq
        %v8203 = vshrl.u32 %v8202, 7
        %v8204 = vsub.s32 %v8201, %v8203
        %v8205 = vrot.slane %v8195, %v8204
        %v8207 = vunpack.c.l.s4 1966171168
        %v8208 = vunpack.c.0.s8 %v8207
        %v8209 = vlaneseq
        %v8210 = vshrl.u32 %v8209, 7
        %v8211 = vsub.s32 %v8208, %v8210
        %v8212 = vrot.slane %v8196, %v8211
        %v8214 = vunpack.c.l.s4 1966171168
        %v8215 = vunpack.c.0.s8 %v8214
        %v8216 = vlaneseq
        %v8217 = vshrl.u32 %v8216, 7
        %v8218 = vsub.s32 %v8215, %v8217
        %v8219 = vrot.slane %v8197, %v8218
        %v8221 = vunpack.c.l.s4 1966171168
        %v8222 = vunpack.c.0.s8 %v8221
        %v8223 = vlaneseq
        %v8224 = vshrl.u32 %v8223, 7
        %v8225 = vsub.s32 %v8222, %v8224
        %v8226 = vrot.slane %v8198, %v8225
        %v8227 = vcombine.low %v8205, %v8212
        %v8228 = vcombine.low %v8219, %v8226
        %v8230 = vunpack.c.l.s4 1966171168
        %v8231 = vunpack.c.0.s8 %v8230
        %v8232 = vlaneseq
        %v8233 = vshrl.u32 %v8232, 7
        %v8234 = vsub.s32 %v8231, %v8233
        %v8235 = vrot.slane %v8227, %v8234
        %v8237 = vunpack.c.l.s4 1966171168
        %v8238 = vunpack.c.0.s8 %v8237
        %v8239 = vlaneseq
        %v8240 = vshrl.u32 %v8239, 7
        %v8241 = vsub.s32 %v8238, %v8240
        %v8242 = vrot.slane %v8228, %v8241
        %v8243 = vcombine.low %v8235, %v8242
        %v8244 = vcombine.low %v6781, %v6785
        %v8245 = vcombine.low %v6789, %v6793
        %v8246 = vcombine.low %v6797, %v6801
        %v8247 = vcombine.low %v6805, %v6809
        %v8249 = vunpack.c.l.s4 1966171168
        %v8250 = vunpack.c.0.s8 %v8249
        %v8251 = vlaneseq
        %v8252 = vshrl.u32 %v8251, 7
        %v8253 = vsub.s32 %v8250, %v8252
        %v8254 = vrot.slane %v8244, %v8253
        %v8256 = vunpack.c.l.s4 1966171168
        %v8257 = vunpack.c.0.s8 %v8256
        %v8258 = vlaneseq
        %v8259 = vshrl.u32 %v8258, 7
        %v8260 = vsub.s32 %v8257, %v8259
        %v8261 = vrot.slane %v8245, %v8260
        %v8263 = vunpack.c.l.s4 1966171168
        %v8264 = vunpack.c.0.s8 %v8263
        %v8265 = vlaneseq
        %v8266 = vshrl.u32 %v8265, 7
        %v8267 = vsub.s32 %v8264, %v8266
        %v8268 = vrot.slane %v8246, %v8267
        %v8270 = vunpack.c.l.s4 1966171168
        %v8271 = vunpack.c.0.s8 %v8270
        %v8272 = vlaneseq
        %v8273 = vshrl.u32 %v8272, 7
        %v8274 = vsub.s32 %v8271, %v8273
        %v8275 = vrot.slane %v8247, %v8274
        %v8276 = vcombine.low %v8254, %v8261
        %v8277 = vcombine.low %v8268, %v8275
        %v8279 = vunpack.c.l.s4 1966171168
        %v8280 = vunpack.c.0.s8 %v8279
        %v8281 = vlaneseq
        %v8282 = vshrl.u32 %v8281, 7
        %v8283 = vsub.s32 %v8280, %v8282
        %v8284 = vrot.slane %v8276, %v8283
        %v8286 = vunpack.c.l.s4 1966171168
        %v8287 = vunpack.c.0.s8 %v8286
        %v8288 = vlaneseq
        %v8289 = vshrl.u32 %v8288, 7
        %v8290 = vsub.s32 %v8287, %v8289
        %v8291 = vrot.slane %v8277, %v8290
        %v8292 = vcombine.low %v8284, %v8291
        %v8293 = vcombine.low %v6813, %v6817
        %v8294 = vcombine.low %v6821, %v6825
        %v8295 = vcombine.low %v6829, %v6833
        %v8296 = vcombine.low %v6837, %v6841
        %v8298 = vunpack.c.l.s4 1966171168
        %v8299 = vunpack.c.0.s8 %v8298
        %v8300 = vlaneseq
        %v8301 = vshrl.u32 %v8300, 7
        %v8302 = vsub.s32 %v8299, %v8301
        %v8303 = vrot.slane %v8293, %v8302
        %v8305 = vunpack.c.l.s4 1966171168
        %v8306 = vunpack.c.0.s8 %v8305
        %v8307 = vlaneseq
        %v8308 = vshrl.u32 %v8307, 7
        %v8309 = vsub.s32 %v8306, %v8308
        %v8310 = vrot.slane %v8294, %v8309
        %v8312 = vunpack.c.l.s4 1966171168
        %v8313 = vunpack.c.0.s8 %v8312
        %v8314 = vlaneseq
        %v8315 = vshrl.u32 %v8314, 7
        %v8316 = vsub.s32 %v8313, %v8315
        %v8317 = vrot.slane %v8295, %v8316
        %v8319 = vunpack.c.l.s4 1966171168
        %v8320 = vunpack.c.0.s8 %v8319
        %v8321 = vlaneseq
        %v8322 = vshrl.u32 %v8321, 7
        %v8323 = vsub.s32 %v8320, %v8322
        %v8324 = vrot.slane %v8296, %v8323
        %v8325 = vcombine.low %v8303, %v8310
        %v8326 = vcombine.low %v8317, %v8324
        %v8328 = vunpack.c.l.s4 1966171168
        %v8329 = vunpack.c.0.s8 %v8328
        %v8330 = vlaneseq
        %v8331 = vshrl.u32 %v8330, 7
        %v8332 = vsub.s32 %v8329, %v8331
        %v8333 = vrot.slane %v8325, %v8332
        %v8335 = vunpack.c.l.s4 1966171168
        %v8336 = vunpack.c.0.s8 %v8335
        %v8337 = vlaneseq
        %v8338 = vshrl.u32 %v8337, 7
        %v8339 = vsub.s32 %v8336, %v8338
        %v8340 = vrot.slane %v8326, %v8339
        %v8341 = vcombine.low %v8333, %v8340
        %v8342 = vcombine.low %v6845, %v6849
        %v8343 = vcombine.low %v6853, %v6857
        %v8344 = vcombine.low %v6861, %v6865
        %v8345 = vcombine.low %v6869, %v6873
        %v8347 = vunpack.c.l.s4 1966171168
        %v8348 = vunpack.c.0.s8 %v8347
        %v8349 = vlaneseq
        %v8350 = vshrl.u32 %v8349, 7
        %v8351 = vsub.s32 %v8348, %v8350
        %v8352 = vrot.slane %v8342, %v8351
        %v8354 = vunpack.c.l.s4 1966171168
        %v8355 = vunpack.c.0.s8 %v8354
        %v8356 = vlaneseq
        %v8357 = vshrl.u32 %v8356, 7
        %v8358 = vsub.s32 %v8355, %v8357
        %v8359 = vrot.slane %v8343, %v8358
        %v8361 = vunpack.c.l.s4 1966171168
        %v8362 = vunpack.c.0.s8 %v8361
        %v8363 = vlaneseq
        %v8364 = vshrl.u32 %v8363, 7
        %v8365 = vsub.s32 %v8362, %v8364
        %v8366 = vrot.slane %v8344, %v8365
        %v8368 = vunpack.c.l.s4 1966171168
        %v8369 = vunpack.c.0.s8 %v8368
        %v8370 = vlaneseq
        %v8371 = vshrl.u32 %v8370, 7
        %v8372 = vsub.s32 %v8369, %v8371
        %v8373 = vrot.slane %v8345, %v8372
        %v8374 = vcombine.low %v8352, %v8359
        %v8375 = vcombine.low %v8366, %v8373
        %v8377 = vunpack.c.l.s4 1966171168
        %v8378 = vunpack.c.0.s8 %v8377
        %v8379 = vlaneseq
        %v8380 = vshrl.u32 %v8379, 7
        %v8381 = vsub.s32 %v8378, %v8380
        %v8382 = vrot.slane %v8374, %v8381
        %v8384 = vunpack.c.l.s4 1966171168
        %v8385 = vunpack.c.0.s8 %v8384
        %v8386 = vlaneseq
        %v8387 = vshrl.u32 %v8386, 7
        %v8388 = vsub.s32 %v8385, %v8387
        %v8389 = vrot.slane %v8375, %v8388
        %v8390 = vcombine.low %v8382, %v8389
        %v8391 = vcombine.low %v6877, %v6881
        %v8392 = vcombine.low %v6885, %v6889
        %v8393 = vcombine.low %v6893, %v6897
        %v8394 = vcombine.low %v6901, %v6905
        %v8396 = vunpack.c.l.s4 1966171168
        %v8397 = vunpack.c.0.s8 %v8396
        %v8398 = vlaneseq
        %v8399 = vshrl.u32 %v8398, 7
        %v8400 = vsub.s32 %v8397, %v8399
        %v8401 = vrot.slane %v8391, %v8400
        %v8403 = vunpack.c.l.s4 1966171168
        %v8404 = vunpack.c.0.s8 %v8403
        %v8405 = vlaneseq
        %v8406 = vshrl.u32 %v8405, 7
        %v8407 = vsub.s32 %v8404, %v8406
        %v8408 = vrot.slane %v8392, %v8407
        %v8410 = vunpack.c.l.s4 1966171168
        %v8411 = vunpack.c.0.s8 %v8410
        %v8412 = vlaneseq
        %v8413 = vshrl.u32 %v8412, 7
        %v8414 = vsub.s32 %v8411, %v8413
        %v8415 = vrot.slane %v8393, %v8414
        %v8417 = vunpack.c.l.s4 1966171168
        %v8418 = vunpack.c.0.s8 %v8417
        %v8419 = vlaneseq
        %v8420 = vshrl.u32 %v8419, 7
        %v8421 = vsub.s32 %v8418, %v8420
        %v8422 = vrot.slane %v8394, %v8421
        %v8423 = vcombine.low %v8401, %v8408
        %v8424 = vcombine.low %v8415, %v8422
        %v8426 = vunpack.c.l.s4 1966171168
        %v8427 = vunpack.c.0.s8 %v8426
        %v8428 = vlaneseq
        %v8429 = vshrl.u32 %v8428, 7
        %v8430 = vsub.s32 %v8427, %v8429
        %v8431 = vrot.slane %v8423, %v8430
        %v8433 = vunpack.c.l.s4 1966171168
        %v8434 = vunpack.c.0.s8 %v8433
        %v8435 = vlaneseq
        %v8436 = vshrl.u32 %v8435, 7
        %v8437 = vsub.s32 %v8434, %v8436
        %v8438 = vrot.slane %v8424, %v8437
        %v8439 = vcombine.low %v8431, %v8438
        %v8440 = vcombine.low %v6909, %v6913
        %v8441 = vcombine.low %v6917, %v6921
        %v8442 = vcombine.low %v6925, %v6929
        %v8443 = vcombine.low %v6933, %v6937
        %v8445 = vunpack.c.l.s4 1966171168
        %v8446 = vunpack.c.0.s8 %v8445
        %v8447 = vlaneseq
        %v8448 = vshrl.u32 %v8447, 7
        %v8449 = vsub.s32 %v8446, %v8448
        %v8450 = vrot.slane %v8440, %v8449
        %v8452 = vunpack.c.l.s4 1966171168
        %v8453 = vunpack.c.0.s8 %v8452
        %v8454 = vlaneseq
        %v8455 = vshrl.u32 %v8454, 7
        %v8456 = vsub.s32 %v8453, %v8455
        %v8457 = vrot.slane %v8441, %v8456
        %v8459 = vunpack.c.l.s4 1966171168
        %v8460 = vunpack.c.0.s8 %v8459
        %v8461 = vlaneseq
        %v8462 = vshrl.u32 %v8461, 7
        %v8463 = vsub.s32 %v8460, %v8462
        %v8464 = vrot.slane %v8442, %v8463
        %v8466 = vunpack.c.l.s4 1966171168
        %v8467 = vunpack.c.0.s8 %v8466
        %v8468 = vlaneseq
        %v8469 = vshrl.u32 %v8468, 7
        %v8470 = vsub.s32 %v8467, %v8469
        %v8471 = vrot.slane %v8443, %v8470
        %v8472 = vcombine.low %v8450, %v8457
        %v8473 = vcombine.low %v8464, %v8471
        %v8475 = vunpack.c.l.s4 1966171168
        %v8476 = vunpack.c.0.s8 %v8475
        %v8477 = vlaneseq
        %v8478 = vshrl.u32 %v8477, 7
        %v8479 = vsub.s32 %v8476, %v8478
        %v8480 = vrot.slane %v8472, %v8479
        %v8482 = vunpack.c.l.s4 1966171168
        %v8483 = vunpack.c.0.s8 %v8482
        %v8484 = vlaneseq
        %v8485 = vshrl.u32 %v8484, 7
        %v8486 = vsub.s32 %v8483, %v8485
        %v8487 = vrot.slane %v8473, %v8486
        %v8488 = vcombine.low %v8480, %v8487
        %v8489 = vcombine.low %v6941, %v6945
        %v8490 = vcombine.low %v6949, %v6953
        %v8491 = vcombine.low %v6957, %v6961
        %v8492 = vcombine.low %v6965, %v6969
        %v8494 = vunpack.c.l.s4 1966171168
        %v8495 = vunpack.c.0.s8 %v8494
        %v8496 = vlaneseq
        %v8497 = vshrl.u32 %v8496, 7
        %v8498 = vsub.s32 %v8495, %v8497
        %v8499 = vrot.slane %v8489, %v8498
        %v8501 = vunpack.c.l.s4 1966171168
        %v8502 = vunpack.c.0.s8 %v8501
        %v8503 = vlaneseq
        %v8504 = vshrl.u32 %v8503, 7
        %v8505 = vsub.s32 %v8502, %v8504
        %v8506 = vrot.slane %v8490, %v8505
        %v8508 = vunpack.c.l.s4 1966171168
        %v8509 = vunpack.c.0.s8 %v8508
        %v8510 = vlaneseq
        %v8511 = vshrl.u32 %v8510, 7
        %v8512 = vsub.s32 %v8509, %v8511
        %v8513 = vrot.slane %v8491, %v8512
        %v8515 = vunpack.c.l.s4 1966171168
        %v8516 = vunpack.c.0.s8 %v8515
        %v8517 = vlaneseq
        %v8518 = vshrl.u32 %v8517, 7
        %v8519 = vsub.s32 %v8516, %v8518
        %v8520 = vrot.slane %v8492, %v8519
        %v8521 = vcombine.low %v8499, %v8506
        %v8522 = vcombine.low %v8513, %v8520
        %v8524 = vunpack.c.l.s4 1966171168
        %v8525 = vunpack.c.0.s8 %v8524
        %v8526 = vlaneseq
        %v8527 = vshrl.u32 %v8526, 7
        %v8528 = vsub.s32 %v8525, %v8527
        %v8529 = vrot.slane %v8521, %v8528
        %v8531 = vunpack.c.l.s4 1966171168
        %v8532 = vunpack.c.0.s8 %v8531
        %v8533 = vlaneseq
        %v8534 = vshrl.u32 %v8533, 7
        %v8535 = vsub.s32 %v8532, %v8534
        %v8536 = vrot.slane %v8522, %v8535
        %v8537 = vcombine.low %v8529, %v8536
        %8538 = vset.pattern.permute.xlu0 0
        %8539 = vperm.xlu0 %8538, %v7018
        %v8540 = vpop.permute.xlu0 %8539
        %8541 = vset.pattern.permute.xlu0 0
        %8542 = vperm.xlu0 %8541, %v7067
        %v8543 = vpop.permute.xlu0 %8542
        %8544 = vset.pattern.permute.xlu0 0
        %8545 = vperm.xlu0 %8544, %v7116
        %v8546 = vpop.permute.xlu0 %8545
        %8547 = vset.pattern.permute.xlu0 0
        %8548 = vperm.xlu0 %8547, %v7165
        %v8549 = vpop.permute.xlu0 %8548
        %8550 = vset.pattern.permute.xlu0 0
        %8551 = vperm.xlu0 %8550, %v7214
        %v8552 = vpop.permute.xlu0 %8551
        %8553 = vset.pattern.permute.xlu0 0
        %8554 = vperm.xlu0 %8553, %v7263
        %v8555 = vpop.permute.xlu0 %8554
        %8556 = vset.pattern.permute.xlu0 0
        %8557 = vperm.xlu0 %8556, %v7312
        %v8558 = vpop.permute.xlu0 %8557
        %8559 = vset.pattern.permute.xlu0 0
        %8560 = vperm.xlu0 %8559, %v7361
        %v8561 = vpop.permute.xlu0 %8560
        %8562 = vset.pattern.permute.xlu0 0
        %8563 = vperm.xlu0 %8562, %v7410
        %v8564 = vpop.permute.xlu0 %8563
        %8565 = vset.pattern.permute.xlu0 0
        %8566 = vperm.xlu0 %8565, %v7459
        %v8567 = vpop.permute.xlu0 %8566
        %8568 = vset.pattern.permute.xlu0 0
        %8569 = vperm.xlu0 %8568, %v7508
        %v8570 = vpop.permute.xlu0 %8569
        %8571 = vset.pattern.permute.xlu0 0
        %8572 = vperm.xlu0 %8571, %v7557
        %v8573 = vpop.permute.xlu0 %8572
        %8574 = vset.pattern.permute.xlu0 0
        %8575 = vperm.xlu0 %8574, %v7606
        %v8576 = vpop.permute.xlu0 %8575
        %8577 = vset.pattern.permute.xlu0 0
        %8578 = vperm.xlu0 %8577, %v7655
        %v8579 = vpop.permute.xlu0 %8578
        %8580 = vset.pattern.permute.xlu0 0
        %8581 = vperm.xlu0 %8580, %v7704
        %v8582 = vpop.permute.xlu0 %8581
        %8583 = vset.pattern.permute.xlu0 0
        %8584 = vperm.xlu0 %8583, %v7753
        %v8585 = vpop.permute.xlu0 %8584
        %8586 = vset.pattern.permute.xlu0 0
        %8587 = vperm.xlu0 %8586, %v7802
        %v8588 = vpop.permute.xlu0 %8587
        %8589 = vset.pattern.permute.xlu0 0
        %8590 = vperm.xlu0 %8589, %v7851
        %v8591 = vpop.permute.xlu0 %8590
        %8592 = vset.pattern.permute.xlu0 0
        %8593 = vperm.xlu0 %8592, %v7900
        %v8594 = vpop.permute.xlu0 %8593
        %8595 = vset.pattern.permute.xlu0 0
        %8596 = vperm.xlu0 %8595, %v7949
        %v8597 = vpop.permute.xlu0 %8596
        %8598 = vset.pattern.permute.xlu0 0
        %8599 = vperm.xlu0 %8598, %v7998
        %v8600 = vpop.permute.xlu0 %8599
        %8601 = vset.pattern.permute.xlu0 0
        %8602 = vperm.xlu0 %8601, %v8047
        %v8603 = vpop.permute.xlu0 %8602
        %8604 = vset.pattern.permute.xlu0 0
        %8605 = vperm.xlu0 %8604, %v8096
        %v8606 = vpop.permute.xlu0 %8605
        %8607 = vset.pattern.permute.xlu0 0
        %8608 = vperm.xlu0 %8607, %v8145
        %v8609 = vpop.permute.xlu0 %8608
        %8610 = vset.pattern.permute.xlu0 0
        %8611 = vperm.xlu0 %8610, %v8194
        %v8612 = vpop.permute.xlu0 %8611
        %8613 = vset.pattern.permute.xlu0 0
        %8614 = vperm.xlu0 %8613, %v8243
        %v8615 = vpop.permute.xlu0 %8614
        %8616 = vset.pattern.permute.xlu0 0
        %8617 = vperm.xlu0 %8616, %v8292
        %v8618 = vpop.permute.xlu0 %8617
        %8619 = vset.pattern.permute.xlu0 0
        %8620 = vperm.xlu0 %8619, %v8341
        %v8621 = vpop.permute.xlu0 %8620
        %8622 = vset.pattern.permute.xlu0 0
        %8623 = vperm.xlu0 %8622, %v8390
        %v8624 = vpop.permute.xlu0 %8623
        %8625 = vset.pattern.permute.xlu0 0
        %8626 = vperm.xlu0 %8625, %v8439
        %v8627 = vpop.permute.xlu0 %8626
        %8628 = vset.pattern.permute.xlu0 0
        %8629 = vperm.xlu0 %8628, %v8488
        %v8630 = vpop.permute.xlu0 %8629
        %8631 = vset.pattern.permute.xlu0 0
        %8632 = vperm.xlu0 %8631, %v8537
        %v8633 = vpop.permute.xlu0 %8632
        %v8634 = vlaneseq
        %v8635 = vand.u32 %v8634, 127
        %v8636 = vlaneseq
        %v8637 = vshrl.u32 %v8636, 7
        %v8638 = vsub.s32 %v8635, %v8637
        %v8639 = vrot.slane %v8540, %v8638
        %v8640 = vadd.s32 %v8635, 4294967288
        %v8641 = vlaneseq
        %v8642 = vshrl.u32 %v8641, 7
        %v8643 = vsub.s32 %v8640, %v8642
        %v8644 = vrot.slane %v8543, %v8643
        %vm8645 = vcmask 130112
        %v8646 = vsel %vm8645, %v8644, %v8639
        %v8647 = vadd.s32 %v8635, 4294967280
        %v8648 = vlaneseq
        %v8649 = vshrl.u32 %v8648, 7
        %v8650 = vsub.s32 %v8647, %v8649
        %v8651 = vrot.slane %v8546, %v8650
        %vm8652 = vcmask 195712
        %v8653 = vsel %vm8652, %v8651, %v8646
        %v8654 = vadd.s32 %v8635, 4294967272
        %v8655 = vlaneseq
        %v8656 = vshrl.u32 %v8655, 7
        %v8657 = vsub.s32 %v8654, %v8656
        %v8658 = vrot.slane %v8549, %v8657
        %vm8659 = vcmask 261312
        %v8660 = vsel %vm8659, %v8658, %v8653
        %v8661 = vadd.s32 %v8635, 4294967264
        %v8662 = vlaneseq
        %v8663 = vshrl.u32 %v8662, 7
        %v8664 = vsub.s32 %v8661, %v8663
        %v8665 = vrot.slane %v8552, %v8664
        %vm8666 = vcmask 326912
        %v8667 = vsel %vm8666, %v8665, %v8660
        %v8668 = vadd.s32 %v8635, 4294967256
        %v8669 = vlaneseq
        %v8670 = vshrl.u32 %v8669, 7
        %v8671 = vsub.s32 %v8668, %v8670
        %v8672 = vrot.slane %v8555, %v8671
        %vm8673 = vcmask 392512
        %v8674 = vsel %vm8673, %v8672, %v8667
        %v8675 = vadd.s32 %v8635, 4294967248
        %v8676 = vlaneseq
        %v8677 = vshrl.u32 %v8676, 7
        %v8678 = vsub.s32 %v8675, %v8677
        %v8679 = vrot.slane %v8558, %v8678
        %vm8680 = vcmask 458112
        %v8681 = vsel %vm8680, %v8679, %v8674
        %v8682 = vadd.s32 %v8635, 4294967240
        %v8683 = vlaneseq
        %v8684 = vshrl.u32 %v8683, 7
        %v8685 = vsub.s32 %v8682, %v8684
        %v8686 = vrot.slane %v8561, %v8685
        %vm8687 = vcmask 523712
        %v8688 = vsel %vm8687, %v8686, %v8681
        %v8689 = vadd.s32 %v8635, 4294967232
        %v8690 = vlaneseq
        %v8691 = vshrl.u32 %v8690, 7
        %v8692 = vsub.s32 %v8689, %v8691
        %v8693 = vrot.slane %v8564, %v8692
        %vm8694 = vcmask 589312
        %v8695 = vsel %vm8694, %v8693, %v8688
        %v8696 = vadd.s32 %v8635, 4294967224
        %v8697 = vlaneseq
        %v8698 = vshrl.u32 %v8697, 7
        %v8699 = vsub.s32 %v8696, %v8698
        %v8700 = vrot.slane %v8567, %v8699
        %vm8701 = vcmask 654912
        %v8702 = vsel %vm8701, %v8700, %v8695
        %v8703 = vadd.s32 %v8635, 4294967216
        %v8704 = vlaneseq
        %v8705 = vshrl.u32 %v8704, 7
        %v8706 = vsub.s32 %v8703, %v8705
        %v8707 = vrot.slane %v8570, %v8706
        %vm8708 = vcmask 720512
        %v8709 = vsel %vm8708, %v8707, %v8702
        %v8710 = vadd.s32 %v8635, 4294967208
        %v8711 = vlaneseq
        %v8712 = vshrl.u32 %v8711, 7
        %v8713 = vsub.s32 %v8710, %v8712
        %v8714 = vrot.slane %v8573, %v8713
        %vm8715 = vcmask 786112
        %v8716 = vsel %vm8715, %v8714, %v8709
        %v8717 = vadd.s32 %v8635, 4294967200
        %v8718 = vlaneseq
        %v8719 = vshrl.u32 %v8718, 7
        %v8720 = vsub.s32 %v8717, %v8719
        %v8721 = vrot.slane %v8576, %v8720
        %vm8722 = vcmask 851712
        %v8723 = vsel %vm8722, %v8721, %v8716
        %v8724 = vadd.s32 %v8635, 4294967192
        %v8725 = vlaneseq
        %v8726 = vshrl.u32 %v8725, 7
        %v8727 = vsub.s32 %v8724, %v8726
        %v8728 = vrot.slane %v8579, %v8727
        %vm8729 = vcmask 917312
        %v8730 = vsel %vm8729, %v8728, %v8723
        %v8731 = vadd.s32 %v8635, 4294967184
        %v8732 = vlaneseq
        %v8733 = vshrl.u32 %v8732, 7
        %v8734 = vsub.s32 %v8731, %v8733
        %v8735 = vrot.slane %v8582, %v8734
        %vm8736 = vcmask 982912
        %v8737 = vsel %vm8736, %v8735, %v8730
        %v8738 = vadd.s32 %v8635, 4294967176
        %v8739 = vlaneseq
        %v8740 = vshrl.u32 %v8739, 7
        %v8741 = vsub.s32 %v8738, %v8740
        %v8742 = vrot.slane %v8585, %v8741
        %vm8743 = vcmask 1048512
        %v8744 = vsel %vm8743, %v8742, %v8737
        %v8745 = vlaneseq
        %v8746 = vshrl.u32 %v8745, 7
        %v8747 = vsub.s32 %v8635, %v8746
        %v8748 = vrot.slane %v8588, %v8747
        %v8749 = vlaneseq
        %v8750 = vshrl.u32 %v8749, 7
        %v8751 = vsub.s32 %v8640, %v8750
        %v8752 = vrot.slane %v8591, %v8751
        %v8753 = vsel %vm8645, %v8752, %v8748
        %v8754 = vlaneseq
        %v8755 = vshrl.u32 %v8754, 7
        %v8756 = vsub.s32 %v8647, %v8755
        %v8757 = vrot.slane %v8594, %v8756
        %v8758 = vsel %vm8652, %v8757, %v8753
        %v8759 = vlaneseq
        %v8760 = vshrl.u32 %v8759, 7
        %v8761 = vsub.s32 %v8654, %v8760
        %v8762 = vrot.slane %v8597, %v8761
        %v8763 = vsel %vm8659, %v8762, %v8758
        %v8764 = vlaneseq
        %v8765 = vshrl.u32 %v8764, 7
        %v8766 = vsub.s32 %v8661, %v8765
        %v8767 = vrot.slane %v8600, %v8766
        %v8768 = vsel %vm8666, %v8767, %v8763
        %v8769 = vlaneseq
        %v8770 = vshrl.u32 %v8769, 7
        %v8771 = vsub.s32 %v8668, %v8770
        %v8772 = vrot.slane %v8603, %v8771
        %v8773 = vsel %vm8673, %v8772, %v8768
        %v8774 = vlaneseq
        %v8775 = vshrl.u32 %v8774, 7
        %v8776 = vsub.s32 %v8675, %v8775
        %v8777 = vrot.slane %v8606, %v8776
        %v8778 = vsel %vm8680, %v8777, %v8773
        %v8779 = vlaneseq
        %v8780 = vshrl.u32 %v8779, 7
        %v8781 = vsub.s32 %v8682, %v8780
        %v8782 = vrot.slane %v8609, %v8781
        %v8783 = vsel %vm8687, %v8782, %v8778
        %v8784 = vlaneseq
        %v8785 = vshrl.u32 %v8784, 7
        %v8786 = vsub.s32 %v8689, %v8785
        %v8787 = vrot.slane %v8612, %v8786
        %v8788 = vsel %vm8694, %v8787, %v8783
        %v8789 = vlaneseq
        %v8790 = vshrl.u32 %v8789, 7
        %v8791 = vsub.s32 %v8696, %v8790
        %v8792 = vrot.slane %v8615, %v8791
        %v8793 = vsel %vm8701, %v8792, %v8788
        %v8794 = vlaneseq
        %v8795 = vshrl.u32 %v8794, 7
        %v8796 = vsub.s32 %v8703, %v8795
        %v8797 = vrot.slane %v8618, %v8796
        %v8798 = vsel %vm8708, %v8797, %v8793
        %v8799 = vlaneseq
        %v8800 = vshrl.u32 %v8799, 7
        %v8801 = vsub.s32 %v8710, %v8800
        %v8802 = vrot.slane %v8621, %v8801
        %v8803 = vsel %vm8715, %v8802, %v8798
        %v8804 = vlaneseq
        %v8805 = vshrl.u32 %v8804, 7
        %v8806 = vsub.s32 %v8717, %v8805
        %v8807 = vrot.slane %v8624, %v8806
        %v8808 = vsel %vm8722, %v8807, %v8803
        %v8809 = vlaneseq
        %v8810 = vshrl.u32 %v8809, 7
        %v8811 = vsub.s32 %v8724, %v8810
        %v8812 = vrot.slane %v8627, %v8811
        %v8813 = vsel %vm8729, %v8812, %v8808
        %v8814 = vlaneseq
        %v8815 = vshrl.u32 %v8814, 7
        %v8816 = vsub.s32 %v8731, %v8815
        %v8817 = vrot.slane %v8630, %v8816
        %v8818 = vsel %vm8736, %v8817, %v8813
        %v8819 = vlaneseq
        %v8820 = vshrl.u32 %v8819, 7
        %v8821 = vsub.s32 %v8738, %v8820
        %v8822 = vrot.slane %v8633, %v8821
        %v8823 = vsel %vm8743, %v8822, %v8818
        %v8824 = vcombine.low %v8744, %v8823
        %v8826 = vunpack.c.l.s4 1966171168
        %v8827 = vunpack.c.0.s8 %v8826
        %v8828 = vlaneseq
        %v8829 = vshrl.u32 %v8828, 7
        %v8830 = vsub.s32 %v8827, %v8829
        %v8831 = vrot.slane %v8824, %v8830
        %v8833 = vunpack.c.l.s4 1966171168
        %v8834 = vunpack.c.0.s8 %v8833
        %v8835 = vlaneseq
        %v8836 = vshrl.u32 %v8835, 7
        %v8837 = vsub.s32 %v8834, %v8836
        %v8838 = vrot.slane %v8831, %v8837
        %v8840 = vlaneseq
        %vm8841 = vcmp.ge.s32.totalorder %v8840, 0
        %vm8842 = vcmp.lt.s32.totalorder %v8840, 256
        %vm8843 = vmand %vm8841, %vm8842
        %8844 = vst.msk [vmem:[%s317] sm:$0x3] %vm8843, %v8838
        %s8845 = sand.u32 %s210, 1
        %s8846 = scalar_lea.sflag [#allocation5], %s8845
        %s8847 = sand.u32 %s210, 1
        %s8848 = smul.addr %s8847, 2
        %s8849 = scalar_lea.vmem [#allocation4], %s8848
        // Predicated region
        $region53: #{tpu_custom_call.1} parent=51 // pred_check
          %p8850 = pneg %p220
        $region54: #{tpu_custom_call.1} parent=51 // pred_check_branch
          %8852 = sbr.rel (%p8850) target = $region56
        $region55: #{tpu_custom_call.1} parent=51 // pred_region
          %s8854 = ssub.s32 32, 32
          %8855 = vsyncadd %s8846, %s8854
          %s8856 = smul.addr %s24, 2
          %s8857 = smul.addr %s8856, 16
          %s8858 = scalar_lea.hbm %s8, %s8857
          %s8860 = sshll.u32 %s8849, 4
          %s8861 = int_to_ptr.vmem [resolvable:$true] %s8860
          %8863 = dma.vmem_to_hbm [thread:$0]  %s8861, 32, %s8858, %s8846
        $region56: #{tpu_custom_call.1} parent=51 // pred_fallthru
          _
      $region52: #{tpu_custom_call.1} parent=5 // pred_fallthru
        _
      %p8864 = scmp.le.s32.totalorder 2, %s19
      // Predicated region
      $region57: #{tpu_custom_call.1} parent=5 // pred_check
        %p8865 = pneg %p8864
      $region58: #{tpu_custom_call.1} parent=5 // pred_check_branch
        %8867 = sbr.rel (%p8865) target = $region60
      $region59: #{tpu_custom_call.1} parent=5 // pred_region
        %s8868 = ssub.s32 %s19, 2
        // Predicated region
        $region61: #{tpu_custom_call.1} parent=59 // pred_check
          %p8869 = pneg %p226
        $region62: #{tpu_custom_call.1} parent=59 // pred_check_branch
          %8871 = sbr.rel (%p8869) target = $region64
        $region63: #{tpu_custom_call.1} parent=59 // pred_region
          %s8872 = sand.u32 %s211, 1
          %s8873 = scalar_lea.sflag [#allocation5], %s8872
          %s8874 = sand.u32 %s211, 1
          %s8875 = smul.addr %s8874, 2
          %s8876 = scalar_lea.vmem [#allocation4], %s8875
          %8877 = dma.done %s8873, 32
        $region64: #{tpu_custom_call.1} parent=59 // pred_fallthru
          _
      $region60: #{tpu_custom_call.1} parent=5 // pred_fallthru
        _
    $region6: #{tpu_custom_call.1} parent=1 // loop_footer
      %s23 = sadd.s32 1, %s19
    $region7: #{tpu_custom_call.1} parent=1 // loop_footer_branch
      %18 = sbr.rel target = $region3
    $region8: #{tpu_custom_call.1} parent=1 // loop_exit
      _
    %8878 = vsyncpa [#allocation5], 1
    %s8879 = scalar_lea.sflag [#allocation5], 1
    %8880 = vsyncpa %s8879, 1

</llo_original>
